<compile_context>
chip_gen: v6e
topology: v6e:2x2x1
jax: 0.10.0
libtpu: 0.0.40
codegen_flags: <defaults>
</compile_context>

<pallas_src>
import math
from functools import partial

import numpy as np
import jax
import jax.numpy as jnp
from jax.experimental import pallas as pl
from jax.experimental.pallas import tpu as pltpu

_SQRT_HALF = 1.0 / math.sqrt(2.0)


def _erf(x, poly_dtype=jnp.float32):
    # Abramowitz & Stegun 7.1.26 polynomial erf.
    # exp and the (approx) reciprocal ride the EUP slot; only the mul/add
    # polynomial chain hits the VALU, and it runs in `poly_dtype` (bf16 on
    # v6e/v7x halves vreg count / VALU ops, fp32 on v5e which has no bf16 VPU).
    a1, a2, a3, a4, a5 = (0.254829592, -0.284496736, 1.421413741,
                          -1.453152027, 1.061405429)
    p = 0.3275911
    ax = jnp.abs(x)
    t = pl.reciprocal(1.0 + p * ax, approx=True).astype(poly_dtype)
    poly = ((((a5 * t + a4) * t + a3) * t + a2) * t + a1) * t
    y = 1.0 - poly.astype(jnp.float32) * jnp.exp(-ax * ax)
    return jnp.where(x >= 0, y, -y)


def _gelu_exact(x, poly_dtype):
    # Matches torch.nn.GELU() default (approximate='none').
    return 0.5 * x * (1.0 + _erf(x * _SQRT_HALF, poly_dtype))


def _mlp_fused_kernel(x_ref, w1_ref, b1_ref, w2_ref, b2_ref, o_ref, *,
                      poly_dtype):
    # Cast the activation tile to the MXU dtype *in-kernel* (no wrapper pass).
    x = x_ref[...].astype(w1_ref.dtype)
    # fc1: bf16 x bf16 on the MXU, fp32 accumulation.
    h = jnp.dot(x, w1_ref[...], preferred_element_type=jnp.float32)
    # bias + exact GELU; hidden tile never leaves VMEM/vregs.
    h = _gelu_exact(h + b1_ref[...], poly_dtype)
    # fc2: hidden back to bf16 for the MXU, fp32 accumulation, fused epilogue.
    y = jnp.dot(h.astype(w2_ref.dtype), w2_ref[...],
                preferred_element_type=jnp.float32)
    o_ref[...] = (y + b2_ref[...]).astype(o_ref.dtype)


def _round_up(v, m):
    return ((v + m - 1) // m) * m


def _default_gelu_poly_dtype():
    # v5e has no bf16 VALU/EUP -> keep the polynomial in fp32 there.
    try:
        kind = jax.devices()[0].device_kind.lower()
    except Exception:  # pragma: no cover - device query is best-effort only
        kind = ""
    return jnp.float32 if "v5" in kind else jnp.bfloat16


def _build_call(M, K, H, N, tm, out_dtype, x_itemsize, w_itemsize, poly_dtype,
                vmem_limit_bytes, single_buffer_weights):
    def const_spec(shape):
        # Constant-index blocks: DMA'd once; single-buffer them when supported
        # to halve resident weight VMEM (key on v7x's 64 MiB VMEM).
        if single_buffer_weights:
            return pl.BlockSpec(shape, lambda i: (0, 0),
                                pipeline_mode=pl.Buffered(1))
        return pl.BlockSpec(shape, lambda i: (0, 0))

    flops = 2 * M * K * H + 2 * M * H * N
    bytes_accessed = (M * K * x_itemsize + (K * H + H * N) * w_itemsize
                      + (H + N) * 4 + M * N * jnp.dtype(out_dtype).itemsize)

    return pl.pallas_call(
        partial(_mlp_fused_kernel, poly_dtype=poly_dtype),
        out_shape=jax.ShapeDtypeStruct((M, N), out_dtype),
        grid_spec=pltpu.PrefetchScalarGridSpec(
            num_scalar_prefetch=0,
            grid=(pl.cdiv(M, tm),),            # ragged M -> masked edge block
            in_specs=[
                pl.BlockSpec((tm, K), lambda i: (i, 0)),  # activation row tile
                const_spec((K, H)),                       # fc1 weight (resident)
                const_spec((1, H)),                       # fc1 bias
                const_spec((H, N)),                       # fc2 weight (resident)
                const_spec((1, N)),                       # fc2 bias
            ],
            out_specs=pl.BlockSpec((tm, N), lambda i: (i, 0)),
        ),
        compiler_params=pltpu.CompilerParams(
            dimension_semantics=("parallel",),
            # v7x-safe (<64 MiB physical); v5e/v6e (128 MiB) may raise this to
            # keep larger resident weights / bigger tiles.
            vmem_limit_bytes=vmem_limit_bytes,
        ),
        cost_estimate=pl.CostEstimate(flops=flops,
                                      transcendentals=2 * M * H,
                                      bytes_accessed=bytes_accessed),
    )


def mlp_forward(x, w1, b1, w2, b2, *, block_m=512,
                compute_dtype=jnp.bfloat16, out_dtype=None,
                gelu_poly_dtype=None,
                vmem_limit_bytes=48 * 1024 * 1024):
    """Fused Mlp forward: fc2(GELU(fc1(x))).  x: (..., in_features).

    Pass w1/w2 already cast to `compute_dtype` (done once at init) to avoid
    re-reading fp32 weights from HBM every call.  Output dtype defaults to the
    compute dtype (bf16); pass out_dtype=x.dtype for fp32 parity.
    """
    orig_shape = x.shape
    K, H = w1.shape
    H2, N = w2.shape
    assert orig_shape[-1] == K and H == H2

    out_dtype = compute_dtype if out_dtype is None else out_dtype
    poly_dtype = (_default_gelu_poly_dtype()
                  if gelu_poly_dtype is None else gelu_poly_dtype)

    xf = x.reshape(-1, K)            # no pad, no dtype cast: native-dtype load
    M = xf.shape[0]

    # Row tile: large, multiple of 16 (bf16 sublane packing) unless it is the
    # whole array (block == full dim is always legal).
    tm = min(block_m, M)
    if tm != M and tm % 16:
        tm = _round_up(tm, 16)

    # Weights should arrive pre-cast (once, outside the per-call path); cast
    # here only as a fallback.  Biases stay fp32 for the epilogue.
    w1c = w1 if w1.dtype == compute_dtype else w1.astype(compute_dtype)
    w2c = w2 if w2.dtype == compute_dtype else w2.astype(compute_dtype)
    b1r = b1.reshape(1, H).astype(jnp.float32)
    b2r = b2.reshape(1, N).astype(jnp.float32)

    args = (xf, w1c, b1r, w2c, b2r)
    x_isz = jnp.dtype(xf.dtype).itemsize
    w_isz = jnp.dtype(compute_dtype).itemsize
    try:
        out = _build_call(M, K, H, N, tm, out_dtype, x_isz, w_isz, poly_dtype,
                          vmem_limit_bytes, single_buffer_weights=True)(*args)
    except Exception:
        # pipeline_mode=pl.Buffered(1) unsupported on this JAX/Mosaic combo:
        # fall back to default double-buffered constant-index specs.
        out = _build_call(M, K, H, N, tm, out_dtype, x_isz, w_isz, poly_dtype,
                          vmem_limit_bytes, single_buffer_weights=False)(*args)

    return out.reshape(*orig_shape[:-1], N)


def reference_forward(x, w1, b1, w2, b2):
    """Plain-JAX fp32 reference matching the torch Mlp forward (drop=0)."""
    h = x @ w1 + b1
    h = jax.nn.gelu(h, approximate=False)    # norm_layer=None -> Identity
    return h @ w2 + b2                        # dropout p=0 -> Identity


def init_linear_params(key, in_dim, out_dim):
    # Mimics torch nn.Linear default init; weight stored (in, out).
    kw, kb = jax.random.split(key)
    bound = 1.0 / math.sqrt(in_dim)
    w = jax.random.uniform(kw, (in_dim, out_dim), jnp.float32, -bound, bound)
    b = jax.random.uniform(kb, (out_dim,), jnp.float32, -bound, bound)
    return w, b


if __name__ == "__main__":
    # Small ViT-ish config: tokens = 2 * 1024, in=128, hidden=256, out=128.
    # Feature dims are multiples of 128 (lane-dense, unmasked vst);
    # M=2048 / tm=512 -> 4 grid steps (>=2 per v7x TensorCore).
    bs, seq = 2, 1024
    in_features, hidden_features, out_features = 128, 256, 128

    key = jax.random.PRNGKey(0)
    kx, k1, k2 = jax.random.split(key, 3)
    x = jax.random.normal(kx, (bs, seq, in_features), dtype=jnp.float32)
    w1, b1 = init_linear_params(k1, in_features, hidden_features)
    w2, b2 = init_linear_params(k2, hidden_features, out_features)

    # Pre-cast the weights to the MXU dtype ONCE, outside the per-call path.
    w1_c = w1.astype(jnp.bfloat16)
    w2_c = w2.astype(jnp.bfloat16)

    out = mlp_forward(x, w1_c, b1, w2_c, b2, block_m=512)
    out = jax.block_until_ready(out)
    assert out.shape == (bs, seq, out_features), out.shape

    ref = reference_forward(x, w1, b1, w2, b2)
    # bf16 MXU inputs, bf16 output, approx-reciprocal/bf16-poly erf -> loosened
    # tolerance vs the fp32 reference.
    np.testing.assert_allclose(np.asarray(jnp.asarray(out, jnp.float32)),
                               np.asarray(ref), rtol=3e-2, atol=3e-2)
    print("KERNEL_OK")
</pallas_src>

<mosaic_0001>
module attributes {stable_mosaic.version = 11 : i64} {
  func.func @_mlp_fused_kernel(%arg0: i32, %arg1: memref<512x128xf32, #tpu.memory_space<vmem>>, %arg2: memref<128x256xbf16, #tpu.memory_space<vmem>>, %arg3: memref<1x256xf32, #tpu.memory_space<vmem>>, %arg4: memref<256x128xbf16, #tpu.memory_space<vmem>>, %arg5: memref<1x128xf32, #tpu.memory_space<vmem>>, %arg6: memref<512x128xbf16, #tpu.memory_space<vmem>>) attributes {dimension_semantics = [#tpu.dimension_semantics<parallel>], iteration_bounds = array<i64: 4>, scalar_prefetch = 0 : i64, scratch_operands = 0 : i64, tpu.core_type = #tpu.core_type<tc>, window_params = [{transform_indices = @transform_0, window_bounds = array<i64: 512, 128>}, {pipeline_mode = #tpu.pipeline_mode<synchronous>, transform_indices = @transform_1, window_bounds = array<i64: 128, 256>}, {pipeline_mode = #tpu.pipeline_mode<synchronous>, transform_indices = @transform_2, window_bounds = array<i64: 1, 256>}, {pipeline_mode = #tpu.pipeline_mode<synchronous>, transform_indices = @transform_3, window_bounds = array<i64: 256, 128>}, {pipeline_mode = #tpu.pipeline_mode<synchronous>, transform_indices = @transform_4, window_bounds = array<i64: 1, 128>}, {transform_indices = @transform_5, window_bounds = array<i64: 512, 128>}]} {
    %c0 = arith.constant 0 : index
    %c0_0 = arith.constant 0 : index
    %0 = vector.load %arg1[%c0, %c0_0] : memref<512x128xf32, #tpu.memory_space<vmem>>, vector<512x128xf32>
    %1 = arith.truncf %0 : vector<512x128xf32> to vector<512x128xbf16>
    %c0_1 = arith.constant 0 : index
    %c0_2 = arith.constant 0 : index
    %2 = vector.load %arg2[%c0_1, %c0_2] : memref<128x256xbf16, #tpu.memory_space<vmem>>, vector<128x256xbf16>
    %cst = arith.constant dense<0.000000e+00> : vector<512x256xf32>
    %3 = tpu.matmul %1, %2, %cst {dimension_numbers = #tpu.dot_dimension_numbers<[1], [0], [0], [1], [0, 0, 1, 1], [], []>} : vector<512x128xbf16>, vector<128x256xbf16>, vector<512x256xf32> -> vector<512x256xf32>
    %c0_3 = arith.constant 0 : index
    %c0_4 = arith.constant 0 : index
    %4 = vector.load %arg3[%c0_3, %c0_4] : memref<1x256xf32, #tpu.memory_space<vmem>>, vector<1x256xf32>
    %5 = vector.broadcast %4 : vector<1x256xf32> to vector<512x256xf32>
    %6 = arith.addf %3, %5 : vector<512x256xf32>
    %cst_5 = arith.constant 5.000000e-01 : f32
    %7 = vector.broadcast %cst_5 : f32 to vector<512x256xf32>
    %8 = arith.mulf %7, %6 : vector<512x256xf32>
    %cst_6 = arith.constant 0.707106769 : f32
    %9 = vector.broadcast %cst_6 : f32 to vector<512x256xf32>
    %10 = arith.mulf %6, %9 : vector<512x256xf32>
    %11 = math.absf %10 : vector<512x256xf32>
    %cst_7 = arith.constant 0.327591091 : f32
    %12 = vector.broadcast %cst_7 : f32 to vector<512x256xf32>
    %13 = arith.mulf %12, %11 : vector<512x256xf32>
    %cst_8 = arith.constant 1.000000e+00 : f32
    %14 = vector.broadcast %cst_8 : f32 to vector<512x256xf32>
    %15 = arith.addf %14, %13 : vector<512x256xf32>
    %16 = tpu.reciprocal %15 {approx = true} : vector<512x256xf32> -> vector<512x256xf32>
    %17 = arith.truncf %16 : vector<512x256xf32> to vector<512x256xbf16>
    %cst_9 = arith.constant 1.062500e+00 : bf16
    %18 = vector.broadcast %cst_9 : bf16 to vector<512x256xbf16>
    %19 = arith.mulf %18, %17 : vector<512x256xbf16>
    %cst_10 = arith.constant -1.453130e+00 : bf16
    %20 = vector.broadcast %cst_10 : bf16 to vector<512x256xbf16>
    %21 = arith.addf %19, %20 : vector<512x256xbf16>
    %22 = arith.mulf %21, %17 : vector<512x256xbf16>
    %cst_11 = arith.constant 1.421880e+00 : bf16
    %23 = vector.broadcast %cst_11 : bf16 to vector<512x256xbf16>
    %24 = arith.addf %22, %23 : vector<512x256xbf16>
    %25 = arith.mulf %24, %17 : vector<512x256xbf16>
    %cst_12 = arith.constant -2.851560e-01 : bf16
    %26 = vector.broadcast %cst_12 : bf16 to vector<512x256xbf16>
    %27 = arith.addf %25, %26 : vector<512x256xbf16>
    %28 = arith.mulf %27, %17 : vector<512x256xbf16>
    %cst_13 = arith.constant 2.539060e-01 : bf16
    %29 = vector.broadcast %cst_13 : bf16 to vector<512x256xbf16>
    %30 = arith.addf %28, %29 : vector<512x256xbf16>
    %31 = arith.mulf %30, %17 : vector<512x256xbf16>
    %32 = arith.extf %31 : vector<512x256xbf16> to vector<512x256xf32>
    %cst_14 = arith.constant 0.000000e+00 : f32
    %33 = vector.broadcast %cst_14 : f32 to vector<512x256xf32>
    %34 = arith.subf %33, %11 : vector<512x256xf32>
    %35 = arith.mulf %34, %11 : vector<512x256xf32>
    %36 = math.exp %35 : vector<512x256xf32>
    %37 = arith.mulf %32, %36 : vector<512x256xf32>
    %cst_15 = arith.constant 1.000000e+00 : f32
    %38 = vector.broadcast %cst_15 : f32 to vector<512x256xf32>
    %39 = arith.subf %38, %37 : vector<512x256xf32>
    %cst_16 = arith.constant 0.000000e+00 : f32
    %40 = vector.broadcast %cst_16 : f32 to vector<512x256xf32>
    %41 = arith.cmpf oge, %10, %40 : vector<512x256xf32>
    %cst_17 = arith.constant 0.000000e+00 : f32
    %42 = vector.broadcast %cst_17 : f32 to vector<512x256xf32>
    %43 = arith.subf %42, %39 : vector<512x256xf32>
    %44 = arith.select %41, %39, %43 : vector<512x256xi1>, vector<512x256xf32>
    %cst_18 = arith.constant 1.000000e+00 : f32
    %45 = vector.broadcast %cst_18 : f32 to vector<512x256xf32>
    %46 = arith.addf %45, %44 : vector<512x256xf32>
    %47 = arith.mulf %8, %46 : vector<512x256xf32>
    %48 = arith.truncf %47 : vector<512x256xf32> to vector<512x256xbf16>
    %c0_19 = arith.constant 0 : index
    %c0_20 = arith.constant 0 : index
    %49 = vector.load %arg4[%c0_19, %c0_20] : memref<256x128xbf16, #tpu.memory_space<vmem>>, vector<256x128xbf16>
    %cst_21 = arith.constant dense<0.000000e+00> : vector<512x128xf32>
    %50 = tpu.matmul %48, %49, %cst_21 {dimension_numbers = #tpu.dot_dimension_numbers<[1], [0], [0], [1], [0, 0, 1, 1], [], []>} : vector<512x256xbf16>, vector<256x128xbf16>, vector<512x128xf32> -> vector<512x128xf32>
    %c0_22 = arith.constant 0 : index
    %c0_23 = arith.constant 0 : index
    %51 = vector.load %arg5[%c0_22, %c0_23] : memref<1x128xf32, #tpu.memory_space<vmem>>, vector<1x128xf32>
    %52 = vector.broadcast %51 : vector<1x128xf32> to vector<512x128xf32>
    %53 = arith.addf %50, %52 : vector<512x128xf32>
    %54 = arith.truncf %53 : vector<512x128xf32> to vector<512x128xbf16>
    %c0_24 = arith.constant 0 : index
    %c0_25 = arith.constant 0 : index
    %55 = vector.load %arg6[%c0_24, %c0_25] : memref<512x128xbf16, #tpu.memory_space<vmem>>, vector<512x128xbf16>
    tpu.vector_store %arg6[%c0_24, %c0_25], %54 {strides = array<i32>} : memref<512x128xbf16, #tpu.memory_space<vmem>>, vector<512x128xbf16>,
    return
  }
  func.func @transform_0(%arg0: i32) -> (i32, i32) {
    %c0_i32 = arith.constant 0 : i32
    %c0_i32_0 = arith.constant 0 : i32
    return %arg0, %c0_i32 : i32, i32
  }
  func.func @transform_1(%arg0: i32) -> (i32, i32) {
    %c0_i32 = arith.constant 0 : i32
    %c0_i32_0 = arith.constant 0 : i32
    %c0_i32_1 = arith.constant 0 : i32
    return %c0_i32, %c0_i32_0 : i32, i32
  }
  func.func @transform_2(%arg0: i32) -> (i32, i32) {
    %c0_i32 = arith.constant 0 : i32
    %c0_i32_0 = arith.constant 0 : i32
    %c0_i32_1 = arith.constant 0 : i32
    return %c0_i32, %c0_i32_0 : i32, i32
  }
  func.func @transform_3(%arg0: i32) -> (i32, i32) {
    %c0_i32 = arith.constant 0 : i32
    %c0_i32_0 = arith.constant 0 : i32
    %c0_i32_1 = arith.constant 0 : i32
    return %c0_i32, %c0_i32_0 : i32, i32
  }
  func.func @transform_4(%arg0: i32) -> (i32, i32) {
    %c0_i32 = arith.constant 0 : i32
    %c0_i32_0 = arith.constant 0 : i32
    %c0_i32_1 = arith.constant 0 : i32
    return %c0_i32, %c0_i32_0 : i32, i32
  }
  func.func @transform_5(%arg0: i32) -> (i32, i32) {
    %c0_i32 = arith.constant 0 : i32
    %c0_i32_0 = arith.constant 0 : i32
    return %arg0, %c0_i32 : i32, i32
  }
}

module attributes {stable_mosaic.version = 11 : i64} {
  func.func @_mlp_fused_kernel(%arg0: i32, %arg1: memref<512x128xf32, #tpu.memory_space<vmem>>, %arg2: memref<128x256xbf16, #tpu.memory_space<vmem>>, %arg3: memref<1x256xf32, #tpu.memory_space<vmem>>, %arg4: memref<256x128xbf16, #tpu.memory_space<vmem>>, %arg5: memref<1x128xf32, #tpu.memory_space<vmem>>, %arg6: memref<512x128xbf16, #tpu.memory_space<vmem>>) attributes {dimension_semantics = [#tpu.dimension_semantics<parallel>], iteration_bounds = array<i64: 4>, scalar_prefetch = 0 : i64, scratch_operands = 0 : i64, tpu.core_type = #tpu.core_type<tc>, window_params = [{transform_indices = @transform_0, window_bounds = array<i64: 512, 128>}, {pipeline_mode = #tpu.pipeline_mode<synchronous>, transform_indices = @transform_1, window_bounds = array<i64: 128, 256>}, {pipeline_mode = #tpu.pipeline_mode<synchronous>, transform_indices = @transform_2, window_bounds = array<i64: 1, 256>}, {pipeline_mode = #tpu.pipeline_mode<synchronous>, transform_indices = @transform_3, window_bounds = array<i64: 256, 128>}, {pipeline_mode = #tpu.pipeline_mode<synchronous>, transform_indices = @transform_4, window_bounds = array<i64: 1, 128>}, {transform_indices = @transform_5, window_bounds = array<i64: 512, 128>}]} {
    %c0 = arith.constant 0 : index
    %c0_0 = arith.constant 0 : index
    %0 = vector.load %arg1[%c0, %c0_0] : memref<512x128xf32, #tpu.memory_space<vmem>>, vector<512x128xf32>
    %1 = arith.truncf %0 : vector<512x128xf32> to vector<512x128xbf16>
    %c0_1 = arith.constant 0 : index
    %c0_2 = arith.constant 0 : index
    %2 = vector.load %arg2[%c0_1, %c0_2] : memref<128x256xbf16, #tpu.memory_space<vmem>>, vector<128x256xbf16>
    %cst = arith.constant dense<0.000000e+00> : vector<512x256xf32>
    %3 = tpu.matmul %1, %2, %cst {dimension_numbers = #tpu.dot_dimension_numbers<[1], [0], [0], [1], [0, 0, 1, 1], [], []>} : vector<512x128xbf16>, vector<128x256xbf16>, vector<512x256xf32> -> vector<512x256xf32>
    %c0_3 = arith.constant 0 : index
    %c0_4 = arith.constant 0 : index
    %4 = vector.load %arg3[%c0_3, %c0_4] : memref<1x256xf32, #tpu.memory_space<vmem>>, vector<1x256xf32>
    %5 = vector.broadcast %4 : vector<1x256xf32> to vector<512x256xf32>
    %6 = arith.addf %3, %5 : vector<512x256xf32>
    %cst_5 = arith.constant 5.000000e-01 : f32
    %7 = vector.broadcast %cst_5 : f32 to vector<512x256xf32>
    %8 = arith.mulf %7, %6 : vector<512x256xf32>
    %cst_6 = arith.constant 0.707106769 : f32
    %9 = vector.broadcast %cst_6 : f32 to vector<512x256xf32>
    %10 = arith.mulf %6, %9 : vector<512x256xf32>
    %11 = math.absf %10 : vector<512x256xf32>
    %cst_7 = arith.constant 0.327591091 : f32
    %12 = vector.broadcast %cst_7 : f32 to vector<512x256xf32>
    %13 = arith.mulf %12, %11 : vector<512x256xf32>
    %cst_8 = arith.constant 1.000000e+00 : f32
    %14 = vector.broadcast %cst_8 : f32 to vector<512x256xf32>
    %15 = arith.addf %14, %13 : vector<512x256xf32>
    %16 = tpu.reciprocal %15 {approx = true} : vector<512x256xf32> -> vector<512x256xf32>
    %17 = arith.truncf %16 : vector<512x256xf32> to vector<512x256xbf16>
    %cst_9 = arith.constant 1.062500e+00 : bf16
    %18 = vector.broadcast %cst_9 : bf16 to vector<512x256xbf16>
    %19 = arith.mulf %18, %17 : vector<512x256xbf16>
    %cst_10 = arith.constant -1.453130e+00 : bf16
    %20 = vector.broadcast %cst_10 : bf16 to vector<512x256xbf16>
    %21 = arith.addf %19, %20 : vector<512x256xbf16>
    %22 = arith.mulf %21, %17 : vector<512x256xbf16>
    %cst_11 = arith.constant 1.421880e+00 : bf16
    %23 = vector.broadcast %cst_11 : bf16 to vector<512x256xbf16>
    %24 = arith.addf %22, %23 : vector<512x256xbf16>
    %25 = arith.mulf %24, %17 : vector<512x256xbf16>
    %cst_12 = arith.constant -2.851560e-01 : bf16
    %26 = vector.broadcast %cst_12 : bf16 to vector<512x256xbf16>
    %27 = arith.addf %25, %26 : vector<512x256xbf16>
    %28 = arith.mulf %27, %17 : vector<512x256xbf16>
    %cst_13 = arith.constant 2.539060e-01 : bf16
    %29 = vector.broadcast %cst_13 : bf16 to vector<512x256xbf16>
    %30 = arith.addf %28, %29 : vector<512x256xbf16>
    %31 = arith.mulf %30, %17 : vector<512x256xbf16>
    %32 = arith.extf %31 : vector<512x256xbf16> to vector<512x256xf32>
    %cst_14 = arith.constant 0.000000e+00 : f32
    %33 = vector.broadcast %cst_14 : f32 to vector<512x256xf32>
    %34 = arith.subf %33, %11 : vector<512x256xf32>
    %35 = arith.mulf %34, %11 : vector<512x256xf32>
    %36 = math.exp %35 : vector<512x256xf32>
    %37 = arith.mulf %32, %36 : vector<512x256xf32>
    %cst_15 = arith.constant 1.000000e+00 : f32
    %38 = vector.broadcast %cst_15 : f32 to vector<512x256xf32>
    %39 = arith.subf %38, %37 : vector<512x256xf32>
    %cst_16 = arith.constant 0.000000e+00 : f32
    %40 = vector.broadcast %cst_16 : f32 to vector<512x256xf32>
    %41 = arith.cmpf oge, %10, %40 : vector<512x256xf32>
    %cst_17 = arith.constant 0.000000e+00 : f32
    %42 = vector.broadcast %cst_17 : f32 to vector<512x256xf32>
    %43 = arith.subf %42, %39 : vector<512x256xf32>
    %44 = arith.select %41, %39, %43 : vector<512x256xi1>, vector<512x256xf32>
    %cst_18 = arith.constant 1.000000e+00 : f32
    %45 = vector.broadcast %cst_18 : f32 to vector<512x256xf32>
    %46 = arith.addf %45, %44 : vector<512x256xf32>
    %47 = arith.mulf %8, %46 : vector<512x256xf32>
    %48 = arith.truncf %47 : vector<512x256xf32> to vector<512x256xbf16>
    %c0_19 = arith.constant 0 : index
    %c0_20 = arith.constant 0 : index
    %49 = vector.load %arg4[%c0_19, %c0_20] : memref<256x128xbf16, #tpu.memory_space<vmem>>, vector<256x128xbf16>
    %cst_21 = arith.constant dense<0.000000e+00> : vector<512x128xf32>
    %50 = tpu.matmul %48, %49, %cst_21 {dimension_numbers = #tpu.dot_dimension_numbers<[1], [0], [0], [1], [0, 0, 1, 1], [], []>} : vector<512x256xbf16>, vector<256x128xbf16>, vector<512x128xf32> -> vector<512x128xf32>
    %c0_22 = arith.constant 0 : index
    %c0_23 = arith.constant 0 : index
    %51 = vector.load %arg5[%c0_22, %c0_23] : memref<1x128xf32, #tpu.memory_space<vmem>>, vector<1x128xf32>
    %52 = vector.broadcast %51 : vector<1x128xf32> to vector<512x128xf32>
    %53 = arith.addf %50, %52 : vector<512x128xf32>
    %54 = arith.truncf %53 : vector<512x128xf32> to vector<512x128xbf16>
    %c0_24 = arith.constant 0 : index
    %c0_25 = arith.constant 0 : index
    %55 = vector.load %arg6[%c0_24, %c0_25] : memref<512x128xbf16, #tpu.memory_space<vmem>>, vector<512x128xbf16>
    tpu.vector_store %arg6[%c0_24, %c0_25], %54 {strides = array<i32>} : memref<512x128xbf16, #tpu.memory_space<vmem>>, vector<512x128xbf16>,
    return
  }
  func.func @transform_0(%arg0: i32) -> (i32, i32) {
    %c0_i32 = arith.constant 0 : i32
    %c0_i32_0 = arith.constant 0 : i32
    return %arg0, %c0_i32 : i32, i32
  }
  func.func @transform_1(%arg0: i32) -> (i32, i32) {
    %c0_i32 = arith.constant 0 : i32
    %c0_i32_0 = arith.constant 0 : i32
    %c0_i32_1 = arith.constant 0 : i32
    return %c0_i32, %c0_i32_0 : i32, i32
  }
  func.func @transform_2(%arg0: i32) -> (i32, i32) {
    %c0_i32 = arith.constant 0 : i32
    %c0_i32_0 = arith.constant 0 : i32
    %c0_i32_1 = arith.constant 0 : i32
    return %c0_i32, %c0_i32_0 : i32, i32
  }
  func.func @transform_3(%arg0: i32) -> (i32, i32) {
    %c0_i32 = arith.constant 0 : i32
    %c0_i32_0 = arith.constant 0 : i32
    %c0_i32_1 = arith.constant 0 : i32
    return %c0_i32, %c0_i32_0 : i32, i32
  }
  func.func @transform_4(%arg0: i32) -> (i32, i32) {
    %c0_i32 = arith.constant 0 : i32
    %c0_i32_0 = arith.constant 0 : i32
    %c0_i32_1 = arith.constant 0 : i32
    return %c0_i32, %c0_i32_0 : i32, i32
  }
  func.func @transform_5(%arg0: i32) -> (i32, i32) {
    %c0_i32 = arith.constant 0 : i32
    %c0_i32_0 = arith.constant 0 : i32
    return %arg0, %c0_i32 : i32, i32
  }
}

</mosaic_0001>

<llo_original>
// kernel: tpu_custom_call.1
$region0: #{tpu_custom_call.1}
  #allocation0 [shape = 'u32[]', space=smem, size = 0x4, offset = 0x4, fixed_abs, tag = 'smem constant byte address 0x4 - core index']
  #allocation1 [shape = 'u32[144,128]{1,0:T(1,128)}', space=vmem, size = 0x12000, scoped, tag = 'internal scratch']
  %s0 = inlined_call_operand.hbm [shape: f32[2048,128], index: 0, kind: input, shape index: {}]
  %s1 = inlined_call_operand.hbm [shape: bf16[128,256], index: 1, kind: input, shape index: {}]
  %s2 = inlined_call_operand.vmem [shape: f32[1,256], index: 2, kind: input, shape index: {}]
  %s3 = inlined_call_operand.hbm [shape: bf16[256,128], index: 3, kind: input, shape index: {}]
  %s4 = inlined_call_operand.vmem [shape: f32[1,128], index: 4, kind: input, shape index: {}]
  %s5 = inlined_call_operand.hbm [shape: bf16[2048,128], index: 5, kind: output, shape index: {}]
  %s6 = sld [smem:[#allocation0]]
  $region65: #{tpu_custom_call.1} parent=0
    _
  %s8 = ssub.s32 1, %s6
  %s9 = scalar_select 0, %s8, %s6
  $region1: #{tpu_custom_call.1} parent=0
    #allocation2 [shape = 'u8[524288]{0}', space=vmem, size = 0x80000, scoped, tag = 'input window, operand 0']
    #allocation3 [shape = 's32[2]{0}', space=sflag, size = 0x8, scoped, tag = 'scoped memory for tpu_custom_call.1']
    #allocation4 [shape = 's32[2]{0}', space=sflag, size = 0x8, scoped, tag = 'scoped memory for tpu_custom_call.1']
    #allocation5 [shape = 'u8[65536]{0}', space=vmem, size = 0x10000, scoped, tag = 'input window, operand 1, single buffered']
    #allocation6 [shape = 's32[1]{0}', space=sflag, size = 0x4, scoped, tag = 'scoped memory for tpu_custom_call.1']
    #allocation7 [shape = 'u8[65536]{0}', space=vmem, size = 0x10000, scoped, tag = 'input window, operand 3, single buffered']
    #allocation8 [shape = 'u8[262144]{0}', space=vmem, size = 0x40000, scoped, tag = 'output window, operand 0']
    %10 = vsyncpa [#allocation3], 0
    %s11 = scalar_lea.sflag [#allocation3], 1
    %12 = vsyncpa %s11, 0
    %13 = vsyncpa [#allocation6], 0
    %14 = vsyncpa [#allocation4], 0
    %s15 = scalar_lea.sflag [#allocation4], 1
    %16 = vsyncpa %s15, 0
    loop: start=0, step=1, limit=6
    $region2: #{tpu_custom_call.1} parent=1 // loop_pre_header
      _
    $region3: #{tpu_custom_call.1} parent=1 // loop_header
      %s18 = sphi 0, %s22
      %p19 = scmp.ge.s32.totalorder %s18, 6
      %s28 = sphi 0, %s30
      %s31 = sphi 0, %s28
      %s32 = sphi 0, %s31
      %s48 = sphi 0, %s32
      %s52 = sphi 0, %s52
      %s54 = sphi 0, %s52
      %s55 = sphi 0, %s54
      %s69 = sphi 0, %s55
      %s73 = sphi 0, %s73
      %s75 = sphi 0, %s73
      %s76 = sphi 0, %s75
      %s90 = sphi 0, %s76
      %s94 = sphi 0, %s94
      %s96 = sphi 0, %s94
      %s97 = sphi 0, %s96
      %s111 = sphi 0, %s97
      %s115 = sphi 0, %s115
      %s117 = sphi 0, %s115
      %s118 = sphi 0, %s117
      %s132 = sphi 0, %s118
      %s138 = sphi 0, %s140
      %s141 = sphi 0, %s138
      %s142 = sphi 0, %s141
      %s158 = sphi 0, %s142
    $region4: #{tpu_custom_call.1} parent=1 // loop_header_branch
      %21 = sbr.rel (%p19) target = $region8
    $region5: #{tpu_custom_call.1} parent=1 // loop_body
      %s23 = ssub.s32 %s18, 1
      %s24 = ssub.s32 %s18, 2
      %s25 = sadd.s32 %s18, 1
      %s26 = ssub.s32 %s18, %s25
      %p27 = scmp.eq.s32.totalorder %s26, 0
      %s29 = sadd.s32 %s28, 1
      %s30 = scalar_select %p27, %s28, %s29
      %p33 = pneg %p27
      %p34 = scmp.eq.s32.totalorder %s18, 3
      %p35 = por %p33, %p34
      %p36 = scmp.ne.s32.totalorder %s28, %s31
      %p37 = scmp.eq.s32.totalorder %s18, 0
      %p38 = por %p36, %p37
      %p39 = scmp.ne.s32.totalorder %s28, %s31
      %p40 = scmp.eq.s32.totalorder %s23, 3
      %p41 = por %p39, %p40
      %p42 = scmp.ne.s32.totalorder %s31, %s32
      %p43 = scmp.eq.s32.totalorder %s23, 0
      %p44 = por %p42, %p43
      %p45 = scmp.ne.s32.totalorder %s31, %s32
      %p46 = scmp.eq.s32.totalorder %s24, 3
      %p47 = por %p45, %p46
      %p49 = scmp.ne.s32.totalorder %s32, %s48
      %p50 = scmp.eq.s32.totalorder %s24, 0
      %p51 = por %p49, %p50
      %s53 = sadd.s32 %s52, 1
      %p56 = scmp.eq.s32.totalorder %s18, 3
      %p57 = scmp.ne.s32.totalorder %s52, %s54
      %p58 = scmp.eq.s32.totalorder %s18, 0
      %p59 = por %p57, %p58
      %p60 = scmp.ne.s32.totalorder %s52, %s54
      %p61 = scmp.eq.s32.totalorder %s23, 3
      %p62 = por %p60, %p61
      %p63 = scmp.ne.s32.totalorder %s54, %s55
      %p64 = scmp.eq.s32.totalorder %s23, 0
      %p65 = por %p63, %p64
      %p66 = scmp.ne.s32.totalorder %s54, %s55
      %p67 = scmp.eq.s32.totalorder %s24, 3
      %p68 = por %p66, %p67
      %p70 = scmp.ne.s32.totalorder %s55, %s69
      %p71 = scmp.eq.s32.totalorder %s24, 0
      %p72 = por %p70, %p71
      %s74 = sadd.s32 %s73, 1
      %p77 = scmp.eq.s32.totalorder %s18, 3
      %p78 = scmp.ne.s32.totalorder %s73, %s75
      %p79 = scmp.eq.s32.totalorder %s18, 0
      %p80 = por %p78, %p79
      %p81 = scmp.ne.s32.totalorder %s73, %s75
      %p82 = scmp.eq.s32.totalorder %s23, 3
      %p83 = por %p81, %p82
      %p84 = scmp.ne.s32.totalorder %s75, %s76
      %p85 = scmp.eq.s32.totalorder %s23, 0
      %p86 = por %p84, %p85
      %p87 = scmp.ne.s32.totalorder %s75, %s76
      %p88 = scmp.eq.s32.totalorder %s24, 3
      %p89 = por %p87, %p88
      %p91 = scmp.ne.s32.totalorder %s76, %s90
      %p92 = scmp.eq.s32.totalorder %s24, 0
      %p93 = por %p91, %p92
      %s95 = sadd.s32 %s94, 1
      %p98 = scmp.eq.s32.totalorder %s18, 3
      %p99 = scmp.ne.s32.totalorder %s94, %s96
      %p100 = scmp.eq.s32.totalorder %s18, 0
      %p101 = por %p99, %p100
      %p102 = scmp.ne.s32.totalorder %s94, %s96
      %p103 = scmp.eq.s32.totalorder %s23, 3
      %p104 = por %p102, %p103
      %p105 = scmp.ne.s32.totalorder %s96, %s97
      %p106 = scmp.eq.s32.totalorder %s23, 0
      %p107 = por %p105, %p106
      %p108 = scmp.ne.s32.totalorder %s96, %s97
      %p109 = scmp.eq.s32.totalorder %s24, 3
      %p110 = por %p108, %p109
      %p112 = scmp.ne.s32.totalorder %s97, %s111
      %p113 = scmp.eq.s32.totalorder %s24, 0
      %p114 = por %p112, %p113
      %s116 = sadd.s32 %s115, 1
      %p119 = scmp.eq.s32.totalorder %s18, 3
      %p120 = scmp.ne.s32.totalorder %s115, %s117
      %p121 = scmp.eq.s32.totalorder %s18, 0
      %p122 = por %p120, %p121
      %p123 = scmp.ne.s32.totalorder %s115, %s117
      %p124 = scmp.eq.s32.totalorder %s23, 3
      %p125 = por %p123, %p124
      %p126 = scmp.ne.s32.totalorder %s117, %s118
      %p127 = scmp.eq.s32.totalorder %s23, 0
      %p128 = por %p126, %p127
      %p129 = scmp.ne.s32.totalorder %s117, %s118
      %p130 = scmp.eq.s32.totalorder %s24, 3
      %p131 = por %p129, %p130
      %p133 = scmp.ne.s32.totalorder %s118, %s132
      %p134 = scmp.eq.s32.totalorder %s24, 0
      %p135 = por %p133, %p134
      %s136 = ssub.s32 %s18, %s25
      %p137 = scmp.eq.s32.totalorder %s136, 0
      %s139 = sadd.s32 %s138, 1
      %s140 = scalar_select %p137, %s138, %s139
      %p143 = pneg %p137
      %p144 = scmp.eq.s32.totalorder %s18, 3
      %p145 = por %p143, %p144
      %p146 = scmp.ne.s32.totalorder %s138, %s141
      %p147 = scmp.eq.s32.totalorder %s18, 0
      %p148 = por %p146, %p147
      %p149 = scmp.ne.s32.totalorder %s138, %s141
      %p150 = scmp.eq.s32.totalorder %s23, 3
      %p151 = por %p149, %p150
      %p152 = scmp.ne.s32.totalorder %s141, %s142
      %p153 = scmp.eq.s32.totalorder %s23, 0
      %p154 = por %p152, %p153
      %p155 = scmp.ne.s32.totalorder %s141, %s142
      %p156 = scmp.eq.s32.totalorder %s24, 3
      %p157 = por %p155, %p156
      %p159 = scmp.ne.s32.totalorder %s142, %s158
      %p160 = scmp.eq.s32.totalorder %s24, 0
      %p161 = por %p159, %p160
      %p162 = scmp.le.s32.totalorder 1, %s18
      %p163 = scmp.lt.s32.totalorder %s18, 5
      %p164 = pnand %p162, %p163
      %p165 = pneg %p164
      // Predicated region
      $region9: #{tpu_custom_call.1} parent=5 // pred_check
        _
      $region10: #{tpu_custom_call.1} parent=5 // pred_check_branch
        %167 = sbr.rel (%p164) target = $region12
      $region11: #{tpu_custom_call.1} parent=5 // pred_region
        %s168 = ssub.s32 %s18, 1
        // Predicated region
        $region13: #{tpu_custom_call.1} parent=11 // pred_check
          %p169 = pneg %p65
        $region14: #{tpu_custom_call.1} parent=11 // pred_check_branch
          %171 = sbr.rel (%p169) target = $region16
        $region15: #{tpu_custom_call.1} parent=11 // pred_region
          %s173 = ssub.s32 2048, 2048
          %174 = vsyncadd [#allocation6], %s173
          %s175 = sshll.u32 [#allocation5], 4
          %s176 = int_to_ptr.vmem [resolvable:$true] %s175
          %181 = dma.hbm_to_vmem [thread:$0]  %s1, 2048, %s176, [#allocation6], 128, 128, 8
        $region16: #{tpu_custom_call.1} parent=11 // pred_fallthru
          _
        // Predicated region
        $region17: #{tpu_custom_call.1} parent=11 // pred_check
          %p182 = pneg %p86
        $region18: #{tpu_custom_call.1} parent=11 // pred_check_branch
          %184 = sbr.rel (%p182) target = $region20
        $region19: #{tpu_custom_call.1} parent=11 // pred_region
          _
        $region20: #{tpu_custom_call.1} parent=11 // pred_fallthru
          _
        // Predicated region
        $region21: #{tpu_custom_call.1} parent=11 // pred_check
          %p185 = pneg %p107
        $region22: #{tpu_custom_call.1} parent=11 // pred_check_branch
          %187 = sbr.rel (%p185) target = $region24
        $region23: #{tpu_custom_call.1} parent=11 // pred_region
          %s189 = ssub.s32 2048, 2048
          %190 = vsyncadd [#allocation6], %s189
          %s191 = sshll.u32 [#allocation7], 4
          %s192 = int_to_ptr.vmem [resolvable:$true] %s191
          %197 = dma.hbm_to_vmem [thread:$0]  %s3, 2048, %s192, [#allocation6], 64, 64, 4
        $region24: #{tpu_custom_call.1} parent=11 // pred_fallthru
          _
        // Predicated region
        $region25: #{tpu_custom_call.1} parent=11 // pred_check
          %p198 = pneg %p128
        $region26: #{tpu_custom_call.1} parent=11 // pred_check_branch
          %200 = sbr.rel (%p198) target = $region28
        $region27: #{tpu_custom_call.1} parent=11 // pred_region
          _
        $region28: #{tpu_custom_call.1} parent=11 // pred_fallthru
          _
      $region12: #{tpu_custom_call.1} parent=5 // pred_fallthru
        _
      %p201 = scmp.lt.s32.totalorder %s18, 4
      // Predicated region
      $region29: #{tpu_custom_call.1} parent=5 // pred_check
        %p202 = pneg %p201
      $region30: #{tpu_custom_call.1} parent=5 // pred_check_branch
        %204 = sbr.rel (%p202) target = $region32
      $region31: #{tpu_custom_call.1} parent=5 // pred_region
        // Predicated region
        $region33: #{tpu_custom_call.1} parent=31 // pred_check
          %p205 = pneg %p38
        $region34: #{tpu_custom_call.1} parent=31 // pred_check_branch
          %207 = sbr.rel (%p205) target = $region36
        $region35: #{tpu_custom_call.1} parent=31 // pred_region
          %s208 = sand.u32 %s28, 1
          %s209 = scalar_lea.sflag [#allocation3], %s208
          %s210 = sand.u32 %s28, 1
          %s211 = smul.addr %s210, 512
          %s212 = scalar_lea.vmem [#allocation2], %s211
          %s213 = smul.u32 64, %s18
          %s215 = ssub.s32 8192, 8192
          %216 = vsyncadd %s209, %s215
          %s217 = smul.addr %s213, 128
          %s218 = scalar_lea.hbm %s0, %s217
          %s219 = sshll.u32 %s212, 4
          %s220 = int_to_ptr.vmem [resolvable:$true] %s219
          %225 = dma.hbm_to_vmem [thread:$0]  %s218, 8192, %s220, %s209, 128, 128, 8
        $region36: #{tpu_custom_call.1} parent=31 // pred_fallthru
          _
      $region32: #{tpu_custom_call.1} parent=5 // pred_fallthru
        _
      %p226 = scmp.le.s32.totalorder 1, %s18
      %p227 = scmp.lt.s32.totalorder %s18, 5
      %p228 = pnand %p226, %p227
      %p229 = pneg %p228
      // Predicated region
      $region37: #{tpu_custom_call.1} parent=5 // pred_check
        _
      $region38: #{tpu_custom_call.1} parent=5 // pred_check_branch
        %231 = sbr.rel (%p228) target = $region40
      $region39: #{tpu_custom_call.1} parent=5 // pred_region
        %s232 = ssub.s32 %s18, 1
        %s233 = sand.u32 %s31, 1
        %s234 = scalar_lea.sflag [#allocation3], %s233
        %s235 = sand.u32 %s31, 1
        %s236 = smul.addr %s235, 512
        %s237 = scalar_lea.vmem [#allocation2], %s236
        // Predicated region
        $region41: #{tpu_custom_call.1} parent=39 // pred_check
          %p238 = pneg %p44
        $region42: #{tpu_custom_call.1} parent=39 // pred_check_branch
          %240 = sbr.rel (%p238) target = $region44
        $region43: #{tpu_custom_call.1} parent=39 // pred_region
          %241 = dma.done %s234, 8192
        $region44: #{tpu_custom_call.1} parent=39 // pred_fallthru
          _
        // Predicated region
        $region45: #{tpu_custom_call.1} parent=39 // pred_check
          %p242 = pneg %p65
        $region46: #{tpu_custom_call.1} parent=39 // pred_check_branch
          %244 = sbr.rel (%p242) target = $region48
        $region47: #{tpu_custom_call.1} parent=39 // pred_region
          %245 = dma.done [#allocation6], 2048
        $region48: #{tpu_custom_call.1} parent=39 // pred_fallthru
          _
        // Predicated region
        $region49: #{tpu_custom_call.1} parent=39 // pred_check
          %p246 = pneg %p107
        $region50: #{tpu_custom_call.1} parent=39 // pred_check_branch
          %248 = sbr.rel (%p246) target = $region52
        $region51: #{tpu_custom_call.1} parent=39 // pred_region
          %249 = dma.done [#allocation6], 2048
        $region52: #{tpu_custom_call.1} parent=39 // pred_fallthru
          _
        %s250 = sand.u32 %s31, 1
        %s251 = scalar_lea.sflag [#allocation3], %s250
        %s252 = sand.u32 %s31, 1
        %s253 = smul.addr %s252, 512
        %s254 = scalar_lea.vmem [#allocation2], %s253
        %p255 = pneg %p44
        %p256 = pneg %p41
        %p257 = pneg %p65
        %p258 = pneg %p62
        %p259 = pneg %p86
        %p260 = pneg %p83
        %p261 = pneg %p107
        %p262 = pneg %p104
        %p263 = pneg %p128
        %p264 = pneg %p125
        %p265 = pneg %p154
        %p266 = pneg %p151
        %s267 = sand.u32 %s141, 1
        %s268 = scalar_lea.sflag [#allocation4], %s267
        %s269 = sand.u32 %s141, 1
        %s270 = smul.addr %s269, 256
        %s271 = scalar_lea.vmem [#allocation8], %s270
        %s272 = smul.u32 64, %s23
        %s273 = smul.u32 64, %s23
        %v280 = vld [vmem:[%s237] sm:$0xff]
        %v281 = vld [vmem:[%s237 + $0x8] sm:$0xff]
        %v282 = vld [vmem:[%s237 + $0x10] sm:$0xff]
        %v283 = vld [vmem:[%s237 + $0x18] sm:$0xff]
        %v284 = vld [vmem:[%s237 + $0x20] sm:$0xff]
        %v285 = vld [vmem:[%s237 + $0x28] sm:$0xff]
        %v286 = vld [vmem:[%s237 + $0x30] sm:$0xff]
        %v287 = vld [vmem:[%s237 + $0x38] sm:$0xff]
        %v288 = vld [vmem:[%s237 + $0x40] sm:$0xff]
        %v289 = vld [vmem:[%s237 + $0x48] sm:$0xff]
        %v290 = vld [vmem:[%s237 + $0x50] sm:$0xff]
        %v291 = vld [vmem:[%s237 + $0x58] sm:$0xff]
        %v292 = vld [vmem:[%s237 + $0x60] sm:$0xff]
        %v293 = vld [vmem:[%s237 + $0x68] sm:$0xff]
        %v294 = vld [vmem:[%s237 + $0x70] sm:$0xff]
        %v295 = vld [vmem:[%s237 + $0x78] sm:$0xff]
        %v296 = vld [vmem:[%s237 + $0x80] sm:$0xff]
        %v297 = vld [vmem:[%s237 + $0x88] sm:$0xff]
        %v298 = vld [vmem:[%s237 + $0x90] sm:$0xff]
        %v299 = vld [vmem:[%s237 + $0x98] sm:$0xff]
        %v300 = vld [vmem:[%s237 + $0xa0] sm:$0xff]
        %v301 = vld [vmem:[%s237 + $0xa8] sm:$0xff]
        %v302 = vld [vmem:[%s237 + $0xb0] sm:$0xff]
        %v303 = vld [vmem:[%s237 + $0xb8] sm:$0xff]
        %v304 = vld [vmem:[%s237 + $0xc0] sm:$0xff]
        %v305 = vld [vmem:[%s237 + $0xc8] sm:$0xff]
        %v306 = vld [vmem:[%s237 + $0xd0] sm:$0xff]
        %v307 = vld [vmem:[%s237 + $0xd8] sm:$0xff]
        %v308 = vld [vmem:[%s237 + $0xe0] sm:$0xff]
        %v309 = vld [vmem:[%s237 + $0xe8] sm:$0xff]
        %v310 = vld [vmem:[%s237 + $0xf0] sm:$0xff]
        %v311 = vld [vmem:[%s237 + $0xf8] sm:$0xff]
        %v312 = vld [vmem:[%s237 + $0x100] sm:$0xff]
        %v313 = vld [vmem:[%s237 + $0x108] sm:$0xff]
        %v314 = vld [vmem:[%s237 + $0x110] sm:$0xff]
        %v315 = vld [vmem:[%s237 + $0x118] sm:$0xff]
        %v316 = vld [vmem:[%s237 + $0x120] sm:$0xff]
        %v317 = vld [vmem:[%s237 + $0x128] sm:$0xff]
        %v318 = vld [vmem:[%s237 + $0x130] sm:$0xff]
        %v319 = vld [vmem:[%s237 + $0x138] sm:$0xff]
        %v320 = vld [vmem:[%s237 + $0x140] sm:$0xff]
        %v321 = vld [vmem:[%s237 + $0x148] sm:$0xff]
        %v322 = vld [vmem:[%s237 + $0x150] sm:$0xff]
        %v323 = vld [vmem:[%s237 + $0x158] sm:$0xff]
        %v324 = vld [vmem:[%s237 + $0x160] sm:$0xff]
        %v325 = vld [vmem:[%s237 + $0x168] sm:$0xff]
        %v326 = vld [vmem:[%s237 + $0x170] sm:$0xff]
        %v327 = vld [vmem:[%s237 + $0x178] sm:$0xff]
        %v328 = vld [vmem:[%s237 + $0x180] sm:$0xff]
        %v329 = vld [vmem:[%s237 + $0x188] sm:$0xff]
        %v330 = vld [vmem:[%s237 + $0x190] sm:$0xff]
        %v331 = vld [vmem:[%s237 + $0x198] sm:$0xff]
        %v332 = vld [vmem:[%s237 + $0x1a0] sm:$0xff]
        %v333 = vld [vmem:[%s237 + $0x1a8] sm:$0xff]
        %v334 = vld [vmem:[%s237 + $0x1b0] sm:$0xff]
        %v335 = vld [vmem:[%s237 + $0x1b8] sm:$0xff]
        %v336 = vld [vmem:[%s237 + $0x1c0] sm:$0xff]
        %v337 = vld [vmem:[%s237 + $0x1c8] sm:$0xff]
        %v338 = vld [vmem:[%s237 + $0x1d0] sm:$0xff]
        %v339 = vld [vmem:[%s237 + $0x1d8] sm:$0xff]
        %v340 = vld [vmem:[%s237 + $0x1e0] sm:$0xff]
        %v341 = vld [vmem:[%s237 + $0x1e8] sm:$0xff]
        %v342 = vld [vmem:[%s237 + $0x1f0] sm:$0xff]
        %v343 = vld [vmem:[%s237 + $0x1f8] sm:$0xff]
        %v344 = vpack.c.bf16 %v281, %v280
        %v345 = vpack.c.bf16 %v283, %v282
        %v346 = vpack.c.bf16 %v285, %v284
        %v347 = vpack.c.bf16 %v287, %v286
        %v348 = vpack.c.bf16 %v289, %v288
        %v349 = vpack.c.bf16 %v291, %v290
        %v350 = vpack.c.bf16 %v293, %v292
        %v351 = vpack.c.bf16 %v295, %v294
        %v352 = vpack.c.bf16 %v297, %v296
        %v353 = vpack.c.bf16 %v299, %v298
        %v354 = vpack.c.bf16 %v301, %v300
        %v355 = vpack.c.bf16 %v303, %v302
        %v356 = vpack.c.bf16 %v305, %v304
        %v357 = vpack.c.bf16 %v307, %v306
        %v358 = vpack.c.bf16 %v309, %v308
        %v359 = vpack.c.bf16 %v311, %v310
        %v360 = vpack.c.bf16 %v313, %v312
        %v361 = vpack.c.bf16 %v315, %v314
        %v362 = vpack.c.bf16 %v317, %v316
        %v363 = vpack.c.bf16 %v319, %v318
        %v364 = vpack.c.bf16 %v321, %v320
        %v365 = vpack.c.bf16 %v323, %v322
        %v366 = vpack.c.bf16 %v325, %v324
        %v367 = vpack.c.bf16 %v327, %v326
        %v368 = vpack.c.bf16 %v329, %v328
        %v369 = vpack.c.bf16 %v331, %v330
        %v370 = vpack.c.bf16 %v333, %v332
        %v371 = vpack.c.bf16 %v335, %v334
        %v372 = vpack.c.bf16 %v337, %v336
        %v373 = vpack.c.bf16 %v339, %v338
        %v374 = vpack.c.bf16 %v341, %v340
        %v375 = vpack.c.bf16 %v343, %v342
        %v376 = vld [vmem:[#allocation5] sm:$0xff]
        %v377 = vld [vmem:[#allocation5 + $0x8] sm:$0xff]
        %v378 = vld [vmem:[#allocation5 + $0x10] sm:$0xff]
        %v379 = vld [vmem:[#allocation5 + $0x18] sm:$0xff]
        %v380 = vld [vmem:[#allocation5 + $0x20] sm:$0xff]
        %v381 = vld [vmem:[#allocation5 + $0x28] sm:$0xff]
        %v382 = vld [vmem:[#allocation5 + $0x30] sm:$0xff]
        %v383 = vld [vmem:[#allocation5 + $0x38] sm:$0xff]
        %v384 = vld [vmem:[#allocation5 + $0x40] sm:$0xff]
        %v385 = vld [vmem:[#allocation5 + $0x48] sm:$0xff]
        %v386 = vld [vmem:[#allocation5 + $0x50] sm:$0xff]
        %v387 = vld [vmem:[#allocation5 + $0x58] sm:$0xff]
        %v388 = vld [vmem:[#allocation5 + $0x60] sm:$0xff]
        %v389 = vld [vmem:[#allocation5 + $0x68] sm:$0xff]
        %v390 = vld [vmem:[#allocation5 + $0x70] sm:$0xff]
        %v391 = vld [vmem:[#allocation5 + $0x78] sm:$0xff]
        %v392 = vld [vmem:[%s2] sm:$0x3]
        %v394 = vlaneseq
        %v395 = vshrl.u32 %v394, 7
        %v396 = vsub.s32 0, %v395
        %v397 = vrot.slane %v392, %v396
        %v398 = vlaneseq
        %v399 = vshrl.u32 %v398, 7
        %v400 = vsub.s32 1, %v399
        %v401 = vrot.slane %v392, %v400
        %v420 = vunpack.c.l.b16 %v376
        %v421 = vunpack.c.h.b16 %v376
        %v422 = vunpack.c.l.b16 %v377
        %v423 = vunpack.c.h.b16 %v377
        %v424 = vunpack.c.l.b16 %v378
        %v425 = vunpack.c.h.b16 %v378
        %v426 = vunpack.c.l.b16 %v379
        %v427 = vunpack.c.h.b16 %v379
        %v428 = vunpack.c.l.b16 %v380
        %v429 = vunpack.c.h.b16 %v380
        %v430 = vunpack.c.l.b16 %v381
        %v431 = vunpack.c.h.b16 %v381
        %v432 = vunpack.c.l.b16 %v382
        %v433 = vunpack.c.h.b16 %v382
        %v434 = vunpack.c.l.b16 %v383
        %v435 = vunpack.c.h.b16 %v383
        %v436 = vunpack.c.l.b16 %v384
        %v437 = vunpack.c.h.b16 %v384
        %v438 = vunpack.c.l.b16 %v385
        %v439 = vunpack.c.h.b16 %v385
        %v440 = vunpack.c.l.b16 %v386
        %v441 = vunpack.c.h.b16 %v386
        %v442 = vunpack.c.l.b16 %v387
        %v443 = vunpack.c.h.b16 %v387
        %v444 = vunpack.c.l.b16 %v388
        %v445 = vunpack.c.h.b16 %v388
        %v446 = vunpack.c.l.b16 %v389
        %v447 = vunpack.c.h.b16 %v389
        %v448 = vunpack.c.l.b16 %v390
        %v449 = vunpack.c.h.b16 %v390
        %v450 = vunpack.c.l.b16 %v391
        %v451 = vunpack.c.h.b16 %v391
        %v452 = vpack.c.b16 %v422, %v420
        %v453 = vpack.c.b16 %v423, %v421
        %v454 = vpack.c.b16 %v426, %v424
        %v455 = vpack.c.b16 %v427, %v425
        %v456 = vpack.c.b16 %v430, %v428
        %v457 = vpack.c.b16 %v431, %v429
        %v458 = vpack.c.b16 %v434, %v432
        %v459 = vpack.c.b16 %v435, %v433
        %v460 = vpack.c.b16 %v438, %v436
        %v461 = vpack.c.b16 %v439, %v437
        %v462 = vpack.c.b16 %v442, %v440
        %v463 = vpack.c.b16 %v443, %v441
        %v464 = vpack.c.b16 %v446, %v444
        %v465 = vpack.c.b16 %v447, %v445
        %v466 = vpack.c.b16 %v450, %v448
        %v467 = vpack.c.b16 %v451, %v449
        %484 = vmatprep.subr.bf16.mxu0 %v467
        %485 = vmatpush1.bf16.msra.mxu0 %v466
        %486 = vmatprep.subr.bf16.mxu0 %v465
        %487 = vmatpush1.bf16.msra.mxu0 %v464
        %488 = vmatprep.subr.bf16.mxu0 %v463
        %489 = vmatpush1.bf16.msra.mxu0 %v462
        %490 = vmatprep.subr.bf16.mxu0 %v461
        %491 = vmatpush1.bf16.msra.mxu0 %v460
        %492 = vmatprep.subr.bf16.mxu0 %v459
        %493 = vmatpush1.bf16.msra.mxu0 %v458
        %494 = vmatprep.subr.bf16.mxu0 %v457
        %495 = vmatpush1.bf16.msra.mxu0 %v456
        %496 = vmatprep.subr.bf16.mxu0 %v455
        %497 = vmatpush1.bf16.msra.mxu0 %v454
        %498 = vmatprep.subr.bf16.mxu0 %v453
        %499 = vmatpush1.bf16.msra.mxu0 %v452
        %500 = vmatprep.subr.bf16.mxu0 0
        %501 = vmatpush2.bf16.msra.mxu0 0
        %502 = vmatprep.subr.bf16.mxu0 0
        %503 = vmatpush2.bf16.msra.mxu0 0
        %504 = vmatprep.subr.bf16.mxu0 0
        %505 = vmatpush2.bf16.msra.mxu0 0
        %506 = vmatprep.subr.bf16.mxu0 0
        %507 = vmatpush2.bf16.msra.mxu0 0
        %508 = vmatprep.subr.bf16.mxu0 0
        %509 = vmatpush2.bf16.msra.mxu0 0
        %510 = vmatprep.subr.bf16.mxu0 0
        %511 = vmatpush2.bf16.msra.mxu0 0
        %512 = vmatprep.subr.bf16.mxu0 0
        %513 = vmatpush2.bf16.msra.mxu0 0
        %514 = vmatprep.subr.bf16.mxu0 0
        %515 = vmatpush2.bf16.msra.mxu0 0
        %516 = vmatprep.mubr.bf16.mxu0 0
        %517 = vmatmul.mubr.bf16.gmra.mxu0 %v344
        %v518 = vpop.f32.mrf.mxu0
        %v519 = vadd.f32 %v397, %v518
        %v520 = vpop.f32.mrf.mxu0
        %v521 = vadd.f32 %v401, %v520
        %v522 = vpop.f32.mrf.mxu0
        %v523 = vadd.f32 %v397, %v522
        %v524 = vpop.f32.mrf.mxu0
        %v525 = vadd.f32 %v401, %v524
        %526 = vmatprep.mubr.bf16.mxu0 0
        %527 = vmatmul.mubr.bf16.gmra.mxu0 %v345
        %v528 = vpop.f32.mrf.mxu0
        %v529 = vadd.f32 %v397, %v528
        %v530 = vpop.f32.mrf.mxu0
        %v531 = vadd.f32 %v401, %v530
        %v532 = vpop.f32.mrf.mxu0
        %v533 = vadd.f32 %v397, %v532
        %v534 = vpop.f32.mrf.mxu0
        %v535 = vadd.f32 %v401, %v534
        %536 = vmatprep.mubr.bf16.mxu0 0
        %537 = vmatmul.mubr.bf16.gmra.mxu0 %v346
        %v538 = vpop.f32.mrf.mxu0
        %v539 = vadd.f32 %v397, %v538
        %v540 = vpop.f32.mrf.mxu0
        %v541 = vadd.f32 %v401, %v540
        %v542 = vpop.f32.mrf.mxu0
        %v543 = vadd.f32 %v397, %v542
        %v544 = vpop.f32.mrf.mxu0
        %v545 = vadd.f32 %v401, %v544
        %546 = vmatprep.mubr.bf16.mxu0 0
        %547 = vmatmul.mubr.bf16.gmra.mxu0 %v347
        %v548 = vpop.f32.mrf.mxu0
        %v549 = vadd.f32 %v397, %v548
        %v550 = vpop.f32.mrf.mxu0
        %v551 = vadd.f32 %v401, %v550
        %v552 = vpop.f32.mrf.mxu0
        %v553 = vadd.f32 %v397, %v552
        %v554 = vpop.f32.mrf.mxu0
        %v555 = vadd.f32 %v401, %v554
        %556 = vmatprep.mubr.bf16.mxu0 0
        %557 = vmatmul.mubr.bf16.gmra.mxu0 %v348
        %v558 = vpop.f32.mrf.mxu0
        %v559 = vadd.f32 %v397, %v558
        %v560 = vpop.f32.mrf.mxu0
        %v561 = vadd.f32 %v401, %v560
        %v562 = vpop.f32.mrf.mxu0
        %v563 = vadd.f32 %v397, %v562
        %v564 = vpop.f32.mrf.mxu0
        %v565 = vadd.f32 %v401, %v564
        %566 = vmatprep.mubr.bf16.mxu0 0
        %567 = vmatmul.mubr.bf16.gmra.mxu0 %v349
        %v568 = vpop.f32.mrf.mxu0
        %v569 = vadd.f32 %v397, %v568
        %v570 = vpop.f32.mrf.mxu0
        %v571 = vadd.f32 %v401, %v570
        %v572 = vpop.f32.mrf.mxu0
        %v573 = vadd.f32 %v397, %v572
        %v574 = vpop.f32.mrf.mxu0
        %v575 = vadd.f32 %v401, %v574
        %576 = vmatprep.mubr.bf16.mxu0 0
        %577 = vmatmul.mubr.bf16.gmra.mxu0 %v350
        %v578 = vpop.f32.mrf.mxu0
        %v579 = vadd.f32 %v397, %v578
        %v580 = vpop.f32.mrf.mxu0
        %v581 = vadd.f32 %v401, %v580
        %v582 = vpop.f32.mrf.mxu0
        %v583 = vadd.f32 %v397, %v582
        %v584 = vpop.f32.mrf.mxu0
        %v585 = vadd.f32 %v401, %v584
        %586 = vmatprep.mubr.bf16.mxu0 0
        %587 = vmatmul.mubr.bf16.gmra.mxu0 %v351
        %v588 = vpop.f32.mrf.mxu0
        %v589 = vadd.f32 %v397, %v588
        %v590 = vpop.f32.mrf.mxu0
        %v591 = vadd.f32 %v401, %v590
        %v592 = vpop.f32.mrf.mxu0
        %v593 = vadd.f32 %v397, %v592
        %v594 = vpop.f32.mrf.mxu0
        %v595 = vadd.f32 %v401, %v594
        %596 = vmatprep.mubr.bf16.mxu0 0
        %597 = vmatmul.mubr.bf16.gmra.mxu0 %v352
        %v598 = vpop.f32.mrf.mxu0
        %v599 = vadd.f32 %v397, %v598
        %v600 = vpop.f32.mrf.mxu0
        %v601 = vadd.f32 %v401, %v600
        %v602 = vpop.f32.mrf.mxu0
        %v603 = vadd.f32 %v397, %v602
        %v604 = vpop.f32.mrf.mxu0
        %v605 = vadd.f32 %v401, %v604
        %606 = vmatprep.mubr.bf16.mxu0 0
        %607 = vmatmul.mubr.bf16.gmra.mxu0 %v353
        %v608 = vpop.f32.mrf.mxu0
        %v609 = vadd.f32 %v397, %v608
        %v610 = vpop.f32.mrf.mxu0
        %v611 = vadd.f32 %v401, %v610
        %v612 = vpop.f32.mrf.mxu0
        %v613 = vadd.f32 %v397, %v612
        %v614 = vpop.f32.mrf.mxu0
        %v615 = vadd.f32 %v401, %v614
        %616 = vmatprep.mubr.bf16.mxu0 0
        %617 = vmatmul.mubr.bf16.gmra.mxu0 %v354
        %v618 = vpop.f32.mrf.mxu0
        %v619 = vadd.f32 %v397, %v618
        %v620 = vpop.f32.mrf.mxu0
        %v621 = vadd.f32 %v401, %v620
        %v622 = vpop.f32.mrf.mxu0
        %v623 = vadd.f32 %v397, %v622
        %v624 = vpop.f32.mrf.mxu0
        %v625 = vadd.f32 %v401, %v624
        %626 = vmatprep.mubr.bf16.mxu0 0
        %627 = vmatmul.mubr.bf16.gmra.mxu0 %v355
        %v628 = vpop.f32.mrf.mxu0
        %v629 = vadd.f32 %v397, %v628
        %v630 = vpop.f32.mrf.mxu0
        %v631 = vadd.f32 %v401, %v630
        %v632 = vpop.f32.mrf.mxu0
        %v633 = vadd.f32 %v397, %v632
        %v634 = vpop.f32.mrf.mxu0
        %v635 = vadd.f32 %v401, %v634
        %636 = vmatprep.mubr.bf16.mxu0 0
        %637 = vmatmul.mubr.bf16.gmra.mxu0 %v356
        %v638 = vpop.f32.mrf.mxu0
        %v639 = vadd.f32 %v397, %v638
        %v640 = vpop.f32.mrf.mxu0
        %v641 = vadd.f32 %v401, %v640
        %v642 = vpop.f32.mrf.mxu0
        %v643 = vadd.f32 %v397, %v642
        %v644 = vpop.f32.mrf.mxu0
        %v645 = vadd.f32 %v401, %v644
        %646 = vmatprep.mubr.bf16.mxu0 0
        %647 = vmatmul.mubr.bf16.gmra.mxu0 %v357
        %v648 = vpop.f32.mrf.mxu0
        %v649 = vadd.f32 %v397, %v648
        %v650 = vpop.f32.mrf.mxu0
        %v651 = vadd.f32 %v401, %v650
        %v652 = vpop.f32.mrf.mxu0
        %v653 = vadd.f32 %v397, %v652
        %v654 = vpop.f32.mrf.mxu0
        %v655 = vadd.f32 %v401, %v654
        %656 = vmatprep.mubr.bf16.mxu0 0
        %657 = vmatmul.mubr.bf16.gmra.mxu0 %v358
        %v658 = vpop.f32.mrf.mxu0
        %v659 = vadd.f32 %v397, %v658
        %v660 = vpop.f32.mrf.mxu0
        %v661 = vadd.f32 %v401, %v660
        %v662 = vpop.f32.mrf.mxu0
        %v663 = vadd.f32 %v397, %v662
        %v664 = vpop.f32.mrf.mxu0
        %v665 = vadd.f32 %v401, %v664
        %666 = vmatprep.mubr.bf16.mxu0 0
        %667 = vmatmul.mubr.bf16.gmra.mxu0 %v359
        %v668 = vpop.f32.mrf.mxu0
        %v669 = vadd.f32 %v397, %v668
        %v670 = vpop.f32.mrf.mxu0
        %v671 = vadd.f32 %v401, %v670
        %v672 = vpop.f32.mrf.mxu0
        %v673 = vadd.f32 %v397, %v672
        %v674 = vpop.f32.mrf.mxu0
        %v675 = vadd.f32 %v401, %v674
        %676 = vmatprep.mubr.bf16.mxu0 0
        %677 = vmatmul.mubr.bf16.gmra.mxu0 %v360
        %v678 = vpop.f32.mrf.mxu0
        %v679 = vadd.f32 %v397, %v678
        %v680 = vpop.f32.mrf.mxu0
        %v681 = vadd.f32 %v401, %v680
        %v682 = vpop.f32.mrf.mxu0
        %v683 = vadd.f32 %v397, %v682
        %v684 = vpop.f32.mrf.mxu0
        %v685 = vadd.f32 %v401, %v684
        %686 = vmatprep.mubr.bf16.mxu0 0
        %687 = vmatmul.mubr.bf16.gmra.mxu0 %v361
        %v688 = vpop.f32.mrf.mxu0
        %v689 = vadd.f32 %v397, %v688
        %v690 = vpop.f32.mrf.mxu0
        %v691 = vadd.f32 %v401, %v690
        %v692 = vpop.f32.mrf.mxu0
        %v693 = vadd.f32 %v397, %v692
        %v694 = vpop.f32.mrf.mxu0
        %v695 = vadd.f32 %v401, %v694
        %696 = vmatprep.mubr.bf16.mxu0 0
        %697 = vmatmul.mubr.bf16.gmra.mxu0 %v362
        %v698 = vpop.f32.mrf.mxu0
        %v699 = vadd.f32 %v397, %v698
        %v700 = vpop.f32.mrf.mxu0
        %v701 = vadd.f32 %v401, %v700
        %v702 = vpop.f32.mrf.mxu0
        %v703 = vadd.f32 %v397, %v702
        %v704 = vpop.f32.mrf.mxu0
        %v705 = vadd.f32 %v401, %v704
        %706 = vmatprep.mubr.bf16.mxu0 0
        %707 = vmatmul.mubr.bf16.gmra.mxu0 %v363
        %v708 = vpop.f32.mrf.mxu0
        %v709 = vadd.f32 %v397, %v708
        %v710 = vpop.f32.mrf.mxu0
        %v711 = vadd.f32 %v401, %v710
        %v712 = vpop.f32.mrf.mxu0
        %v713 = vadd.f32 %v397, %v712
        %v714 = vpop.f32.mrf.mxu0
        %v715 = vadd.f32 %v401, %v714
        %716 = vmatprep.mubr.bf16.mxu0 0
        %717 = vmatmul.mubr.bf16.gmra.mxu0 %v364
        %v718 = vpop.f32.mrf.mxu0
        %v719 = vadd.f32 %v397, %v718
        %v720 = vpop.f32.mrf.mxu0
        %v721 = vadd.f32 %v401, %v720
        %v722 = vpop.f32.mrf.mxu0
        %v723 = vadd.f32 %v397, %v722
        %v724 = vpop.f32.mrf.mxu0
        %v725 = vadd.f32 %v401, %v724
        %726 = vmatprep.mubr.bf16.mxu0 0
        %727 = vmatmul.mubr.bf16.gmra.mxu0 %v365
        %v728 = vpop.f32.mrf.mxu0
        %v729 = vadd.f32 %v397, %v728
        %v730 = vpop.f32.mrf.mxu0
        %v731 = vadd.f32 %v401, %v730
        %v732 = vpop.f32.mrf.mxu0
        %v733 = vadd.f32 %v397, %v732
        %v734 = vpop.f32.mrf.mxu0
        %v735 = vadd.f32 %v401, %v734
        %736 = vmatprep.mubr.bf16.mxu0 0
        %737 = vmatmul.mubr.bf16.gmra.mxu0 %v366
        %v738 = vpop.f32.mrf.mxu0
        %v739 = vadd.f32 %v397, %v738
        %v740 = vpop.f32.mrf.mxu0
        %v741 = vadd.f32 %v401, %v740
        %v742 = vpop.f32.mrf.mxu0
        %v743 = vadd.f32 %v397, %v742
        %v744 = vpop.f32.mrf.mxu0
        %v745 = vadd.f32 %v401, %v744
        %746 = vmatprep.mubr.bf16.mxu0 0
        %747 = vmatmul.mubr.bf16.gmra.mxu0 %v367
        %v748 = vpop.f32.mrf.mxu0
        %v749 = vadd.f32 %v397, %v748
        %v750 = vpop.f32.mrf.mxu0
        %v751 = vadd.f32 %v401, %v750
        %v752 = vpop.f32.mrf.mxu0
        %v753 = vadd.f32 %v397, %v752
        %v754 = vpop.f32.mrf.mxu0
        %v755 = vadd.f32 %v401, %v754
        %756 = vmatprep.mubr.bf16.mxu0 0
        %757 = vmatmul.mubr.bf16.gmra.mxu0 %v368
        %v758 = vpop.f32.mrf.mxu0
        %v759 = vadd.f32 %v397, %v758
        %v760 = vpop.f32.mrf.mxu0
        %v761 = vadd.f32 %v401, %v760
        %v762 = vpop.f32.mrf.mxu0
        %v763 = vadd.f32 %v397, %v762
        %v764 = vpop.f32.mrf.mxu0
        %v765 = vadd.f32 %v401, %v764
        %766 = vmatprep.mubr.bf16.mxu0 0
        %767 = vmatmul.mubr.bf16.gmra.mxu0 %v369
        %v768 = vpop.f32.mrf.mxu0
        %v769 = vadd.f32 %v397, %v768
        %v770 = vpop.f32.mrf.mxu0
        %v771 = vadd.f32 %v401, %v770
        %v772 = vpop.f32.mrf.mxu0
        %v773 = vadd.f32 %v397, %v772
        %v774 = vpop.f32.mrf.mxu0
        %v775 = vadd.f32 %v401, %v774
        %776 = vmatprep.mubr.bf16.mxu0 0
        %777 = vmatmul.mubr.bf16.gmra.mxu0 %v370
        %v778 = vpop.f32.mrf.mxu0
        %v779 = vadd.f32 %v397, %v778
        %v780 = vpop.f32.mrf.mxu0
        %v781 = vadd.f32 %v401, %v780
        %v782 = vpop.f32.mrf.mxu0
        %v783 = vadd.f32 %v397, %v782
        %v784 = vpop.f32.mrf.mxu0
        %v785 = vadd.f32 %v401, %v784
        %786 = vmatprep.mubr.bf16.mxu0 0
        %787 = vmatmul.mubr.bf16.gmra.mxu0 %v371
        %v788 = vpop.f32.mrf.mxu0
        %v789 = vadd.f32 %v397, %v788
        %v790 = vpop.f32.mrf.mxu0
        %v791 = vadd.f32 %v401, %v790
        %v792 = vpop.f32.mrf.mxu0
        %v793 = vadd.f32 %v397, %v792
        %v794 = vpop.f32.mrf.mxu0
        %v795 = vadd.f32 %v401, %v794
        %796 = vmatprep.mubr.bf16.mxu0 0
        %797 = vmatmul.mubr.bf16.gmra.mxu0 %v372
        %v798 = vpop.f32.mrf.mxu0
        %v799 = vadd.f32 %v397, %v798
        %v800 = vpop.f32.mrf.mxu0
        %v801 = vadd.f32 %v401, %v800
        %v802 = vpop.f32.mrf.mxu0
        %v803 = vadd.f32 %v397, %v802
        %v804 = vpop.f32.mrf.mxu0
        %v805 = vadd.f32 %v401, %v804
        %806 = vmatprep.mubr.bf16.mxu0 0
        %807 = vmatmul.mubr.bf16.gmra.mxu0 %v373
        %v808 = vpop.f32.mrf.mxu0
        %v809 = vadd.f32 %v397, %v808
        %v810 = vpop.f32.mrf.mxu0
        %v811 = vadd.f32 %v401, %v810
        %v812 = vpop.f32.mrf.mxu0
        %v813 = vadd.f32 %v397, %v812
        %v814 = vpop.f32.mrf.mxu0
        %v815 = vadd.f32 %v401, %v814
        %816 = vmatprep.mubr.bf16.mxu0 0
        %817 = vmatmul.mubr.bf16.gmra.mxu0 %v374
        %v818 = vpop.f32.mrf.mxu0
        %v819 = vadd.f32 %v397, %v818
        %v820 = vpop.f32.mrf.mxu0
        %v821 = vadd.f32 %v401, %v820
        %v822 = vpop.f32.mrf.mxu0
        %v823 = vadd.f32 %v397, %v822
        %v824 = vpop.f32.mrf.mxu0
        %v825 = vadd.f32 %v401, %v824
        %826 = vmatprep.mubr.bf16.mxu0 0
        %827 = vmatmul.mubr.bf16.gmra.mxu0 %v375
        %v828 = vpop.f32.mrf.mxu0
        %v829 = vadd.f32 %v397, %v828
        %v830 = vpop.f32.mrf.mxu0
        %v831 = vadd.f32 %v401, %v830
        %v832 = vpop.f32.mrf.mxu0
        %v833 = vadd.f32 %v397, %v832
        %v834 = vpop.f32.mrf.mxu0
        %v835 = vadd.f32 %v401, %v834
        %836 = vdwg.mxu0
        %v837 = vmul.f32 %v519, 0.5
        %v838 = vmul.f32 %v521, 0.5
        %v839 = vmul.f32 %v523, 0.5
        %v840 = vmul.f32 %v525, 0.5
        %v841 = vmul.f32 %v529, 0.5
        %v842 = vmul.f32 %v531, 0.5
        %v843 = vmul.f32 %v533, 0.5
        %v844 = vmul.f32 %v535, 0.5
        %v845 = vmul.f32 %v539, 0.5
        %v846 = vmul.f32 %v541, 0.5
        %v847 = vmul.f32 %v543, 0.5
        %v848 = vmul.f32 %v545, 0.5
        %v849 = vmul.f32 %v549, 0.5
        %v850 = vmul.f32 %v551, 0.5
        %v851 = vmul.f32 %v553, 0.5
        %v852 = vmul.f32 %v555, 0.5
        %v853 = vmul.f32 %v559, 0.5
        %v854 = vmul.f32 %v561, 0.5
        %v855 = vmul.f32 %v563, 0.5
        %v856 = vmul.f32 %v565, 0.5
        %v857 = vmul.f32 %v569, 0.5
        %v858 = vmul.f32 %v571, 0.5
        %v859 = vmul.f32 %v573, 0.5
        %v860 = vmul.f32 %v575, 0.5
        %v861 = vmul.f32 %v579, 0.5
        %v862 = vmul.f32 %v581, 0.5
        %v863 = vmul.f32 %v583, 0.5
        %v864 = vmul.f32 %v585, 0.5
        %v865 = vmul.f32 %v589, 0.5
        %v866 = vmul.f32 %v591, 0.5
        %v867 = vmul.f32 %v593, 0.5
        %v868 = vmul.f32 %v595, 0.5
        %v869 = vmul.f32 %v599, 0.5
        %v870 = vmul.f32 %v601, 0.5
        %v871 = vmul.f32 %v603, 0.5
        %v872 = vmul.f32 %v605, 0.5
        %v873 = vmul.f32 %v609, 0.5
        %v874 = vmul.f32 %v611, 0.5
        %v875 = vmul.f32 %v613, 0.5
        %v876 = vmul.f32 %v615, 0.5
        %v877 = vmul.f32 %v619, 0.5
        %v878 = vmul.f32 %v621, 0.5
        %v879 = vmul.f32 %v623, 0.5
        %v880 = vmul.f32 %v625, 0.5
        %v881 = vmul.f32 %v629, 0.5
        %v882 = vmul.f32 %v631, 0.5
        %v883 = vmul.f32 %v633, 0.5
        %v884 = vmul.f32 %v635, 0.5
        %v885 = vmul.f32 %v639, 0.5
        %v886 = vmul.f32 %v641, 0.5
        %v887 = vmul.f32 %v643, 0.5
        %v888 = vmul.f32 %v645, 0.5
        %v889 = vmul.f32 %v649, 0.5
        %v890 = vmul.f32 %v651, 0.5
        %v891 = vmul.f32 %v653, 0.5
        %v892 = vmul.f32 %v655, 0.5
        %v893 = vmul.f32 %v659, 0.5
        %v894 = vmul.f32 %v661, 0.5
        %v895 = vmul.f32 %v663, 0.5
        %v896 = vmul.f32 %v665, 0.5
        %v897 = vmul.f32 %v669, 0.5
        %v898 = vmul.f32 %v671, 0.5
        %v899 = vmul.f32 %v673, 0.5
        %v900 = vmul.f32 %v675, 0.5
        %v901 = vmul.f32 %v679, 0.5
        %v902 = vmul.f32 %v681, 0.5
        %v903 = vmul.f32 %v683, 0.5
        %v904 = vmul.f32 %v685, 0.5
        %v905 = vmul.f32 %v689, 0.5
        %v906 = vmul.f32 %v691, 0.5
        %v907 = vmul.f32 %v693, 0.5
        %v908 = vmul.f32 %v695, 0.5
        %v909 = vmul.f32 %v699, 0.5
        %v910 = vmul.f32 %v701, 0.5
        %v911 = vmul.f32 %v703, 0.5
        %v912 = vmul.f32 %v705, 0.5
        %v913 = vmul.f32 %v709, 0.5
        %v914 = vmul.f32 %v711, 0.5
        %v915 = vmul.f32 %v713, 0.5
        %v916 = vmul.f32 %v715, 0.5
        %v917 = vmul.f32 %v719, 0.5
        %v918 = vmul.f32 %v721, 0.5
        %v919 = vmul.f32 %v723, 0.5
        %v920 = vmul.f32 %v725, 0.5
        %v921 = vmul.f32 %v729, 0.5
        %v922 = vmul.f32 %v731, 0.5
        %v923 = vmul.f32 %v733, 0.5
        %v924 = vmul.f32 %v735, 0.5
        %v925 = vmul.f32 %v739, 0.5
        %v926 = vmul.f32 %v741, 0.5
        %v927 = vmul.f32 %v743, 0.5
        %v928 = vmul.f32 %v745, 0.5
        %v929 = vmul.f32 %v749, 0.5
        %v930 = vmul.f32 %v751, 0.5
        %v931 = vmul.f32 %v753, 0.5
        %v932 = vmul.f32 %v755, 0.5
        %v933 = vmul.f32 %v759, 0.5
        %v934 = vmul.f32 %v761, 0.5
        %v935 = vmul.f32 %v763, 0.5
        %v936 = vmul.f32 %v765, 0.5
        %v937 = vmul.f32 %v769, 0.5
        %v938 = vmul.f32 %v771, 0.5
        %v939 = vmul.f32 %v773, 0.5
        %v940 = vmul.f32 %v775, 0.5
        %v941 = vmul.f32 %v779, 0.5
        %v942 = vmul.f32 %v781, 0.5
        %v943 = vmul.f32 %v783, 0.5
        %v944 = vmul.f32 %v785, 0.5
        %v945 = vmul.f32 %v789, 0.5
        %v946 = vmul.f32 %v791, 0.5
        %v947 = vmul.f32 %v793, 0.5
        %v948 = vmul.f32 %v795, 0.5
        %v949 = vmul.f32 %v799, 0.5
        %v950 = vmul.f32 %v801, 0.5
        %v951 = vmul.f32 %v803, 0.5
        %v952 = vmul.f32 %v805, 0.5
        %v953 = vmul.f32 %v809, 0.5
        %v954 = vmul.f32 %v811, 0.5
        %v955 = vmul.f32 %v813, 0.5
        %v956 = vmul.f32 %v815, 0.5
        %v957 = vmul.f32 %v819, 0.5
        %v958 = vmul.f32 %v821, 0.5
        %v959 = vmul.f32 %v823, 0.5
        %v960 = vmul.f32 %v825, 0.5
        %v961 = vmul.f32 %v829, 0.5
        %v962 = vmul.f32 %v831, 0.5
        %v963 = vmul.f32 %v833, 0.5
        %v964 = vmul.f32 %v835, 0.5
        %v965 = vmul.f32 %v519, 0.70710677
        %v966 = vmul.f32 %v521, 0.70710677
        %v967 = vmul.f32 %v523, 0.70710677
        %v968 = vmul.f32 %v525, 0.70710677
        %v969 = vmul.f32 %v529, 0.70710677
        %v970 = vmul.f32 %v531, 0.70710677
        %v971 = vmul.f32 %v533, 0.70710677
        %v972 = vmul.f32 %v535, 0.70710677
        %v973 = vmul.f32 %v539, 0.70710677
        %v974 = vmul.f32 %v541, 0.70710677
        %v975 = vmul.f32 %v543, 0.70710677
        %v976 = vmul.f32 %v545, 0.70710677
        %v977 = vmul.f32 %v549, 0.70710677
        %v978 = vmul.f32 %v551, 0.70710677
        %v979 = vmul.f32 %v553, 0.70710677
        %v980 = vmul.f32 %v555, 0.70710677
        %v981 = vmul.f32 %v559, 0.70710677
        %v982 = vmul.f32 %v561, 0.70710677
        %v983 = vmul.f32 %v563, 0.70710677
        %v984 = vmul.f32 %v565, 0.70710677
        %v985 = vmul.f32 %v569, 0.70710677
        %v986 = vmul.f32 %v571, 0.70710677
        %v987 = vmul.f32 %v573, 0.70710677
        %v988 = vmul.f32 %v575, 0.70710677
        %v989 = vmul.f32 %v579, 0.70710677
        %v990 = vmul.f32 %v581, 0.70710677
        %v991 = vmul.f32 %v583, 0.70710677
        %v992 = vmul.f32 %v585, 0.70710677
        %v993 = vmul.f32 %v589, 0.70710677
        %v994 = vmul.f32 %v591, 0.70710677
        %v995 = vmul.f32 %v593, 0.70710677
        %v996 = vmul.f32 %v595, 0.70710677
        %v997 = vmul.f32 %v599, 0.70710677
        %v998 = vmul.f32 %v601, 0.70710677
        %v999 = vmul.f32 %v603, 0.70710677
        %v1000 = vmul.f32 %v605, 0.70710677
        %v1001 = vmul.f32 %v609, 0.70710677
        %v1002 = vmul.f32 %v611, 0.70710677
        %v1003 = vmul.f32 %v613, 0.70710677
        %v1004 = vmul.f32 %v615, 0.70710677
        %v1005 = vmul.f32 %v619, 0.70710677
        %v1006 = vmul.f32 %v621, 0.70710677
        %v1007 = vmul.f32 %v623, 0.70710677
        %v1008 = vmul.f32 %v625, 0.70710677
        %v1009 = vmul.f32 %v629, 0.70710677
        %v1010 = vmul.f32 %v631, 0.70710677
        %v1011 = vmul.f32 %v633, 0.70710677
        %v1012 = vmul.f32 %v635, 0.70710677
        %v1013 = vmul.f32 %v639, 0.70710677
        %v1014 = vmul.f32 %v641, 0.70710677
        %v1015 = vmul.f32 %v643, 0.70710677
        %v1016 = vmul.f32 %v645, 0.70710677
        %v1017 = vmul.f32 %v649, 0.70710677
        %v1018 = vmul.f32 %v651, 0.70710677
        %v1019 = vmul.f32 %v653, 0.70710677
        %v1020 = vmul.f32 %v655, 0.70710677
        %v1021 = vmul.f32 %v659, 0.70710677
        %v1022 = vmul.f32 %v661, 0.70710677
        %v1023 = vmul.f32 %v663, 0.70710677
        %v1024 = vmul.f32 %v665, 0.70710677
        %v1025 = vmul.f32 %v669, 0.70710677
        %v1026 = vmul.f32 %v671, 0.70710677
        %v1027 = vmul.f32 %v673, 0.70710677
        %v1028 = vmul.f32 %v675, 0.70710677
        %v1029 = vmul.f32 %v679, 0.70710677
        %v1030 = vmul.f32 %v681, 0.70710677
        %v1031 = vmul.f32 %v683, 0.70710677
        %v1032 = vmul.f32 %v685, 0.70710677
        %v1033 = vmul.f32 %v689, 0.70710677
        %v1034 = vmul.f32 %v691, 0.70710677
        %v1035 = vmul.f32 %v693, 0.70710677
        %v1036 = vmul.f32 %v695, 0.70710677
        %v1037 = vmul.f32 %v699, 0.70710677
        %v1038 = vmul.f32 %v701, 0.70710677
        %v1039 = vmul.f32 %v703, 0.70710677
        %v1040 = vmul.f32 %v705, 0.70710677
        %v1041 = vmul.f32 %v709, 0.70710677
        %v1042 = vmul.f32 %v711, 0.70710677
        %v1043 = vmul.f32 %v713, 0.70710677
        %v1044 = vmul.f32 %v715, 0.70710677
        %v1045 = vmul.f32 %v719, 0.70710677
        %v1046 = vmul.f32 %v721, 0.70710677
        %v1047 = vmul.f32 %v723, 0.70710677
        %v1048 = vmul.f32 %v725, 0.70710677
        %v1049 = vmul.f32 %v729, 0.70710677
        %v1050 = vmul.f32 %v731, 0.70710677
        %v1051 = vmul.f32 %v733, 0.70710677
        %v1052 = vmul.f32 %v735, 0.70710677
        %v1053 = vmul.f32 %v739, 0.70710677
        %v1054 = vmul.f32 %v741, 0.70710677
        %v1055 = vmul.f32 %v743, 0.70710677
        %v1056 = vmul.f32 %v745, 0.70710677
        %v1057 = vmul.f32 %v749, 0.70710677
        %v1058 = vmul.f32 %v751, 0.70710677
        %v1059 = vmul.f32 %v753, 0.70710677
        %v1060 = vmul.f32 %v755, 0.70710677
        %v1061 = vmul.f32 %v759, 0.70710677
        %v1062 = vmul.f32 %v761, 0.70710677
        %v1063 = vmul.f32 %v763, 0.70710677
        %v1064 = vmul.f32 %v765, 0.70710677
        %v1065 = vmul.f32 %v769, 0.70710677
        %v1066 = vmul.f32 %v771, 0.70710677
        %v1067 = vmul.f32 %v773, 0.70710677
        %v1068 = vmul.f32 %v775, 0.70710677
        %v1069 = vmul.f32 %v779, 0.70710677
        %v1070 = vmul.f32 %v781, 0.70710677
        %v1071 = vmul.f32 %v783, 0.70710677
        %v1072 = vmul.f32 %v785, 0.70710677
        %v1073 = vmul.f32 %v789, 0.70710677
        %v1074 = vmul.f32 %v791, 0.70710677
        %v1075 = vmul.f32 %v793, 0.70710677
        %v1076 = vmul.f32 %v795, 0.70710677
        %v1077 = vmul.f32 %v799, 0.70710677
        %v1078 = vmul.f32 %v801, 0.70710677
        %v1079 = vmul.f32 %v803, 0.70710677
        %v1080 = vmul.f32 %v805, 0.70710677
        %v1081 = vmul.f32 %v809, 0.70710677
        %v1082 = vmul.f32 %v811, 0.70710677
        %v1083 = vmul.f32 %v813, 0.70710677
        %v1084 = vmul.f32 %v815, 0.70710677
        %v1085 = vmul.f32 %v819, 0.70710677
        %v1086 = vmul.f32 %v821, 0.70710677
        %v1087 = vmul.f32 %v823, 0.70710677
        %v1088 = vmul.f32 %v825, 0.70710677
        %v1089 = vmul.f32 %v829, 0.70710677
        %v1090 = vmul.f32 %v831, 0.70710677
        %v1091 = vmul.f32 %v833, 0.70710677
        %v1092 = vmul.f32 %v835, 0.70710677
        %v1093 = vand.u32 2147483647, %v965
        %v1094 = vand.u32 2147483647, %v966
        %v1095 = vand.u32 2147483647, %v967
        %v1096 = vand.u32 2147483647, %v968
        %v1097 = vand.u32 2147483647, %v969
        %v1098 = vand.u32 2147483647, %v970
        %v1099 = vand.u32 2147483647, %v971
        %v1100 = vand.u32 2147483647, %v972
        %v1101 = vand.u32 2147483647, %v973
        %v1102 = vand.u32 2147483647, %v974
        %v1103 = vand.u32 2147483647, %v975
        %v1104 = vand.u32 2147483647, %v976
        %v1105 = vand.u32 2147483647, %v977
        %v1106 = vand.u32 2147483647, %v978
        %v1107 = vand.u32 2147483647, %v979
        %v1108 = vand.u32 2147483647, %v980
        %v1109 = vand.u32 2147483647, %v981
        %v1110 = vand.u32 2147483647, %v982
        %v1111 = vand.u32 2147483647, %v983
        %v1112 = vand.u32 2147483647, %v984
        %v1113 = vand.u32 2147483647, %v985
        %v1114 = vand.u32 2147483647, %v986
        %v1115 = vand.u32 2147483647, %v987
        %v1116 = vand.u32 2147483647, %v988
        %v1117 = vand.u32 2147483647, %v989
        %v1118 = vand.u32 2147483647, %v990
        %v1119 = vand.u32 2147483647, %v991
        %v1120 = vand.u32 2147483647, %v992
        %v1121 = vand.u32 2147483647, %v993
        %v1122 = vand.u32 2147483647, %v994
        %v1123 = vand.u32 2147483647, %v995
        %v1124 = vand.u32 2147483647, %v996
        %v1125 = vand.u32 2147483647, %v997
        %v1126 = vand.u32 2147483647, %v998
        %v1127 = vand.u32 2147483647, %v999
        %v1128 = vand.u32 2147483647, %v1000
        %v1129 = vand.u32 2147483647, %v1001
        %v1130 = vand.u32 2147483647, %v1002
        %v1131 = vand.u32 2147483647, %v1003
        %v1132 = vand.u32 2147483647, %v1004
        %v1133 = vand.u32 2147483647, %v1005
        %v1134 = vand.u32 2147483647, %v1006
        %v1135 = vand.u32 2147483647, %v1007
        %v1136 = vand.u32 2147483647, %v1008
        %v1137 = vand.u32 2147483647, %v1009
        %v1138 = vand.u32 2147483647, %v1010
        %v1139 = vand.u32 2147483647, %v1011
        %v1140 = vand.u32 2147483647, %v1012
        %v1141 = vand.u32 2147483647, %v1013
        %v1142 = vand.u32 2147483647, %v1014
        %v1143 = vand.u32 2147483647, %v1015
        %v1144 = vand.u32 2147483647, %v1016
        %v1145 = vand.u32 2147483647, %v1017
        %v1146 = vand.u32 2147483647, %v1018
        %v1147 = vand.u32 2147483647, %v1019
        %v1148 = vand.u32 2147483647, %v1020
        %v1149 = vand.u32 2147483647, %v1021
        %v1150 = vand.u32 2147483647, %v1022
        %v1151 = vand.u32 2147483647, %v1023
        %v1152 = vand.u32 2147483647, %v1024
        %v1153 = vand.u32 2147483647, %v1025
        %v1154 = vand.u32 2147483647, %v1026
        %v1155 = vand.u32 2147483647, %v1027
        %v1156 = vand.u32 2147483647, %v1028
        %v1157 = vand.u32 2147483647, %v1029
        %v1158 = vand.u32 2147483647, %v1030
        %v1159 = vand.u32 2147483647, %v1031
        %v1160 = vand.u32 2147483647, %v1032
        %v1161 = vand.u32 2147483647, %v1033
        %v1162 = vand.u32 2147483647, %v1034
        %v1163 = vand.u32 2147483647, %v1035
        %v1164 = vand.u32 2147483647, %v1036
        %v1165 = vand.u32 2147483647, %v1037
        %v1166 = vand.u32 2147483647, %v1038
        %v1167 = vand.u32 2147483647, %v1039
        %v1168 = vand.u32 2147483647, %v1040
        %v1169 = vand.u32 2147483647, %v1041
        %v1170 = vand.u32 2147483647, %v1042
        %v1171 = vand.u32 2147483647, %v1043
        %v1172 = vand.u32 2147483647, %v1044
        %v1173 = vand.u32 2147483647, %v1045
        %v1174 = vand.u32 2147483647, %v1046
        %v1175 = vand.u32 2147483647, %v1047
        %v1176 = vand.u32 2147483647, %v1048
        %v1177 = vand.u32 2147483647, %v1049
        %v1178 = vand.u32 2147483647, %v1050
        %v1179 = vand.u32 2147483647, %v1051
        %v1180 = vand.u32 2147483647, %v1052
        %v1181 = vand.u32 2147483647, %v1053
        %v1182 = vand.u32 2147483647, %v1054
        %v1183 = vand.u32 2147483647, %v1055
        %v1184 = vand.u32 2147483647, %v1056
        %v1185 = vand.u32 2147483647, %v1057
        %v1186 = vand.u32 2147483647, %v1058
        %v1187 = vand.u32 2147483647, %v1059
        %v1188 = vand.u32 2147483647, %v1060
        %v1189 = vand.u32 2147483647, %v1061
        %v1190 = vand.u32 2147483647, %v1062
        %v1191 = vand.u32 2147483647, %v1063
        %v1192 = vand.u32 2147483647, %v1064
        %v1193 = vand.u32 2147483647, %v1065
        %v1194 = vand.u32 2147483647, %v1066
        %v1195 = vand.u32 2147483647, %v1067
        %v1196 = vand.u32 2147483647, %v1068
        %v1197 = vand.u32 2147483647, %v1069
        %v1198 = vand.u32 2147483647, %v1070
        %v1199 = vand.u32 2147483647, %v1071
        %v1200 = vand.u32 2147483647, %v1072
        %v1201 = vand.u32 2147483647, %v1073
        %v1202 = vand.u32 2147483647, %v1074
        %v1203 = vand.u32 2147483647, %v1075
        %v1204 = vand.u32 2147483647, %v1076
        %v1205 = vand.u32 2147483647, %v1077
        %v1206 = vand.u32 2147483647, %v1078
        %v1207 = vand.u32 2147483647, %v1079
        %v1208 = vand.u32 2147483647, %v1080
        %v1209 = vand.u32 2147483647, %v1081
        %v1210 = vand.u32 2147483647, %v1082
        %v1211 = vand.u32 2147483647, %v1083
        %v1212 = vand.u32 2147483647, %v1084
        %v1213 = vand.u32 2147483647, %v1085
        %v1214 = vand.u32 2147483647, %v1086
        %v1215 = vand.u32 2147483647, %v1087
        %v1216 = vand.u32 2147483647, %v1088
        %v1217 = vand.u32 2147483647, %v1089
        %v1218 = vand.u32 2147483647, %v1090
        %v1219 = vand.u32 2147483647, %v1091
        %v1220 = vand.u32 2147483647, %v1092
        %v1221 = vmul.f32 %v1093, 0.3275911
        %v1222 = vmul.f32 %v1094, 0.3275911
        %v1223 = vmul.f32 %v1095, 0.3275911
        %v1224 = vmul.f32 %v1096, 0.3275911
        %v1225 = vmul.f32 %v1097, 0.3275911
        %v1226 = vmul.f32 %v1098, 0.3275911
        %v1227 = vmul.f32 %v1099, 0.3275911
        %v1228 = vmul.f32 %v1100, 0.3275911
        %v1229 = vmul.f32 %v1101, 0.3275911
        %v1230 = vmul.f32 %v1102, 0.3275911
        %v1231 = vmul.f32 %v1103, 0.3275911
        %v1232 = vmul.f32 %v1104, 0.3275911
        %v1233 = vmul.f32 %v1105, 0.3275911
        %v1234 = vmul.f32 %v1106, 0.3275911
        %v1235 = vmul.f32 %v1107, 0.3275911
        %v1236 = vmul.f32 %v1108, 0.3275911
        %v1237 = vmul.f32 %v1109, 0.3275911
        %v1238 = vmul.f32 %v1110, 0.3275911
        %v1239 = vmul.f32 %v1111, 0.3275911
        %v1240 = vmul.f32 %v1112, 0.3275911
        %v1241 = vmul.f32 %v1113, 0.3275911
        %v1242 = vmul.f32 %v1114, 0.3275911
        %v1243 = vmul.f32 %v1115, 0.3275911
        %v1244 = vmul.f32 %v1116, 0.3275911
        %v1245 = vmul.f32 %v1117, 0.3275911
        %v1246 = vmul.f32 %v1118, 0.3275911
        %v1247 = vmul.f32 %v1119, 0.3275911
        %v1248 = vmul.f32 %v1120, 0.3275911
        %v1249 = vmul.f32 %v1121, 0.3275911
        %v1250 = vmul.f32 %v1122, 0.3275911
        %v1251 = vmul.f32 %v1123, 0.3275911
        %v1252 = vmul.f32 %v1124, 0.3275911
        %v1253 = vmul.f32 %v1125, 0.3275911
        %v1254 = vmul.f32 %v1126, 0.3275911
        %v1255 = vmul.f32 %v1127, 0.3275911
        %v1256 = vmul.f32 %v1128, 0.3275911
        %v1257 = vmul.f32 %v1129, 0.3275911
        %v1258 = vmul.f32 %v1130, 0.3275911
        %v1259 = vmul.f32 %v1131, 0.3275911
        %v1260 = vmul.f32 %v1132, 0.3275911
        %v1261 = vmul.f32 %v1133, 0.3275911
        %v1262 = vmul.f32 %v1134, 0.3275911
        %v1263 = vmul.f32 %v1135, 0.3275911
        %v1264 = vmul.f32 %v1136, 0.3275911
        %v1265 = vmul.f32 %v1137, 0.3275911
        %v1266 = vmul.f32 %v1138, 0.3275911
        %v1267 = vmul.f32 %v1139, 0.3275911
        %v1268 = vmul.f32 %v1140, 0.3275911
        %v1269 = vmul.f32 %v1141, 0.3275911
        %v1270 = vmul.f32 %v1142, 0.3275911
        %v1271 = vmul.f32 %v1143, 0.3275911
        %v1272 = vmul.f32 %v1144, 0.3275911
        %v1273 = vmul.f32 %v1145, 0.3275911
        %v1274 = vmul.f32 %v1146, 0.3275911
        %v1275 = vmul.f32 %v1147, 0.3275911
        %v1276 = vmul.f32 %v1148, 0.3275911
        %v1277 = vmul.f32 %v1149, 0.3275911
        %v1278 = vmul.f32 %v1150, 0.3275911
        %v1279 = vmul.f32 %v1151, 0.3275911
        %v1280 = vmul.f32 %v1152, 0.3275911
        %v1281 = vmul.f32 %v1153, 0.3275911
        %v1282 = vmul.f32 %v1154, 0.3275911
        %v1283 = vmul.f32 %v1155, 0.3275911
        %v1284 = vmul.f32 %v1156, 0.3275911
        %v1285 = vmul.f32 %v1157, 0.3275911
        %v1286 = vmul.f32 %v1158, 0.3275911
        %v1287 = vmul.f32 %v1159, 0.3275911
        %v1288 = vmul.f32 %v1160, 0.3275911
        %v1289 = vmul.f32 %v1161, 0.3275911
        %v1290 = vmul.f32 %v1162, 0.3275911
        %v1291 = vmul.f32 %v1163, 0.3275911
        %v1292 = vmul.f32 %v1164, 0.3275911
        %v1293 = vmul.f32 %v1165, 0.3275911
        %v1294 = vmul.f32 %v1166, 0.3275911
        %v1295 = vmul.f32 %v1167, 0.3275911
        %v1296 = vmul.f32 %v1168, 0.3275911
        %v1297 = vmul.f32 %v1169, 0.3275911
        %v1298 = vmul.f32 %v1170, 0.3275911
        %v1299 = vmul.f32 %v1171, 0.3275911
        %v1300 = vmul.f32 %v1172, 0.3275911
        %v1301 = vmul.f32 %v1173, 0.3275911
        %v1302 = vmul.f32 %v1174, 0.3275911
        %v1303 = vmul.f32 %v1175, 0.3275911
        %v1304 = vmul.f32 %v1176, 0.3275911
        %v1305 = vmul.f32 %v1177, 0.3275911
        %v1306 = vmul.f32 %v1178, 0.3275911
        %v1307 = vmul.f32 %v1179, 0.3275911
        %v1308 = vmul.f32 %v1180, 0.3275911
        %v1309 = vmul.f32 %v1181, 0.3275911
        %v1310 = vmul.f32 %v1182, 0.3275911
        %v1311 = vmul.f32 %v1183, 0.3275911
        %v1312 = vmul.f32 %v1184, 0.3275911
        %v1313 = vmul.f32 %v1185, 0.3275911
        %v1314 = vmul.f32 %v1186, 0.3275911
        %v1315 = vmul.f32 %v1187, 0.3275911
        %v1316 = vmul.f32 %v1188, 0.3275911
        %v1317 = vmul.f32 %v1189, 0.3275911
        %v1318 = vmul.f32 %v1190, 0.3275911
        %v1319 = vmul.f32 %v1191, 0.3275911
        %v1320 = vmul.f32 %v1192, 0.3275911
        %v1321 = vmul.f32 %v1193, 0.3275911
        %v1322 = vmul.f32 %v1194, 0.3275911
        %v1323 = vmul.f32 %v1195, 0.3275911
        %v1324 = vmul.f32 %v1196, 0.3275911
        %v1325 = vmul.f32 %v1197, 0.3275911
        %v1326 = vmul.f32 %v1198, 0.3275911
        %v1327 = vmul.f32 %v1199, 0.3275911
        %v1328 = vmul.f32 %v1200, 0.3275911
        %v1329 = vmul.f32 %v1201, 0.3275911
        %v1330 = vmul.f32 %v1202, 0.3275911
        %v1331 = vmul.f32 %v1203, 0.3275911
        %v1332 = vmul.f32 %v1204, 0.3275911
        %v1333 = vmul.f32 %v1205, 0.3275911
        %v1334 = vmul.f32 %v1206, 0.3275911
        %v1335 = vmul.f32 %v1207, 0.3275911
        %v1336 = vmul.f32 %v1208, 0.3275911
        %v1337 = vmul.f32 %v1209, 0.3275911
        %v1338 = vmul.f32 %v1210, 0.3275911
        %v1339 = vmul.f32 %v1211, 0.3275911
        %v1340 = vmul.f32 %v1212, 0.3275911
        %v1341 = vmul.f32 %v1213, 0.3275911
        %v1342 = vmul.f32 %v1214, 0.3275911
        %v1343 = vmul.f32 %v1215, 0.3275911
        %v1344 = vmul.f32 %v1216, 0.3275911
        %v1345 = vmul.f32 %v1217, 0.3275911
        %v1346 = vmul.f32 %v1218, 0.3275911
        %v1347 = vmul.f32 %v1219, 0.3275911
        %v1348 = vmul.f32 %v1220, 0.3275911
        %v1349 = vadd.f32 %v1221, 1.0
        %v1350 = vadd.f32 %v1222, 1.0
        %v1351 = vadd.f32 %v1223, 1.0
        %v1352 = vadd.f32 %v1224, 1.0
        %v1353 = vadd.f32 %v1225, 1.0
        %v1354 = vadd.f32 %v1226, 1.0
        %v1355 = vadd.f32 %v1227, 1.0
        %v1356 = vadd.f32 %v1228, 1.0
        %v1357 = vadd.f32 %v1229, 1.0
        %v1358 = vadd.f32 %v1230, 1.0
        %v1359 = vadd.f32 %v1231, 1.0
        %v1360 = vadd.f32 %v1232, 1.0
        %v1361 = vadd.f32 %v1233, 1.0
        %v1362 = vadd.f32 %v1234, 1.0
        %v1363 = vadd.f32 %v1235, 1.0
        %v1364 = vadd.f32 %v1236, 1.0
        %v1365 = vadd.f32 %v1237, 1.0
        %v1366 = vadd.f32 %v1238, 1.0
        %v1367 = vadd.f32 %v1239, 1.0
        %v1368 = vadd.f32 %v1240, 1.0
        %v1369 = vadd.f32 %v1241, 1.0
        %v1370 = vadd.f32 %v1242, 1.0
        %v1371 = vadd.f32 %v1243, 1.0
        %v1372 = vadd.f32 %v1244, 1.0
        %v1373 = vadd.f32 %v1245, 1.0
        %v1374 = vadd.f32 %v1246, 1.0
        %v1375 = vadd.f32 %v1247, 1.0
        %v1376 = vadd.f32 %v1248, 1.0
        %v1377 = vadd.f32 %v1249, 1.0
        %v1378 = vadd.f32 %v1250, 1.0
        %v1379 = vadd.f32 %v1251, 1.0
        %v1380 = vadd.f32 %v1252, 1.0
        %v1381 = vadd.f32 %v1253, 1.0
        %v1382 = vadd.f32 %v1254, 1.0
        %v1383 = vadd.f32 %v1255, 1.0
        %v1384 = vadd.f32 %v1256, 1.0
        %v1385 = vadd.f32 %v1257, 1.0
        %v1386 = vadd.f32 %v1258, 1.0
        %v1387 = vadd.f32 %v1259, 1.0
        %v1388 = vadd.f32 %v1260, 1.0
        %v1389 = vadd.f32 %v1261, 1.0
        %v1390 = vadd.f32 %v1262, 1.0
        %v1391 = vadd.f32 %v1263, 1.0
        %v1392 = vadd.f32 %v1264, 1.0
        %v1393 = vadd.f32 %v1265, 1.0
        %v1394 = vadd.f32 %v1266, 1.0
        %v1395 = vadd.f32 %v1267, 1.0
        %v1396 = vadd.f32 %v1268, 1.0
        %v1397 = vadd.f32 %v1269, 1.0
        %v1398 = vadd.f32 %v1270, 1.0
        %v1399 = vadd.f32 %v1271, 1.0
        %v1400 = vadd.f32 %v1272, 1.0
        %v1401 = vadd.f32 %v1273, 1.0
        %v1402 = vadd.f32 %v1274, 1.0
        %v1403 = vadd.f32 %v1275, 1.0
        %v1404 = vadd.f32 %v1276, 1.0
        %v1405 = vadd.f32 %v1277, 1.0
        %v1406 = vadd.f32 %v1278, 1.0
        %v1407 = vadd.f32 %v1279, 1.0
        %v1408 = vadd.f32 %v1280, 1.0
        %v1409 = vadd.f32 %v1281, 1.0
        %v1410 = vadd.f32 %v1282, 1.0
        %v1411 = vadd.f32 %v1283, 1.0
        %v1412 = vadd.f32 %v1284, 1.0
        %v1413 = vadd.f32 %v1285, 1.0
        %v1414 = vadd.f32 %v1286, 1.0
        %v1415 = vadd.f32 %v1287, 1.0
        %v1416 = vadd.f32 %v1288, 1.0
        %v1417 = vadd.f32 %v1289, 1.0
        %v1418 = vadd.f32 %v1290, 1.0
        %v1419 = vadd.f32 %v1291, 1.0
        %v1420 = vadd.f32 %v1292, 1.0
        %v1421 = vadd.f32 %v1293, 1.0
        %v1422 = vadd.f32 %v1294, 1.0
        %v1423 = vadd.f32 %v1295, 1.0
        %v1424 = vadd.f32 %v1296, 1.0
        %v1425 = vadd.f32 %v1297, 1.0
        %v1426 = vadd.f32 %v1298, 1.0
        %v1427 = vadd.f32 %v1299, 1.0
        %v1428 = vadd.f32 %v1300, 1.0
        %v1429 = vadd.f32 %v1301, 1.0
        %v1430 = vadd.f32 %v1302, 1.0
        %v1431 = vadd.f32 %v1303, 1.0
        %v1432 = vadd.f32 %v1304, 1.0
        %v1433 = vadd.f32 %v1305, 1.0
        %v1434 = vadd.f32 %v1306, 1.0
        %v1435 = vadd.f32 %v1307, 1.0
        %v1436 = vadd.f32 %v1308, 1.0
        %v1437 = vadd.f32 %v1309, 1.0
        %v1438 = vadd.f32 %v1310, 1.0
        %v1439 = vadd.f32 %v1311, 1.0
        %v1440 = vadd.f32 %v1312, 1.0
        %v1441 = vadd.f32 %v1313, 1.0
        %v1442 = vadd.f32 %v1314, 1.0
        %v1443 = vadd.f32 %v1315, 1.0
        %v1444 = vadd.f32 %v1316, 1.0
        %v1445 = vadd.f32 %v1317, 1.0
        %v1446 = vadd.f32 %v1318, 1.0
        %v1447 = vadd.f32 %v1319, 1.0
        %v1448 = vadd.f32 %v1320, 1.0
        %v1449 = vadd.f32 %v1321, 1.0
        %v1450 = vadd.f32 %v1322, 1.0
        %v1451 = vadd.f32 %v1323, 1.0
        %v1452 = vadd.f32 %v1324, 1.0
        %v1453 = vadd.f32 %v1325, 1.0
        %v1454 = vadd.f32 %v1326, 1.0
        %v1455 = vadd.f32 %v1327, 1.0
        %v1456 = vadd.f32 %v1328, 1.0
        %v1457 = vadd.f32 %v1329, 1.0
        %v1458 = vadd.f32 %v1330, 1.0
        %v1459 = vadd.f32 %v1331, 1.0
        %v1460 = vadd.f32 %v1332, 1.0
        %v1461 = vadd.f32 %v1333, 1.0
        %v1462 = vadd.f32 %v1334, 1.0
        %v1463 = vadd.f32 %v1335, 1.0
        %v1464 = vadd.f32 %v1336, 1.0
        %v1465 = vadd.f32 %v1337, 1.0
        %v1466 = vadd.f32 %v1338, 1.0
        %v1467 = vadd.f32 %v1339, 1.0
        %v1468 = vadd.f32 %v1340, 1.0
        %v1469 = vadd.f32 %v1341, 1.0
        %v1470 = vadd.f32 %v1342, 1.0
        %v1471 = vadd.f32 %v1343, 1.0
        %v1472 = vadd.f32 %v1344, 1.0
        %v1473 = vadd.f32 %v1345, 1.0
        %v1474 = vadd.f32 %v1346, 1.0
        %v1475 = vadd.f32 %v1347, 1.0
        %v1476 = vadd.f32 %v1348, 1.0
        %v1477 = vrcp.pop %v1349
        %v1478 = vrcp.pop %v1350
        %v1479 = vrcp.pop %v1351
        %v1480 = vrcp.pop %v1352
        %v1481 = vrcp.pop %v1353
        %v1482 = vrcp.pop %v1354
        %v1483 = vrcp.pop %v1355
        %v1484 = vrcp.pop %v1356
        %v1485 = vrcp.pop %v1357
        %v1486 = vrcp.pop %v1358
        %v1487 = vrcp.pop %v1359
        %v1488 = vrcp.pop %v1360
        %v1489 = vrcp.pop %v1361
        %v1490 = vrcp.pop %v1362
        %v1491 = vrcp.pop %v1363
        %v1492 = vrcp.pop %v1364
        %v1493 = vrcp.pop %v1365
        %v1494 = vrcp.pop %v1366
        %v1495 = vrcp.pop %v1367
        %v1496 = vrcp.pop %v1368
        %v1497 = vrcp.pop %v1369
        %v1498 = vrcp.pop %v1370
        %v1499 = vrcp.pop %v1371
        %v1500 = vrcp.pop %v1372
        %v1501 = vrcp.pop %v1373
        %v1502 = vrcp.pop %v1374
        %v1503 = vrcp.pop %v1375
        %v1504 = vrcp.pop %v1376
        %v1505 = vrcp.pop %v1377
        %v1506 = vrcp.pop %v1378
        %v1507 = vrcp.pop %v1379
        %v1508 = vrcp.pop %v1380
        %v1509 = vrcp.pop %v1381
        %v1510 = vrcp.pop %v1382
        %v1511 = vrcp.pop %v1383
        %v1512 = vrcp.pop %v1384
        %v1513 = vrcp.pop %v1385
        %v1514 = vrcp.pop %v1386
        %v1515 = vrcp.pop %v1387
        %v1516 = vrcp.pop %v1388
        %v1517 = vrcp.pop %v1389
        %v1518 = vrcp.pop %v1390
        %v1519 = vrcp.pop %v1391
        %v1520 = vrcp.pop %v1392
        %v1521 = vrcp.pop %v1393
        %v1522 = vrcp.pop %v1394
        %v1523 = vrcp.pop %v1395
        %v1524 = vrcp.pop %v1396
        %v1525 = vrcp.pop %v1397
        %v1526 = vrcp.pop %v1398
        %v1527 = vrcp.pop %v1399
        %v1528 = vrcp.pop %v1400
        %v1529 = vrcp.pop %v1401
        %v1530 = vrcp.pop %v1402
        %v1531 = vrcp.pop %v1403
        %v1532 = vrcp.pop %v1404
        %v1533 = vrcp.pop %v1405
        %v1534 = vrcp.pop %v1406
        %v1535 = vrcp.pop %v1407
        %v1536 = vrcp.pop %v1408
        %v1537 = vrcp.pop %v1409
        %v1538 = vrcp.pop %v1410
        %v1539 = vrcp.pop %v1411
        %v1540 = vrcp.pop %v1412
        %v1541 = vrcp.pop %v1413
        %v1542 = vrcp.pop %v1414
        %v1543 = vrcp.pop %v1415
        %v1544 = vrcp.pop %v1416
        %v1545 = vrcp.pop %v1417
        %v1546 = vrcp.pop %v1418
        %v1547 = vrcp.pop %v1419
        %v1548 = vrcp.pop %v1420
        %v1549 = vrcp.pop %v1421
        %v1550 = vrcp.pop %v1422
        %v1551 = vrcp.pop %v1423
        %v1552 = vrcp.pop %v1424
        %v1553 = vrcp.pop %v1425
        %v1554 = vrcp.pop %v1426
        %v1555 = vrcp.pop %v1427
        %v1556 = vrcp.pop %v1428
        %v1557 = vrcp.pop %v1429
        %v1558 = vrcp.pop %v1430
        %v1559 = vrcp.pop %v1431
        %v1560 = vrcp.pop %v1432
        %v1561 = vrcp.pop %v1433
        %v1562 = vrcp.pop %v1434
        %v1563 = vrcp.pop %v1435
        %v1564 = vrcp.pop %v1436
        %v1565 = vrcp.pop %v1437
        %v1566 = vrcp.pop %v1438
        %v1567 = vrcp.pop %v1439
        %v1568 = vrcp.pop %v1440
        %v1569 = vrcp.pop %v1441
        %v1570 = vrcp.pop %v1442
        %v1571 = vrcp.pop %v1443
        %v1572 = vrcp.pop %v1444
        %v1573 = vrcp.pop %v1445
        %v1574 = vrcp.pop %v1446
        %v1575 = vrcp.pop %v1447
        %v1576 = vrcp.pop %v1448
        %v1577 = vrcp.pop %v1449
        %v1578 = vrcp.pop %v1450
        %v1579 = vrcp.pop %v1451
        %v1580 = vrcp.pop %v1452
        %v1581 = vrcp.pop %v1453
        %v1582 = vrcp.pop %v1454
        %v1583 = vrcp.pop %v1455
        %v1584 = vrcp.pop %v1456
        %v1585 = vrcp.pop %v1457
        %v1586 = vrcp.pop %v1458
        %v1587 = vrcp.pop %v1459
        %v1588 = vrcp.pop %v1460
        %v1589 = vrcp.pop %v1461
        %v1590 = vrcp.pop %v1462
        %v1591 = vrcp.pop %v1463
        %v1592 = vrcp.pop %v1464
        %v1593 = vrcp.pop %v1465
        %v1594 = vrcp.pop %v1466
        %v1595 = vrcp.pop %v1467
        %v1596 = vrcp.pop %v1468
        %v1597 = vrcp.pop %v1469
        %v1598 = vrcp.pop %v1470
        %v1599 = vrcp.pop %v1471
        %v1600 = vrcp.pop %v1472
        %v1601 = vrcp.pop %v1473
        %v1602 = vrcp.pop %v1474
        %v1603 = vrcp.pop %v1475
        %v1604 = vrcp.pop %v1476
        %v1605 = vpack.c.bf16 %v1479, %v1477
        %v1606 = vpack.c.bf16 %v1480, %v1478
        %v1607 = vpack.c.bf16 %v1483, %v1481
        %v1608 = vpack.c.bf16 %v1484, %v1482
        %v1609 = vpack.c.bf16 %v1487, %v1485
        %v1610 = vpack.c.bf16 %v1488, %v1486
        %v1611 = vpack.c.bf16 %v1491, %v1489
        %v1612 = vpack.c.bf16 %v1492, %v1490
        %v1613 = vpack.c.bf16 %v1495, %v1493
        %v1614 = vpack.c.bf16 %v1496, %v1494
        %v1615 = vpack.c.bf16 %v1499, %v1497
        %v1616 = vpack.c.bf16 %v1500, %v1498
        %v1617 = vpack.c.bf16 %v1503, %v1501
        %v1618 = vpack.c.bf16 %v1504, %v1502
        %v1619 = vpack.c.bf16 %v1507, %v1505
        %v1620 = vpack.c.bf16 %v1508, %v1506
        %v1621 = vpack.c.bf16 %v1511, %v1509
        %v1622 = vpack.c.bf16 %v1512, %v1510
        %v1623 = vpack.c.bf16 %v1515, %v1513
        %v1624 = vpack.c.bf16 %v1516, %v1514
        %v1625 = vpack.c.bf16 %v1519, %v1517
        %v1626 = vpack.c.bf16 %v1520, %v1518
        %v1627 = vpack.c.bf16 %v1523, %v1521
        %v1628 = vpack.c.bf16 %v1524, %v1522
        %v1629 = vpack.c.bf16 %v1527, %v1525
        %v1630 = vpack.c.bf16 %v1528, %v1526
        %v1631 = vpack.c.bf16 %v1531, %v1529
        %v1632 = vpack.c.bf16 %v1532, %v1530
        %v1633 = vpack.c.bf16 %v1535, %v1533
        %v1634 = vpack.c.bf16 %v1536, %v1534
        %v1635 = vpack.c.bf16 %v1539, %v1537
        %v1636 = vpack.c.bf16 %v1540, %v1538
        %v1637 = vpack.c.bf16 %v1543, %v1541
        %v1638 = vpack.c.bf16 %v1544, %v1542
        %v1639 = vpack.c.bf16 %v1547, %v1545
        %v1640 = vpack.c.bf16 %v1548, %v1546
        %v1641 = vpack.c.bf16 %v1551, %v1549
        %v1642 = vpack.c.bf16 %v1552, %v1550
        %v1643 = vpack.c.bf16 %v1555, %v1553
        %v1644 = vpack.c.bf16 %v1556, %v1554
        %v1645 = vpack.c.bf16 %v1559, %v1557
        %v1646 = vpack.c.bf16 %v1560, %v1558
        %v1647 = vpack.c.bf16 %v1563, %v1561
        %v1648 = vpack.c.bf16 %v1564, %v1562
        %v1649 = vpack.c.bf16 %v1567, %v1565
        %v1650 = vpack.c.bf16 %v1568, %v1566
        %v1651 = vpack.c.bf16 %v1571, %v1569
        %v1652 = vpack.c.bf16 %v1572, %v1570
        %v1653 = vpack.c.bf16 %v1575, %v1573
        %v1654 = vpack.c.bf16 %v1576, %v1574
        %v1655 = vpack.c.bf16 %v1579, %v1577
        %v1656 = vpack.c.bf16 %v1580, %v1578
        %v1657 = vpack.c.bf16 %v1583, %v1581
        %v1658 = vpack.c.bf16 %v1584, %v1582
        %v1659 = vpack.c.bf16 %v1587, %v1585
        %v1660 = vpack.c.bf16 %v1588, %v1586
        %v1661 = vpack.c.bf16 %v1591, %v1589
        %v1662 = vpack.c.bf16 %v1592, %v1590
        %v1663 = vpack.c.bf16 %v1595, %v1593
        %v1664 = vpack.c.bf16 %v1596, %v1594
        %v1665 = vpack.c.bf16 %v1599, %v1597
        %v1666 = vpack.c.bf16 %v1600, %v1598
        %v1667 = vpack.c.bf16 %v1603, %v1601
        %v1668 = vpack.c.bf16 %v1604, %v1602
        %v1669 = vmul.bf16 %v1605, 1065893768
        %v1670 = vmul.bf16 %v1606, 1065893768
        %v1671 = vmul.bf16 %v1607, 1065893768
        %v1672 = vmul.bf16 %v1608, 1065893768
        %v1673 = vmul.bf16 %v1609, 1065893768
        %v1674 = vmul.bf16 %v1610, 1065893768
        %v1675 = vmul.bf16 %v1611, 1065893768
        %v1676 = vmul.bf16 %v1612, 1065893768
        %v1677 = vmul.bf16 %v1613, 1065893768
        %v1678 = vmul.bf16 %v1614, 1065893768
        %v1679 = vmul.bf16 %v1615, 1065893768
        %v1680 = vmul.bf16 %v1616, 1065893768
        %v1681 = vmul.bf16 %v1617, 1065893768
        %v1682 = vmul.bf16 %v1618, 1065893768
        %v1683 = vmul.bf16 %v1619, 1065893768
        %v1684 = vmul.bf16 %v1620, 1065893768
        %v1685 = vmul.bf16 %v1621, 1065893768
        %v1686 = vmul.bf16 %v1622, 1065893768
        %v1687 = vmul.bf16 %v1623, 1065893768
        %v1688 = vmul.bf16 %v1624, 1065893768
        %v1689 = vmul.bf16 %v1625, 1065893768
        %v1690 = vmul.bf16 %v1626, 1065893768
        %v1691 = vmul.bf16 %v1627, 1065893768
        %v1692 = vmul.bf16 %v1628, 1065893768
        %v1693 = vmul.bf16 %v1629, 1065893768
        %v1694 = vmul.bf16 %v1630, 1065893768
        %v1695 = vmul.bf16 %v1631, 1065893768
        %v1696 = vmul.bf16 %v1632, 1065893768
        %v1697 = vmul.bf16 %v1633, 1065893768
        %v1698 = vmul.bf16 %v1634, 1065893768
        %v1699 = vmul.bf16 %v1635, 1065893768
        %v1700 = vmul.bf16 %v1636, 1065893768
        %v1701 = vmul.bf16 %v1637, 1065893768
        %v1702 = vmul.bf16 %v1638, 1065893768
        %v1703 = vmul.bf16 %v1639, 1065893768
        %v1704 = vmul.bf16 %v1640, 1065893768
        %v1705 = vmul.bf16 %v1641, 1065893768
        %v1706 = vmul.bf16 %v1642, 1065893768
        %v1707 = vmul.bf16 %v1643, 1065893768
        %v1708 = vmul.bf16 %v1644, 1065893768
        %v1709 = vmul.bf16 %v1645, 1065893768
        %v1710 = vmul.bf16 %v1646, 1065893768
        %v1711 = vmul.bf16 %v1647, 1065893768
        %v1712 = vmul.bf16 %v1648, 1065893768
        %v1713 = vmul.bf16 %v1649, 1065893768
        %v1714 = vmul.bf16 %v1650, 1065893768
        %v1715 = vmul.bf16 %v1651, 1065893768
        %v1716 = vmul.bf16 %v1652, 1065893768
        %v1717 = vmul.bf16 %v1653, 1065893768
        %v1718 = vmul.bf16 %v1654, 1065893768
        %v1719 = vmul.bf16 %v1655, 1065893768
        %v1720 = vmul.bf16 %v1656, 1065893768
        %v1721 = vmul.bf16 %v1657, 1065893768
        %v1722 = vmul.bf16 %v1658, 1065893768
        %v1723 = vmul.bf16 %v1659, 1065893768
        %v1724 = vmul.bf16 %v1660, 1065893768
        %v1725 = vmul.bf16 %v1661, 1065893768
        %v1726 = vmul.bf16 %v1662, 1065893768
        %v1727 = vmul.bf16 %v1663, 1065893768
        %v1728 = vmul.bf16 %v1664, 1065893768
        %v1729 = vmul.bf16 %v1665, 1065893768
        %v1730 = vmul.bf16 %v1666, 1065893768
        %v1731 = vmul.bf16 %v1667, 1065893768
        %v1732 = vmul.bf16 %v1668, 1065893768
        %v1733 = vadd.bf16 %v1669, 3216687034
        %v1734 = vadd.bf16 %v1670, 3216687034
        %v1735 = vadd.bf16 %v1671, 3216687034
        %v1736 = vadd.bf16 %v1672, 3216687034
        %v1737 = vadd.bf16 %v1673, 3216687034
        %v1738 = vadd.bf16 %v1674, 3216687034
        %v1739 = vadd.bf16 %v1675, 3216687034
        %v1740 = vadd.bf16 %v1676, 3216687034
        %v1741 = vadd.bf16 %v1677, 3216687034
        %v1742 = vadd.bf16 %v1678, 3216687034
        %v1743 = vadd.bf16 %v1679, 3216687034
        %v1744 = vadd.bf16 %v1680, 3216687034
        %v1745 = vadd.bf16 %v1681, 3216687034
        %v1746 = vadd.bf16 %v1682, 3216687034
        %v1747 = vadd.bf16 %v1683, 3216687034
        %v1748 = vadd.bf16 %v1684, 3216687034
        %v1749 = vadd.bf16 %v1685, 3216687034
        %v1750 = vadd.bf16 %v1686, 3216687034
        %v1751 = vadd.bf16 %v1687, 3216687034
        %v1752 = vadd.bf16 %v1688, 3216687034
        %v1753 = vadd.bf16 %v1689, 3216687034
        %v1754 = vadd.bf16 %v1690, 3216687034
        %v1755 = vadd.bf16 %v1691, 3216687034
        %v1756 = vadd.bf16 %v1692, 3216687034
        %v1757 = vadd.bf16 %v1693, 3216687034
        %v1758 = vadd.bf16 %v1694, 3216687034
        %v1759 = vadd.bf16 %v1695, 3216687034
        %v1760 = vadd.bf16 %v1696, 3216687034
        %v1761 = vadd.bf16 %v1697, 3216687034
        %v1762 = vadd.bf16 %v1698, 3216687034
        %v1763 = vadd.bf16 %v1699, 3216687034
        %v1764 = vadd.bf16 %v1700, 3216687034
        %v1765 = vadd.bf16 %v1701, 3216687034
        %v1766 = vadd.bf16 %v1702, 3216687034
        %v1767 = vadd.bf16 %v1703, 3216687034
        %v1768 = vadd.bf16 %v1704, 3216687034
        %v1769 = vadd.bf16 %v1705, 3216687034
        %v1770 = vadd.bf16 %v1706, 3216687034
        %v1771 = vadd.bf16 %v1707, 3216687034
        %v1772 = vadd.bf16 %v1708, 3216687034
        %v1773 = vadd.bf16 %v1709, 3216687034
        %v1774 = vadd.bf16 %v1710, 3216687034
        %v1775 = vadd.bf16 %v1711, 3216687034
        %v1776 = vadd.bf16 %v1712, 3216687034
        %v1777 = vadd.bf16 %v1713, 3216687034
        %v1778 = vadd.bf16 %v1714, 3216687034
        %v1779 = vadd.bf16 %v1715, 3216687034
        %v1780 = vadd.bf16 %v1716, 3216687034
        %v1781 = vadd.bf16 %v1717, 3216687034
        %v1782 = vadd.bf16 %v1718, 3216687034
        %v1783 = vadd.bf16 %v1719, 3216687034
        %v1784 = vadd.bf16 %v1720, 3216687034
        %v1785 = vadd.bf16 %v1721, 3216687034
        %v1786 = vadd.bf16 %v1722, 3216687034
        %v1787 = vadd.bf16 %v1723, 3216687034
        %v1788 = vadd.bf16 %v1724, 3216687034
        %v1789 = vadd.bf16 %v1725, 3216687034
        %v1790 = vadd.bf16 %v1726, 3216687034
        %v1791 = vadd.bf16 %v1727, 3216687034
        %v1792 = vadd.bf16 %v1728, 3216687034
        %v1793 = vadd.bf16 %v1729, 3216687034
        %v1794 = vadd.bf16 %v1730, 3216687034
        %v1795 = vadd.bf16 %v1731, 3216687034
        %v1796 = vadd.bf16 %v1732, 3216687034
        %v1797 = vmul.bf16 %v1733, %v1605
        %v1798 = vmul.bf16 %v1734, %v1606
        %v1799 = vmul.bf16 %v1735, %v1607
        %v1800 = vmul.bf16 %v1736, %v1608
        %v1801 = vmul.bf16 %v1737, %v1609
        %v1802 = vmul.bf16 %v1738, %v1610
        %v1803 = vmul.bf16 %v1739, %v1611
        %v1804 = vmul.bf16 %v1740, %v1612
        %v1805 = vmul.bf16 %v1741, %v1613
        %v1806 = vmul.bf16 %v1742, %v1614
        %v1807 = vmul.bf16 %v1743, %v1615
        %v1808 = vmul.bf16 %v1744, %v1616
        %v1809 = vmul.bf16 %v1745, %v1617
        %v1810 = vmul.bf16 %v1746, %v1618
        %v1811 = vmul.bf16 %v1747, %v1619
        %v1812 = vmul.bf16 %v1748, %v1620
        %v1813 = vmul.bf16 %v1749, %v1621
        %v1814 = vmul.bf16 %v1750, %v1622
        %v1815 = vmul.bf16 %v1751, %v1623
        %v1816 = vmul.bf16 %v1752, %v1624
        %v1817 = vmul.bf16 %v1753, %v1625
        %v1818 = vmul.bf16 %v1754, %v1626
        %v1819 = vmul.bf16 %v1755, %v1627
        %v1820 = vmul.bf16 %v1756, %v1628
        %v1821 = vmul.bf16 %v1757, %v1629
        %v1822 = vmul.bf16 %v1758, %v1630
        %v1823 = vmul.bf16 %v1759, %v1631
        %v1824 = vmul.bf16 %v1760, %v1632
        %v1825 = vmul.bf16 %v1761, %v1633
        %v1826 = vmul.bf16 %v1762, %v1634
        %v1827 = vmul.bf16 %v1763, %v1635
        %v1828 = vmul.bf16 %v1764, %v1636
        %v1829 = vmul.bf16 %v1765, %v1637
        %v1830 = vmul.bf16 %v1766, %v1638
        %v1831 = vmul.bf16 %v1767, %v1639
        %v1832 = vmul.bf16 %v1768, %v1640
        %v1833 = vmul.bf16 %v1769, %v1641
        %v1834 = vmul.bf16 %v1770, %v1642
        %v1835 = vmul.bf16 %v1771, %v1643
        %v1836 = vmul.bf16 %v1772, %v1644
        %v1837 = vmul.bf16 %v1773, %v1645
        %v1838 = vmul.bf16 %v1774, %v1646
        %v1839 = vmul.bf16 %v1775, %v1647
        %v1840 = vmul.bf16 %v1776, %v1648
        %v1841 = vmul.bf16 %v1777, %v1649
        %v1842 = vmul.bf16 %v1778, %v1650
        %v1843 = vmul.bf16 %v1779, %v1651
        %v1844 = vmul.bf16 %v1780, %v1652
        %v1845 = vmul.bf16 %v1781, %v1653
        %v1846 = vmul.bf16 %v1782, %v1654
        %v1847 = vmul.bf16 %v1783, %v1655
        %v1848 = vmul.bf16 %v1784, %v1656
        %v1849 = vmul.bf16 %v1785, %v1657
        %v1850 = vmul.bf16 %v1786, %v1658
        %v1851 = vmul.bf16 %v1787, %v1659
        %v1852 = vmul.bf16 %v1788, %v1660
        %v1853 = vmul.bf16 %v1789, %v1661
        %v1854 = vmul.bf16 %v1790, %v1662
        %v1855 = vmul.bf16 %v1791, %v1663
        %v1856 = vmul.bf16 %v1792, %v1664
        %v1857 = vmul.bf16 %v1793, %v1665
        %v1858 = vmul.bf16 %v1794, %v1666
        %v1859 = vmul.bf16 %v1795, %v1667
        %v1860 = vmul.bf16 %v1796, %v1668
        %v1861 = vadd.bf16 %v1797, 1068908470
        %v1862 = vadd.bf16 %v1798, 1068908470
        %v1863 = vadd.bf16 %v1799, 1068908470
        %v1864 = vadd.bf16 %v1800, 1068908470
        %v1865 = vadd.bf16 %v1801, 1068908470
        %v1866 = vadd.bf16 %v1802, 1068908470
        %v1867 = vadd.bf16 %v1803, 1068908470
        %v1868 = vadd.bf16 %v1804, 1068908470
        %v1869 = vadd.bf16 %v1805, 1068908470
        %v1870 = vadd.bf16 %v1806, 1068908470
        %v1871 = vadd.bf16 %v1807, 1068908470
        %v1872 = vadd.bf16 %v1808, 1068908470
        %v1873 = vadd.bf16 %v1809, 1068908470
        %v1874 = vadd.bf16 %v1810, 1068908470
        %v1875 = vadd.bf16 %v1811, 1068908470
        %v1876 = vadd.bf16 %v1812, 1068908470
        %v1877 = vadd.bf16 %v1813, 1068908470
        %v1878 = vadd.bf16 %v1814, 1068908470
        %v1879 = vadd.bf16 %v1815, 1068908470
        %v1880 = vadd.bf16 %v1816, 1068908470
        %v1881 = vadd.bf16 %v1817, 1068908470
        %v1882 = vadd.bf16 %v1818, 1068908470
        %v1883 = vadd.bf16 %v1819, 1068908470
        %v1884 = vadd.bf16 %v1820, 1068908470
        %v1885 = vadd.bf16 %v1821, 1068908470
        %v1886 = vadd.bf16 %v1822, 1068908470
        %v1887 = vadd.bf16 %v1823, 1068908470
        %v1888 = vadd.bf16 %v1824, 1068908470
        %v1889 = vadd.bf16 %v1825, 1068908470
        %v1890 = vadd.bf16 %v1826, 1068908470
        %v1891 = vadd.bf16 %v1827, 1068908470
        %v1892 = vadd.bf16 %v1828, 1068908470
        %v1893 = vadd.bf16 %v1829, 1068908470
        %v1894 = vadd.bf16 %v1830, 1068908470
        %v1895 = vadd.bf16 %v1831, 1068908470
        %v1896 = vadd.bf16 %v1832, 1068908470
        %v1897 = vadd.bf16 %v1833, 1068908470
        %v1898 = vadd.bf16 %v1834, 1068908470
        %v1899 = vadd.bf16 %v1835, 1068908470
        %v1900 = vadd.bf16 %v1836, 1068908470
        %v1901 = vadd.bf16 %v1837, 1068908470
        %v1902 = vadd.bf16 %v1838, 1068908470
        %v1903 = vadd.bf16 %v1839, 1068908470
        %v1904 = vadd.bf16 %v1840, 1068908470
        %v1905 = vadd.bf16 %v1841, 1068908470
        %v1906 = vadd.bf16 %v1842, 1068908470
        %v1907 = vadd.bf16 %v1843, 1068908470
        %v1908 = vadd.bf16 %v1844, 1068908470
        %v1909 = vadd.bf16 %v1845, 1068908470
        %v1910 = vadd.bf16 %v1846, 1068908470
        %v1911 = vadd.bf16 %v1847, 1068908470
        %v1912 = vadd.bf16 %v1848, 1068908470
        %v1913 = vadd.bf16 %v1849, 1068908470
        %v1914 = vadd.bf16 %v1850, 1068908470
        %v1915 = vadd.bf16 %v1851, 1068908470
        %v1916 = vadd.bf16 %v1852, 1068908470
        %v1917 = vadd.bf16 %v1853, 1068908470
        %v1918 = vadd.bf16 %v1854, 1068908470
        %v1919 = vadd.bf16 %v1855, 1068908470
        %v1920 = vadd.bf16 %v1856, 1068908470
        %v1921 = vadd.bf16 %v1857, 1068908470
        %v1922 = vadd.bf16 %v1858, 1068908470
        %v1923 = vadd.bf16 %v1859, 1068908470
        %v1924 = vadd.bf16 %v1860, 1068908470
        %v1925 = vmul.bf16 %v1861, %v1605
        %v1926 = vmul.bf16 %v1862, %v1606
        %v1927 = vmul.bf16 %v1863, %v1607
        %v1928 = vmul.bf16 %v1864, %v1608
        %v1929 = vmul.bf16 %v1865, %v1609
        %v1930 = vmul.bf16 %v1866, %v1610
        %v1931 = vmul.bf16 %v1867, %v1611
        %v1932 = vmul.bf16 %v1868, %v1612
        %v1933 = vmul.bf16 %v1869, %v1613
        %v1934 = vmul.bf16 %v1870, %v1614
        %v1935 = vmul.bf16 %v1871, %v1615
        %v1936 = vmul.bf16 %v1872, %v1616
        %v1937 = vmul.bf16 %v1873, %v1617
        %v1938 = vmul.bf16 %v1874, %v1618
        %v1939 = vmul.bf16 %v1875, %v1619
        %v1940 = vmul.bf16 %v1876, %v1620
        %v1941 = vmul.bf16 %v1877, %v1621
        %v1942 = vmul.bf16 %v1878, %v1622
        %v1943 = vmul.bf16 %v1879, %v1623
        %v1944 = vmul.bf16 %v1880, %v1624
        %v1945 = vmul.bf16 %v1881, %v1625
        %v1946 = vmul.bf16 %v1882, %v1626
        %v1947 = vmul.bf16 %v1883, %v1627
        %v1948 = vmul.bf16 %v1884, %v1628
        %v1949 = vmul.bf16 %v1885, %v1629
        %v1950 = vmul.bf16 %v1886, %v1630
        %v1951 = vmul.bf16 %v1887, %v1631
        %v1952 = vmul.bf16 %v1888, %v1632
        %v1953 = vmul.bf16 %v1889, %v1633
        %v1954 = vmul.bf16 %v1890, %v1634
        %v1955 = vmul.bf16 %v1891, %v1635
        %v1956 = vmul.bf16 %v1892, %v1636
        %v1957 = vmul.bf16 %v1893, %v1637
        %v1958 = vmul.bf16 %v1894, %v1638
        %v1959 = vmul.bf16 %v1895, %v1639
        %v1960 = vmul.bf16 %v1896, %v1640
        %v1961 = vmul.bf16 %v1897, %v1641
        %v1962 = vmul.bf16 %v1898, %v1642
        %v1963 = vmul.bf16 %v1899, %v1643
        %v1964 = vmul.bf16 %v1900, %v1644
        %v1965 = vmul.bf16 %v1901, %v1645
        %v1966 = vmul.bf16 %v1902, %v1646
        %v1967 = vmul.bf16 %v1903, %v1647
        %v1968 = vmul.bf16 %v1904, %v1648
        %v1969 = vmul.bf16 %v1905, %v1649
        %v1970 = vmul.bf16 %v1906, %v1650
        %v1971 = vmul.bf16 %v1907, %v1651
        %v1972 = vmul.bf16 %v1908, %v1652
        %v1973 = vmul.bf16 %v1909, %v1653
        %v1974 = vmul.bf16 %v1910, %v1654
        %v1975 = vmul.bf16 %v1911, %v1655
        %v1976 = vmul.bf16 %v1912, %v1656
        %v1977 = vmul.bf16 %v1913, %v1657
        %v1978 = vmul.bf16 %v1914, %v1658
        %v1979 = vmul.bf16 %v1915, %v1659
        %v1980 = vmul.bf16 %v1916, %v1660
        %v1981 = vmul.bf16 %v1917, %v1661
        %v1982 = vmul.bf16 %v1918, %v1662
        %v1983 = vmul.bf16 %v1919, %v1663
        %v1984 = vmul.bf16 %v1920, %v1664
        %v1985 = vmul.bf16 %v1921, %v1665
        %v1986 = vmul.bf16 %v1922, %v1666
        %v1987 = vmul.bf16 %v1923, %v1667
        %v1988 = vmul.bf16 %v1924, %v1668
        %v1989 = vadd.bf16 %v1925, 3197288082
        %v1990 = vadd.bf16 %v1926, 3197288082
        %v1991 = vadd.bf16 %v1927, 3197288082
        %v1992 = vadd.bf16 %v1928, 3197288082
        %v1993 = vadd.bf16 %v1929, 3197288082
        %v1994 = vadd.bf16 %v1930, 3197288082
        %v1995 = vadd.bf16 %v1931, 3197288082
        %v1996 = vadd.bf16 %v1932, 3197288082
        %v1997 = vadd.bf16 %v1933, 3197288082
        %v1998 = vadd.bf16 %v1934, 3197288082
        %v1999 = vadd.bf16 %v1935, 3197288082
        %v2000 = vadd.bf16 %v1936, 3197288082
        %v2001 = vadd.bf16 %v1937, 3197288082
        %v2002 = vadd.bf16 %v1938, 3197288082
        %v2003 = vadd.bf16 %v1939, 3197288082
        %v2004 = vadd.bf16 %v1940, 3197288082
        %v2005 = vadd.bf16 %v1941, 3197288082
        %v2006 = vadd.bf16 %v1942, 3197288082
        %v2007 = vadd.bf16 %v1943, 3197288082
        %v2008 = vadd.bf16 %v1944, 3197288082
        %v2009 = vadd.bf16 %v1945, 3197288082
        %v2010 = vadd.bf16 %v1946, 3197288082
        %v2011 = vadd.bf16 %v1947, 3197288082
        %v2012 = vadd.bf16 %v1948, 3197288082
        %v2013 = vadd.bf16 %v1949, 3197288082
        %v2014 = vadd.bf16 %v1950, 3197288082
        %v2015 = vadd.bf16 %v1951, 3197288082
        %v2016 = vadd.bf16 %v1952, 3197288082
        %v2017 = vadd.bf16 %v1953, 3197288082
        %v2018 = vadd.bf16 %v1954, 3197288082
        %v2019 = vadd.bf16 %v1955, 3197288082
        %v2020 = vadd.bf16 %v1956, 3197288082
        %v2021 = vadd.bf16 %v1957, 3197288082
        %v2022 = vadd.bf16 %v1958, 3197288082
        %v2023 = vadd.bf16 %v1959, 3197288082
        %v2024 = vadd.bf16 %v1960, 3197288082
        %v2025 = vadd.bf16 %v1961, 3197288082
        %v2026 = vadd.bf16 %v1962, 3197288082
        %v2027 = vadd.bf16 %v1963, 3197288082
        %v2028 = vadd.bf16 %v1964, 3197288082
        %v2029 = vadd.bf16 %v1965, 3197288082
        %v2030 = vadd.bf16 %v1966, 3197288082
        %v2031 = vadd.bf16 %v1967, 3197288082
        %v2032 = vadd.bf16 %v1968, 3197288082
        %v2033 = vadd.bf16 %v1969, 3197288082
        %v2034 = vadd.bf16 %v1970, 3197288082
        %v2035 = vadd.bf16 %v1971, 3197288082
        %v2036 = vadd.bf16 %v1972, 3197288082
        %v2037 = vadd.bf16 %v1973, 3197288082
        %v2038 = vadd.bf16 %v1974, 3197288082
        %v2039 = vadd.bf16 %v1975, 3197288082
        %v2040 = vadd.bf16 %v1976, 3197288082
        %v2041 = vadd.bf16 %v1977, 3197288082
        %v2042 = vadd.bf16 %v1978, 3197288082
        %v2043 = vadd.bf16 %v1979, 3197288082
        %v2044 = vadd.bf16 %v1980, 3197288082
        %v2045 = vadd.bf16 %v1981, 3197288082
        %v2046 = vadd.bf16 %v1982, 3197288082
        %v2047 = vadd.bf16 %v1983, 3197288082
        %v2048 = vadd.bf16 %v1984, 3197288082
        %v2049 = vadd.bf16 %v1985, 3197288082
        %v2050 = vadd.bf16 %v1986, 3197288082
        %v2051 = vadd.bf16 %v1987, 3197288082
        %v2052 = vadd.bf16 %v1988, 3197288082
        %v2053 = vmul.bf16 %v1989, %v1605
        %v2054 = vmul.bf16 %v1990, %v1606
        %v2055 = vmul.bf16 %v1991, %v1607
        %v2056 = vmul.bf16 %v1992, %v1608
        %v2057 = vmul.bf16 %v1993, %v1609
        %v2058 = vmul.bf16 %v1994, %v1610
        %v2059 = vmul.bf16 %v1995, %v1611
        %v2060 = vmul.bf16 %v1996, %v1612
        %v2061 = vmul.bf16 %v1997, %v1613
        %v2062 = vmul.bf16 %v1998, %v1614
        %v2063 = vmul.bf16 %v1999, %v1615
        %v2064 = vmul.bf16 %v2000, %v1616
        %v2065 = vmul.bf16 %v2001, %v1617
        %v2066 = vmul.bf16 %v2002, %v1618
        %v2067 = vmul.bf16 %v2003, %v1619
        %v2068 = vmul.bf16 %v2004, %v1620
        %v2069 = vmul.bf16 %v2005, %v1621
        %v2070 = vmul.bf16 %v2006, %v1622
        %v2071 = vmul.bf16 %v2007, %v1623
        %v2072 = vmul.bf16 %v2008, %v1624
        %v2073 = vmul.bf16 %v2009, %v1625
        %v2074 = vmul.bf16 %v2010, %v1626
        %v2075 = vmul.bf16 %v2011, %v1627
        %v2076 = vmul.bf16 %v2012, %v1628
        %v2077 = vmul.bf16 %v2013, %v1629
        %v2078 = vmul.bf16 %v2014, %v1630
        %v2079 = vmul.bf16 %v2015, %v1631
        %v2080 = vmul.bf16 %v2016, %v1632
        %v2081 = vmul.bf16 %v2017, %v1633
        %v2082 = vmul.bf16 %v2018, %v1634
        %v2083 = vmul.bf16 %v2019, %v1635
        %v2084 = vmul.bf16 %v2020, %v1636
        %v2085 = vmul.bf16 %v2021, %v1637
        %v2086 = vmul.bf16 %v2022, %v1638
        %v2087 = vmul.bf16 %v2023, %v1639
        %v2088 = vmul.bf16 %v2024, %v1640
        %v2089 = vmul.bf16 %v2025, %v1641
        %v2090 = vmul.bf16 %v2026, %v1642
        %v2091 = vmul.bf16 %v2027, %v1643
        %v2092 = vmul.bf16 %v2028, %v1644
        %v2093 = vmul.bf16 %v2029, %v1645
        %v2094 = vmul.bf16 %v2030, %v1646
        %v2095 = vmul.bf16 %v2031, %v1647
        %v2096 = vmul.bf16 %v2032, %v1648
        %v2097 = vmul.bf16 %v2033, %v1649
        %v2098 = vmul.bf16 %v2034, %v1650
        %v2099 = vmul.bf16 %v2035, %v1651
        %v2100 = vmul.bf16 %v2036, %v1652
        %v2101 = vmul.bf16 %v2037, %v1653
        %v2102 = vmul.bf16 %v2038, %v1654
        %v2103 = vmul.bf16 %v2039, %v1655
        %v2104 = vmul.bf16 %v2040, %v1656
        %v2105 = vmul.bf16 %v2041, %v1657
        %v2106 = vmul.bf16 %v2042, %v1658
        %v2107 = vmul.bf16 %v2043, %v1659
        %v2108 = vmul.bf16 %v2044, %v1660
        %v2109 = vmul.bf16 %v2045, %v1661
        %v2110 = vmul.bf16 %v2046, %v1662
        %v2111 = vmul.bf16 %v2047, %v1663
        %v2112 = vmul.bf16 %v2048, %v1664
        %v2113 = vmul.bf16 %v2049, %v1665
        %v2114 = vmul.bf16 %v2050, %v1666
        %v2115 = vmul.bf16 %v2051, %v1667
        %v2116 = vmul.bf16 %v2052, %v1668
        %v2117 = vadd.bf16 %v2053, 1048723074
        %v2118 = vadd.bf16 %v2054, 1048723074
        %v2119 = vadd.bf16 %v2055, 1048723074
        %v2120 = vadd.bf16 %v2056, 1048723074
        %v2121 = vadd.bf16 %v2057, 1048723074
        %v2122 = vadd.bf16 %v2058, 1048723074
        %v2123 = vadd.bf16 %v2059, 1048723074
        %v2124 = vadd.bf16 %v2060, 1048723074
        %v2125 = vadd.bf16 %v2061, 1048723074
        %v2126 = vadd.bf16 %v2062, 1048723074
        %v2127 = vadd.bf16 %v2063, 1048723074
        %v2128 = vadd.bf16 %v2064, 1048723074
        %v2129 = vadd.bf16 %v2065, 1048723074
        %v2130 = vadd.bf16 %v2066, 1048723074
        %v2131 = vadd.bf16 %v2067, 1048723074
        %v2132 = vadd.bf16 %v2068, 1048723074
        %v2133 = vadd.bf16 %v2069, 1048723074
        %v2134 = vadd.bf16 %v2070, 1048723074
        %v2135 = vadd.bf16 %v2071, 1048723074
        %v2136 = vadd.bf16 %v2072, 1048723074
        %v2137 = vadd.bf16 %v2073, 1048723074
        %v2138 = vadd.bf16 %v2074, 1048723074
        %v2139 = vadd.bf16 %v2075, 1048723074
        %v2140 = vadd.bf16 %v2076, 1048723074
        %v2141 = vadd.bf16 %v2077, 1048723074
        %v2142 = vadd.bf16 %v2078, 1048723074
        %v2143 = vadd.bf16 %v2079, 1048723074
        %v2144 = vadd.bf16 %v2080, 1048723074
        %v2145 = vadd.bf16 %v2081, 1048723074
        %v2146 = vadd.bf16 %v2082, 1048723074
        %v2147 = vadd.bf16 %v2083, 1048723074
        %v2148 = vadd.bf16 %v2084, 1048723074
        %v2149 = vadd.bf16 %v2085, 1048723074
        %v2150 = vadd.bf16 %v2086, 1048723074
        %v2151 = vadd.bf16 %v2087, 1048723074
        %v2152 = vadd.bf16 %v2088, 1048723074
        %v2153 = vadd.bf16 %v2089, 1048723074
        %v2154 = vadd.bf16 %v2090, 1048723074
        %v2155 = vadd.bf16 %v2091, 1048723074
        %v2156 = vadd.bf16 %v2092, 1048723074
        %v2157 = vadd.bf16 %v2093, 1048723074
        %v2158 = vadd.bf16 %v2094, 1048723074
        %v2159 = vadd.bf16 %v2095, 1048723074
        %v2160 = vadd.bf16 %v2096, 1048723074
        %v2161 = vadd.bf16 %v2097, 1048723074
        %v2162 = vadd.bf16 %v2098, 1048723074
        %v2163 = vadd.bf16 %v2099, 1048723074
        %v2164 = vadd.bf16 %v2100, 1048723074
        %v2165 = vadd.bf16 %v2101, 1048723074
        %v2166 = vadd.bf16 %v2102, 1048723074
        %v2167 = vadd.bf16 %v2103, 1048723074
        %v2168 = vadd.bf16 %v2104, 1048723074
        %v2169 = vadd.bf16 %v2105, 1048723074
        %v2170 = vadd.bf16 %v2106, 1048723074
        %v2171 = vadd.bf16 %v2107, 1048723074
        %v2172 = vadd.bf16 %v2108, 1048723074
        %v2173 = vadd.bf16 %v2109, 1048723074
        %v2174 = vadd.bf16 %v2110, 1048723074
        %v2175 = vadd.bf16 %v2111, 1048723074
        %v2176 = vadd.bf16 %v2112, 1048723074
        %v2177 = vadd.bf16 %v2113, 1048723074
        %v2178 = vadd.bf16 %v2114, 1048723074
        %v2179 = vadd.bf16 %v2115, 1048723074
        %v2180 = vadd.bf16 %v2116, 1048723074
        %v2181 = vmul.bf16 %v2117, %v1605
        %v2182 = vmul.bf16 %v2118, %v1606
        %v2183 = vmul.bf16 %v2119, %v1607
        %v2184 = vmul.bf16 %v2120, %v1608
        %v2185 = vmul.bf16 %v2121, %v1609
        %v2186 = vmul.bf16 %v2122, %v1610
        %v2187 = vmul.bf16 %v2123, %v1611
        %v2188 = vmul.bf16 %v2124, %v1612
        %v2189 = vmul.bf16 %v2125, %v1613
        %v2190 = vmul.bf16 %v2126, %v1614
        %v2191 = vmul.bf16 %v2127, %v1615
        %v2192 = vmul.bf16 %v2128, %v1616
        %v2193 = vmul.bf16 %v2129, %v1617
        %v2194 = vmul.bf16 %v2130, %v1618
        %v2195 = vmul.bf16 %v2131, %v1619
        %v2196 = vmul.bf16 %v2132, %v1620
        %v2197 = vmul.bf16 %v2133, %v1621
        %v2198 = vmul.bf16 %v2134, %v1622
        %v2199 = vmul.bf16 %v2135, %v1623
        %v2200 = vmul.bf16 %v2136, %v1624
        %v2201 = vmul.bf16 %v2137, %v1625
        %v2202 = vmul.bf16 %v2138, %v1626
        %v2203 = vmul.bf16 %v2139, %v1627
        %v2204 = vmul.bf16 %v2140, %v1628
        %v2205 = vmul.bf16 %v2141, %v1629
        %v2206 = vmul.bf16 %v2142, %v1630
        %v2207 = vmul.bf16 %v2143, %v1631
        %v2208 = vmul.bf16 %v2144, %v1632
        %v2209 = vmul.bf16 %v2145, %v1633
        %v2210 = vmul.bf16 %v2146, %v1634
        %v2211 = vmul.bf16 %v2147, %v1635
        %v2212 = vmul.bf16 %v2148, %v1636
        %v2213 = vmul.bf16 %v2149, %v1637
        %v2214 = vmul.bf16 %v2150, %v1638
        %v2215 = vmul.bf16 %v2151, %v1639
        %v2216 = vmul.bf16 %v2152, %v1640
        %v2217 = vmul.bf16 %v2153, %v1641
        %v2218 = vmul.bf16 %v2154, %v1642
        %v2219 = vmul.bf16 %v2155, %v1643
        %v2220 = vmul.bf16 %v2156, %v1644
        %v2221 = vmul.bf16 %v2157, %v1645
        %v2222 = vmul.bf16 %v2158, %v1646
        %v2223 = vmul.bf16 %v2159, %v1647
        %v2224 = vmul.bf16 %v2160, %v1648
        %v2225 = vmul.bf16 %v2161, %v1649
        %v2226 = vmul.bf16 %v2162, %v1650
        %v2227 = vmul.bf16 %v2163, %v1651
        %v2228 = vmul.bf16 %v2164, %v1652
        %v2229 = vmul.bf16 %v2165, %v1653
        %v2230 = vmul.bf16 %v2166, %v1654
        %v2231 = vmul.bf16 %v2167, %v1655
        %v2232 = vmul.bf16 %v2168, %v1656
        %v2233 = vmul.bf16 %v2169, %v1657
        %v2234 = vmul.bf16 %v2170, %v1658
        %v2235 = vmul.bf16 %v2171, %v1659
        %v2236 = vmul.bf16 %v2172, %v1660
        %v2237 = vmul.bf16 %v2173, %v1661
        %v2238 = vmul.bf16 %v2174, %v1662
        %v2239 = vmul.bf16 %v2175, %v1663
        %v2240 = vmul.bf16 %v2176, %v1664
        %v2241 = vmul.bf16 %v2177, %v1665
        %v2242 = vmul.bf16 %v2178, %v1666
        %v2243 = vmul.bf16 %v2179, %v1667
        %v2244 = vmul.bf16 %v2180, %v1668
        %v2245 = vunpack.c.l.bf16 %v2181
        %v2246 = vunpack.c.l.bf16 %v2182
        %v2247 = vunpack.c.h.bf16 %v2181
        %v2248 = vunpack.c.h.bf16 %v2182
        %v2249 = vunpack.c.l.bf16 %v2183
        %v2250 = vunpack.c.l.bf16 %v2184
        %v2251 = vunpack.c.h.bf16 %v2183
        %v2252 = vunpack.c.h.bf16 %v2184
        %v2253 = vunpack.c.l.bf16 %v2185
        %v2254 = vunpack.c.l.bf16 %v2186
        %v2255 = vunpack.c.h.bf16 %v2185
        %v2256 = vunpack.c.h.bf16 %v2186
        %v2257 = vunpack.c.l.bf16 %v2187
        %v2258 = vunpack.c.l.bf16 %v2188
        %v2259 = vunpack.c.h.bf16 %v2187
        %v2260 = vunpack.c.h.bf16 %v2188
        %v2261 = vunpack.c.l.bf16 %v2189
        %v2262 = vunpack.c.l.bf16 %v2190
        %v2263 = vunpack.c.h.bf16 %v2189
        %v2264 = vunpack.c.h.bf16 %v2190
        %v2265 = vunpack.c.l.bf16 %v2191
        %v2266 = vunpack.c.l.bf16 %v2192
        %v2267 = vunpack.c.h.bf16 %v2191
        %v2268 = vunpack.c.h.bf16 %v2192
        %v2269 = vunpack.c.l.bf16 %v2193
        %v2270 = vunpack.c.l.bf16 %v2194
        %v2271 = vunpack.c.h.bf16 %v2193
        %v2272 = vunpack.c.h.bf16 %v2194
        %v2273 = vunpack.c.l.bf16 %v2195
        %v2274 = vunpack.c.l.bf16 %v2196
        %v2275 = vunpack.c.h.bf16 %v2195
        %v2276 = vunpack.c.h.bf16 %v2196
        %v2277 = vunpack.c.l.bf16 %v2197
        %v2278 = vunpack.c.l.bf16 %v2198
        %v2279 = vunpack.c.h.bf16 %v2197
        %v2280 = vunpack.c.h.bf16 %v2198
        %v2281 = vunpack.c.l.bf16 %v2199
        %v2282 = vunpack.c.l.bf16 %v2200
        %v2283 = vunpack.c.h.bf16 %v2199
        %v2284 = vunpack.c.h.bf16 %v2200
        %v2285 = vunpack.c.l.bf16 %v2201
        %v2286 = vunpack.c.l.bf16 %v2202
        %v2287 = vunpack.c.h.bf16 %v2201
        %v2288 = vunpack.c.h.bf16 %v2202
        %v2289 = vunpack.c.l.bf16 %v2203
        %v2290 = vunpack.c.l.bf16 %v2204
        %v2291 = vunpack.c.h.bf16 %v2203
        %v2292 = vunpack.c.h.bf16 %v2204
        %v2293 = vunpack.c.l.bf16 %v2205
        %v2294 = vunpack.c.l.bf16 %v2206
        %v2295 = vunpack.c.h.bf16 %v2205
        %v2296 = vunpack.c.h.bf16 %v2206
        %v2297 = vunpack.c.l.bf16 %v2207
        %v2298 = vunpack.c.l.bf16 %v2208
        %v2299 = vunpack.c.h.bf16 %v2207
        %v2300 = vunpack.c.h.bf16 %v2208
        %v2301 = vunpack.c.l.bf16 %v2209
        %v2302 = vunpack.c.l.bf16 %v2210
        %v2303 = vunpack.c.h.bf16 %v2209
        %v2304 = vunpack.c.h.bf16 %v2210
        %v2305 = vunpack.c.l.bf16 %v2211
        %v2306 = vunpack.c.l.bf16 %v2212
        %v2307 = vunpack.c.h.bf16 %v2211
        %v2308 = vunpack.c.h.bf16 %v2212
        %v2309 = vunpack.c.l.bf16 %v2213
        %v2310 = vunpack.c.l.bf16 %v2214
        %v2311 = vunpack.c.h.bf16 %v2213
        %v2312 = vunpack.c.h.bf16 %v2214
        %v2313 = vunpack.c.l.bf16 %v2215
        %v2314 = vunpack.c.l.bf16 %v2216
        %v2315 = vunpack.c.h.bf16 %v2215
        %v2316 = vunpack.c.h.bf16 %v2216
        %v2317 = vunpack.c.l.bf16 %v2217
        %v2318 = vunpack.c.l.bf16 %v2218
        %v2319 = vunpack.c.h.bf16 %v2217
        %v2320 = vunpack.c.h.bf16 %v2218
        %v2321 = vunpack.c.l.bf16 %v2219
        %v2322 = vunpack.c.l.bf16 %v2220
        %v2323 = vunpack.c.h.bf16 %v2219
        %v2324 = vunpack.c.h.bf16 %v2220
        %v2325 = vunpack.c.l.bf16 %v2221
        %v2326 = vunpack.c.l.bf16 %v2222
        %v2327 = vunpack.c.h.bf16 %v2221
        %v2328 = vunpack.c.h.bf16 %v2222
        %v2329 = vunpack.c.l.bf16 %v2223
        %v2330 = vunpack.c.l.bf16 %v2224
        %v2331 = vunpack.c.h.bf16 %v2223
        %v2332 = vunpack.c.h.bf16 %v2224
        %v2333 = vunpack.c.l.bf16 %v2225
        %v2334 = vunpack.c.l.bf16 %v2226
        %v2335 = vunpack.c.h.bf16 %v2225
        %v2336 = vunpack.c.h.bf16 %v2226
        %v2337 = vunpack.c.l.bf16 %v2227
        %v2338 = vunpack.c.l.bf16 %v2228
        %v2339 = vunpack.c.h.bf16 %v2227
        %v2340 = vunpack.c.h.bf16 %v2228
        %v2341 = vunpack.c.l.bf16 %v2229
        %v2342 = vunpack.c.l.bf16 %v2230
        %v2343 = vunpack.c.h.bf16 %v2229
        %v2344 = vunpack.c.h.bf16 %v2230
        %v2345 = vunpack.c.l.bf16 %v2231
        %v2346 = vunpack.c.l.bf16 %v2232
        %v2347 = vunpack.c.h.bf16 %v2231
        %v2348 = vunpack.c.h.bf16 %v2232
        %v2349 = vunpack.c.l.bf16 %v2233
        %v2350 = vunpack.c.l.bf16 %v2234
        %v2351 = vunpack.c.h.bf16 %v2233
        %v2352 = vunpack.c.h.bf16 %v2234
        %v2353 = vunpack.c.l.bf16 %v2235
        %v2354 = vunpack.c.l.bf16 %v2236
        %v2355 = vunpack.c.h.bf16 %v2235
        %v2356 = vunpack.c.h.bf16 %v2236
        %v2357 = vunpack.c.l.bf16 %v2237
        %v2358 = vunpack.c.l.bf16 %v2238
        %v2359 = vunpack.c.h.bf16 %v2237
        %v2360 = vunpack.c.h.bf16 %v2238
        %v2361 = vunpack.c.l.bf16 %v2239
        %v2362 = vunpack.c.l.bf16 %v2240
        %v2363 = vunpack.c.h.bf16 %v2239
        %v2364 = vunpack.c.h.bf16 %v2240
        %v2365 = vunpack.c.l.bf16 %v2241
        %v2366 = vunpack.c.l.bf16 %v2242
        %v2367 = vunpack.c.h.bf16 %v2241
        %v2368 = vunpack.c.h.bf16 %v2242
        %v2369 = vunpack.c.l.bf16 %v2243
        %v2370 = vunpack.c.l.bf16 %v2244
        %v2371 = vunpack.c.h.bf16 %v2243
        %v2372 = vunpack.c.h.bf16 %v2244
        %v2373 = vsub.f32 0.0, %v1093
        %v2374 = vsub.f32 0.0, %v1094
        %v2375 = vsub.f32 0.0, %v1095
        %v2376 = vsub.f32 0.0, %v1096
        %v2377 = vsub.f32 0.0, %v1097
        %v2378 = vsub.f32 0.0, %v1098
        %v2379 = vsub.f32 0.0, %v1099
        %v2380 = vsub.f32 0.0, %v1100
        %v2381 = vsub.f32 0.0, %v1101
        %v2382 = vsub.f32 0.0, %v1102
        %v2383 = vsub.f32 0.0, %v1103
        %v2384 = vsub.f32 0.0, %v1104
        %v2385 = vsub.f32 0.0, %v1105
        %v2386 = vsub.f32 0.0, %v1106
        %v2387 = vsub.f32 0.0, %v1107
        %v2388 = vsub.f32 0.0, %v1108
        %v2389 = vsub.f32 0.0, %v1109
        %v2390 = vsub.f32 0.0, %v1110
        %v2391 = vsub.f32 0.0, %v1111
        %v2392 = vsub.f32 0.0, %v1112
        %v2393 = vsub.f32 0.0, %v1113
        %v2394 = vsub.f32 0.0, %v1114
        %v2395 = vsub.f32 0.0, %v1115
        %v2396 = vsub.f32 0.0, %v1116
        %v2397 = vsub.f32 0.0, %v1117
        %v2398 = vsub.f32 0.0, %v1118
        %v2399 = vsub.f32 0.0, %v1119
        %v2400 = vsub.f32 0.0, %v1120
        %v2401 = vsub.f32 0.0, %v1121
        %v2402 = vsub.f32 0.0, %v1122
        %v2403 = vsub.f32 0.0, %v1123
        %v2404 = vsub.f32 0.0, %v1124
        %v2405 = vsub.f32 0.0, %v1125
        %v2406 = vsub.f32 0.0, %v1126
        %v2407 = vsub.f32 0.0, %v1127
        %v2408 = vsub.f32 0.0, %v1128
        %v2409 = vsub.f32 0.0, %v1129
        %v2410 = vsub.f32 0.0, %v1130
        %v2411 = vsub.f32 0.0, %v1131
        %v2412 = vsub.f32 0.0, %v1132
        %v2413 = vsub.f32 0.0, %v1133
        %v2414 = vsub.f32 0.0, %v1134
        %v2415 = vsub.f32 0.0, %v1135
        %v2416 = vsub.f32 0.0, %v1136
        %v2417 = vsub.f32 0.0, %v1137
        %v2418 = vsub.f32 0.0, %v1138
        %v2419 = vsub.f32 0.0, %v1139
        %v2420 = vsub.f32 0.0, %v1140
        %v2421 = vsub.f32 0.0, %v1141
        %v2422 = vsub.f32 0.0, %v1142
        %v2423 = vsub.f32 0.0, %v1143
        %v2424 = vsub.f32 0.0, %v1144
        %v2425 = vsub.f32 0.0, %v1145
        %v2426 = vsub.f32 0.0, %v1146
        %v2427 = vsub.f32 0.0, %v1147
        %v2428 = vsub.f32 0.0, %v1148
        %v2429 = vsub.f32 0.0, %v1149
        %v2430 = vsub.f32 0.0, %v1150
        %v2431 = vsub.f32 0.0, %v1151
        %v2432 = vsub.f32 0.0, %v1152
        %v2433 = vsub.f32 0.0, %v1153
        %v2434 = vsub.f32 0.0, %v1154
        %v2435 = vsub.f32 0.0, %v1155
        %v2436 = vsub.f32 0.0, %v1156
        %v2437 = vsub.f32 0.0, %v1157
        %v2438 = vsub.f32 0.0, %v1158
        %v2439 = vsub.f32 0.0, %v1159
        %v2440 = vsub.f32 0.0, %v1160
        %v2441 = vsub.f32 0.0, %v1161
        %v2442 = vsub.f32 0.0, %v1162
        %v2443 = vsub.f32 0.0, %v1163
        %v2444 = vsub.f32 0.0, %v1164
        %v2445 = vsub.f32 0.0, %v1165
        %v2446 = vsub.f32 0.0, %v1166
        %v2447 = vsub.f32 0.0, %v1167
        %v2448 = vsub.f32 0.0, %v1168
        %v2449 = vsub.f32 0.0, %v1169
        %v2450 = vsub.f32 0.0, %v1170
        %v2451 = vsub.f32 0.0, %v1171
        %v2452 = vsub.f32 0.0, %v1172
        %v2453 = vsub.f32 0.0, %v1173
        %v2454 = vsub.f32 0.0, %v1174
        %v2455 = vsub.f32 0.0, %v1175
        %v2456 = vsub.f32 0.0, %v1176
        %v2457 = vsub.f32 0.0, %v1177
        %v2458 = vsub.f32 0.0, %v1178
        %v2459 = vsub.f32 0.0, %v1179
        %v2460 = vsub.f32 0.0, %v1180
        %v2461 = vsub.f32 0.0, %v1181
        %v2462 = vsub.f32 0.0, %v1182
        %v2463 = vsub.f32 0.0, %v1183
        %v2464 = vsub.f32 0.0, %v1184
        %v2465 = vsub.f32 0.0, %v1185
        %v2466 = vsub.f32 0.0, %v1186
        %v2467 = vsub.f32 0.0, %v1187
        %v2468 = vsub.f32 0.0, %v1188
        %v2469 = vsub.f32 0.0, %v1189
        %v2470 = vsub.f32 0.0, %v1190
        %v2471 = vsub.f32 0.0, %v1191
        %v2472 = vsub.f32 0.0, %v1192
        %v2473 = vsub.f32 0.0, %v1193
        %v2474 = vsub.f32 0.0, %v1194
        %v2475 = vsub.f32 0.0, %v1195
        %v2476 = vsub.f32 0.0, %v1196
        %v2477 = vsub.f32 0.0, %v1197
        %v2478 = vsub.f32 0.0, %v1198
        %v2479 = vsub.f32 0.0, %v1199
        %v2480 = vsub.f32 0.0, %v1200
        %v2481 = vsub.f32 0.0, %v1201
        %v2482 = vsub.f32 0.0, %v1202
        %v2483 = vsub.f32 0.0, %v1203
        %v2484 = vsub.f32 0.0, %v1204
        %v2485 = vsub.f32 0.0, %v1205
        %v2486 = vsub.f32 0.0, %v1206
        %v2487 = vsub.f32 0.0, %v1207
        %v2488 = vsub.f32 0.0, %v1208
        %v2489 = vsub.f32 0.0, %v1209
        %v2490 = vsub.f32 0.0, %v1210
        %v2491 = vsub.f32 0.0, %v1211
        %v2492 = vsub.f32 0.0, %v1212
        %v2493 = vsub.f32 0.0, %v1213
        %v2494 = vsub.f32 0.0, %v1214
        %v2495 = vsub.f32 0.0, %v1215
        %v2496 = vsub.f32 0.0, %v1216
        %v2497 = vsub.f32 0.0, %v1217
        %v2498 = vsub.f32 0.0, %v1218
        %v2499 = vsub.f32 0.0, %v1219
        %v2500 = vsub.f32 0.0, %v1220
        %v2501 = vmul.f32 %v2373, %v1093
        %v2502 = vmul.f32 %v2374, %v1094
        %v2503 = vmul.f32 %v2375, %v1095
        %v2504 = vmul.f32 %v2376, %v1096
        %v2505 = vmul.f32 %v2377, %v1097
        %v2506 = vmul.f32 %v2378, %v1098
        %v2507 = vmul.f32 %v2379, %v1099
        %v2508 = vmul.f32 %v2380, %v1100
        %v2509 = vmul.f32 %v2381, %v1101
        %v2510 = vmul.f32 %v2382, %v1102
        %v2511 = vmul.f32 %v2383, %v1103
        %v2512 = vmul.f32 %v2384, %v1104
        %v2513 = vmul.f32 %v2385, %v1105
        %v2514 = vmul.f32 %v2386, %v1106
        %v2515 = vmul.f32 %v2387, %v1107
        %v2516 = vmul.f32 %v2388, %v1108
        %v2517 = vmul.f32 %v2389, %v1109
        %v2518 = vmul.f32 %v2390, %v1110
        %v2519 = vmul.f32 %v2391, %v1111
        %v2520 = vmul.f32 %v2392, %v1112
        %v2521 = vmul.f32 %v2393, %v1113
        %v2522 = vmul.f32 %v2394, %v1114
        %v2523 = vmul.f32 %v2395, %v1115
        %v2524 = vmul.f32 %v2396, %v1116
        %v2525 = vmul.f32 %v2397, %v1117
        %v2526 = vmul.f32 %v2398, %v1118
        %v2527 = vmul.f32 %v2399, %v1119
        %v2528 = vmul.f32 %v2400, %v1120
        %v2529 = vmul.f32 %v2401, %v1121
        %v2530 = vmul.f32 %v2402, %v1122
        %v2531 = vmul.f32 %v2403, %v1123
        %v2532 = vmul.f32 %v2404, %v1124
        %v2533 = vmul.f32 %v2405, %v1125
        %v2534 = vmul.f32 %v2406, %v1126
        %v2535 = vmul.f32 %v2407, %v1127
        %v2536 = vmul.f32 %v2408, %v1128
        %v2537 = vmul.f32 %v2409, %v1129
        %v2538 = vmul.f32 %v2410, %v1130
        %v2539 = vmul.f32 %v2411, %v1131
        %v2540 = vmul.f32 %v2412, %v1132
        %v2541 = vmul.f32 %v2413, %v1133
        %v2542 = vmul.f32 %v2414, %v1134
        %v2543 = vmul.f32 %v2415, %v1135
        %v2544 = vmul.f32 %v2416, %v1136
        %v2545 = vmul.f32 %v2417, %v1137
        %v2546 = vmul.f32 %v2418, %v1138
        %v2547 = vmul.f32 %v2419, %v1139
        %v2548 = vmul.f32 %v2420, %v1140
        %v2549 = vmul.f32 %v2421, %v1141
        %v2550 = vmul.f32 %v2422, %v1142
        %v2551 = vmul.f32 %v2423, %v1143
        %v2552 = vmul.f32 %v2424, %v1144
        %v2553 = vmul.f32 %v2425, %v1145
        %v2554 = vmul.f32 %v2426, %v1146
        %v2555 = vmul.f32 %v2427, %v1147
        %v2556 = vmul.f32 %v2428, %v1148
        %v2557 = vmul.f32 %v2429, %v1149
        %v2558 = vmul.f32 %v2430, %v1150
        %v2559 = vmul.f32 %v2431, %v1151
        %v2560 = vmul.f32 %v2432, %v1152
        %v2561 = vmul.f32 %v2433, %v1153
        %v2562 = vmul.f32 %v2434, %v1154
        %v2563 = vmul.f32 %v2435, %v1155
        %v2564 = vmul.f32 %v2436, %v1156
        %v2565 = vmul.f32 %v2437, %v1157
        %v2566 = vmul.f32 %v2438, %v1158
        %v2567 = vmul.f32 %v2439, %v1159
        %v2568 = vmul.f32 %v2440, %v1160
        %v2569 = vmul.f32 %v2441, %v1161
        %v2570 = vmul.f32 %v2442, %v1162
        %v2571 = vmul.f32 %v2443, %v1163
        %v2572 = vmul.f32 %v2444, %v1164
        %v2573 = vmul.f32 %v2445, %v1165
        %v2574 = vmul.f32 %v2446, %v1166
        %v2575 = vmul.f32 %v2447, %v1167
        %v2576 = vmul.f32 %v2448, %v1168
        %v2577 = vmul.f32 %v2449, %v1169
        %v2578 = vmul.f32 %v2450, %v1170
        %v2579 = vmul.f32 %v2451, %v1171
        %v2580 = vmul.f32 %v2452, %v1172
        %v2581 = vmul.f32 %v2453, %v1173
        %v2582 = vmul.f32 %v2454, %v1174
        %v2583 = vmul.f32 %v2455, %v1175
        %v2584 = vmul.f32 %v2456, %v1176
        %v2585 = vmul.f32 %v2457, %v1177
        %v2586 = vmul.f32 %v2458, %v1178
        %v2587 = vmul.f32 %v2459, %v1179
        %v2588 = vmul.f32 %v2460, %v1180
        %v2589 = vmul.f32 %v2461, %v1181
        %v2590 = vmul.f32 %v2462, %v1182
        %v2591 = vmul.f32 %v2463, %v1183
        %v2592 = vmul.f32 %v2464, %v1184
        %v2593 = vmul.f32 %v2465, %v1185
        %v2594 = vmul.f32 %v2466, %v1186
        %v2595 = vmul.f32 %v2467, %v1187
        %v2596 = vmul.f32 %v2468, %v1188
        %v2597 = vmul.f32 %v2469, %v1189
        %v2598 = vmul.f32 %v2470, %v1190
        %v2599 = vmul.f32 %v2471, %v1191
        %v2600 = vmul.f32 %v2472, %v1192
        %v2601 = vmul.f32 %v2473, %v1193
        %v2602 = vmul.f32 %v2474, %v1194
        %v2603 = vmul.f32 %v2475, %v1195
        %v2604 = vmul.f32 %v2476, %v1196
        %v2605 = vmul.f32 %v2477, %v1197
        %v2606 = vmul.f32 %v2478, %v1198
        %v2607 = vmul.f32 %v2479, %v1199
        %v2608 = vmul.f32 %v2480, %v1200
        %v2609 = vmul.f32 %v2481, %v1201
        %v2610 = vmul.f32 %v2482, %v1202
        %v2611 = vmul.f32 %v2483, %v1203
        %v2612 = vmul.f32 %v2484, %v1204
        %v2613 = vmul.f32 %v2485, %v1205
        %v2614 = vmul.f32 %v2486, %v1206
        %v2615 = vmul.f32 %v2487, %v1207
        %v2616 = vmul.f32 %v2488, %v1208
        %v2617 = vmul.f32 %v2489, %v1209
        %v2618 = vmul.f32 %v2490, %v1210
        %v2619 = vmul.f32 %v2491, %v1211
        %v2620 = vmul.f32 %v2492, %v1212
        %v2621 = vmul.f32 %v2493, %v1213
        %v2622 = vmul.f32 %v2494, %v1214
        %v2623 = vmul.f32 %v2495, %v1215
        %v2624 = vmul.f32 %v2496, %v1216
        %v2625 = vmul.f32 %v2497, %v1217
        %v2626 = vmul.f32 %v2498, %v1218
        %v2627 = vmul.f32 %v2499, %v1219
        %v2628 = vmul.f32 %v2500, %v1220
        %v2629 = vmul.f32 %v2501, 1.442695
        %v2630 = vpow.pop %v2629
        %v2631 = vmul.f32 %v2502, 1.442695
        %v2632 = vpow.pop %v2631
        %v2633 = vmul.f32 %v2503, 1.442695
        %v2634 = vpow.pop %v2633
        %v2635 = vmul.f32 %v2504, 1.442695
        %v2636 = vpow.pop %v2635
        %v2637 = vmul.f32 %v2505, 1.442695
        %v2638 = vpow.pop %v2637
        %v2639 = vmul.f32 %v2506, 1.442695
        %v2640 = vpow.pop %v2639
        %v2641 = vmul.f32 %v2507, 1.442695
        %v2642 = vpow.pop %v2641
        %v2643 = vmul.f32 %v2508, 1.442695
        %v2644 = vpow.pop %v2643
        %v2645 = vmul.f32 %v2509, 1.442695
        %v2646 = vpow.pop %v2645
        %v2647 = vmul.f32 %v2510, 1.442695
        %v2648 = vpow.pop %v2647
        %v2649 = vmul.f32 %v2511, 1.442695
        %v2650 = vpow.pop %v2649
        %v2651 = vmul.f32 %v2512, 1.442695
        %v2652 = vpow.pop %v2651
        %v2653 = vmul.f32 %v2513, 1.442695
        %v2654 = vpow.pop %v2653
        %v2655 = vmul.f32 %v2514, 1.442695
        %v2656 = vpow.pop %v2655
        %v2657 = vmul.f32 %v2515, 1.442695
        %v2658 = vpow.pop %v2657
        %v2659 = vmul.f32 %v2516, 1.442695
        %v2660 = vpow.pop %v2659
        %v2661 = vmul.f32 %v2517, 1.442695
        %v2662 = vpow.pop %v2661
        %v2663 = vmul.f32 %v2518, 1.442695
        %v2664 = vpow.pop %v2663
        %v2665 = vmul.f32 %v2519, 1.442695
        %v2666 = vpow.pop %v2665
        %v2667 = vmul.f32 %v2520, 1.442695
        %v2668 = vpow.pop %v2667
        %v2669 = vmul.f32 %v2521, 1.442695
        %v2670 = vpow.pop %v2669
        %v2671 = vmul.f32 %v2522, 1.442695
        %v2672 = vpow.pop %v2671
        %v2673 = vmul.f32 %v2523, 1.442695
        %v2674 = vpow.pop %v2673
        %v2675 = vmul.f32 %v2524, 1.442695
        %v2676 = vpow.pop %v2675
        %v2677 = vmul.f32 %v2525, 1.442695
        %v2678 = vpow.pop %v2677
        %v2679 = vmul.f32 %v2526, 1.442695
        %v2680 = vpow.pop %v2679
        %v2681 = vmul.f32 %v2527, 1.442695
        %v2682 = vpow.pop %v2681
        %v2683 = vmul.f32 %v2528, 1.442695
        %v2684 = vpow.pop %v2683
        %v2685 = vmul.f32 %v2529, 1.442695
        %v2686 = vpow.pop %v2685
        %v2687 = vmul.f32 %v2530, 1.442695
        %v2688 = vpow.pop %v2687
        %v2689 = vmul.f32 %v2531, 1.442695
        %v2690 = vpow.pop %v2689
        %v2691 = vmul.f32 %v2532, 1.442695
        %v2692 = vpow.pop %v2691
        %v2693 = vmul.f32 %v2533, 1.442695
        %v2694 = vpow.pop %v2693
        %v2695 = vmul.f32 %v2534, 1.442695
        %v2696 = vpow.pop %v2695
        %v2697 = vmul.f32 %v2535, 1.442695
        %v2698 = vpow.pop %v2697
        %v2699 = vmul.f32 %v2536, 1.442695
        %v2700 = vpow.pop %v2699
        %v2701 = vmul.f32 %v2537, 1.442695
        %v2702 = vpow.pop %v2701
        %v2703 = vmul.f32 %v2538, 1.442695
        %v2704 = vpow.pop %v2703
        %v2705 = vmul.f32 %v2539, 1.442695
        %v2706 = vpow.pop %v2705
        %v2707 = vmul.f32 %v2540, 1.442695
        %v2708 = vpow.pop %v2707
        %v2709 = vmul.f32 %v2541, 1.442695
        %v2710 = vpow.pop %v2709
        %v2711 = vmul.f32 %v2542, 1.442695
        %v2712 = vpow.pop %v2711
        %v2713 = vmul.f32 %v2543, 1.442695
        %v2714 = vpow.pop %v2713
        %v2715 = vmul.f32 %v2544, 1.442695
        %v2716 = vpow.pop %v2715
        %v2717 = vmul.f32 %v2545, 1.442695
        %v2718 = vpow.pop %v2717
        %v2719 = vmul.f32 %v2546, 1.442695
        %v2720 = vpow.pop %v2719
        %v2721 = vmul.f32 %v2547, 1.442695
        %v2722 = vpow.pop %v2721
        %v2723 = vmul.f32 %v2548, 1.442695
        %v2724 = vpow.pop %v2723
        %v2725 = vmul.f32 %v2549, 1.442695
        %v2726 = vpow.pop %v2725
        %v2727 = vmul.f32 %v2550, 1.442695
        %v2728 = vpow.pop %v2727
        %v2729 = vmul.f32 %v2551, 1.442695
        %v2730 = vpow.pop %v2729
        %v2731 = vmul.f32 %v2552, 1.442695
        %v2732 = vpow.pop %v2731
        %v2733 = vmul.f32 %v2553, 1.442695
        %v2734 = vpow.pop %v2733
        %v2735 = vmul.f32 %v2554, 1.442695
        %v2736 = vpow.pop %v2735
        %v2737 = vmul.f32 %v2555, 1.442695
        %v2738 = vpow.pop %v2737
        %v2739 = vmul.f32 %v2556, 1.442695
        %v2740 = vpow.pop %v2739
        %v2741 = vmul.f32 %v2557, 1.442695
        %v2742 = vpow.pop %v2741
        %v2743 = vmul.f32 %v2558, 1.442695
        %v2744 = vpow.pop %v2743
        %v2745 = vmul.f32 %v2559, 1.442695
        %v2746 = vpow.pop %v2745
        %v2747 = vmul.f32 %v2560, 1.442695
        %v2748 = vpow.pop %v2747
        %v2749 = vmul.f32 %v2561, 1.442695
        %v2750 = vpow.pop %v2749
        %v2751 = vmul.f32 %v2562, 1.442695
        %v2752 = vpow.pop %v2751
        %v2753 = vmul.f32 %v2563, 1.442695
        %v2754 = vpow.pop %v2753
        %v2755 = vmul.f32 %v2564, 1.442695
        %v2756 = vpow.pop %v2755
        %v2757 = vmul.f32 %v2565, 1.442695
        %v2758 = vpow.pop %v2757
        %v2759 = vmul.f32 %v2566, 1.442695
        %v2760 = vpow.pop %v2759
        %v2761 = vmul.f32 %v2567, 1.442695
        %v2762 = vpow.pop %v2761
        %v2763 = vmul.f32 %v2568, 1.442695
        %v2764 = vpow.pop %v2763
        %v2765 = vmul.f32 %v2569, 1.442695
        %v2766 = vpow.pop %v2765
        %v2767 = vmul.f32 %v2570, 1.442695
        %v2768 = vpow.pop %v2767
        %v2769 = vmul.f32 %v2571, 1.442695
        %v2770 = vpow.pop %v2769
        %v2771 = vmul.f32 %v2572, 1.442695
        %v2772 = vpow.pop %v2771
        %v2773 = vmul.f32 %v2573, 1.442695
        %v2774 = vpow.pop %v2773
        %v2775 = vmul.f32 %v2574, 1.442695
        %v2776 = vpow.pop %v2775
        %v2777 = vmul.f32 %v2575, 1.442695
        %v2778 = vpow.pop %v2777
        %v2779 = vmul.f32 %v2576, 1.442695
        %v2780 = vpow.pop %v2779
        %v2781 = vmul.f32 %v2577, 1.442695
        %v2782 = vpow.pop %v2781
        %v2783 = vmul.f32 %v2578, 1.442695
        %v2784 = vpow.pop %v2783
        %v2785 = vmul.f32 %v2579, 1.442695
        %v2786 = vpow.pop %v2785
        %v2787 = vmul.f32 %v2580, 1.442695
        %v2788 = vpow.pop %v2787
        %v2789 = vmul.f32 %v2581, 1.442695
        %v2790 = vpow.pop %v2789
        %v2791 = vmul.f32 %v2582, 1.442695
        %v2792 = vpow.pop %v2791
        %v2793 = vmul.f32 %v2583, 1.442695
        %v2794 = vpow.pop %v2793
        %v2795 = vmul.f32 %v2584, 1.442695
        %v2796 = vpow.pop %v2795
        %v2797 = vmul.f32 %v2585, 1.442695
        %v2798 = vpow.pop %v2797
        %v2799 = vmul.f32 %v2586, 1.442695
        %v2800 = vpow.pop %v2799
        %v2801 = vmul.f32 %v2587, 1.442695
        %v2802 = vpow.pop %v2801
        %v2803 = vmul.f32 %v2588, 1.442695
        %v2804 = vpow.pop %v2803
        %v2805 = vmul.f32 %v2589, 1.442695
        %v2806 = vpow.pop %v2805
        %v2807 = vmul.f32 %v2590, 1.442695
        %v2808 = vpow.pop %v2807
        %v2809 = vmul.f32 %v2591, 1.442695
        %v2810 = vpow.pop %v2809
        %v2811 = vmul.f32 %v2592, 1.442695
        %v2812 = vpow.pop %v2811
        %v2813 = vmul.f32 %v2593, 1.442695
        %v2814 = vpow.pop %v2813
        %v2815 = vmul.f32 %v2594, 1.442695
        %v2816 = vpow.pop %v2815
        %v2817 = vmul.f32 %v2595, 1.442695
        %v2818 = vpow.pop %v2817
        %v2819 = vmul.f32 %v2596, 1.442695
        %v2820 = vpow.pop %v2819
        %v2821 = vmul.f32 %v2597, 1.442695
        %v2822 = vpow.pop %v2821
        %v2823 = vmul.f32 %v2598, 1.442695
        %v2824 = vpow.pop %v2823
        %v2825 = vmul.f32 %v2599, 1.442695
        %v2826 = vpow.pop %v2825
        %v2827 = vmul.f32 %v2600, 1.442695
        %v2828 = vpow.pop %v2827
        %v2829 = vmul.f32 %v2601, 1.442695
        %v2830 = vpow.pop %v2829
        %v2831 = vmul.f32 %v2602, 1.442695
        %v2832 = vpow.pop %v2831
        %v2833 = vmul.f32 %v2603, 1.442695
        %v2834 = vpow.pop %v2833
        %v2835 = vmul.f32 %v2604, 1.442695
        %v2836 = vpow.pop %v2835
        %v2837 = vmul.f32 %v2605, 1.442695
        %v2838 = vpow.pop %v2837
        %v2839 = vmul.f32 %v2606, 1.442695
        %v2840 = vpow.pop %v2839
        %v2841 = vmul.f32 %v2607, 1.442695
        %v2842 = vpow.pop %v2841
        %v2843 = vmul.f32 %v2608, 1.442695
        %v2844 = vpow.pop %v2843
        %v2845 = vmul.f32 %v2609, 1.442695
        %v2846 = vpow.pop %v2845
        %v2847 = vmul.f32 %v2610, 1.442695
        %v2848 = vpow.pop %v2847
        %v2849 = vmul.f32 %v2611, 1.442695
        %v2850 = vpow.pop %v2849
        %v2851 = vmul.f32 %v2612, 1.442695
        %v2852 = vpow.pop %v2851
        %v2853 = vmul.f32 %v2613, 1.442695
        %v2854 = vpow.pop %v2853
        %v2855 = vmul.f32 %v2614, 1.442695
        %v2856 = vpow.pop %v2855
        %v2857 = vmul.f32 %v2615, 1.442695
        %v2858 = vpow.pop %v2857
        %v2859 = vmul.f32 %v2616, 1.442695
        %v2860 = vpow.pop %v2859
        %v2861 = vmul.f32 %v2617, 1.442695
        %v2862 = vpow.pop %v2861
        %v2863 = vmul.f32 %v2618, 1.442695
        %v2864 = vpow.pop %v2863
        %v2865 = vmul.f32 %v2619, 1.442695
        %v2866 = vpow.pop %v2865
        %v2867 = vmul.f32 %v2620, 1.442695
        %v2868 = vpow.pop %v2867
        %v2869 = vmul.f32 %v2621, 1.442695
        %v2870 = vpow.pop %v2869
        %v2871 = vmul.f32 %v2622, 1.442695
        %v2872 = vpow.pop %v2871
        %v2873 = vmul.f32 %v2623, 1.442695
        %v2874 = vpow.pop %v2873
        %v2875 = vmul.f32 %v2624, 1.442695
        %v2876 = vpow.pop %v2875
        %v2877 = vmul.f32 %v2625, 1.442695
        %v2878 = vpow.pop %v2877
        %v2879 = vmul.f32 %v2626, 1.442695
        %v2880 = vpow.pop %v2879
        %v2881 = vmul.f32 %v2627, 1.442695
        %v2882 = vpow.pop %v2881
        %v2883 = vmul.f32 %v2628, 1.442695
        %v2884 = vpow.pop %v2883
        %v2885 = vmul.f32 %v2245, %v2630
        %v2886 = vmul.f32 %v2246, %v2632
        %v2887 = vmul.f32 %v2247, %v2634
        %v2888 = vmul.f32 %v2248, %v2636
        %v2889 = vmul.f32 %v2249, %v2638
        %v2890 = vmul.f32 %v2250, %v2640
        %v2891 = vmul.f32 %v2251, %v2642
        %v2892 = vmul.f32 %v2252, %v2644
        %v2893 = vmul.f32 %v2253, %v2646
        %v2894 = vmul.f32 %v2254, %v2648
        %v2895 = vmul.f32 %v2255, %v2650
        %v2896 = vmul.f32 %v2256, %v2652
        %v2897 = vmul.f32 %v2257, %v2654
        %v2898 = vmul.f32 %v2258, %v2656
        %v2899 = vmul.f32 %v2259, %v2658
        %v2900 = vmul.f32 %v2260, %v2660
        %v2901 = vmul.f32 %v2261, %v2662
        %v2902 = vmul.f32 %v2262, %v2664
        %v2903 = vmul.f32 %v2263, %v2666
        %v2904 = vmul.f32 %v2264, %v2668
        %v2905 = vmul.f32 %v2265, %v2670
        %v2906 = vmul.f32 %v2266, %v2672
        %v2907 = vmul.f32 %v2267, %v2674
        %v2908 = vmul.f32 %v2268, %v2676
        %v2909 = vmul.f32 %v2269, %v2678
        %v2910 = vmul.f32 %v2270, %v2680
        %v2911 = vmul.f32 %v2271, %v2682
        %v2912 = vmul.f32 %v2272, %v2684
        %v2913 = vmul.f32 %v2273, %v2686
        %v2914 = vmul.f32 %v2274, %v2688
        %v2915 = vmul.f32 %v2275, %v2690
        %v2916 = vmul.f32 %v2276, %v2692
        %v2917 = vmul.f32 %v2277, %v2694
        %v2918 = vmul.f32 %v2278, %v2696
        %v2919 = vmul.f32 %v2279, %v2698
        %v2920 = vmul.f32 %v2280, %v2700
        %v2921 = vmul.f32 %v2281, %v2702
        %v2922 = vmul.f32 %v2282, %v2704
        %v2923 = vmul.f32 %v2283, %v2706
        %v2924 = vmul.f32 %v2284, %v2708
        %v2925 = vmul.f32 %v2285, %v2710
        %v2926 = vmul.f32 %v2286, %v2712
        %v2927 = vmul.f32 %v2287, %v2714
        %v2928 = vmul.f32 %v2288, %v2716
        %v2929 = vmul.f32 %v2289, %v2718
        %v2930 = vmul.f32 %v2290, %v2720
        %v2931 = vmul.f32 %v2291, %v2722
        %v2932 = vmul.f32 %v2292, %v2724
        %v2933 = vmul.f32 %v2293, %v2726
        %v2934 = vmul.f32 %v2294, %v2728
        %v2935 = vmul.f32 %v2295, %v2730
        %v2936 = vmul.f32 %v2296, %v2732
        %v2937 = vmul.f32 %v2297, %v2734
        %v2938 = vmul.f32 %v2298, %v2736
        %v2939 = vmul.f32 %v2299, %v2738
        %v2940 = vmul.f32 %v2300, %v2740
        %v2941 = vmul.f32 %v2301, %v2742
        %v2942 = vmul.f32 %v2302, %v2744
        %v2943 = vmul.f32 %v2303, %v2746
        %v2944 = vmul.f32 %v2304, %v2748
        %v2945 = vmul.f32 %v2305, %v2750
        %v2946 = vmul.f32 %v2306, %v2752
        %v2947 = vmul.f32 %v2307, %v2754
        %v2948 = vmul.f32 %v2308, %v2756
        %v2949 = vmul.f32 %v2309, %v2758
        %v2950 = vmul.f32 %v2310, %v2760
        %v2951 = vmul.f32 %v2311, %v2762
        %v2952 = vmul.f32 %v2312, %v2764
        %v2953 = vmul.f32 %v2313, %v2766
        %v2954 = vmul.f32 %v2314, %v2768
        %v2955 = vmul.f32 %v2315, %v2770
        %v2956 = vmul.f32 %v2316, %v2772
        %v2957 = vmul.f32 %v2317, %v2774
        %v2958 = vmul.f32 %v2318, %v2776
        %v2959 = vmul.f32 %v2319, %v2778
        %v2960 = vmul.f32 %v2320, %v2780
        %v2961 = vmul.f32 %v2321, %v2782
        %v2962 = vmul.f32 %v2322, %v2784
        %v2963 = vmul.f32 %v2323, %v2786
        %v2964 = vmul.f32 %v2324, %v2788
        %v2965 = vmul.f32 %v2325, %v2790
        %v2966 = vmul.f32 %v2326, %v2792
        %v2967 = vmul.f32 %v2327, %v2794
        %v2968 = vmul.f32 %v2328, %v2796
        %v2969 = vmul.f32 %v2329, %v2798
        %v2970 = vmul.f32 %v2330, %v2800
        %v2971 = vmul.f32 %v2331, %v2802
        %v2972 = vmul.f32 %v2332, %v2804
        %v2973 = vmul.f32 %v2333, %v2806
        %v2974 = vmul.f32 %v2334, %v2808
        %v2975 = vmul.f32 %v2335, %v2810
        %v2976 = vmul.f32 %v2336, %v2812
        %v2977 = vmul.f32 %v2337, %v2814
        %v2978 = vmul.f32 %v2338, %v2816
        %v2979 = vmul.f32 %v2339, %v2818
        %v2980 = vmul.f32 %v2340, %v2820
        %v2981 = vmul.f32 %v2341, %v2822
        %v2982 = vmul.f32 %v2342, %v2824
        %v2983 = vmul.f32 %v2343, %v2826
        %v2984 = vmul.f32 %v2344, %v2828
        %v2985 = vmul.f32 %v2345, %v2830
        %v2986 = vmul.f32 %v2346, %v2832
        %v2987 = vmul.f32 %v2347, %v2834
        %v2988 = vmul.f32 %v2348, %v2836
        %v2989 = vmul.f32 %v2349, %v2838
        %v2990 = vmul.f32 %v2350, %v2840
        %v2991 = vmul.f32 %v2351, %v2842
        %v2992 = vmul.f32 %v2352, %v2844
        %v2993 = vmul.f32 %v2353, %v2846
        %v2994 = vmul.f32 %v2354, %v2848
        %v2995 = vmul.f32 %v2355, %v2850
        %v2996 = vmul.f32 %v2356, %v2852
        %v2997 = vmul.f32 %v2357, %v2854
        %v2998 = vmul.f32 %v2358, %v2856
        %v2999 = vmul.f32 %v2359, %v2858
        %v3000 = vmul.f32 %v2360, %v2860
        %v3001 = vmul.f32 %v2361, %v2862
        %v3002 = vmul.f32 %v2362, %v2864
        %v3003 = vmul.f32 %v2363, %v2866
        %v3004 = vmul.f32 %v2364, %v2868
        %v3005 = vmul.f32 %v2365, %v2870
        %v3006 = vmul.f32 %v2366, %v2872
        %v3007 = vmul.f32 %v2367, %v2874
        %v3008 = vmul.f32 %v2368, %v2876
        %v3009 = vmul.f32 %v2369, %v2878
        %v3010 = vmul.f32 %v2370, %v2880
        %v3011 = vmul.f32 %v2371, %v2882
        %v3012 = vmul.f32 %v2372, %v2884
        %v3013 = vsub.f32 1.0, %v2885
        %v3014 = vsub.f32 1.0, %v2886
        %v3015 = vsub.f32 1.0, %v2887
        %v3016 = vsub.f32 1.0, %v2888
        %v3017 = vsub.f32 1.0, %v2889
        %v3018 = vsub.f32 1.0, %v2890
        %v3019 = vsub.f32 1.0, %v2891
        %v3020 = vsub.f32 1.0, %v2892
        %v3021 = vsub.f32 1.0, %v2893
        %v3022 = vsub.f32 1.0, %v2894
        %v3023 = vsub.f32 1.0, %v2895
        %v3024 = vsub.f32 1.0, %v2896
        %v3025 = vsub.f32 1.0, %v2897
        %v3026 = vsub.f32 1.0, %v2898
        %v3027 = vsub.f32 1.0, %v2899
        %v3028 = vsub.f32 1.0, %v2900
        %v3029 = vsub.f32 1.0, %v2901
        %v3030 = vsub.f32 1.0, %v2902
        %v3031 = vsub.f32 1.0, %v2903
        %v3032 = vsub.f32 1.0, %v2904
        %v3033 = vsub.f32 1.0, %v2905
        %v3034 = vsub.f32 1.0, %v2906
        %v3035 = vsub.f32 1.0, %v2907
        %v3036 = vsub.f32 1.0, %v2908
        %v3037 = vsub.f32 1.0, %v2909
        %v3038 = vsub.f32 1.0, %v2910
        %v3039 = vsub.f32 1.0, %v2911
        %v3040 = vsub.f32 1.0, %v2912
        %v3041 = vsub.f32 1.0, %v2913
        %v3042 = vsub.f32 1.0, %v2914
        %v3043 = vsub.f32 1.0, %v2915
        %v3044 = vsub.f32 1.0, %v2916
        %v3045 = vsub.f32 1.0, %v2917
        %v3046 = vsub.f32 1.0, %v2918
        %v3047 = vsub.f32 1.0, %v2919
        %v3048 = vsub.f32 1.0, %v2920
        %v3049 = vsub.f32 1.0, %v2921
        %v3050 = vsub.f32 1.0, %v2922
        %v3051 = vsub.f32 1.0, %v2923
        %v3052 = vsub.f32 1.0, %v2924
        %v3053 = vsub.f32 1.0, %v2925
        %v3054 = vsub.f32 1.0, %v2926
        %v3055 = vsub.f32 1.0, %v2927
        %v3056 = vsub.f32 1.0, %v2928
        %v3057 = vsub.f32 1.0, %v2929
        %v3058 = vsub.f32 1.0, %v2930
        %v3059 = vsub.f32 1.0, %v2931
        %v3060 = vsub.f32 1.0, %v2932
        %v3061 = vsub.f32 1.0, %v2933
        %v3062 = vsub.f32 1.0, %v2934
        %v3063 = vsub.f32 1.0, %v2935
        %v3064 = vsub.f32 1.0, %v2936
        %v3065 = vsub.f32 1.0, %v2937
        %v3066 = vsub.f32 1.0, %v2938
        %v3067 = vsub.f32 1.0, %v2939
        %v3068 = vsub.f32 1.0, %v2940
        %v3069 = vsub.f32 1.0, %v2941
        %v3070 = vsub.f32 1.0, %v2942
        %v3071 = vsub.f32 1.0, %v2943
        %v3072 = vsub.f32 1.0, %v2944
        %v3073 = vsub.f32 1.0, %v2945
        %v3074 = vsub.f32 1.0, %v2946
        %v3075 = vsub.f32 1.0, %v2947
        %v3076 = vsub.f32 1.0, %v2948
        %v3077 = vsub.f32 1.0, %v2949
        %v3078 = vsub.f32 1.0, %v2950
        %v3079 = vsub.f32 1.0, %v2951
        %v3080 = vsub.f32 1.0, %v2952
        %v3081 = vsub.f32 1.0, %v2953
        %v3082 = vsub.f32 1.0, %v2954
        %v3083 = vsub.f32 1.0, %v2955
        %v3084 = vsub.f32 1.0, %v2956
        %v3085 = vsub.f32 1.0, %v2957
        %v3086 = vsub.f32 1.0, %v2958
        %v3087 = vsub.f32 1.0, %v2959
        %v3088 = vsub.f32 1.0, %v2960
        %v3089 = vsub.f32 1.0, %v2961
        %v3090 = vsub.f32 1.0, %v2962
        %v3091 = vsub.f32 1.0, %v2963
        %v3092 = vsub.f32 1.0, %v2964
        %v3093 = vsub.f32 1.0, %v2965
        %v3094 = vsub.f32 1.0, %v2966
        %v3095 = vsub.f32 1.0, %v2967
        %v3096 = vsub.f32 1.0, %v2968
        %v3097 = vsub.f32 1.0, %v2969
        %v3098 = vsub.f32 1.0, %v2970
        %v3099 = vsub.f32 1.0, %v2971
        %v3100 = vsub.f32 1.0, %v2972
        %v3101 = vsub.f32 1.0, %v2973
        %v3102 = vsub.f32 1.0, %v2974
        %v3103 = vsub.f32 1.0, %v2975
        %v3104 = vsub.f32 1.0, %v2976
        %v3105 = vsub.f32 1.0, %v2977
        %v3106 = vsub.f32 1.0, %v2978
        %v3107 = vsub.f32 1.0, %v2979
        %v3108 = vsub.f32 1.0, %v2980
        %v3109 = vsub.f32 1.0, %v2981
        %v3110 = vsub.f32 1.0, %v2982
        %v3111 = vsub.f32 1.0, %v2983
        %v3112 = vsub.f32 1.0, %v2984
        %v3113 = vsub.f32 1.0, %v2985
        %v3114 = vsub.f32 1.0, %v2986
        %v3115 = vsub.f32 1.0, %v2987
        %v3116 = vsub.f32 1.0, %v2988
        %v3117 = vsub.f32 1.0, %v2989
        %v3118 = vsub.f32 1.0, %v2990
        %v3119 = vsub.f32 1.0, %v2991
        %v3120 = vsub.f32 1.0, %v2992
        %v3121 = vsub.f32 1.0, %v2993
        %v3122 = vsub.f32 1.0, %v2994
        %v3123 = vsub.f32 1.0, %v2995
        %v3124 = vsub.f32 1.0, %v2996
        %v3125 = vsub.f32 1.0, %v2997
        %v3126 = vsub.f32 1.0, %v2998
        %v3127 = vsub.f32 1.0, %v2999
        %v3128 = vsub.f32 1.0, %v3000
        %v3129 = vsub.f32 1.0, %v3001
        %v3130 = vsub.f32 1.0, %v3002
        %v3131 = vsub.f32 1.0, %v3003
        %v3132 = vsub.f32 1.0, %v3004
        %v3133 = vsub.f32 1.0, %v3005
        %v3134 = vsub.f32 1.0, %v3006
        %v3135 = vsub.f32 1.0, %v3007
        %v3136 = vsub.f32 1.0, %v3008
        %v3137 = vsub.f32 1.0, %v3009
        %v3138 = vsub.f32 1.0, %v3010
        %v3139 = vsub.f32 1.0, %v3011
        %v3140 = vsub.f32 1.0, %v3012
        %vm3141 = vcmp.ge.f32.partialorder %v965, 0.0
        %vm3142 = vcmp.ge.f32.partialorder %v966, 0.0
        %vm3143 = vcmp.ge.f32.partialorder %v967, 0.0
        %vm3144 = vcmp.ge.f32.partialorder %v968, 0.0
        %vm3145 = vcmp.ge.f32.partialorder %v969, 0.0
        %vm3146 = vcmp.ge.f32.partialorder %v970, 0.0
        %vm3147 = vcmp.ge.f32.partialorder %v971, 0.0
        %vm3148 = vcmp.ge.f32.partialorder %v972, 0.0
        %vm3149 = vcmp.ge.f32.partialorder %v973, 0.0
        %vm3150 = vcmp.ge.f32.partialorder %v974, 0.0
        %vm3151 = vcmp.ge.f32.partialorder %v975, 0.0
        %vm3152 = vcmp.ge.f32.partialorder %v976, 0.0
        %vm3153 = vcmp.ge.f32.partialorder %v977, 0.0
        %vm3154 = vcmp.ge.f32.partialorder %v978, 0.0
        %vm3155 = vcmp.ge.f32.partialorder %v979, 0.0
        %vm3156 = vcmp.ge.f32.partialorder %v980, 0.0
        %vm3157 = vcmp.ge.f32.partialorder %v981, 0.0
        %vm3158 = vcmp.ge.f32.partialorder %v982, 0.0
        %vm3159 = vcmp.ge.f32.partialorder %v983, 0.0
        %vm3160 = vcmp.ge.f32.partialorder %v984, 0.0
        %vm3161 = vcmp.ge.f32.partialorder %v985, 0.0
        %vm3162 = vcmp.ge.f32.partialorder %v986, 0.0
        %vm3163 = vcmp.ge.f32.partialorder %v987, 0.0
        %vm3164 = vcmp.ge.f32.partialorder %v988, 0.0
        %vm3165 = vcmp.ge.f32.partialorder %v989, 0.0
        %vm3166 = vcmp.ge.f32.partialorder %v990, 0.0
        %vm3167 = vcmp.ge.f32.partialorder %v991, 0.0
        %vm3168 = vcmp.ge.f32.partialorder %v992, 0.0
        %vm3169 = vcmp.ge.f32.partialorder %v993, 0.0
        %vm3170 = vcmp.ge.f32.partialorder %v994, 0.0
        %vm3171 = vcmp.ge.f32.partialorder %v995, 0.0
        %vm3172 = vcmp.ge.f32.partialorder %v996, 0.0
        %vm3173 = vcmp.ge.f32.partialorder %v997, 0.0
        %vm3174 = vcmp.ge.f32.partialorder %v998, 0.0
        %vm3175 = vcmp.ge.f32.partialorder %v999, 0.0
        %vm3176 = vcmp.ge.f32.partialorder %v1000, 0.0
        %vm3177 = vcmp.ge.f32.partialorder %v1001, 0.0
        %vm3178 = vcmp.ge.f32.partialorder %v1002, 0.0
        %vm3179 = vcmp.ge.f32.partialorder %v1003, 0.0
        %vm3180 = vcmp.ge.f32.partialorder %v1004, 0.0
        %vm3181 = vcmp.ge.f32.partialorder %v1005, 0.0
        %vm3182 = vcmp.ge.f32.partialorder %v1006, 0.0
        %vm3183 = vcmp.ge.f32.partialorder %v1007, 0.0
        %vm3184 = vcmp.ge.f32.partialorder %v1008, 0.0
        %vm3185 = vcmp.ge.f32.partialorder %v1009, 0.0
        %vm3186 = vcmp.ge.f32.partialorder %v1010, 0.0
        %vm3187 = vcmp.ge.f32.partialorder %v1011, 0.0
        %vm3188 = vcmp.ge.f32.partialorder %v1012, 0.0
        %vm3189 = vcmp.ge.f32.partialorder %v1013, 0.0
        %vm3190 = vcmp.ge.f32.partialorder %v1014, 0.0
        %vm3191 = vcmp.ge.f32.partialorder %v1015, 0.0
        %vm3192 = vcmp.ge.f32.partialorder %v1016, 0.0
        %vm3193 = vcmp.ge.f32.partialorder %v1017, 0.0
        %vm3194 = vcmp.ge.f32.partialorder %v1018, 0.0
        %vm3195 = vcmp.ge.f32.partialorder %v1019, 0.0
        %vm3196 = vcmp.ge.f32.partialorder %v1020, 0.0
        %vm3197 = vcmp.ge.f32.partialorder %v1021, 0.0
        %vm3198 = vcmp.ge.f32.partialorder %v1022, 0.0
        %vm3199 = vcmp.ge.f32.partialorder %v1023, 0.0
        %vm3200 = vcmp.ge.f32.partialorder %v1024, 0.0
        %vm3201 = vcmp.ge.f32.partialorder %v1025, 0.0
        %vm3202 = vcmp.ge.f32.partialorder %v1026, 0.0
        %vm3203 = vcmp.ge.f32.partialorder %v1027, 0.0
        %vm3204 = vcmp.ge.f32.partialorder %v1028, 0.0
        %vm3205 = vcmp.ge.f32.partialorder %v1029, 0.0
        %vm3206 = vcmp.ge.f32.partialorder %v1030, 0.0
        %vm3207 = vcmp.ge.f32.partialorder %v1031, 0.0
        %vm3208 = vcmp.ge.f32.partialorder %v1032, 0.0
        %vm3209 = vcmp.ge.f32.partialorder %v1033, 0.0
        %vm3210 = vcmp.ge.f32.partialorder %v1034, 0.0
        %vm3211 = vcmp.ge.f32.partialorder %v1035, 0.0
        %vm3212 = vcmp.ge.f32.partialorder %v1036, 0.0
        %vm3213 = vcmp.ge.f32.partialorder %v1037, 0.0
        %vm3214 = vcmp.ge.f32.partialorder %v1038, 0.0
        %vm3215 = vcmp.ge.f32.partialorder %v1039, 0.0
        %vm3216 = vcmp.ge.f32.partialorder %v1040, 0.0
        %vm3217 = vcmp.ge.f32.partialorder %v1041, 0.0
        %vm3218 = vcmp.ge.f32.partialorder %v1042, 0.0
        %vm3219 = vcmp.ge.f32.partialorder %v1043, 0.0
        %vm3220 = vcmp.ge.f32.partialorder %v1044, 0.0
        %vm3221 = vcmp.ge.f32.partialorder %v1045, 0.0
        %vm3222 = vcmp.ge.f32.partialorder %v1046, 0.0
        %vm3223 = vcmp.ge.f32.partialorder %v1047, 0.0
        %vm3224 = vcmp.ge.f32.partialorder %v1048, 0.0
        %vm3225 = vcmp.ge.f32.partialorder %v1049, 0.0
        %vm3226 = vcmp.ge.f32.partialorder %v1050, 0.0
        %vm3227 = vcmp.ge.f32.partialorder %v1051, 0.0
        %vm3228 = vcmp.ge.f32.partialorder %v1052, 0.0
        %vm3229 = vcmp.ge.f32.partialorder %v1053, 0.0
        %vm3230 = vcmp.ge.f32.partialorder %v1054, 0.0
        %vm3231 = vcmp.ge.f32.partialorder %v1055, 0.0
        %vm3232 = vcmp.ge.f32.partialorder %v1056, 0.0
        %vm3233 = vcmp.ge.f32.partialorder %v1057, 0.0
        %vm3234 = vcmp.ge.f32.partialorder %v1058, 0.0
        %vm3235 = vcmp.ge.f32.partialorder %v1059, 0.0
        %vm3236 = vcmp.ge.f32.partialorder %v1060, 0.0
        %vm3237 = vcmp.ge.f32.partialorder %v1061, 0.0
        %vm3238 = vcmp.ge.f32.partialorder %v1062, 0.0
        %vm3239 = vcmp.ge.f32.partialorder %v1063, 0.0
        %vm3240 = vcmp.ge.f32.partialorder %v1064, 0.0
        %vm3241 = vcmp.ge.f32.partialorder %v1065, 0.0
        %vm3242 = vcmp.ge.f32.partialorder %v1066, 0.0
        %vm3243 = vcmp.ge.f32.partialorder %v1067, 0.0
        %vm3244 = vcmp.ge.f32.partialorder %v1068, 0.0
        %vm3245 = vcmp.ge.f32.partialorder %v1069, 0.0
        %vm3246 = vcmp.ge.f32.partialorder %v1070, 0.0
        %vm3247 = vcmp.ge.f32.partialorder %v1071, 0.0
        %vm3248 = vcmp.ge.f32.partialorder %v1072, 0.0
        %vm3249 = vcmp.ge.f32.partialorder %v1073, 0.0
        %vm3250 = vcmp.ge.f32.partialorder %v1074, 0.0
        %vm3251 = vcmp.ge.f32.partialorder %v1075, 0.0
        %vm3252 = vcmp.ge.f32.partialorder %v1076, 0.0
        %vm3253 = vcmp.ge.f32.partialorder %v1077, 0.0
        %vm3254 = vcmp.ge.f32.partialorder %v1078, 0.0
        %vm3255 = vcmp.ge.f32.partialorder %v1079, 0.0
        %vm3256 = vcmp.ge.f32.partialorder %v1080, 0.0
        %vm3257 = vcmp.ge.f32.partialorder %v1081, 0.0
        %vm3258 = vcmp.ge.f32.partialorder %v1082, 0.0
        %vm3259 = vcmp.ge.f32.partialorder %v1083, 0.0
        %vm3260 = vcmp.ge.f32.partialorder %v1084, 0.0
        %vm3261 = vcmp.ge.f32.partialorder %v1085, 0.0
        %vm3262 = vcmp.ge.f32.partialorder %v1086, 0.0
        %vm3263 = vcmp.ge.f32.partialorder %v1087, 0.0
        %vm3264 = vcmp.ge.f32.partialorder %v1088, 0.0
        %vm3265 = vcmp.ge.f32.partialorder %v1089, 0.0
        %vm3266 = vcmp.ge.f32.partialorder %v1090, 0.0
        %vm3267 = vcmp.ge.f32.partialorder %v1091, 0.0
        %vm3268 = vcmp.ge.f32.partialorder %v1092, 0.0
        %v3269 = vsub.f32 0.0, %v3013
        %v3270 = vsub.f32 0.0, %v3014
        %v3271 = vsub.f32 0.0, %v3015
        %v3272 = vsub.f32 0.0, %v3016
        %v3273 = vsub.f32 0.0, %v3017
        %v3274 = vsub.f32 0.0, %v3018
        %v3275 = vsub.f32 0.0, %v3019
        %v3276 = vsub.f32 0.0, %v3020
        %v3277 = vsub.f32 0.0, %v3021
        %v3278 = vsub.f32 0.0, %v3022
        %v3279 = vsub.f32 0.0, %v3023
        %v3280 = vsub.f32 0.0, %v3024
        %v3281 = vsub.f32 0.0, %v3025
        %v3282 = vsub.f32 0.0, %v3026
        %v3283 = vsub.f32 0.0, %v3027
        %v3284 = vsub.f32 0.0, %v3028
        %v3285 = vsub.f32 0.0, %v3029
        %v3286 = vsub.f32 0.0, %v3030
        %v3287 = vsub.f32 0.0, %v3031
        %v3288 = vsub.f32 0.0, %v3032
        %v3289 = vsub.f32 0.0, %v3033
        %v3290 = vsub.f32 0.0, %v3034
        %v3291 = vsub.f32 0.0, %v3035
        %v3292 = vsub.f32 0.0, %v3036
        %v3293 = vsub.f32 0.0, %v3037
        %v3294 = vsub.f32 0.0, %v3038
        %v3295 = vsub.f32 0.0, %v3039
        %v3296 = vsub.f32 0.0, %v3040
        %v3297 = vsub.f32 0.0, %v3041
        %v3298 = vsub.f32 0.0, %v3042
        %v3299 = vsub.f32 0.0, %v3043
        %v3300 = vsub.f32 0.0, %v3044
        %v3301 = vsub.f32 0.0, %v3045
        %v3302 = vsub.f32 0.0, %v3046
        %v3303 = vsub.f32 0.0, %v3047
        %v3304 = vsub.f32 0.0, %v3048
        %v3305 = vsub.f32 0.0, %v3049
        %v3306 = vsub.f32 0.0, %v3050
        %v3307 = vsub.f32 0.0, %v3051
        %v3308 = vsub.f32 0.0, %v3052
        %v3309 = vsub.f32 0.0, %v3053
        %v3310 = vsub.f32 0.0, %v3054
        %v3311 = vsub.f32 0.0, %v3055
        %v3312 = vsub.f32 0.0, %v3056
        %v3313 = vsub.f32 0.0, %v3057
        %v3314 = vsub.f32 0.0, %v3058
        %v3315 = vsub.f32 0.0, %v3059
        %v3316 = vsub.f32 0.0, %v3060
        %v3317 = vsub.f32 0.0, %v3061
        %v3318 = vsub.f32 0.0, %v3062
        %v3319 = vsub.f32 0.0, %v3063
        %v3320 = vsub.f32 0.0, %v3064
        %v3321 = vsub.f32 0.0, %v3065
        %v3322 = vsub.f32 0.0, %v3066
        %v3323 = vsub.f32 0.0, %v3067
        %v3324 = vsub.f32 0.0, %v3068
        %v3325 = vsub.f32 0.0, %v3069
        %v3326 = vsub.f32 0.0, %v3070
        %v3327 = vsub.f32 0.0, %v3071
        %v3328 = vsub.f32 0.0, %v3072
        %v3329 = vsub.f32 0.0, %v3073
        %v3330 = vsub.f32 0.0, %v3074
        %v3331 = vsub.f32 0.0, %v3075
        %v3332 = vsub.f32 0.0, %v3076
        %v3333 = vsub.f32 0.0, %v3077
        %v3334 = vsub.f32 0.0, %v3078
        %v3335 = vsub.f32 0.0, %v3079
        %v3336 = vsub.f32 0.0, %v3080
        %v3337 = vsub.f32 0.0, %v3081
        %v3338 = vsub.f32 0.0, %v3082
        %v3339 = vsub.f32 0.0, %v3083
        %v3340 = vsub.f32 0.0, %v3084
        %v3341 = vsub.f32 0.0, %v3085
        %v3342 = vsub.f32 0.0, %v3086
        %v3343 = vsub.f32 0.0, %v3087
        %v3344 = vsub.f32 0.0, %v3088
        %v3345 = vsub.f32 0.0, %v3089
        %v3346 = vsub.f32 0.0, %v3090
        %v3347 = vsub.f32 0.0, %v3091
        %v3348 = vsub.f32 0.0, %v3092
        %v3349 = vsub.f32 0.0, %v3093
        %v3350 = vsub.f32 0.0, %v3094
        %v3351 = vsub.f32 0.0, %v3095
        %v3352 = vsub.f32 0.0, %v3096
        %v3353 = vsub.f32 0.0, %v3097
        %v3354 = vsub.f32 0.0, %v3098
        %v3355 = vsub.f32 0.0, %v3099
        %v3356 = vsub.f32 0.0, %v3100
        %v3357 = vsub.f32 0.0, %v3101
        %v3358 = vsub.f32 0.0, %v3102
        %v3359 = vsub.f32 0.0, %v3103
        %v3360 = vsub.f32 0.0, %v3104
        %v3361 = vsub.f32 0.0, %v3105
        %v3362 = vsub.f32 0.0, %v3106
        %v3363 = vsub.f32 0.0, %v3107
        %v3364 = vsub.f32 0.0, %v3108
        %v3365 = vsub.f32 0.0, %v3109
        %v3366 = vsub.f32 0.0, %v3110
        %v3367 = vsub.f32 0.0, %v3111
        %v3368 = vsub.f32 0.0, %v3112
        %v3369 = vsub.f32 0.0, %v3113
        %v3370 = vsub.f32 0.0, %v3114
        %v3371 = vsub.f32 0.0, %v3115
        %v3372 = vsub.f32 0.0, %v3116
        %v3373 = vsub.f32 0.0, %v3117
        %v3374 = vsub.f32 0.0, %v3118
        %v3375 = vsub.f32 0.0, %v3119
        %v3376 = vsub.f32 0.0, %v3120
        %v3377 = vsub.f32 0.0, %v3121
        %v3378 = vsub.f32 0.0, %v3122
        %v3379 = vsub.f32 0.0, %v3123
        %v3380 = vsub.f32 0.0, %v3124
        %v3381 = vsub.f32 0.0, %v3125
        %v3382 = vsub.f32 0.0, %v3126
        %v3383 = vsub.f32 0.0, %v3127
        %v3384 = vsub.f32 0.0, %v3128
        %v3385 = vsub.f32 0.0, %v3129
        %v3386 = vsub.f32 0.0, %v3130
        %v3387 = vsub.f32 0.0, %v3131
        %v3388 = vsub.f32 0.0, %v3132
        %v3389 = vsub.f32 0.0, %v3133
        %v3390 = vsub.f32 0.0, %v3134
        %v3391 = vsub.f32 0.0, %v3135
        %v3392 = vsub.f32 0.0, %v3136
        %v3393 = vsub.f32 0.0, %v3137
        %v3394 = vsub.f32 0.0, %v3138
        %v3395 = vsub.f32 0.0, %v3139
        %v3396 = vsub.f32 0.0, %v3140
        %v3397 = vsel %vm3141, %v3013, %v3269
        %v3398 = vsel %vm3142, %v3014, %v3270
        %v3399 = vsel %vm3143, %v3015, %v3271
        %v3400 = vsel %vm3144, %v3016, %v3272
        %v3401 = vsel %vm3145, %v3017, %v3273
        %v3402 = vsel %vm3146, %v3018, %v3274
        %v3403 = vsel %vm3147, %v3019, %v3275
        %v3404 = vsel %vm3148, %v3020, %v3276
        %v3405 = vsel %vm3149, %v3021, %v3277
        %v3406 = vsel %vm3150, %v3022, %v3278
        %v3407 = vsel %vm3151, %v3023, %v3279
        %v3408 = vsel %vm3152, %v3024, %v3280
        %v3409 = vsel %vm3153, %v3025, %v3281
        %v3410 = vsel %vm3154, %v3026, %v3282
        %v3411 = vsel %vm3155, %v3027, %v3283
        %v3412 = vsel %vm3156, %v3028, %v3284
        %v3413 = vsel %vm3157, %v3029, %v3285
        %v3414 = vsel %vm3158, %v3030, %v3286
        %v3415 = vsel %vm3159, %v3031, %v3287
        %v3416 = vsel %vm3160, %v3032, %v3288
        %v3417 = vsel %vm3161, %v3033, %v3289
        %v3418 = vsel %vm3162, %v3034, %v3290
        %v3419 = vsel %vm3163, %v3035, %v3291
        %v3420 = vsel %vm3164, %v3036, %v3292
        %v3421 = vsel %vm3165, %v3037, %v3293
        %v3422 = vsel %vm3166, %v3038, %v3294
        %v3423 = vsel %vm3167, %v3039, %v3295
        %v3424 = vsel %vm3168, %v3040, %v3296
        %v3425 = vsel %vm3169, %v3041, %v3297
        %v3426 = vsel %vm3170, %v3042, %v3298
        %v3427 = vsel %vm3171, %v3043, %v3299
        %v3428 = vsel %vm3172, %v3044, %v3300
        %v3429 = vsel %vm3173, %v3045, %v3301
        %v3430 = vsel %vm3174, %v3046, %v3302
        %v3431 = vsel %vm3175, %v3047, %v3303
        %v3432 = vsel %vm3176, %v3048, %v3304
        %v3433 = vsel %vm3177, %v3049, %v3305
        %v3434 = vsel %vm3178, %v3050, %v3306
        %v3435 = vsel %vm3179, %v3051, %v3307
        %v3436 = vsel %vm3180, %v3052, %v3308
        %v3437 = vsel %vm3181, %v3053, %v3309
        %v3438 = vsel %vm3182, %v3054, %v3310
        %v3439 = vsel %vm3183, %v3055, %v3311
        %v3440 = vsel %vm3184, %v3056, %v3312
        %v3441 = vsel %vm3185, %v3057, %v3313
        %v3442 = vsel %vm3186, %v3058, %v3314
        %v3443 = vsel %vm3187, %v3059, %v3315
        %v3444 = vsel %vm3188, %v3060, %v3316
        %v3445 = vsel %vm3189, %v3061, %v3317
        %v3446 = vsel %vm3190, %v3062, %v3318
        %v3447 = vsel %vm3191, %v3063, %v3319
        %v3448 = vsel %vm3192, %v3064, %v3320
        %v3449 = vsel %vm3193, %v3065, %v3321
        %v3450 = vsel %vm3194, %v3066, %v3322
        %v3451 = vsel %vm3195, %v3067, %v3323
        %v3452 = vsel %vm3196, %v3068, %v3324
        %v3453 = vsel %vm3197, %v3069, %v3325
        %v3454 = vsel %vm3198, %v3070, %v3326
        %v3455 = vsel %vm3199, %v3071, %v3327
        %v3456 = vsel %vm3200, %v3072, %v3328
        %v3457 = vsel %vm3201, %v3073, %v3329
        %v3458 = vsel %vm3202, %v3074, %v3330
        %v3459 = vsel %vm3203, %v3075, %v3331
        %v3460 = vsel %vm3204, %v3076, %v3332
        %v3461 = vsel %vm3205, %v3077, %v3333
        %v3462 = vsel %vm3206, %v3078, %v3334
        %v3463 = vsel %vm3207, %v3079, %v3335
        %v3464 = vsel %vm3208, %v3080, %v3336
        %v3465 = vsel %vm3209, %v3081, %v3337
        %v3466 = vsel %vm3210, %v3082, %v3338
        %v3467 = vsel %vm3211, %v3083, %v3339
        %v3468 = vsel %vm3212, %v3084, %v3340
        %v3469 = vsel %vm3213, %v3085, %v3341
        %v3470 = vsel %vm3214, %v3086, %v3342
        %v3471 = vsel %vm3215, %v3087, %v3343
        %v3472 = vsel %vm3216, %v3088, %v3344
        %v3473 = vsel %vm3217, %v3089, %v3345
        %v3474 = vsel %vm3218, %v3090, %v3346
        %v3475 = vsel %vm3219, %v3091, %v3347
        %v3476 = vsel %vm3220, %v3092, %v3348
        %v3477 = vsel %vm3221, %v3093, %v3349
        %v3478 = vsel %vm3222, %v3094, %v3350
        %v3479 = vsel %vm3223, %v3095, %v3351
        %v3480 = vsel %vm3224, %v3096, %v3352
        %v3481 = vsel %vm3225, %v3097, %v3353
        %v3482 = vsel %vm3226, %v3098, %v3354
        %v3483 = vsel %vm3227, %v3099, %v3355
        %v3484 = vsel %vm3228, %v3100, %v3356
        %v3485 = vsel %vm3229, %v3101, %v3357
        %v3486 = vsel %vm3230, %v3102, %v3358
        %v3487 = vsel %vm3231, %v3103, %v3359
        %v3488 = vsel %vm3232, %v3104, %v3360
        %v3489 = vsel %vm3233, %v3105, %v3361
        %v3490 = vsel %vm3234, %v3106, %v3362
        %v3491 = vsel %vm3235, %v3107, %v3363
        %v3492 = vsel %vm3236, %v3108, %v3364
        %v3493 = vsel %vm3237, %v3109, %v3365
        %v3494 = vsel %vm3238, %v3110, %v3366
        %v3495 = vsel %vm3239, %v3111, %v3367
        %v3496 = vsel %vm3240, %v3112, %v3368
        %v3497 = vsel %vm3241, %v3113, %v3369
        %v3498 = vsel %vm3242, %v3114, %v3370
        %v3499 = vsel %vm3243, %v3115, %v3371
        %v3500 = vsel %vm3244, %v3116, %v3372
        %v3501 = vsel %vm3245, %v3117, %v3373
        %v3502 = vsel %vm3246, %v3118, %v3374
        %v3503 = vsel %vm3247, %v3119, %v3375
        %v3504 = vsel %vm3248, %v3120, %v3376
        %v3505 = vsel %vm3249, %v3121, %v3377
        %v3506 = vsel %vm3250, %v3122, %v3378
        %v3507 = vsel %vm3251, %v3123, %v3379
        %v3508 = vsel %vm3252, %v3124, %v3380
        %v3509 = vsel %vm3253, %v3125, %v3381
        %v3510 = vsel %vm3254, %v3126, %v3382
        %v3511 = vsel %vm3255, %v3127, %v3383
        %v3512 = vsel %vm3256, %v3128, %v3384
        %v3513 = vsel %vm3257, %v3129, %v3385
        %v3514 = vsel %vm3258, %v3130, %v3386
        %v3515 = vsel %vm3259, %v3131, %v3387
        %v3516 = vsel %vm3260, %v3132, %v3388
        %v3517 = vsel %vm3261, %v3133, %v3389
        %v3518 = vsel %vm3262, %v3134, %v3390
        %v3519 = vsel %vm3263, %v3135, %v3391
        %v3520 = vsel %vm3264, %v3136, %v3392
        %v3521 = vsel %vm3265, %v3137, %v3393
        %v3522 = vsel %vm3266, %v3138, %v3394
        %v3523 = vsel %vm3267, %v3139, %v3395
        %v3524 = vsel %vm3268, %v3140, %v3396
        %v3525 = vadd.f32 %v3397, 1.0
        %v3526 = vadd.f32 %v3398, 1.0
        %v3527 = vadd.f32 %v3399, 1.0
        %v3528 = vadd.f32 %v3400, 1.0
        %v3529 = vadd.f32 %v3401, 1.0
        %v3530 = vadd.f32 %v3402, 1.0
        %v3531 = vadd.f32 %v3403, 1.0
        %v3532 = vadd.f32 %v3404, 1.0
        %v3533 = vadd.f32 %v3405, 1.0
        %v3534 = vadd.f32 %v3406, 1.0
        %v3535 = vadd.f32 %v3407, 1.0
        %v3536 = vadd.f32 %v3408, 1.0
        %v3537 = vadd.f32 %v3409, 1.0
        %v3538 = vadd.f32 %v3410, 1.0
        %v3539 = vadd.f32 %v3411, 1.0
        %v3540 = vadd.f32 %v3412, 1.0
        %v3541 = vadd.f32 %v3413, 1.0
        %v3542 = vadd.f32 %v3414, 1.0
        %v3543 = vadd.f32 %v3415, 1.0
        %v3544 = vadd.f32 %v3416, 1.0
        %v3545 = vadd.f32 %v3417, 1.0
        %v3546 = vadd.f32 %v3418, 1.0
        %v3547 = vadd.f32 %v3419, 1.0
        %v3548 = vadd.f32 %v3420, 1.0
        %v3549 = vadd.f32 %v3421, 1.0
        %v3550 = vadd.f32 %v3422, 1.0
        %v3551 = vadd.f32 %v3423, 1.0
        %v3552 = vadd.f32 %v3424, 1.0
        %v3553 = vadd.f32 %v3425, 1.0
        %v3554 = vadd.f32 %v3426, 1.0
        %v3555 = vadd.f32 %v3427, 1.0
        %v3556 = vadd.f32 %v3428, 1.0
        %v3557 = vadd.f32 %v3429, 1.0
        %v3558 = vadd.f32 %v3430, 1.0
        %v3559 = vadd.f32 %v3431, 1.0
        %v3560 = vadd.f32 %v3432, 1.0
        %v3561 = vadd.f32 %v3433, 1.0
        %v3562 = vadd.f32 %v3434, 1.0
        %v3563 = vadd.f32 %v3435, 1.0
        %v3564 = vadd.f32 %v3436, 1.0
        %v3565 = vadd.f32 %v3437, 1.0
        %v3566 = vadd.f32 %v3438, 1.0
        %v3567 = vadd.f32 %v3439, 1.0
        %v3568 = vadd.f32 %v3440, 1.0
        %v3569 = vadd.f32 %v3441, 1.0
        %v3570 = vadd.f32 %v3442, 1.0
        %v3571 = vadd.f32 %v3443, 1.0
        %v3572 = vadd.f32 %v3444, 1.0
        %v3573 = vadd.f32 %v3445, 1.0
        %v3574 = vadd.f32 %v3446, 1.0
        %v3575 = vadd.f32 %v3447, 1.0
        %v3576 = vadd.f32 %v3448, 1.0
        %v3577 = vadd.f32 %v3449, 1.0
        %v3578 = vadd.f32 %v3450, 1.0
        %v3579 = vadd.f32 %v3451, 1.0
        %v3580 = vadd.f32 %v3452, 1.0
        %v3581 = vadd.f32 %v3453, 1.0
        %v3582 = vadd.f32 %v3454, 1.0
        %v3583 = vadd.f32 %v3455, 1.0
        %v3584 = vadd.f32 %v3456, 1.0
        %v3585 = vadd.f32 %v3457, 1.0
        %v3586 = vadd.f32 %v3458, 1.0
        %v3587 = vadd.f32 %v3459, 1.0
        %v3588 = vadd.f32 %v3460, 1.0
        %v3589 = vadd.f32 %v3461, 1.0
        %v3590 = vadd.f32 %v3462, 1.0
        %v3591 = vadd.f32 %v3463, 1.0
        %v3592 = vadd.f32 %v3464, 1.0
        %v3593 = vadd.f32 %v3465, 1.0
        %v3594 = vadd.f32 %v3466, 1.0
        %v3595 = vadd.f32 %v3467, 1.0
        %v3596 = vadd.f32 %v3468, 1.0
        %v3597 = vadd.f32 %v3469, 1.0
        %v3598 = vadd.f32 %v3470, 1.0
        %v3599 = vadd.f32 %v3471, 1.0
        %v3600 = vadd.f32 %v3472, 1.0
        %v3601 = vadd.f32 %v3473, 1.0
        %v3602 = vadd.f32 %v3474, 1.0
        %v3603 = vadd.f32 %v3475, 1.0
        %v3604 = vadd.f32 %v3476, 1.0
        %v3605 = vadd.f32 %v3477, 1.0
        %v3606 = vadd.f32 %v3478, 1.0
        %v3607 = vadd.f32 %v3479, 1.0
        %v3608 = vadd.f32 %v3480, 1.0
        %v3609 = vadd.f32 %v3481, 1.0
        %v3610 = vadd.f32 %v3482, 1.0
        %v3611 = vadd.f32 %v3483, 1.0
        %v3612 = vadd.f32 %v3484, 1.0
        %v3613 = vadd.f32 %v3485, 1.0
        %v3614 = vadd.f32 %v3486, 1.0
        %v3615 = vadd.f32 %v3487, 1.0
        %v3616 = vadd.f32 %v3488, 1.0
        %v3617 = vadd.f32 %v3489, 1.0
        %v3618 = vadd.f32 %v3490, 1.0
        %v3619 = vadd.f32 %v3491, 1.0
        %v3620 = vadd.f32 %v3492, 1.0
        %v3621 = vadd.f32 %v3493, 1.0
        %v3622 = vadd.f32 %v3494, 1.0
        %v3623 = vadd.f32 %v3495, 1.0
        %v3624 = vadd.f32 %v3496, 1.0
        %v3625 = vadd.f32 %v3497, 1.0
        %v3626 = vadd.f32 %v3498, 1.0
        %v3627 = vadd.f32 %v3499, 1.0
        %v3628 = vadd.f32 %v3500, 1.0
        %v3629 = vadd.f32 %v3501, 1.0
        %v3630 = vadd.f32 %v3502, 1.0
        %v3631 = vadd.f32 %v3503, 1.0
        %v3632 = vadd.f32 %v3504, 1.0
        %v3633 = vadd.f32 %v3505, 1.0
        %v3634 = vadd.f32 %v3506, 1.0
        %v3635 = vadd.f32 %v3507, 1.0
        %v3636 = vadd.f32 %v3508, 1.0
        %v3637 = vadd.f32 %v3509, 1.0
        %v3638 = vadd.f32 %v3510, 1.0
        %v3639 = vadd.f32 %v3511, 1.0
        %v3640 = vadd.f32 %v3512, 1.0
        %v3641 = vadd.f32 %v3513, 1.0
        %v3642 = vadd.f32 %v3514, 1.0
        %v3643 = vadd.f32 %v3515, 1.0
        %v3644 = vadd.f32 %v3516, 1.0
        %v3645 = vadd.f32 %v3517, 1.0
        %v3646 = vadd.f32 %v3518, 1.0
        %v3647 = vadd.f32 %v3519, 1.0
        %v3648 = vadd.f32 %v3520, 1.0
        %v3649 = vadd.f32 %v3521, 1.0
        %v3650 = vadd.f32 %v3522, 1.0
        %v3651 = vadd.f32 %v3523, 1.0
        %v3652 = vadd.f32 %v3524, 1.0
        %v3653 = vmul.f32 %v837, %v3525
        %v3654 = vmul.f32 %v838, %v3526
        %v3655 = vmul.f32 %v839, %v3527
        %v3656 = vmul.f32 %v840, %v3528
        %v3657 = vmul.f32 %v841, %v3529
        %v3658 = vmul.f32 %v842, %v3530
        %v3659 = vmul.f32 %v843, %v3531
        %v3660 = vmul.f32 %v844, %v3532
        %v3661 = vmul.f32 %v845, %v3533
        %v3662 = vmul.f32 %v846, %v3534
        %v3663 = vmul.f32 %v847, %v3535
        %v3664 = vmul.f32 %v848, %v3536
        %v3665 = vmul.f32 %v849, %v3537
        %v3666 = vmul.f32 %v850, %v3538
        %v3667 = vmul.f32 %v851, %v3539
        %v3668 = vmul.f32 %v852, %v3540
        %v3669 = vmul.f32 %v853, %v3541
        %v3670 = vmul.f32 %v854, %v3542
        %v3671 = vmul.f32 %v855, %v3543
        %v3672 = vmul.f32 %v856, %v3544
        %v3673 = vmul.f32 %v857, %v3545
        %v3674 = vmul.f32 %v858, %v3546
        %v3675 = vmul.f32 %v859, %v3547
        %v3676 = vmul.f32 %v860, %v3548
        %v3677 = vmul.f32 %v861, %v3549
        %v3678 = vmul.f32 %v862, %v3550
        %v3679 = vmul.f32 %v863, %v3551
        %v3680 = vmul.f32 %v864, %v3552
        %v3681 = vmul.f32 %v865, %v3553
        %v3682 = vmul.f32 %v866, %v3554
        %v3683 = vmul.f32 %v867, %v3555
        %v3684 = vmul.f32 %v868, %v3556
        %v3685 = vmul.f32 %v869, %v3557
        %v3686 = vmul.f32 %v870, %v3558
        %v3687 = vmul.f32 %v871, %v3559
        %v3688 = vmul.f32 %v872, %v3560
        %v3689 = vmul.f32 %v873, %v3561
        %v3690 = vmul.f32 %v874, %v3562
        %v3691 = vmul.f32 %v875, %v3563
        %v3692 = vmul.f32 %v876, %v3564
        %v3693 = vmul.f32 %v877, %v3565
        %v3694 = vmul.f32 %v878, %v3566
        %v3695 = vmul.f32 %v879, %v3567
        %v3696 = vmul.f32 %v880, %v3568
        %v3697 = vmul.f32 %v881, %v3569
        %v3698 = vmul.f32 %v882, %v3570
        %v3699 = vmul.f32 %v883, %v3571
        %v3700 = vmul.f32 %v884, %v3572
        %v3701 = vmul.f32 %v885, %v3573
        %v3702 = vmul.f32 %v886, %v3574
        %v3703 = vmul.f32 %v887, %v3575
        %v3704 = vmul.f32 %v888, %v3576
        %v3705 = vmul.f32 %v889, %v3577
        %v3706 = vmul.f32 %v890, %v3578
        %v3707 = vmul.f32 %v891, %v3579
        %v3708 = vmul.f32 %v892, %v3580
        %v3709 = vmul.f32 %v893, %v3581
        %v3710 = vmul.f32 %v894, %v3582
        %v3711 = vmul.f32 %v895, %v3583
        %v3712 = vmul.f32 %v896, %v3584
        %v3713 = vmul.f32 %v897, %v3585
        %v3714 = vmul.f32 %v898, %v3586
        %v3715 = vmul.f32 %v899, %v3587
        %v3716 = vmul.f32 %v900, %v3588
        %v3717 = vmul.f32 %v901, %v3589
        %v3718 = vmul.f32 %v902, %v3590
        %v3719 = vmul.f32 %v903, %v3591
        %v3720 = vmul.f32 %v904, %v3592
        %v3721 = vmul.f32 %v905, %v3593
        %v3722 = vmul.f32 %v906, %v3594
        %v3723 = vmul.f32 %v907, %v3595
        %v3724 = vmul.f32 %v908, %v3596
        %v3725 = vmul.f32 %v909, %v3597
        %v3726 = vmul.f32 %v910, %v3598
        %v3727 = vmul.f32 %v911, %v3599
        %v3728 = vmul.f32 %v912, %v3600
        %v3729 = vmul.f32 %v913, %v3601
        %v3730 = vmul.f32 %v914, %v3602
        %v3731 = vmul.f32 %v915, %v3603
        %v3732 = vmul.f32 %v916, %v3604
        %v3733 = vmul.f32 %v917, %v3605
        %v3734 = vmul.f32 %v918, %v3606
        %v3735 = vmul.f32 %v919, %v3607
        %v3736 = vmul.f32 %v920, %v3608
        %v3737 = vmul.f32 %v921, %v3609
        %v3738 = vmul.f32 %v922, %v3610
        %v3739 = vmul.f32 %v923, %v3611
        %v3740 = vmul.f32 %v924, %v3612
        %v3741 = vmul.f32 %v925, %v3613
        %v3742 = vmul.f32 %v926, %v3614
        %v3743 = vmul.f32 %v927, %v3615
        %v3744 = vmul.f32 %v928, %v3616
        %v3745 = vmul.f32 %v929, %v3617
        %v3746 = vmul.f32 %v930, %v3618
        %v3747 = vmul.f32 %v931, %v3619
        %v3748 = vmul.f32 %v932, %v3620
        %v3749 = vmul.f32 %v933, %v3621
        %v3750 = vmul.f32 %v934, %v3622
        %v3751 = vmul.f32 %v935, %v3623
        %v3752 = vmul.f32 %v936, %v3624
        %v3753 = vmul.f32 %v937, %v3625
        %v3754 = vmul.f32 %v938, %v3626
        %v3755 = vmul.f32 %v939, %v3627
        %v3756 = vmul.f32 %v940, %v3628
        %v3757 = vmul.f32 %v941, %v3629
        %v3758 = vmul.f32 %v942, %v3630
        %v3759 = vmul.f32 %v943, %v3631
        %v3760 = vmul.f32 %v944, %v3632
        %v3761 = vmul.f32 %v945, %v3633
        %v3762 = vmul.f32 %v946, %v3634
        %v3763 = vmul.f32 %v947, %v3635
        %v3764 = vmul.f32 %v948, %v3636
        %v3765 = vmul.f32 %v949, %v3637
        %v3766 = vmul.f32 %v950, %v3638
        %v3767 = vmul.f32 %v951, %v3639
        %v3768 = vmul.f32 %v952, %v3640
        %v3769 = vmul.f32 %v953, %v3641
        %v3770 = vmul.f32 %v954, %v3642
        %v3771 = vmul.f32 %v955, %v3643
        %v3772 = vmul.f32 %v956, %v3644
        %v3773 = vmul.f32 %v957, %v3645
        %v3774 = vmul.f32 %v958, %v3646
        %v3775 = vmul.f32 %v959, %v3647
        %v3776 = vmul.f32 %v960, %v3648
        %v3777 = vmul.f32 %v961, %v3649
        %v3778 = vmul.f32 %v962, %v3650
        %v3779 = vmul.f32 %v963, %v3651
        %v3780 = vmul.f32 %v964, %v3652
        %v3781 = vpack.c.bf16 %v3655, %v3653
        %v3782 = vpack.c.bf16 %v3656, %v3654
        %v3783 = vpack.c.bf16 %v3659, %v3657
        %v3784 = vpack.c.bf16 %v3660, %v3658
        %v3785 = vpack.c.bf16 %v3663, %v3661
        %v3786 = vpack.c.bf16 %v3664, %v3662
        %v3787 = vpack.c.bf16 %v3667, %v3665
        %v3788 = vpack.c.bf16 %v3668, %v3666
        %v3789 = vpack.c.bf16 %v3671, %v3669
        %v3790 = vpack.c.bf16 %v3672, %v3670
        %v3791 = vpack.c.bf16 %v3675, %v3673
        %v3792 = vpack.c.bf16 %v3676, %v3674
        %v3793 = vpack.c.bf16 %v3679, %v3677
        %v3794 = vpack.c.bf16 %v3680, %v3678
        %v3795 = vpack.c.bf16 %v3683, %v3681
        %v3796 = vpack.c.bf16 %v3684, %v3682
        %v3797 = vpack.c.bf16 %v3687, %v3685
        %v3798 = vpack.c.bf16 %v3688, %v3686
        %v3799 = vpack.c.bf16 %v3691, %v3689
        %v3800 = vpack.c.bf16 %v3692, %v3690
        %v3801 = vpack.c.bf16 %v3695, %v3693
        %v3802 = vpack.c.bf16 %v3696, %v3694
        %v3803 = vpack.c.bf16 %v3699, %v3697
        %v3804 = vpack.c.bf16 %v3700, %v3698
        %v3805 = vpack.c.bf16 %v3703, %v3701
        %v3806 = vpack.c.bf16 %v3704, %v3702
        %v3807 = vpack.c.bf16 %v3707, %v3705
        %v3808 = vpack.c.bf16 %v3708, %v3706
        %v3809 = vpack.c.bf16 %v3711, %v3709
        %v3810 = vpack.c.bf16 %v3712, %v3710
        %v3811 = vpack.c.bf16 %v3715, %v3713
        %v3812 = vpack.c.bf16 %v3716, %v3714
        %v3813 = vpack.c.bf16 %v3719, %v3717
        %v3814 = vpack.c.bf16 %v3720, %v3718
        %v3815 = vpack.c.bf16 %v3723, %v3721
        %v3816 = vpack.c.bf16 %v3724, %v3722
        %v3817 = vpack.c.bf16 %v3727, %v3725
        %v3818 = vpack.c.bf16 %v3728, %v3726
        %v3819 = vpack.c.bf16 %v3731, %v3729
        %v3820 = vpack.c.bf16 %v3732, %v3730
        %v3821 = vpack.c.bf16 %v3735, %v3733
        %v3822 = vpack.c.bf16 %v3736, %v3734
        %v3823 = vpack.c.bf16 %v3739, %v3737
        %v3824 = vpack.c.bf16 %v3740, %v3738
        %v3825 = vpack.c.bf16 %v3743, %v3741
        %v3826 = vpack.c.bf16 %v3744, %v3742
        %v3827 = vpack.c.bf16 %v3747, %v3745
        %v3828 = vpack.c.bf16 %v3748, %v3746
        %v3829 = vpack.c.bf16 %v3751, %v3749
        %v3830 = vpack.c.bf16 %v3752, %v3750
        %v3831 = vpack.c.bf16 %v3755, %v3753
        %v3832 = vpack.c.bf16 %v3756, %v3754
        %v3833 = vpack.c.bf16 %v3759, %v3757
        %v3834 = vpack.c.bf16 %v3760, %v3758
        %v3835 = vpack.c.bf16 %v3763, %v3761
        %v3836 = vpack.c.bf16 %v3764, %v3762
        %v3837 = vpack.c.bf16 %v3767, %v3765
        %v3838 = vpack.c.bf16 %v3768, %v3766
        %v3839 = vpack.c.bf16 %v3771, %v3769
        %v3840 = vpack.c.bf16 %v3772, %v3770
        %v3841 = vpack.c.bf16 %v3775, %v3773
        %v3842 = vpack.c.bf16 %v3776, %v3774
        %v3843 = vpack.c.bf16 %v3779, %v3777
        %v3844 = vpack.c.bf16 %v3780, %v3778
        %v3845 = vld [vmem:[#allocation7] sm:$0xf]
        %v3846 = vld [vmem:[#allocation7 + $0x4] sm:$0xf]
        %v3847 = vld [vmem:[#allocation7 + $0x8] sm:$0xf]
        %v3848 = vld [vmem:[#allocation7 + $0xc] sm:$0xf]
        %v3849 = vld [vmem:[#allocation7 + $0x10] sm:$0xf]
        %v3850 = vld [vmem:[#allocation7 + $0x14] sm:$0xf]
        %v3851 = vld [vmem:[#allocation7 + $0x18] sm:$0xf]
        %v3852 = vld [vmem:[#allocation7 + $0x1c] sm:$0xf]
        %v3853 = vld [vmem:[#allocation7 + $0x20] sm:$0xf]
        %v3854 = vld [vmem:[#allocation7 + $0x24] sm:$0xf]
        %v3855 = vld [vmem:[#allocation7 + $0x28] sm:$0xf]
        %v3856 = vld [vmem:[#allocation7 + $0x2c] sm:$0xf]
        %v3857 = vld [vmem:[#allocation7 + $0x30] sm:$0xf]
        %v3858 = vld [vmem:[#allocation7 + $0x34] sm:$0xf]
        %v3859 = vld [vmem:[#allocation7 + $0x38] sm:$0xf]
        %v3860 = vld [vmem:[#allocation7 + $0x3c] sm:$0xf]
        %v3861 = vld [vmem:[#allocation7 + $0x40] sm:$0xf]
        %v3862 = vld [vmem:[#allocation7 + $0x44] sm:$0xf]
        %v3863 = vld [vmem:[#allocation7 + $0x48] sm:$0xf]
        %v3864 = vld [vmem:[#allocation7 + $0x4c] sm:$0xf]
        %v3865 = vld [vmem:[#allocation7 + $0x50] sm:$0xf]
        %v3866 = vld [vmem:[#allocation7 + $0x54] sm:$0xf]
        %v3867 = vld [vmem:[#allocation7 + $0x58] sm:$0xf]
        %v3868 = vld [vmem:[#allocation7 + $0x5c] sm:$0xf]
        %v3869 = vld [vmem:[#allocation7 + $0x60] sm:$0xf]
        %v3870 = vld [vmem:[#allocation7 + $0x64] sm:$0xf]
        %v3871 = vld [vmem:[#allocation7 + $0x68] sm:$0xf]
        %v3872 = vld [vmem:[#allocation7 + $0x6c] sm:$0xf]
        %v3873 = vld [vmem:[#allocation7 + $0x70] sm:$0xf]
        %v3874 = vld [vmem:[#allocation7 + $0x74] sm:$0xf]
        %v3875 = vld [vmem:[#allocation7 + $0x78] sm:$0xf]
        %v3876 = vld [vmem:[#allocation7 + $0x7c] sm:$0xf]
        %v3877 = vld [vmem:[%s4] sm:$0x1]
        %v3879 = vlaneseq
        %v3880 = vshrl.u32 %v3879, 7
        %v3881 = vsub.s32 0, %v3880
        %v3882 = vrot.slane %v3877, %v3881
        %v3916 = vunpack.c.l.b16 %v3845
        %v3917 = vunpack.c.l.b16 %v3846
        %v3918 = vunpack.c.l.b16 %v3847
        %v3919 = vunpack.c.l.b16 %v3848
        %v3920 = vunpack.c.l.b16 %v3849
        %v3921 = vunpack.c.l.b16 %v3850
        %v3922 = vunpack.c.l.b16 %v3851
        %v3923 = vunpack.c.l.b16 %v3852
        %v3924 = vunpack.c.l.b16 %v3853
        %v3925 = vunpack.c.l.b16 %v3854
        %v3926 = vunpack.c.l.b16 %v3855
        %v3927 = vunpack.c.l.b16 %v3856
        %v3928 = vunpack.c.l.b16 %v3857
        %v3929 = vunpack.c.l.b16 %v3858
        %v3930 = vunpack.c.l.b16 %v3859
        %v3931 = vunpack.c.l.b16 %v3860
        %v3932 = vunpack.c.l.b16 %v3861
        %v3933 = vunpack.c.l.b16 %v3862
        %v3934 = vunpack.c.l.b16 %v3863
        %v3935 = vunpack.c.l.b16 %v3864
        %v3936 = vunpack.c.l.b16 %v3865
        %v3937 = vunpack.c.l.b16 %v3866
        %v3938 = vunpack.c.l.b16 %v3867
        %v3939 = vunpack.c.l.b16 %v3868
        %v3940 = vunpack.c.l.b16 %v3869
        %v3941 = vunpack.c.l.b16 %v3870
        %v3942 = vunpack.c.l.b16 %v3871
        %v3943 = vunpack.c.l.b16 %v3872
        %v3944 = vunpack.c.l.b16 %v3873
        %v3945 = vunpack.c.l.b16 %v3874
        %v3946 = vunpack.c.l.b16 %v3875
        %v3947 = vunpack.c.l.b16 %v3876
        %v3948 = vpack.c.b16 %v3917, %v3916
        %v3949 = vpack.c.b16 %v3919, %v3918
        %v3950 = vpack.c.b16 %v3921, %v3920
        %v3951 = vpack.c.b16 %v3923, %v3922
        %v3952 = vpack.c.b16 %v3925, %v3924
        %v3953 = vpack.c.b16 %v3927, %v3926
        %v3954 = vpack.c.b16 %v3929, %v3928
        %v3955 = vpack.c.b16 %v3931, %v3930
        %v3956 = vpack.c.b16 %v3933, %v3932
        %v3957 = vpack.c.b16 %v3935, %v3934
        %v3958 = vpack.c.b16 %v3937, %v3936
        %v3959 = vpack.c.b16 %v3939, %v3938
        %v3960 = vpack.c.b16 %v3941, %v3940
        %v3961 = vpack.c.b16 %v3943, %v3942
        %v3962 = vpack.c.b16 %v3945, %v3944
        %v3963 = vpack.c.b16 %v3947, %v3946
        %3980 = vmatprep.subr.bf16.mxu0 0
        %3981 = vmatpush1.bf16.msra.mxu0 %v3955
        %3982 = vmatprep.subr.bf16.mxu0 0
        %3983 = vmatpush1.bf16.msra.mxu0 %v3954
        %3984 = vmatprep.subr.bf16.mxu0 0
        %3985 = vmatpush1.bf16.msra.mxu0 %v3953
        %3986 = vmatprep.subr.bf16.mxu0 0
        %3987 = vmatpush1.bf16.msra.mxu0 %v3952
        %3988 = vmatprep.subr.bf16.mxu0 0
        %3989 = vmatpush1.bf16.msra.mxu0 %v3951
        %3990 = vmatprep.subr.bf16.mxu0 0
        %3991 = vmatpush1.bf16.msra.mxu0 %v3950
        %3992 = vmatprep.subr.bf16.mxu0 0
        %3993 = vmatpush1.bf16.msra.mxu0 %v3949
        %3994 = vmatprep.subr.bf16.mxu0 0
        %3995 = vmatpush1.bf16.msra.mxu0 %v3948
        %3996 = vmatprep.subr.bf16.mxu0 0
        %3997 = vmatpush2.bf16.msra.mxu0 %v3963
        %3998 = vmatprep.subr.bf16.mxu0 0
        %3999 = vmatpush2.bf16.msra.mxu0 %v3962
        %4000 = vmatprep.subr.bf16.mxu0 0
        %4001 = vmatpush2.bf16.msra.mxu0 %v3961
        %4002 = vmatprep.subr.bf16.mxu0 0
        %4003 = vmatpush2.bf16.msra.mxu0 %v3960
        %4004 = vmatprep.subr.bf16.mxu0 0
        %4005 = vmatpush2.bf16.msra.mxu0 %v3959
        %4006 = vmatprep.subr.bf16.mxu0 0
        %4007 = vmatpush2.bf16.msra.mxu0 %v3958
        %4008 = vmatprep.subr.bf16.mxu0 0
        %4009 = vmatpush2.bf16.msra.mxu0 %v3957
        %4010 = vmatprep.subr.bf16.mxu0 0
        %4011 = vmatpush2.bf16.msra.mxu0 %v3956
        %4012 = vmatprep.mubr.bf16.mxu0 %v3782
        %4013 = vmatmul.mubr.bf16.gmra.mxu0 %v3781
        %v4014 = vpop.f32.mrf.mxu0
        %v4015 = vadd.f32 %v3882, %v4014
        %v4016 = vpop.f32.mrf.mxu0
        %v4017 = vpop.f32.mrf.mxu0
        %v4018 = vadd.f32 %v3882, %v4017
        %v4019 = vpop.f32.mrf.mxu0
        %4020 = vmatprep.mubr.bf16.mxu0 %v3784
        %4021 = vmatmul.mubr.bf16.gmra.mxu0 %v3783
        %v4022 = vpop.f32.mrf.mxu0
        %v4023 = vadd.f32 %v3882, %v4022
        %v4024 = vpop.f32.mrf.mxu0
        %v4025 = vpop.f32.mrf.mxu0
        %v4026 = vadd.f32 %v3882, %v4025
        %v4027 = vpop.f32.mrf.mxu0
        %4028 = vmatprep.mubr.bf16.mxu0 %v3786
        %4029 = vmatmul.mubr.bf16.gmra.mxu0 %v3785
        %v4030 = vpop.f32.mrf.mxu0
        %v4031 = vadd.f32 %v3882, %v4030
        %v4032 = vpop.f32.mrf.mxu0
        %v4033 = vpop.f32.mrf.mxu0
        %v4034 = vadd.f32 %v3882, %v4033
        %v4035 = vpop.f32.mrf.mxu0
        %4036 = vmatprep.mubr.bf16.mxu0 %v3788
        %4037 = vmatmul.mubr.bf16.gmra.mxu0 %v3787
        %v4038 = vpop.f32.mrf.mxu0
        %v4039 = vadd.f32 %v3882, %v4038
        %v4040 = vpop.f32.mrf.mxu0
        %v4041 = vpop.f32.mrf.mxu0
        %v4042 = vadd.f32 %v3882, %v4041
        %v4043 = vpop.f32.mrf.mxu0
        %4044 = vmatprep.mubr.bf16.mxu0 %v3790
        %4045 = vmatmul.mubr.bf16.gmra.mxu0 %v3789
        %v4046 = vpop.f32.mrf.mxu0
        %v4047 = vadd.f32 %v3882, %v4046
        %v4048 = vpop.f32.mrf.mxu0
        %v4049 = vpop.f32.mrf.mxu0
        %v4050 = vadd.f32 %v3882, %v4049
        %v4051 = vpop.f32.mrf.mxu0
        %4052 = vmatprep.mubr.bf16.mxu0 %v3792
        %4053 = vmatmul.mubr.bf16.gmra.mxu0 %v3791
        %v4054 = vpop.f32.mrf.mxu0
        %v4055 = vadd.f32 %v3882, %v4054
        %v4056 = vpop.f32.mrf.mxu0
        %v4057 = vpop.f32.mrf.mxu0
        %v4058 = vadd.f32 %v3882, %v4057
        %v4059 = vpop.f32.mrf.mxu0
        %4060 = vmatprep.mubr.bf16.mxu0 %v3794
        %4061 = vmatmul.mubr.bf16.gmra.mxu0 %v3793
        %v4062 = vpop.f32.mrf.mxu0
        %v4063 = vadd.f32 %v3882, %v4062
        %v4064 = vpop.f32.mrf.mxu0
        %v4065 = vpop.f32.mrf.mxu0
        %v4066 = vadd.f32 %v3882, %v4065
        %v4067 = vpop.f32.mrf.mxu0
        %4068 = vmatprep.mubr.bf16.mxu0 %v3796
        %4069 = vmatmul.mubr.bf16.gmra.mxu0 %v3795
        %v4070 = vpop.f32.mrf.mxu0
        %v4071 = vadd.f32 %v3882, %v4070
        %v4072 = vpop.f32.mrf.mxu0
        %v4073 = vpop.f32.mrf.mxu0
        %v4074 = vadd.f32 %v3882, %v4073
        %v4075 = vpop.f32.mrf.mxu0
        %4076 = vmatprep.mubr.bf16.mxu0 %v3798
        %4077 = vmatmul.mubr.bf16.gmra.mxu0 %v3797
        %v4078 = vpop.f32.mrf.mxu0
        %v4079 = vadd.f32 %v3882, %v4078
        %v4080 = vpop.f32.mrf.mxu0
        %v4081 = vpop.f32.mrf.mxu0
        %v4082 = vadd.f32 %v3882, %v4081
        %v4083 = vpop.f32.mrf.mxu0
        %4084 = vmatprep.mubr.bf16.mxu0 %v3800
        %4085 = vmatmul.mubr.bf16.gmra.mxu0 %v3799
        %v4086 = vpop.f32.mrf.mxu0
        %v4087 = vadd.f32 %v3882, %v4086
        %v4088 = vpop.f32.mrf.mxu0
        %v4089 = vpop.f32.mrf.mxu0
        %v4090 = vadd.f32 %v3882, %v4089
        %v4091 = vpop.f32.mrf.mxu0
        %4092 = vmatprep.mubr.bf16.mxu0 %v3802
        %4093 = vmatmul.mubr.bf16.gmra.mxu0 %v3801
        %v4094 = vpop.f32.mrf.mxu0
        %v4095 = vadd.f32 %v3882, %v4094
        %v4096 = vpop.f32.mrf.mxu0
        %v4097 = vpop.f32.mrf.mxu0
        %v4098 = vadd.f32 %v3882, %v4097
        %v4099 = vpop.f32.mrf.mxu0
        %4100 = vmatprep.mubr.bf16.mxu0 %v3804
        %4101 = vmatmul.mubr.bf16.gmra.mxu0 %v3803
        %v4102 = vpop.f32.mrf.mxu0
        %v4103 = vadd.f32 %v3882, %v4102
        %v4104 = vpop.f32.mrf.mxu0
        %v4105 = vpop.f32.mrf.mxu0
        %v4106 = vadd.f32 %v3882, %v4105
        %v4107 = vpop.f32.mrf.mxu0
        %4108 = vmatprep.mubr.bf16.mxu0 %v3806
        %4109 = vmatmul.mubr.bf16.gmra.mxu0 %v3805
        %v4110 = vpop.f32.mrf.mxu0
        %v4111 = vadd.f32 %v3882, %v4110
        %v4112 = vpop.f32.mrf.mxu0
        %v4113 = vpop.f32.mrf.mxu0
        %v4114 = vadd.f32 %v3882, %v4113
        %v4115 = vpop.f32.mrf.mxu0
        %4116 = vmatprep.mubr.bf16.mxu0 %v3808
        %4117 = vmatmul.mubr.bf16.gmra.mxu0 %v3807
        %v4118 = vpop.f32.mrf.mxu0
        %v4119 = vadd.f32 %v3882, %v4118
        %v4120 = vpop.f32.mrf.mxu0
        %v4121 = vpop.f32.mrf.mxu0
        %v4122 = vadd.f32 %v3882, %v4121
        %v4123 = vpop.f32.mrf.mxu0
        %4124 = vmatprep.mubr.bf16.mxu0 %v3810
        %4125 = vmatmul.mubr.bf16.gmra.mxu0 %v3809
        %v4126 = vpop.f32.mrf.mxu0
        %v4127 = vadd.f32 %v3882, %v4126
        %v4128 = vpop.f32.mrf.mxu0
        %v4129 = vpop.f32.mrf.mxu0
        %v4130 = vadd.f32 %v3882, %v4129
        %v4131 = vpop.f32.mrf.mxu0
        %4132 = vmatprep.mubr.bf16.mxu0 %v3812
        %4133 = vmatmul.mubr.bf16.gmra.mxu0 %v3811
        %v4134 = vpop.f32.mrf.mxu0
        %v4135 = vadd.f32 %v3882, %v4134
        %v4136 = vpop.f32.mrf.mxu0
        %v4137 = vpop.f32.mrf.mxu0
        %v4138 = vadd.f32 %v3882, %v4137
        %v4139 = vpop.f32.mrf.mxu0
        %4140 = vmatprep.mubr.bf16.mxu0 %v3814
        %4141 = vmatmul.mubr.bf16.gmra.mxu0 %v3813
        %v4142 = vpop.f32.mrf.mxu0
        %v4143 = vadd.f32 %v3882, %v4142
        %v4144 = vpop.f32.mrf.mxu0
        %v4145 = vpop.f32.mrf.mxu0
        %v4146 = vadd.f32 %v3882, %v4145
        %v4147 = vpop.f32.mrf.mxu0
        %4148 = vmatprep.mubr.bf16.mxu0 %v3816
        %4149 = vmatmul.mubr.bf16.gmra.mxu0 %v3815
        %v4150 = vpop.f32.mrf.mxu0
        %v4151 = vadd.f32 %v3882, %v4150
        %v4152 = vpop.f32.mrf.mxu0
        %v4153 = vpop.f32.mrf.mxu0
        %v4154 = vadd.f32 %v3882, %v4153
        %v4155 = vpop.f32.mrf.mxu0
        %4156 = vmatprep.mubr.bf16.mxu0 %v3818
        %4157 = vmatmul.mubr.bf16.gmra.mxu0 %v3817
        %v4158 = vpop.f32.mrf.mxu0
        %v4159 = vadd.f32 %v3882, %v4158
        %v4160 = vpop.f32.mrf.mxu0
        %v4161 = vpop.f32.mrf.mxu0
        %v4162 = vadd.f32 %v3882, %v4161
        %v4163 = vpop.f32.mrf.mxu0
        %4164 = vmatprep.mubr.bf16.mxu0 %v3820
        %4165 = vmatmul.mubr.bf16.gmra.mxu0 %v3819
        %v4166 = vpop.f32.mrf.mxu0
        %v4167 = vadd.f32 %v3882, %v4166
        %v4168 = vpop.f32.mrf.mxu0
        %v4169 = vpop.f32.mrf.mxu0
        %v4170 = vadd.f32 %v3882, %v4169
        %v4171 = vpop.f32.mrf.mxu0
        %4172 = vmatprep.mubr.bf16.mxu0 %v3822
        %4173 = vmatmul.mubr.bf16.gmra.mxu0 %v3821
        %v4174 = vpop.f32.mrf.mxu0
        %v4175 = vadd.f32 %v3882, %v4174
        %v4176 = vpop.f32.mrf.mxu0
        %v4177 = vpop.f32.mrf.mxu0
        %v4178 = vadd.f32 %v3882, %v4177
        %v4179 = vpop.f32.mrf.mxu0
        %4180 = vmatprep.mubr.bf16.mxu0 %v3824
        %4181 = vmatmul.mubr.bf16.gmra.mxu0 %v3823
        %v4182 = vpop.f32.mrf.mxu0
        %v4183 = vadd.f32 %v3882, %v4182
        %v4184 = vpop.f32.mrf.mxu0
        %v4185 = vpop.f32.mrf.mxu0
        %v4186 = vadd.f32 %v3882, %v4185
        %v4187 = vpop.f32.mrf.mxu0
        %4188 = vmatprep.mubr.bf16.mxu0 %v3826
        %4189 = vmatmul.mubr.bf16.gmra.mxu0 %v3825
        %v4190 = vpop.f32.mrf.mxu0
        %v4191 = vadd.f32 %v3882, %v4190
        %v4192 = vpop.f32.mrf.mxu0
        %v4193 = vpop.f32.mrf.mxu0
        %v4194 = vadd.f32 %v3882, %v4193
        %v4195 = vpop.f32.mrf.mxu0
        %4196 = vmatprep.mubr.bf16.mxu0 %v3828
        %4197 = vmatmul.mubr.bf16.gmra.mxu0 %v3827
        %v4198 = vpop.f32.mrf.mxu0
        %v4199 = vadd.f32 %v3882, %v4198
        %v4200 = vpop.f32.mrf.mxu0
        %v4201 = vpop.f32.mrf.mxu0
        %v4202 = vadd.f32 %v3882, %v4201
        %v4203 = vpop.f32.mrf.mxu0
        %4204 = vmatprep.mubr.bf16.mxu0 %v3830
        %4205 = vmatmul.mubr.bf16.gmra.mxu0 %v3829
        %v4206 = vpop.f32.mrf.mxu0
        %v4207 = vadd.f32 %v3882, %v4206
        %v4208 = vpop.f32.mrf.mxu0
        %v4209 = vpop.f32.mrf.mxu0
        %v4210 = vadd.f32 %v3882, %v4209
        %v4211 = vpop.f32.mrf.mxu0
        %4212 = vmatprep.mubr.bf16.mxu0 %v3832
        %4213 = vmatmul.mubr.bf16.gmra.mxu0 %v3831
        %v4214 = vpop.f32.mrf.mxu0
        %v4215 = vadd.f32 %v3882, %v4214
        %v4216 = vpop.f32.mrf.mxu0
        %v4217 = vpop.f32.mrf.mxu0
        %v4218 = vadd.f32 %v3882, %v4217
        %v4219 = vpop.f32.mrf.mxu0
        %4220 = vmatprep.mubr.bf16.mxu0 %v3834
        %4221 = vmatmul.mubr.bf16.gmra.mxu0 %v3833
        %v4222 = vpop.f32.mrf.mxu0
        %v4223 = vadd.f32 %v3882, %v4222
        %v4224 = vpop.f32.mrf.mxu0
        %v4225 = vpop.f32.mrf.mxu0
        %v4226 = vadd.f32 %v3882, %v4225
        %v4227 = vpop.f32.mrf.mxu0
        %4228 = vmatprep.mubr.bf16.mxu0 %v3836
        %4229 = vmatmul.mubr.bf16.gmra.mxu0 %v3835
        %v4230 = vpop.f32.mrf.mxu0
        %v4231 = vadd.f32 %v3882, %v4230
        %v4232 = vpop.f32.mrf.mxu0
        %v4233 = vpop.f32.mrf.mxu0
        %v4234 = vadd.f32 %v3882, %v4233
        %v4235 = vpop.f32.mrf.mxu0
        %4236 = vmatprep.mubr.bf16.mxu0 %v3838
        %4237 = vmatmul.mubr.bf16.gmra.mxu0 %v3837
        %v4238 = vpop.f32.mrf.mxu0
        %v4239 = vadd.f32 %v3882, %v4238
        %v4240 = vpop.f32.mrf.mxu0
        %v4241 = vpop.f32.mrf.mxu0
        %v4242 = vadd.f32 %v3882, %v4241
        %v4243 = vpop.f32.mrf.mxu0
        %4244 = vmatprep.mubr.bf16.mxu0 %v3840
        %4245 = vmatmul.mubr.bf16.gmra.mxu0 %v3839
        %v4246 = vpop.f32.mrf.mxu0
        %v4247 = vadd.f32 %v3882, %v4246
        %v4248 = vpop.f32.mrf.mxu0
        %v4249 = vpop.f32.mrf.mxu0
        %v4250 = vadd.f32 %v3882, %v4249
        %v4251 = vpop.f32.mrf.mxu0
        %4252 = vmatprep.mubr.bf16.mxu0 %v3842
        %4253 = vmatmul.mubr.bf16.gmra.mxu0 %v3841
        %v4254 = vpop.f32.mrf.mxu0
        %v4255 = vadd.f32 %v3882, %v4254
        %v4256 = vpop.f32.mrf.mxu0
        %v4257 = vpop.f32.mrf.mxu0
        %v4258 = vadd.f32 %v3882, %v4257
        %v4259 = vpop.f32.mrf.mxu0
        %4260 = vmatprep.mubr.bf16.mxu0 %v3844
        %4261 = vmatmul.mubr.bf16.gmra.mxu0 %v3843
        %v4262 = vpop.f32.mrf.mxu0
        %v4263 = vadd.f32 %v3882, %v4262
        %v4264 = vpop.f32.mrf.mxu0
        %v4265 = vpop.f32.mrf.mxu0
        %v4266 = vadd.f32 %v3882, %v4265
        %v4267 = vpop.f32.mrf.mxu0
        %4268 = vdwg.mxu0
        %v4269 = vpack.c.bf16 %v4018, %v4015
        %v4270 = vpack.c.bf16 %v4026, %v4023
        %v4271 = vpack.c.bf16 %v4034, %v4031
        %v4272 = vpack.c.bf16 %v4042, %v4039
        %v4273 = vpack.c.bf16 %v4050, %v4047
        %v4274 = vpack.c.bf16 %v4058, %v4055
        %v4275 = vpack.c.bf16 %v4066, %v4063
        %v4276 = vpack.c.bf16 %v4074, %v4071
        %v4277 = vpack.c.bf16 %v4082, %v4079
        %v4278 = vpack.c.bf16 %v4090, %v4087
        %v4279 = vpack.c.bf16 %v4098, %v4095
        %v4280 = vpack.c.bf16 %v4106, %v4103
        %v4281 = vpack.c.bf16 %v4114, %v4111
        %v4282 = vpack.c.bf16 %v4122, %v4119
        %v4283 = vpack.c.bf16 %v4130, %v4127
        %v4284 = vpack.c.bf16 %v4138, %v4135
        %v4285 = vpack.c.bf16 %v4146, %v4143
        %v4286 = vpack.c.bf16 %v4154, %v4151
        %v4287 = vpack.c.bf16 %v4162, %v4159
        %v4288 = vpack.c.bf16 %v4170, %v4167
        %v4289 = vpack.c.bf16 %v4178, %v4175
        %v4290 = vpack.c.bf16 %v4186, %v4183
        %v4291 = vpack.c.bf16 %v4194, %v4191
        %v4292 = vpack.c.bf16 %v4202, %v4199
        %v4293 = vpack.c.bf16 %v4210, %v4207
        %v4294 = vpack.c.bf16 %v4218, %v4215
        %v4295 = vpack.c.bf16 %v4226, %v4223
        %v4296 = vpack.c.bf16 %v4234, %v4231
        %v4297 = vpack.c.bf16 %v4242, %v4239
        %v4298 = vpack.c.bf16 %v4250, %v4247
        %v4299 = vpack.c.bf16 %v4258, %v4255
        %v4300 = vpack.c.bf16 %v4266, %v4263
        %v4333 = vunpack.c.l.b16 %v4269
        %v4334 = vunpack.c.h.b16 %v4269
        %v4335 = vunpack.c.l.b16 %v4270
        %v4336 = vunpack.c.h.b16 %v4270
        %v4337 = vunpack.c.l.b16 %v4271
        %v4338 = vunpack.c.h.b16 %v4271
        %v4339 = vunpack.c.l.b16 %v4272
        %v4340 = vunpack.c.h.b16 %v4272
        %v4341 = vunpack.c.l.b16 %v4273
        %v4342 = vunpack.c.h.b16 %v4273
        %v4343 = vunpack.c.l.b16 %v4274
        %v4344 = vunpack.c.h.b16 %v4274
        %v4345 = vunpack.c.l.b16 %v4275
        %v4346 = vunpack.c.h.b16 %v4275
        %v4347 = vunpack.c.l.b16 %v4276
        %v4348 = vunpack.c.h.b16 %v4276
        %v4349 = vunpack.c.l.b16 %v4277
        %v4350 = vunpack.c.h.b16 %v4277
        %v4351 = vunpack.c.l.b16 %v4278
        %v4352 = vunpack.c.h.b16 %v4278
        %v4353 = vunpack.c.l.b16 %v4279
        %v4354 = vunpack.c.h.b16 %v4279
        %v4355 = vunpack.c.l.b16 %v4280
        %v4356 = vunpack.c.h.b16 %v4280
        %v4357 = vunpack.c.l.b16 %v4281
        %v4358 = vunpack.c.h.b16 %v4281
        %v4359 = vunpack.c.l.b16 %v4282
        %v4360 = vunpack.c.h.b16 %v4282
        %v4361 = vunpack.c.l.b16 %v4283
        %v4362 = vunpack.c.h.b16 %v4283
        %v4363 = vunpack.c.l.b16 %v4284
        %v4364 = vunpack.c.h.b16 %v4284
        %v4365 = vunpack.c.l.b16 %v4285
        %v4366 = vunpack.c.h.b16 %v4285
        %v4367 = vunpack.c.l.b16 %v4286
        %v4368 = vunpack.c.h.b16 %v4286
        %v4369 = vunpack.c.l.b16 %v4287
        %v4370 = vunpack.c.h.b16 %v4287
        %v4371 = vunpack.c.l.b16 %v4288
        %v4372 = vunpack.c.h.b16 %v4288
        %v4373 = vunpack.c.l.b16 %v4289
        %v4374 = vunpack.c.h.b16 %v4289
        %v4375 = vunpack.c.l.b16 %v4290
        %v4376 = vunpack.c.h.b16 %v4290
        %v4377 = vunpack.c.l.b16 %v4291
        %v4378 = vunpack.c.h.b16 %v4291
        %v4379 = vunpack.c.l.b16 %v4292
        %v4380 = vunpack.c.h.b16 %v4292
        %v4381 = vunpack.c.l.b16 %v4293
        %v4382 = vunpack.c.h.b16 %v4293
        %v4383 = vunpack.c.l.b16 %v4294
        %v4384 = vunpack.c.h.b16 %v4294
        %v4385 = vunpack.c.l.b16 %v4295
        %v4386 = vunpack.c.h.b16 %v4295
        %v4387 = vunpack.c.l.b16 %v4296
        %v4388 = vunpack.c.h.b16 %v4296
        %v4389 = vunpack.c.l.b16 %v4297
        %v4390 = vunpack.c.h.b16 %v4297
        %v4391 = vunpack.c.l.b16 %v4298
        %v4392 = vunpack.c.h.b16 %v4298
        %v4393 = vunpack.c.l.b16 %v4299
        %v4394 = vunpack.c.h.b16 %v4299
        %v4395 = vunpack.c.l.b16 %v4300
        %v4396 = vunpack.c.h.b16 %v4300
        %v4397 = vpack.c.b16 %v4333, %v4333
        %v4398 = vpack.c.b16 %v4334, %v4334
        %v4399 = vpack.c.b16 %v4335, %v4335
        %v4400 = vpack.c.b16 %v4336, %v4336
        %v4401 = vpack.c.b16 %v4337, %v4337
        %v4402 = vpack.c.b16 %v4338, %v4338
        %v4403 = vpack.c.b16 %v4339, %v4339
        %v4404 = vpack.c.b16 %v4340, %v4340
        %v4405 = vpack.c.b16 %v4341, %v4341
        %v4406 = vpack.c.b16 %v4342, %v4342
        %v4407 = vpack.c.b16 %v4343, %v4343
        %v4408 = vpack.c.b16 %v4344, %v4344
        %v4409 = vpack.c.b16 %v4345, %v4345
        %v4410 = vpack.c.b16 %v4346, %v4346
        %v4411 = vpack.c.b16 %v4347, %v4347
        %v4412 = vpack.c.b16 %v4348, %v4348
        %v4413 = vpack.c.b16 %v4349, %v4349
        %v4414 = vpack.c.b16 %v4350, %v4350
        %v4415 = vpack.c.b16 %v4351, %v4351
        %v4416 = vpack.c.b16 %v4352, %v4352
        %v4417 = vpack.c.b16 %v4353, %v4353
        %v4418 = vpack.c.b16 %v4354, %v4354
        %v4419 = vpack.c.b16 %v4355, %v4355
        %v4420 = vpack.c.b16 %v4356, %v4356
        %v4421 = vpack.c.b16 %v4357, %v4357
        %v4422 = vpack.c.b16 %v4358, %v4358
        %v4423 = vpack.c.b16 %v4359, %v4359
        %v4424 = vpack.c.b16 %v4360, %v4360
        %v4425 = vpack.c.b16 %v4361, %v4361
        %v4426 = vpack.c.b16 %v4362, %v4362
        %v4427 = vpack.c.b16 %v4363, %v4363
        %v4428 = vpack.c.b16 %v4364, %v4364
        %v4429 = vpack.c.b16 %v4365, %v4365
        %v4430 = vpack.c.b16 %v4366, %v4366
        %v4431 = vpack.c.b16 %v4367, %v4367
        %v4432 = vpack.c.b16 %v4368, %v4368
        %v4433 = vpack.c.b16 %v4369, %v4369
        %v4434 = vpack.c.b16 %v4370, %v4370
        %v4435 = vpack.c.b16 %v4371, %v4371
        %v4436 = vpack.c.b16 %v4372, %v4372
        %v4437 = vpack.c.b16 %v4373, %v4373
        %v4438 = vpack.c.b16 %v4374, %v4374
        %v4439 = vpack.c.b16 %v4375, %v4375
        %v4440 = vpack.c.b16 %v4376, %v4376
        %v4441 = vpack.c.b16 %v4377, %v4377
        %v4442 = vpack.c.b16 %v4378, %v4378
        %v4443 = vpack.c.b16 %v4379, %v4379
        %v4444 = vpack.c.b16 %v4380, %v4380
        %v4445 = vpack.c.b16 %v4381, %v4381
        %v4446 = vpack.c.b16 %v4382, %v4382
        %v4447 = vpack.c.b16 %v4383, %v4383
        %v4448 = vpack.c.b16 %v4384, %v4384
        %v4449 = vpack.c.b16 %v4385, %v4385
        %v4450 = vpack.c.b16 %v4386, %v4386
        %v4451 = vpack.c.b16 %v4387, %v4387
        %v4452 = vpack.c.b16 %v4388, %v4388
        %v4453 = vpack.c.b16 %v4389, %v4389
        %v4454 = vpack.c.b16 %v4390, %v4390
        %v4455 = vpack.c.b16 %v4391, %v4391
        %v4456 = vpack.c.b16 %v4392, %v4392
        %v4457 = vpack.c.b16 %v4393, %v4393
        %v4458 = vpack.c.b16 %v4394, %v4394
        %v4459 = vpack.c.b16 %v4395, %v4395
        %v4460 = vpack.c.b16 %v4396, %v4396
        %4525 = vst [vmem:[%s271] sm:$0xf] %v4397
        %4526 = vst [vmem:[%s271 + $0x4] sm:$0xf] %v4398
        %4527 = vst [vmem:[%s271 + $0x8] sm:$0xf] %v4399
        %4528 = vst [vmem:[%s271 + $0xc] sm:$0xf] %v4400
        %4529 = vst [vmem:[%s271 + $0x10] sm:$0xf] %v4401
        %4530 = vst [vmem:[%s271 + $0x14] sm:$0xf] %v4402
        %4531 = vst [vmem:[%s271 + $0x18] sm:$0xf] %v4403
        %4532 = vst [vmem:[%s271 + $0x1c] sm:$0xf] %v4404
        %4533 = vst [vmem:[%s271 + $0x20] sm:$0xf] %v4405
        %4534 = vst [vmem:[%s271 + $0x24] sm:$0xf] %v4406
        %4535 = vst [vmem:[%s271 + $0x28] sm:$0xf] %v4407
        %4536 = vst [vmem:[%s271 + $0x2c] sm:$0xf] %v4408
        %4537 = vst [vmem:[%s271 + $0x30] sm:$0xf] %v4409
        %4538 = vst [vmem:[%s271 + $0x34] sm:$0xf] %v4410
        %4539 = vst [vmem:[%s271 + $0x38] sm:$0xf] %v4411
        %4540 = vst [vmem:[%s271 + $0x3c] sm:$0xf] %v4412
        %4541 = vst [vmem:[%s271 + $0x40] sm:$0xf] %v4413
        %4542 = vst [vmem:[%s271 + $0x44] sm:$0xf] %v4414
        %4543 = vst [vmem:[%s271 + $0x48] sm:$0xf] %v4415
        %4544 = vst [vmem:[%s271 + $0x4c] sm:$0xf] %v4416
        %4545 = vst [vmem:[%s271 + $0x50] sm:$0xf] %v4417
        %4546 = vst [vmem:[%s271 + $0x54] sm:$0xf] %v4418
        %4547 = vst [vmem:[%s271 + $0x58] sm:$0xf] %v4419
        %4548 = vst [vmem:[%s271 + $0x5c] sm:$0xf] %v4420
        %4549 = vst [vmem:[%s271 + $0x60] sm:$0xf] %v4421
        %4550 = vst [vmem:[%s271 + $0x64] sm:$0xf] %v4422
        %4551 = vst [vmem:[%s271 + $0x68] sm:$0xf] %v4423
        %4552 = vst [vmem:[%s271 + $0x6c] sm:$0xf] %v4424
        %4553 = vst [vmem:[%s271 + $0x70] sm:$0xf] %v4425
        %4554 = vst [vmem:[%s271 + $0x74] sm:$0xf] %v4426
        %4555 = vst [vmem:[%s271 + $0x78] sm:$0xf] %v4427
        %4556 = vst [vmem:[%s271 + $0x7c] sm:$0xf] %v4428
        %4557 = vst [vmem:[%s271 + $0x80] sm:$0xf] %v4429
        %4558 = vst [vmem:[%s271 + $0x84] sm:$0xf] %v4430
        %4559 = vst [vmem:[%s271 + $0x88] sm:$0xf] %v4431
        %4560 = vst [vmem:[%s271 + $0x8c] sm:$0xf] %v4432
        %4561 = vst [vmem:[%s271 + $0x90] sm:$0xf] %v4433
        %4562 = vst [vmem:[%s271 + $0x94] sm:$0xf] %v4434
        %4563 = vst [vmem:[%s271 + $0x98] sm:$0xf] %v4435
        %4564 = vst [vmem:[%s271 + $0x9c] sm:$0xf] %v4436
        %4565 = vst [vmem:[%s271 + $0xa0] sm:$0xf] %v4437
        %4566 = vst [vmem:[%s271 + $0xa4] sm:$0xf] %v4438
        %4567 = vst [vmem:[%s271 + $0xa8] sm:$0xf] %v4439
        %4568 = vst [vmem:[%s271 + $0xac] sm:$0xf] %v4440
        %4569 = vst [vmem:[%s271 + $0xb0] sm:$0xf] %v4441
        %4570 = vst [vmem:[%s271 + $0xb4] sm:$0xf] %v4442
        %4571 = vst [vmem:[%s271 + $0xb8] sm:$0xf] %v4443
        %4572 = vst [vmem:[%s271 + $0xbc] sm:$0xf] %v4444
        %4573 = vst [vmem:[%s271 + $0xc0] sm:$0xf] %v4445
        %4574 = vst [vmem:[%s271 + $0xc4] sm:$0xf] %v4446
        %4575 = vst [vmem:[%s271 + $0xc8] sm:$0xf] %v4447
        %4576 = vst [vmem:[%s271 + $0xcc] sm:$0xf] %v4448
        %4577 = vst [vmem:[%s271 + $0xd0] sm:$0xf] %v4449
        %4578 = vst [vmem:[%s271 + $0xd4] sm:$0xf] %v4450
        %4579 = vst [vmem:[%s271 + $0xd8] sm:$0xf] %v4451
        %4580 = vst [vmem:[%s271 + $0xdc] sm:$0xf] %v4452
        %4581 = vst [vmem:[%s271 + $0xe0] sm:$0xf] %v4453
        %4582 = vst [vmem:[%s271 + $0xe4] sm:$0xf] %v4454
        %4583 = vst [vmem:[%s271 + $0xe8] sm:$0xf] %v4455
        %4584 = vst [vmem:[%s271 + $0xec] sm:$0xf] %v4456
        %4585 = vst [vmem:[%s271 + $0xf0] sm:$0xf] %v4457
        %4586 = vst [vmem:[%s271 + $0xf4] sm:$0xf] %v4458
        %4587 = vst [vmem:[%s271 + $0xf8] sm:$0xf] %v4459
        %4588 = vst [vmem:[%s271 + $0xfc] sm:$0xf] %v4460
        %s4589 = sand.u32 %s141, 1
        %s4590 = scalar_lea.sflag [#allocation4], %s4589
        %s4591 = sand.u32 %s141, 1
        %s4592 = smul.addr %s4591, 256
        %s4593 = scalar_lea.vmem [#allocation8], %s4592
        // Predicated region
        $region53: #{tpu_custom_call.1} parent=39 // pred_check
          %p4594 = pneg %p151
        $region54: #{tpu_custom_call.1} parent=39 // pred_check_branch
          %4596 = sbr.rel (%p4594) target = $region56
        $region55: #{tpu_custom_call.1} parent=39 // pred_region
          %s4597 = smul.u32 64, %s23
          %s4599 = ssub.s32 4096, 4096
          %4600 = vsyncadd %s4590, %s4599
          %s4601 = smul.addr %s4597, 64
          %s4602 = scalar_lea.hbm %s5, %s4601
          %s4603 = sshll.u32 %s4593, 4
          %s4604 = int_to_ptr.vmem [resolvable:$true] %s4603
          %4609 = dma.vmem_to_hbm [thread:$0]  %s4604, 4096, %s4602, %s4590, 64, 64, 4
        $region56: #{tpu_custom_call.1} parent=39 // pred_fallthru
          _
      $region40: #{tpu_custom_call.1} parent=5 // pred_fallthru
        _
      %p4610 = scmp.le.s32.totalorder 2, %s18
      // Predicated region
      $region57: #{tpu_custom_call.1} parent=5 // pred_check
        %p4611 = pneg %p4610
      $region58: #{tpu_custom_call.1} parent=5 // pred_check_branch
        %4613 = sbr.rel (%p4611) target = $region60
      $region59: #{tpu_custom_call.1} parent=5 // pred_region
        %s4614 = ssub.s32 %s18, 2
        // Predicated region
        $region61: #{tpu_custom_call.1} parent=59 // pred_check
          %p4615 = pneg %p157
        $region62: #{tpu_custom_call.1} parent=59 // pred_check_branch
          %4617 = sbr.rel (%p4615) target = $region64
        $region63: #{tpu_custom_call.1} parent=59 // pred_region
          %s4618 = sand.u32 %s142, 1
          %s4619 = scalar_lea.sflag [#allocation4], %s4618
          %s4620 = sand.u32 %s142, 1
          %s4621 = smul.addr %s4620, 256
          %s4622 = scalar_lea.vmem [#allocation8], %s4621
          %4623 = dma.done %s4619, 4096
        $region64: #{tpu_custom_call.1} parent=59 // pred_fallthru
          _
      $region60: #{tpu_custom_call.1} parent=5 // pred_fallthru
        _
    $region6: #{tpu_custom_call.1} parent=1 // loop_footer
      %s22 = sadd.s32 1, %s18
    $region7: #{tpu_custom_call.1} parent=1 // loop_footer_branch
      %17 = sbr.rel target = $region3
    $region8: #{tpu_custom_call.1} parent=1 // loop_exit
      _
    %4624 = vsyncpa [#allocation3], 1
    %s4625 = scalar_lea.sflag [#allocation3], 1
    %4626 = vsyncpa %s4625, 1
    %4627 = vsyncpa [#allocation6], 1
    %4628 = vsyncpa [#allocation4], 1
    %s4629 = scalar_lea.sflag [#allocation4], 1
    %4630 = vsyncpa %s4629, 1

// kernel: tpu_custom_call.1
$region0: #{tpu_custom_call.1}
  #allocation0 [shape = 'u32[]', space=smem, size = 0x4, offset = 0x4, fixed_abs, tag = 'smem constant byte address 0x4 - core index']
  #allocation1 [shape = 'u32[144,128]{1,0:T(1,128)}', space=vmem, size = 0x12000, scoped, tag = 'internal scratch']
  %s0 = inlined_call_operand.hbm [shape: f32[2048,128], index: 0, kind: input, shape index: {}]
  %s1 = inlined_call_operand.hbm [shape: bf16[128,256], index: 1, kind: input, shape index: {}]
  %s2 = inlined_call_operand.vmem [shape: f32[1,256], index: 2, kind: input, shape index: {}]
  %s3 = inlined_call_operand.hbm [shape: bf16[256,128], index: 3, kind: input, shape index: {}]
  %s4 = inlined_call_operand.vmem [shape: f32[1,128], index: 4, kind: input, shape index: {}]
  %s5 = inlined_call_operand.hbm [shape: bf16[2048,128], index: 5, kind: output, shape index: {}]
  %s6 = sld [smem:[#allocation0]]
  $region65: #{tpu_custom_call.1} parent=0
    _
  %s8 = ssub.s32 1, %s6
  %s9 = scalar_select 0, %s8, %s6
  $region1: #{tpu_custom_call.1} parent=0
    #allocation2 [shape = 'u8[524288]{0}', space=vmem, size = 0x80000, scoped, tag = 'input window, operand 0']
    #allocation3 [shape = 's32[2]{0}', space=sflag, size = 0x8, scoped, tag = 'scoped memory for tpu_custom_call.1']
    #allocation4 [shape = 's32[2]{0}', space=sflag, size = 0x8, scoped, tag = 'scoped memory for tpu_custom_call.1']
    #allocation5 [shape = 'u8[65536]{0}', space=vmem, size = 0x10000, scoped, tag = 'input window, operand 1, single buffered']
    #allocation6 [shape = 's32[1]{0}', space=sflag, size = 0x4, scoped, tag = 'scoped memory for tpu_custom_call.1']
    #allocation7 [shape = 'u8[65536]{0}', space=vmem, size = 0x10000, scoped, tag = 'input window, operand 3, single buffered']
    #allocation8 [shape = 'u8[262144]{0}', space=vmem, size = 0x40000, scoped, tag = 'output window, operand 0']
    %10 = vsyncpa [#allocation3], 0
    %s11 = scalar_lea.sflag [#allocation3], 1
    %12 = vsyncpa %s11, 0
    %13 = vsyncpa [#allocation6], 0
    %14 = vsyncpa [#allocation4], 0
    %s15 = scalar_lea.sflag [#allocation4], 1
    %16 = vsyncpa %s15, 0
    loop: start=0, step=1, limit=6
    $region2: #{tpu_custom_call.1} parent=1 // loop_pre_header
      _
    $region3: #{tpu_custom_call.1} parent=1 // loop_header
      %s18 = sphi 0, %s22
      %p19 = scmp.ge.s32.totalorder %s18, 6
      %s28 = sphi 0, %s30
      %s31 = sphi 0, %s28
      %s32 = sphi 0, %s31
      %s48 = sphi 0, %s32
      %s52 = sphi 0, %s52
      %s54 = sphi 0, %s52
      %s55 = sphi 0, %s54
      %s69 = sphi 0, %s55
      %s73 = sphi 0, %s73
      %s75 = sphi 0, %s73
      %s76 = sphi 0, %s75
      %s90 = sphi 0, %s76
      %s94 = sphi 0, %s94
      %s96 = sphi 0, %s94
      %s97 = sphi 0, %s96
      %s111 = sphi 0, %s97
      %s115 = sphi 0, %s115
      %s117 = sphi 0, %s115
      %s118 = sphi 0, %s117
      %s132 = sphi 0, %s118
      %s138 = sphi 0, %s140
      %s141 = sphi 0, %s138
      %s142 = sphi 0, %s141
      %s158 = sphi 0, %s142
    $region4: #{tpu_custom_call.1} parent=1 // loop_header_branch
      %21 = sbr.rel (%p19) target = $region8
    $region5: #{tpu_custom_call.1} parent=1 // loop_body
      %s23 = ssub.s32 %s18, 1
      %s24 = ssub.s32 %s18, 2
      %s25 = sadd.s32 %s18, 1
      %s26 = ssub.s32 %s18, %s25
      %p27 = scmp.eq.s32.totalorder %s26, 0
      %s29 = sadd.s32 %s28, 1
      %s30 = scalar_select %p27, %s28, %s29
      %p33 = pneg %p27
      %p34 = scmp.eq.s32.totalorder %s18, 3
      %p35 = por %p33, %p34
      %p36 = scmp.ne.s32.totalorder %s28, %s31
      %p37 = scmp.eq.s32.totalorder %s18, 0
      %p38 = por %p36, %p37
      %p39 = scmp.ne.s32.totalorder %s28, %s31
      %p40 = scmp.eq.s32.totalorder %s23, 3
      %p41 = por %p39, %p40
      %p42 = scmp.ne.s32.totalorder %s31, %s32
      %p43 = scmp.eq.s32.totalorder %s23, 0
      %p44 = por %p42, %p43
      %p45 = scmp.ne.s32.totalorder %s31, %s32
      %p46 = scmp.eq.s32.totalorder %s24, 3
      %p47 = por %p45, %p46
      %p49 = scmp.ne.s32.totalorder %s32, %s48
      %p50 = scmp.eq.s32.totalorder %s24, 0
      %p51 = por %p49, %p50
      %s53 = sadd.s32 %s52, 1
      %p56 = scmp.eq.s32.totalorder %s18, 3
      %p57 = scmp.ne.s32.totalorder %s52, %s54
      %p58 = scmp.eq.s32.totalorder %s18, 0
      %p59 = por %p57, %p58
      %p60 = scmp.ne.s32.totalorder %s52, %s54
      %p61 = scmp.eq.s32.totalorder %s23, 3
      %p62 = por %p60, %p61
      %p63 = scmp.ne.s32.totalorder %s54, %s55
      %p64 = scmp.eq.s32.totalorder %s23, 0
      %p65 = por %p63, %p64
      %p66 = scmp.ne.s32.totalorder %s54, %s55
      %p67 = scmp.eq.s32.totalorder %s24, 3
      %p68 = por %p66, %p67
      %p70 = scmp.ne.s32.totalorder %s55, %s69
      %p71 = scmp.eq.s32.totalorder %s24, 0
      %p72 = por %p70, %p71
      %s74 = sadd.s32 %s73, 1
      %p77 = scmp.eq.s32.totalorder %s18, 3
      %p78 = scmp.ne.s32.totalorder %s73, %s75
      %p79 = scmp.eq.s32.totalorder %s18, 0
      %p80 = por %p78, %p79
      %p81 = scmp.ne.s32.totalorder %s73, %s75
      %p82 = scmp.eq.s32.totalorder %s23, 3
      %p83 = por %p81, %p82
      %p84 = scmp.ne.s32.totalorder %s75, %s76
      %p85 = scmp.eq.s32.totalorder %s23, 0
      %p86 = por %p84, %p85
      %p87 = scmp.ne.s32.totalorder %s75, %s76
      %p88 = scmp.eq.s32.totalorder %s24, 3
      %p89 = por %p87, %p88
      %p91 = scmp.ne.s32.totalorder %s76, %s90
      %p92 = scmp.eq.s32.totalorder %s24, 0
      %p93 = por %p91, %p92
      %s95 = sadd.s32 %s94, 1
      %p98 = scmp.eq.s32.totalorder %s18, 3
      %p99 = scmp.ne.s32.totalorder %s94, %s96
      %p100 = scmp.eq.s32.totalorder %s18, 0
      %p101 = por %p99, %p100
      %p102 = scmp.ne.s32.totalorder %s94, %s96
      %p103 = scmp.eq.s32.totalorder %s23, 3
      %p104 = por %p102, %p103
      %p105 = scmp.ne.s32.totalorder %s96, %s97
      %p106 = scmp.eq.s32.totalorder %s23, 0
      %p107 = por %p105, %p106
      %p108 = scmp.ne.s32.totalorder %s96, %s97
      %p109 = scmp.eq.s32.totalorder %s24, 3
      %p110 = por %p108, %p109
      %p112 = scmp.ne.s32.totalorder %s97, %s111
      %p113 = scmp.eq.s32.totalorder %s24, 0
      %p114 = por %p112, %p113
      %s116 = sadd.s32 %s115, 1
      %p119 = scmp.eq.s32.totalorder %s18, 3
      %p120 = scmp.ne.s32.totalorder %s115, %s117
      %p121 = scmp.eq.s32.totalorder %s18, 0
      %p122 = por %p120, %p121
      %p123 = scmp.ne.s32.totalorder %s115, %s117
      %p124 = scmp.eq.s32.totalorder %s23, 3
      %p125 = por %p123, %p124
      %p126 = scmp.ne.s32.totalorder %s117, %s118
      %p127 = scmp.eq.s32.totalorder %s23, 0
      %p128 = por %p126, %p127
      %p129 = scmp.ne.s32.totalorder %s117, %s118
      %p130 = scmp.eq.s32.totalorder %s24, 3
      %p131 = por %p129, %p130
      %p133 = scmp.ne.s32.totalorder %s118, %s132
      %p134 = scmp.eq.s32.totalorder %s24, 0
      %p135 = por %p133, %p134
      %s136 = ssub.s32 %s18, %s25
      %p137 = scmp.eq.s32.totalorder %s136, 0
      %s139 = sadd.s32 %s138, 1
      %s140 = scalar_select %p137, %s138, %s139
      %p143 = pneg %p137
      %p144 = scmp.eq.s32.totalorder %s18, 3
      %p145 = por %p143, %p144
      %p146 = scmp.ne.s32.totalorder %s138, %s141
      %p147 = scmp.eq.s32.totalorder %s18, 0
      %p148 = por %p146, %p147
      %p149 = scmp.ne.s32.totalorder %s138, %s141
      %p150 = scmp.eq.s32.totalorder %s23, 3
      %p151 = por %p149, %p150
      %p152 = scmp.ne.s32.totalorder %s141, %s142
      %p153 = scmp.eq.s32.totalorder %s23, 0
      %p154 = por %p152, %p153
      %p155 = scmp.ne.s32.totalorder %s141, %s142
      %p156 = scmp.eq.s32.totalorder %s24, 3
      %p157 = por %p155, %p156
      %p159 = scmp.ne.s32.totalorder %s142, %s158
      %p160 = scmp.eq.s32.totalorder %s24, 0
      %p161 = por %p159, %p160
      %p162 = scmp.le.s32.totalorder 1, %s18
      %p163 = scmp.lt.s32.totalorder %s18, 5
      %p164 = pnand %p162, %p163
      %p165 = pneg %p164
      // Predicated region
      $region9: #{tpu_custom_call.1} parent=5 // pred_check
        _
      $region10: #{tpu_custom_call.1} parent=5 // pred_check_branch
        %167 = sbr.rel (%p164) target = $region12
      $region11: #{tpu_custom_call.1} parent=5 // pred_region
        %s168 = ssub.s32 %s18, 1
        // Predicated region
        $region13: #{tpu_custom_call.1} parent=11 // pred_check
          %p169 = pneg %p65
        $region14: #{tpu_custom_call.1} parent=11 // pred_check_branch
          %171 = sbr.rel (%p169) target = $region16
        $region15: #{tpu_custom_call.1} parent=11 // pred_region
          %s173 = ssub.s32 2048, 2048
          %174 = vsyncadd [#allocation6], %s173
          %s175 = sshll.u32 [#allocation5], 4
          %s176 = int_to_ptr.vmem [resolvable:$true] %s175
          %181 = dma.hbm_to_vmem [thread:$0]  %s1, 2048, %s176, [#allocation6], 128, 128, 8
        $region16: #{tpu_custom_call.1} parent=11 // pred_fallthru
          _
        // Predicated region
        $region17: #{tpu_custom_call.1} parent=11 // pred_check
          %p182 = pneg %p86
        $region18: #{tpu_custom_call.1} parent=11 // pred_check_branch
          %184 = sbr.rel (%p182) target = $region20
        $region19: #{tpu_custom_call.1} parent=11 // pred_region
          _
        $region20: #{tpu_custom_call.1} parent=11 // pred_fallthru
          _
        // Predicated region
        $region21: #{tpu_custom_call.1} parent=11 // pred_check
          %p185 = pneg %p107
        $region22: #{tpu_custom_call.1} parent=11 // pred_check_branch
          %187 = sbr.rel (%p185) target = $region24
        $region23: #{tpu_custom_call.1} parent=11 // pred_region
          %s189 = ssub.s32 2048, 2048
          %190 = vsyncadd [#allocation6], %s189
          %s191 = sshll.u32 [#allocation7], 4
          %s192 = int_to_ptr.vmem [resolvable:$true] %s191
          %197 = dma.hbm_to_vmem [thread:$0]  %s3, 2048, %s192, [#allocation6], 64, 64, 4
        $region24: #{tpu_custom_call.1} parent=11 // pred_fallthru
          _
        // Predicated region
        $region25: #{tpu_custom_call.1} parent=11 // pred_check
          %p198 = pneg %p128
        $region26: #{tpu_custom_call.1} parent=11 // pred_check_branch
          %200 = sbr.rel (%p198) target = $region28
        $region27: #{tpu_custom_call.1} parent=11 // pred_region
          _
        $region28: #{tpu_custom_call.1} parent=11 // pred_fallthru
          _
      $region12: #{tpu_custom_call.1} parent=5 // pred_fallthru
        _
      %p201 = scmp.lt.s32.totalorder %s18, 4
      // Predicated region
      $region29: #{tpu_custom_call.1} parent=5 // pred_check
        %p202 = pneg %p201
      $region30: #{tpu_custom_call.1} parent=5 // pred_check_branch
        %204 = sbr.rel (%p202) target = $region32
      $region31: #{tpu_custom_call.1} parent=5 // pred_region
        // Predicated region
        $region33: #{tpu_custom_call.1} parent=31 // pred_check
          %p205 = pneg %p38
        $region34: #{tpu_custom_call.1} parent=31 // pred_check_branch
          %207 = sbr.rel (%p205) target = $region36
        $region35: #{tpu_custom_call.1} parent=31 // pred_region
          %s208 = sand.u32 %s28, 1
          %s209 = scalar_lea.sflag [#allocation3], %s208
          %s210 = sand.u32 %s28, 1
          %s211 = smul.addr %s210, 512
          %s212 = scalar_lea.vmem [#allocation2], %s211
          %s213 = smul.u32 64, %s18
          %s215 = ssub.s32 8192, 8192
          %216 = vsyncadd %s209, %s215
          %s217 = smul.addr %s213, 128
          %s218 = scalar_lea.hbm %s0, %s217
          %s219 = sshll.u32 %s212, 4
          %s220 = int_to_ptr.vmem [resolvable:$true] %s219
          %225 = dma.hbm_to_vmem [thread:$0]  %s218, 8192, %s220, %s209, 128, 128, 8
        $region36: #{tpu_custom_call.1} parent=31 // pred_fallthru
          _
      $region32: #{tpu_custom_call.1} parent=5 // pred_fallthru
        _
      %p226 = scmp.le.s32.totalorder 1, %s18
      %p227 = scmp.lt.s32.totalorder %s18, 5
      %p228 = pnand %p226, %p227
      %p229 = pneg %p228
      // Predicated region
      $region37: #{tpu_custom_call.1} parent=5 // pred_check
        _
      $region38: #{tpu_custom_call.1} parent=5 // pred_check_branch
        %231 = sbr.rel (%p228) target = $region40
      $region39: #{tpu_custom_call.1} parent=5 // pred_region
        %s232 = ssub.s32 %s18, 1
        %s233 = sand.u32 %s31, 1
        %s234 = scalar_lea.sflag [#allocation3], %s233
        %s235 = sand.u32 %s31, 1
        %s236 = smul.addr %s235, 512
        %s237 = scalar_lea.vmem [#allocation2], %s236
        // Predicated region
        $region41: #{tpu_custom_call.1} parent=39 // pred_check
          %p238 = pneg %p44
        $region42: #{tpu_custom_call.1} parent=39 // pred_check_branch
          %240 = sbr.rel (%p238) target = $region44
        $region43: #{tpu_custom_call.1} parent=39 // pred_region
          %241 = dma.done %s234, 8192
        $region44: #{tpu_custom_call.1} parent=39 // pred_fallthru
          _
        // Predicated region
        $region45: #{tpu_custom_call.1} parent=39 // pred_check
          %p242 = pneg %p65
        $region46: #{tpu_custom_call.1} parent=39 // pred_check_branch
          %244 = sbr.rel (%p242) target = $region48
        $region47: #{tpu_custom_call.1} parent=39 // pred_region
          %245 = dma.done [#allocation6], 2048
        $region48: #{tpu_custom_call.1} parent=39 // pred_fallthru
          _
        // Predicated region
        $region49: #{tpu_custom_call.1} parent=39 // pred_check
          %p246 = pneg %p107
        $region50: #{tpu_custom_call.1} parent=39 // pred_check_branch
          %248 = sbr.rel (%p246) target = $region52
        $region51: #{tpu_custom_call.1} parent=39 // pred_region
          %249 = dma.done [#allocation6], 2048
        $region52: #{tpu_custom_call.1} parent=39 // pred_fallthru
          _
        %s250 = sand.u32 %s31, 1
        %s251 = scalar_lea.sflag [#allocation3], %s250
        %s252 = sand.u32 %s31, 1
        %s253 = smul.addr %s252, 512
        %s254 = scalar_lea.vmem [#allocation2], %s253
        %p255 = pneg %p44
        %p256 = pneg %p41
        %p257 = pneg %p65
        %p258 = pneg %p62
        %p259 = pneg %p86
        %p260 = pneg %p83
        %p261 = pneg %p107
        %p262 = pneg %p104
        %p263 = pneg %p128
        %p264 = pneg %p125
        %p265 = pneg %p154
        %p266 = pneg %p151
        %s267 = sand.u32 %s141, 1
        %s268 = scalar_lea.sflag [#allocation4], %s267
        %s269 = sand.u32 %s141, 1
        %s270 = smul.addr %s269, 256
        %s271 = scalar_lea.vmem [#allocation8], %s270
        %s272 = smul.u32 64, %s23
        %s273 = smul.u32 64, %s23
        %v280 = vld [vmem:[%s237] sm:$0xff]
        %v281 = vld [vmem:[%s237 + $0x8] sm:$0xff]
        %v282 = vld [vmem:[%s237 + $0x10] sm:$0xff]
        %v283 = vld [vmem:[%s237 + $0x18] sm:$0xff]
        %v284 = vld [vmem:[%s237 + $0x20] sm:$0xff]
        %v285 = vld [vmem:[%s237 + $0x28] sm:$0xff]
        %v286 = vld [vmem:[%s237 + $0x30] sm:$0xff]
        %v287 = vld [vmem:[%s237 + $0x38] sm:$0xff]
        %v288 = vld [vmem:[%s237 + $0x40] sm:$0xff]
        %v289 = vld [vmem:[%s237 + $0x48] sm:$0xff]
        %v290 = vld [vmem:[%s237 + $0x50] sm:$0xff]
        %v291 = vld [vmem:[%s237 + $0x58] sm:$0xff]
        %v292 = vld [vmem:[%s237 + $0x60] sm:$0xff]
        %v293 = vld [vmem:[%s237 + $0x68] sm:$0xff]
        %v294 = vld [vmem:[%s237 + $0x70] sm:$0xff]
        %v295 = vld [vmem:[%s237 + $0x78] sm:$0xff]
        %v296 = vld [vmem:[%s237 + $0x80] sm:$0xff]
        %v297 = vld [vmem:[%s237 + $0x88] sm:$0xff]
        %v298 = vld [vmem:[%s237 + $0x90] sm:$0xff]
        %v299 = vld [vmem:[%s237 + $0x98] sm:$0xff]
        %v300 = vld [vmem:[%s237 + $0xa0] sm:$0xff]
        %v301 = vld [vmem:[%s237 + $0xa8] sm:$0xff]
        %v302 = vld [vmem:[%s237 + $0xb0] sm:$0xff]
        %v303 = vld [vmem:[%s237 + $0xb8] sm:$0xff]
        %v304 = vld [vmem:[%s237 + $0xc0] sm:$0xff]
        %v305 = vld [vmem:[%s237 + $0xc8] sm:$0xff]
        %v306 = vld [vmem:[%s237 + $0xd0] sm:$0xff]
        %v307 = vld [vmem:[%s237 + $0xd8] sm:$0xff]
        %v308 = vld [vmem:[%s237 + $0xe0] sm:$0xff]
        %v309 = vld [vmem:[%s237 + $0xe8] sm:$0xff]
        %v310 = vld [vmem:[%s237 + $0xf0] sm:$0xff]
        %v311 = vld [vmem:[%s237 + $0xf8] sm:$0xff]
        %v312 = vld [vmem:[%s237 + $0x100] sm:$0xff]
        %v313 = vld [vmem:[%s237 + $0x108] sm:$0xff]
        %v314 = vld [vmem:[%s237 + $0x110] sm:$0xff]
        %v315 = vld [vmem:[%s237 + $0x118] sm:$0xff]
        %v316 = vld [vmem:[%s237 + $0x120] sm:$0xff]
        %v317 = vld [vmem:[%s237 + $0x128] sm:$0xff]
        %v318 = vld [vmem:[%s237 + $0x130] sm:$0xff]
        %v319 = vld [vmem:[%s237 + $0x138] sm:$0xff]
        %v320 = vld [vmem:[%s237 + $0x140] sm:$0xff]
        %v321 = vld [vmem:[%s237 + $0x148] sm:$0xff]
        %v322 = vld [vmem:[%s237 + $0x150] sm:$0xff]
        %v323 = vld [vmem:[%s237 + $0x158] sm:$0xff]
        %v324 = vld [vmem:[%s237 + $0x160] sm:$0xff]
        %v325 = vld [vmem:[%s237 + $0x168] sm:$0xff]
        %v326 = vld [vmem:[%s237 + $0x170] sm:$0xff]
        %v327 = vld [vmem:[%s237 + $0x178] sm:$0xff]
        %v328 = vld [vmem:[%s237 + $0x180] sm:$0xff]
        %v329 = vld [vmem:[%s237 + $0x188] sm:$0xff]
        %v330 = vld [vmem:[%s237 + $0x190] sm:$0xff]
        %v331 = vld [vmem:[%s237 + $0x198] sm:$0xff]
        %v332 = vld [vmem:[%s237 + $0x1a0] sm:$0xff]
        %v333 = vld [vmem:[%s237 + $0x1a8] sm:$0xff]
        %v334 = vld [vmem:[%s237 + $0x1b0] sm:$0xff]
        %v335 = vld [vmem:[%s237 + $0x1b8] sm:$0xff]
        %v336 = vld [vmem:[%s237 + $0x1c0] sm:$0xff]
        %v337 = vld [vmem:[%s237 + $0x1c8] sm:$0xff]
        %v338 = vld [vmem:[%s237 + $0x1d0] sm:$0xff]
        %v339 = vld [vmem:[%s237 + $0x1d8] sm:$0xff]
        %v340 = vld [vmem:[%s237 + $0x1e0] sm:$0xff]
        %v341 = vld [vmem:[%s237 + $0x1e8] sm:$0xff]
        %v342 = vld [vmem:[%s237 + $0x1f0] sm:$0xff]
        %v343 = vld [vmem:[%s237 + $0x1f8] sm:$0xff]
        %v344 = vpack.c.bf16 %v281, %v280
        %v345 = vpack.c.bf16 %v283, %v282
        %v346 = vpack.c.bf16 %v285, %v284
        %v347 = vpack.c.bf16 %v287, %v286
        %v348 = vpack.c.bf16 %v289, %v288
        %v349 = vpack.c.bf16 %v291, %v290
        %v350 = vpack.c.bf16 %v293, %v292
        %v351 = vpack.c.bf16 %v295, %v294
        %v352 = vpack.c.bf16 %v297, %v296
        %v353 = vpack.c.bf16 %v299, %v298
        %v354 = vpack.c.bf16 %v301, %v300
        %v355 = vpack.c.bf16 %v303, %v302
        %v356 = vpack.c.bf16 %v305, %v304
        %v357 = vpack.c.bf16 %v307, %v306
        %v358 = vpack.c.bf16 %v309, %v308
        %v359 = vpack.c.bf16 %v311, %v310
        %v360 = vpack.c.bf16 %v313, %v312
        %v361 = vpack.c.bf16 %v315, %v314
        %v362 = vpack.c.bf16 %v317, %v316
        %v363 = vpack.c.bf16 %v319, %v318
        %v364 = vpack.c.bf16 %v321, %v320
        %v365 = vpack.c.bf16 %v323, %v322
        %v366 = vpack.c.bf16 %v325, %v324
        %v367 = vpack.c.bf16 %v327, %v326
        %v368 = vpack.c.bf16 %v329, %v328
        %v369 = vpack.c.bf16 %v331, %v330
        %v370 = vpack.c.bf16 %v333, %v332
        %v371 = vpack.c.bf16 %v335, %v334
        %v372 = vpack.c.bf16 %v337, %v336
        %v373 = vpack.c.bf16 %v339, %v338
        %v374 = vpack.c.bf16 %v341, %v340
        %v375 = vpack.c.bf16 %v343, %v342
        %v376 = vld [vmem:[#allocation5] sm:$0xff]
        %v377 = vld [vmem:[#allocation5 + $0x8] sm:$0xff]
        %v378 = vld [vmem:[#allocation5 + $0x10] sm:$0xff]
        %v379 = vld [vmem:[#allocation5 + $0x18] sm:$0xff]
        %v380 = vld [vmem:[#allocation5 + $0x20] sm:$0xff]
        %v381 = vld [vmem:[#allocation5 + $0x28] sm:$0xff]
        %v382 = vld [vmem:[#allocation5 + $0x30] sm:$0xff]
        %v383 = vld [vmem:[#allocation5 + $0x38] sm:$0xff]
        %v384 = vld [vmem:[#allocation5 + $0x40] sm:$0xff]
        %v385 = vld [vmem:[#allocation5 + $0x48] sm:$0xff]
        %v386 = vld [vmem:[#allocation5 + $0x50] sm:$0xff]
        %v387 = vld [vmem:[#allocation5 + $0x58] sm:$0xff]
        %v388 = vld [vmem:[#allocation5 + $0x60] sm:$0xff]
        %v389 = vld [vmem:[#allocation5 + $0x68] sm:$0xff]
        %v390 = vld [vmem:[#allocation5 + $0x70] sm:$0xff]
        %v391 = vld [vmem:[#allocation5 + $0x78] sm:$0xff]
        %v392 = vld [vmem:[%s2] sm:$0x3]
        %v394 = vlaneseq
        %v395 = vshrl.u32 %v394, 7
        %v396 = vsub.s32 0, %v395
        %v397 = vrot.slane %v392, %v396
        %v398 = vlaneseq
        %v399 = vshrl.u32 %v398, 7
        %v400 = vsub.s32 1, %v399
        %v401 = vrot.slane %v392, %v400
        %v420 = vunpack.c.l.b16 %v376
        %v421 = vunpack.c.h.b16 %v376
        %v422 = vunpack.c.l.b16 %v377
        %v423 = vunpack.c.h.b16 %v377
        %v424 = vunpack.c.l.b16 %v378
        %v425 = vunpack.c.h.b16 %v378
        %v426 = vunpack.c.l.b16 %v379
        %v427 = vunpack.c.h.b16 %v379
        %v428 = vunpack.c.l.b16 %v380
        %v429 = vunpack.c.h.b16 %v380
        %v430 = vunpack.c.l.b16 %v381
        %v431 = vunpack.c.h.b16 %v381
        %v432 = vunpack.c.l.b16 %v382
        %v433 = vunpack.c.h.b16 %v382
        %v434 = vunpack.c.l.b16 %v383
        %v435 = vunpack.c.h.b16 %v383
        %v436 = vunpack.c.l.b16 %v384
        %v437 = vunpack.c.h.b16 %v384
        %v438 = vunpack.c.l.b16 %v385
        %v439 = vunpack.c.h.b16 %v385
        %v440 = vunpack.c.l.b16 %v386
        %v441 = vunpack.c.h.b16 %v386
        %v442 = vunpack.c.l.b16 %v387
        %v443 = vunpack.c.h.b16 %v387
        %v444 = vunpack.c.l.b16 %v388
        %v445 = vunpack.c.h.b16 %v388
        %v446 = vunpack.c.l.b16 %v389
        %v447 = vunpack.c.h.b16 %v389
        %v448 = vunpack.c.l.b16 %v390
        %v449 = vunpack.c.h.b16 %v390
        %v450 = vunpack.c.l.b16 %v391
        %v451 = vunpack.c.h.b16 %v391
        %v452 = vpack.c.b16 %v422, %v420
        %v453 = vpack.c.b16 %v423, %v421
        %v454 = vpack.c.b16 %v426, %v424
        %v455 = vpack.c.b16 %v427, %v425
        %v456 = vpack.c.b16 %v430, %v428
        %v457 = vpack.c.b16 %v431, %v429
        %v458 = vpack.c.b16 %v434, %v432
        %v459 = vpack.c.b16 %v435, %v433
        %v460 = vpack.c.b16 %v438, %v436
        %v461 = vpack.c.b16 %v439, %v437
        %v462 = vpack.c.b16 %v442, %v440
        %v463 = vpack.c.b16 %v443, %v441
        %v464 = vpack.c.b16 %v446, %v444
        %v465 = vpack.c.b16 %v447, %v445
        %v466 = vpack.c.b16 %v450, %v448
        %v467 = vpack.c.b16 %v451, %v449
        %484 = vmatprep.subr.bf16.mxu0 %v467
        %485 = vmatpush1.bf16.msra.mxu0 %v466
        %486 = vmatprep.subr.bf16.mxu0 %v465
        %487 = vmatpush1.bf16.msra.mxu0 %v464
        %488 = vmatprep.subr.bf16.mxu0 %v463
        %489 = vmatpush1.bf16.msra.mxu0 %v462
        %490 = vmatprep.subr.bf16.mxu0 %v461
        %491 = vmatpush1.bf16.msra.mxu0 %v460
        %492 = vmatprep.subr.bf16.mxu0 %v459
        %493 = vmatpush1.bf16.msra.mxu0 %v458
        %494 = vmatprep.subr.bf16.mxu0 %v457
        %495 = vmatpush1.bf16.msra.mxu0 %v456
        %496 = vmatprep.subr.bf16.mxu0 %v455
        %497 = vmatpush1.bf16.msra.mxu0 %v454
        %498 = vmatprep.subr.bf16.mxu0 %v453
        %499 = vmatpush1.bf16.msra.mxu0 %v452
        %500 = vmatprep.subr.bf16.mxu0 0
        %501 = vmatpush2.bf16.msra.mxu0 0
        %502 = vmatprep.subr.bf16.mxu0 0
        %503 = vmatpush2.bf16.msra.mxu0 0
        %504 = vmatprep.subr.bf16.mxu0 0
        %505 = vmatpush2.bf16.msra.mxu0 0
        %506 = vmatprep.subr.bf16.mxu0 0
        %507 = vmatpush2.bf16.msra.mxu0 0
        %508 = vmatprep.subr.bf16.mxu0 0
        %509 = vmatpush2.bf16.msra.mxu0 0
        %510 = vmatprep.subr.bf16.mxu0 0
        %511 = vmatpush2.bf16.msra.mxu0 0
        %512 = vmatprep.subr.bf16.mxu0 0
        %513 = vmatpush2.bf16.msra.mxu0 0
        %514 = vmatprep.subr.bf16.mxu0 0
        %515 = vmatpush2.bf16.msra.mxu0 0
        %516 = vmatprep.mubr.bf16.mxu0 0
        %517 = vmatmul.mubr.bf16.gmra.mxu0 %v344
        %v518 = vpop.f32.mrf.mxu0
        %v519 = vadd.f32 %v397, %v518
        %v520 = vpop.f32.mrf.mxu0
        %v521 = vadd.f32 %v401, %v520
        %v522 = vpop.f32.mrf.mxu0
        %v523 = vadd.f32 %v397, %v522
        %v524 = vpop.f32.mrf.mxu0
        %v525 = vadd.f32 %v401, %v524
        %526 = vmatprep.mubr.bf16.mxu0 0
        %527 = vmatmul.mubr.bf16.gmra.mxu0 %v345
        %v528 = vpop.f32.mrf.mxu0
        %v529 = vadd.f32 %v397, %v528
        %v530 = vpop.f32.mrf.mxu0
        %v531 = vadd.f32 %v401, %v530
        %v532 = vpop.f32.mrf.mxu0
        %v533 = vadd.f32 %v397, %v532
        %v534 = vpop.f32.mrf.mxu0
        %v535 = vadd.f32 %v401, %v534
        %536 = vmatprep.mubr.bf16.mxu0 0
        %537 = vmatmul.mubr.bf16.gmra.mxu0 %v346
        %v538 = vpop.f32.mrf.mxu0
        %v539 = vadd.f32 %v397, %v538
        %v540 = vpop.f32.mrf.mxu0
        %v541 = vadd.f32 %v401, %v540
        %v542 = vpop.f32.mrf.mxu0
        %v543 = vadd.f32 %v397, %v542
        %v544 = vpop.f32.mrf.mxu0
        %v545 = vadd.f32 %v401, %v544
        %546 = vmatprep.mubr.bf16.mxu0 0
        %547 = vmatmul.mubr.bf16.gmra.mxu0 %v347
        %v548 = vpop.f32.mrf.mxu0
        %v549 = vadd.f32 %v397, %v548
        %v550 = vpop.f32.mrf.mxu0
        %v551 = vadd.f32 %v401, %v550
        %v552 = vpop.f32.mrf.mxu0
        %v553 = vadd.f32 %v397, %v552
        %v554 = vpop.f32.mrf.mxu0
        %v555 = vadd.f32 %v401, %v554
        %556 = vmatprep.mubr.bf16.mxu0 0
        %557 = vmatmul.mubr.bf16.gmra.mxu0 %v348
        %v558 = vpop.f32.mrf.mxu0
        %v559 = vadd.f32 %v397, %v558
        %v560 = vpop.f32.mrf.mxu0
        %v561 = vadd.f32 %v401, %v560
        %v562 = vpop.f32.mrf.mxu0
        %v563 = vadd.f32 %v397, %v562
        %v564 = vpop.f32.mrf.mxu0
        %v565 = vadd.f32 %v401, %v564
        %566 = vmatprep.mubr.bf16.mxu0 0
        %567 = vmatmul.mubr.bf16.gmra.mxu0 %v349
        %v568 = vpop.f32.mrf.mxu0
        %v569 = vadd.f32 %v397, %v568
        %v570 = vpop.f32.mrf.mxu0
        %v571 = vadd.f32 %v401, %v570
        %v572 = vpop.f32.mrf.mxu0
        %v573 = vadd.f32 %v397, %v572
        %v574 = vpop.f32.mrf.mxu0
        %v575 = vadd.f32 %v401, %v574
        %576 = vmatprep.mubr.bf16.mxu0 0
        %577 = vmatmul.mubr.bf16.gmra.mxu0 %v350
        %v578 = vpop.f32.mrf.mxu0
        %v579 = vadd.f32 %v397, %v578
        %v580 = vpop.f32.mrf.mxu0
        %v581 = vadd.f32 %v401, %v580
        %v582 = vpop.f32.mrf.mxu0
        %v583 = vadd.f32 %v397, %v582
        %v584 = vpop.f32.mrf.mxu0
        %v585 = vadd.f32 %v401, %v584
        %586 = vmatprep.mubr.bf16.mxu0 0
        %587 = vmatmul.mubr.bf16.gmra.mxu0 %v351
        %v588 = vpop.f32.mrf.mxu0
        %v589 = vadd.f32 %v397, %v588
        %v590 = vpop.f32.mrf.mxu0
        %v591 = vadd.f32 %v401, %v590
        %v592 = vpop.f32.mrf.mxu0
        %v593 = vadd.f32 %v397, %v592
        %v594 = vpop.f32.mrf.mxu0
        %v595 = vadd.f32 %v401, %v594
        %596 = vmatprep.mubr.bf16.mxu0 0
        %597 = vmatmul.mubr.bf16.gmra.mxu0 %v352
        %v598 = vpop.f32.mrf.mxu0
        %v599 = vadd.f32 %v397, %v598
        %v600 = vpop.f32.mrf.mxu0
        %v601 = vadd.f32 %v401, %v600
        %v602 = vpop.f32.mrf.mxu0
        %v603 = vadd.f32 %v397, %v602
        %v604 = vpop.f32.mrf.mxu0
        %v605 = vadd.f32 %v401, %v604
        %606 = vmatprep.mubr.bf16.mxu0 0
        %607 = vmatmul.mubr.bf16.gmra.mxu0 %v353
        %v608 = vpop.f32.mrf.mxu0
        %v609 = vadd.f32 %v397, %v608
        %v610 = vpop.f32.mrf.mxu0
        %v611 = vadd.f32 %v401, %v610
        %v612 = vpop.f32.mrf.mxu0
        %v613 = vadd.f32 %v397, %v612
        %v614 = vpop.f32.mrf.mxu0
        %v615 = vadd.f32 %v401, %v614
        %616 = vmatprep.mubr.bf16.mxu0 0
        %617 = vmatmul.mubr.bf16.gmra.mxu0 %v354
        %v618 = vpop.f32.mrf.mxu0
        %v619 = vadd.f32 %v397, %v618
        %v620 = vpop.f32.mrf.mxu0
        %v621 = vadd.f32 %v401, %v620
        %v622 = vpop.f32.mrf.mxu0
        %v623 = vadd.f32 %v397, %v622
        %v624 = vpop.f32.mrf.mxu0
        %v625 = vadd.f32 %v401, %v624
        %626 = vmatprep.mubr.bf16.mxu0 0
        %627 = vmatmul.mubr.bf16.gmra.mxu0 %v355
        %v628 = vpop.f32.mrf.mxu0
        %v629 = vadd.f32 %v397, %v628
        %v630 = vpop.f32.mrf.mxu0
        %v631 = vadd.f32 %v401, %v630
        %v632 = vpop.f32.mrf.mxu0
        %v633 = vadd.f32 %v397, %v632
        %v634 = vpop.f32.mrf.mxu0
        %v635 = vadd.f32 %v401, %v634
        %636 = vmatprep.mubr.bf16.mxu0 0
        %637 = vmatmul.mubr.bf16.gmra.mxu0 %v356
        %v638 = vpop.f32.mrf.mxu0
        %v639 = vadd.f32 %v397, %v638
        %v640 = vpop.f32.mrf.mxu0
        %v641 = vadd.f32 %v401, %v640
        %v642 = vpop.f32.mrf.mxu0
        %v643 = vadd.f32 %v397, %v642
        %v644 = vpop.f32.mrf.mxu0
        %v645 = vadd.f32 %v401, %v644
        %646 = vmatprep.mubr.bf16.mxu0 0
        %647 = vmatmul.mubr.bf16.gmra.mxu0 %v357
        %v648 = vpop.f32.mrf.mxu0
        %v649 = vadd.f32 %v397, %v648
        %v650 = vpop.f32.mrf.mxu0
        %v651 = vadd.f32 %v401, %v650
        %v652 = vpop.f32.mrf.mxu0
        %v653 = vadd.f32 %v397, %v652
        %v654 = vpop.f32.mrf.mxu0
        %v655 = vadd.f32 %v401, %v654
        %656 = vmatprep.mubr.bf16.mxu0 0
        %657 = vmatmul.mubr.bf16.gmra.mxu0 %v358
        %v658 = vpop.f32.mrf.mxu0
        %v659 = vadd.f32 %v397, %v658
        %v660 = vpop.f32.mrf.mxu0
        %v661 = vadd.f32 %v401, %v660
        %v662 = vpop.f32.mrf.mxu0
        %v663 = vadd.f32 %v397, %v662
        %v664 = vpop.f32.mrf.mxu0
        %v665 = vadd.f32 %v401, %v664
        %666 = vmatprep.mubr.bf16.mxu0 0
        %667 = vmatmul.mubr.bf16.gmra.mxu0 %v359
        %v668 = vpop.f32.mrf.mxu0
        %v669 = vadd.f32 %v397, %v668
        %v670 = vpop.f32.mrf.mxu0
        %v671 = vadd.f32 %v401, %v670
        %v672 = vpop.f32.mrf.mxu0
        %v673 = vadd.f32 %v397, %v672
        %v674 = vpop.f32.mrf.mxu0
        %v675 = vadd.f32 %v401, %v674
        %676 = vmatprep.mubr.bf16.mxu0 0
        %677 = vmatmul.mubr.bf16.gmra.mxu0 %v360
        %v678 = vpop.f32.mrf.mxu0
        %v679 = vadd.f32 %v397, %v678
        %v680 = vpop.f32.mrf.mxu0
        %v681 = vadd.f32 %v401, %v680
        %v682 = vpop.f32.mrf.mxu0
        %v683 = vadd.f32 %v397, %v682
        %v684 = vpop.f32.mrf.mxu0
        %v685 = vadd.f32 %v401, %v684
        %686 = vmatprep.mubr.bf16.mxu0 0
        %687 = vmatmul.mubr.bf16.gmra.mxu0 %v361
        %v688 = vpop.f32.mrf.mxu0
        %v689 = vadd.f32 %v397, %v688
        %v690 = vpop.f32.mrf.mxu0
        %v691 = vadd.f32 %v401, %v690
        %v692 = vpop.f32.mrf.mxu0
        %v693 = vadd.f32 %v397, %v692
        %v694 = vpop.f32.mrf.mxu0
        %v695 = vadd.f32 %v401, %v694
        %696 = vmatprep.mubr.bf16.mxu0 0
        %697 = vmatmul.mubr.bf16.gmra.mxu0 %v362
        %v698 = vpop.f32.mrf.mxu0
        %v699 = vadd.f32 %v397, %v698
        %v700 = vpop.f32.mrf.mxu0
        %v701 = vadd.f32 %v401, %v700
        %v702 = vpop.f32.mrf.mxu0
        %v703 = vadd.f32 %v397, %v702
        %v704 = vpop.f32.mrf.mxu0
        %v705 = vadd.f32 %v401, %v704
        %706 = vmatprep.mubr.bf16.mxu0 0
        %707 = vmatmul.mubr.bf16.gmra.mxu0 %v363
        %v708 = vpop.f32.mrf.mxu0
        %v709 = vadd.f32 %v397, %v708
        %v710 = vpop.f32.mrf.mxu0
        %v711 = vadd.f32 %v401, %v710
        %v712 = vpop.f32.mrf.mxu0
        %v713 = vadd.f32 %v397, %v712
        %v714 = vpop.f32.mrf.mxu0
        %v715 = vadd.f32 %v401, %v714
        %716 = vmatprep.mubr.bf16.mxu0 0
        %717 = vmatmul.mubr.bf16.gmra.mxu0 %v364
        %v718 = vpop.f32.mrf.mxu0
        %v719 = vadd.f32 %v397, %v718
        %v720 = vpop.f32.mrf.mxu0
        %v721 = vadd.f32 %v401, %v720
        %v722 = vpop.f32.mrf.mxu0
        %v723 = vadd.f32 %v397, %v722
        %v724 = vpop.f32.mrf.mxu0
        %v725 = vadd.f32 %v401, %v724
        %726 = vmatprep.mubr.bf16.mxu0 0
        %727 = vmatmul.mubr.bf16.gmra.mxu0 %v365
        %v728 = vpop.f32.mrf.mxu0
        %v729 = vadd.f32 %v397, %v728
        %v730 = vpop.f32.mrf.mxu0
        %v731 = vadd.f32 %v401, %v730
        %v732 = vpop.f32.mrf.mxu0
        %v733 = vadd.f32 %v397, %v732
        %v734 = vpop.f32.mrf.mxu0
        %v735 = vadd.f32 %v401, %v734
        %736 = vmatprep.mubr.bf16.mxu0 0
        %737 = vmatmul.mubr.bf16.gmra.mxu0 %v366
        %v738 = vpop.f32.mrf.mxu0
        %v739 = vadd.f32 %v397, %v738
        %v740 = vpop.f32.mrf.mxu0
        %v741 = vadd.f32 %v401, %v740
        %v742 = vpop.f32.mrf.mxu0
        %v743 = vadd.f32 %v397, %v742
        %v744 = vpop.f32.mrf.mxu0
        %v745 = vadd.f32 %v401, %v744
        %746 = vmatprep.mubr.bf16.mxu0 0
        %747 = vmatmul.mubr.bf16.gmra.mxu0 %v367
        %v748 = vpop.f32.mrf.mxu0
        %v749 = vadd.f32 %v397, %v748
        %v750 = vpop.f32.mrf.mxu0
        %v751 = vadd.f32 %v401, %v750
        %v752 = vpop.f32.mrf.mxu0
        %v753 = vadd.f32 %v397, %v752
        %v754 = vpop.f32.mrf.mxu0
        %v755 = vadd.f32 %v401, %v754
        %756 = vmatprep.mubr.bf16.mxu0 0
        %757 = vmatmul.mubr.bf16.gmra.mxu0 %v368
        %v758 = vpop.f32.mrf.mxu0
        %v759 = vadd.f32 %v397, %v758
        %v760 = vpop.f32.mrf.mxu0
        %v761 = vadd.f32 %v401, %v760
        %v762 = vpop.f32.mrf.mxu0
        %v763 = vadd.f32 %v397, %v762
        %v764 = vpop.f32.mrf.mxu0
        %v765 = vadd.f32 %v401, %v764
        %766 = vmatprep.mubr.bf16.mxu0 0
        %767 = vmatmul.mubr.bf16.gmra.mxu0 %v369
        %v768 = vpop.f32.mrf.mxu0
        %v769 = vadd.f32 %v397, %v768
        %v770 = vpop.f32.mrf.mxu0
        %v771 = vadd.f32 %v401, %v770
        %v772 = vpop.f32.mrf.mxu0
        %v773 = vadd.f32 %v397, %v772
        %v774 = vpop.f32.mrf.mxu0
        %v775 = vadd.f32 %v401, %v774
        %776 = vmatprep.mubr.bf16.mxu0 0
        %777 = vmatmul.mubr.bf16.gmra.mxu0 %v370
        %v778 = vpop.f32.mrf.mxu0
        %v779 = vadd.f32 %v397, %v778
        %v780 = vpop.f32.mrf.mxu0
        %v781 = vadd.f32 %v401, %v780
        %v782 = vpop.f32.mrf.mxu0
        %v783 = vadd.f32 %v397, %v782
        %v784 = vpop.f32.mrf.mxu0
        %v785 = vadd.f32 %v401, %v784
        %786 = vmatprep.mubr.bf16.mxu0 0
        %787 = vmatmul.mubr.bf16.gmra.mxu0 %v371
        %v788 = vpop.f32.mrf.mxu0
        %v789 = vadd.f32 %v397, %v788
        %v790 = vpop.f32.mrf.mxu0
        %v791 = vadd.f32 %v401, %v790
        %v792 = vpop.f32.mrf.mxu0
        %v793 = vadd.f32 %v397, %v792
        %v794 = vpop.f32.mrf.mxu0
        %v795 = vadd.f32 %v401, %v794
        %796 = vmatprep.mubr.bf16.mxu0 0
        %797 = vmatmul.mubr.bf16.gmra.mxu0 %v372
        %v798 = vpop.f32.mrf.mxu0
        %v799 = vadd.f32 %v397, %v798
        %v800 = vpop.f32.mrf.mxu0
        %v801 = vadd.f32 %v401, %v800
        %v802 = vpop.f32.mrf.mxu0
        %v803 = vadd.f32 %v397, %v802
        %v804 = vpop.f32.mrf.mxu0
        %v805 = vadd.f32 %v401, %v804
        %806 = vmatprep.mubr.bf16.mxu0 0
        %807 = vmatmul.mubr.bf16.gmra.mxu0 %v373
        %v808 = vpop.f32.mrf.mxu0
        %v809 = vadd.f32 %v397, %v808
        %v810 = vpop.f32.mrf.mxu0
        %v811 = vadd.f32 %v401, %v810
        %v812 = vpop.f32.mrf.mxu0
        %v813 = vadd.f32 %v397, %v812
        %v814 = vpop.f32.mrf.mxu0
        %v815 = vadd.f32 %v401, %v814
        %816 = vmatprep.mubr.bf16.mxu0 0
        %817 = vmatmul.mubr.bf16.gmra.mxu0 %v374
        %v818 = vpop.f32.mrf.mxu0
        %v819 = vadd.f32 %v397, %v818
        %v820 = vpop.f32.mrf.mxu0
        %v821 = vadd.f32 %v401, %v820
        %v822 = vpop.f32.mrf.mxu0
        %v823 = vadd.f32 %v397, %v822
        %v824 = vpop.f32.mrf.mxu0
        %v825 = vadd.f32 %v401, %v824
        %826 = vmatprep.mubr.bf16.mxu0 0
        %827 = vmatmul.mubr.bf16.gmra.mxu0 %v375
        %v828 = vpop.f32.mrf.mxu0
        %v829 = vadd.f32 %v397, %v828
        %v830 = vpop.f32.mrf.mxu0
        %v831 = vadd.f32 %v401, %v830
        %v832 = vpop.f32.mrf.mxu0
        %v833 = vadd.f32 %v397, %v832
        %v834 = vpop.f32.mrf.mxu0
        %v835 = vadd.f32 %v401, %v834
        %836 = vdwg.mxu0
        %v837 = vmul.f32 %v519, 0.5
        %v838 = vmul.f32 %v521, 0.5
        %v839 = vmul.f32 %v523, 0.5
        %v840 = vmul.f32 %v525, 0.5
        %v841 = vmul.f32 %v529, 0.5
        %v842 = vmul.f32 %v531, 0.5
        %v843 = vmul.f32 %v533, 0.5
        %v844 = vmul.f32 %v535, 0.5
        %v845 = vmul.f32 %v539, 0.5
        %v846 = vmul.f32 %v541, 0.5
        %v847 = vmul.f32 %v543, 0.5
        %v848 = vmul.f32 %v545, 0.5
        %v849 = vmul.f32 %v549, 0.5
        %v850 = vmul.f32 %v551, 0.5
        %v851 = vmul.f32 %v553, 0.5
        %v852 = vmul.f32 %v555, 0.5
        %v853 = vmul.f32 %v559, 0.5
        %v854 = vmul.f32 %v561, 0.5
        %v855 = vmul.f32 %v563, 0.5
        %v856 = vmul.f32 %v565, 0.5
        %v857 = vmul.f32 %v569, 0.5
        %v858 = vmul.f32 %v571, 0.5
        %v859 = vmul.f32 %v573, 0.5
        %v860 = vmul.f32 %v575, 0.5
        %v861 = vmul.f32 %v579, 0.5
        %v862 = vmul.f32 %v581, 0.5
        %v863 = vmul.f32 %v583, 0.5
        %v864 = vmul.f32 %v585, 0.5
        %v865 = vmul.f32 %v589, 0.5
        %v866 = vmul.f32 %v591, 0.5
        %v867 = vmul.f32 %v593, 0.5
        %v868 = vmul.f32 %v595, 0.5
        %v869 = vmul.f32 %v599, 0.5
        %v870 = vmul.f32 %v601, 0.5
        %v871 = vmul.f32 %v603, 0.5
        %v872 = vmul.f32 %v605, 0.5
        %v873 = vmul.f32 %v609, 0.5
        %v874 = vmul.f32 %v611, 0.5
        %v875 = vmul.f32 %v613, 0.5
        %v876 = vmul.f32 %v615, 0.5
        %v877 = vmul.f32 %v619, 0.5
        %v878 = vmul.f32 %v621, 0.5
        %v879 = vmul.f32 %v623, 0.5
        %v880 = vmul.f32 %v625, 0.5
        %v881 = vmul.f32 %v629, 0.5
        %v882 = vmul.f32 %v631, 0.5
        %v883 = vmul.f32 %v633, 0.5
        %v884 = vmul.f32 %v635, 0.5
        %v885 = vmul.f32 %v639, 0.5
        %v886 = vmul.f32 %v641, 0.5
        %v887 = vmul.f32 %v643, 0.5
        %v888 = vmul.f32 %v645, 0.5
        %v889 = vmul.f32 %v649, 0.5
        %v890 = vmul.f32 %v651, 0.5
        %v891 = vmul.f32 %v653, 0.5
        %v892 = vmul.f32 %v655, 0.5
        %v893 = vmul.f32 %v659, 0.5
        %v894 = vmul.f32 %v661, 0.5
        %v895 = vmul.f32 %v663, 0.5
        %v896 = vmul.f32 %v665, 0.5
        %v897 = vmul.f32 %v669, 0.5
        %v898 = vmul.f32 %v671, 0.5
        %v899 = vmul.f32 %v673, 0.5
        %v900 = vmul.f32 %v675, 0.5
        %v901 = vmul.f32 %v679, 0.5
        %v902 = vmul.f32 %v681, 0.5
        %v903 = vmul.f32 %v683, 0.5
        %v904 = vmul.f32 %v685, 0.5
        %v905 = vmul.f32 %v689, 0.5
        %v906 = vmul.f32 %v691, 0.5
        %v907 = vmul.f32 %v693, 0.5
        %v908 = vmul.f32 %v695, 0.5
        %v909 = vmul.f32 %v699, 0.5
        %v910 = vmul.f32 %v701, 0.5
        %v911 = vmul.f32 %v703, 0.5
        %v912 = vmul.f32 %v705, 0.5
        %v913 = vmul.f32 %v709, 0.5
        %v914 = vmul.f32 %v711, 0.5
        %v915 = vmul.f32 %v713, 0.5
        %v916 = vmul.f32 %v715, 0.5
        %v917 = vmul.f32 %v719, 0.5
        %v918 = vmul.f32 %v721, 0.5
        %v919 = vmul.f32 %v723, 0.5
        %v920 = vmul.f32 %v725, 0.5
        %v921 = vmul.f32 %v729, 0.5
        %v922 = vmul.f32 %v731, 0.5
        %v923 = vmul.f32 %v733, 0.5
        %v924 = vmul.f32 %v735, 0.5
        %v925 = vmul.f32 %v739, 0.5
        %v926 = vmul.f32 %v741, 0.5
        %v927 = vmul.f32 %v743, 0.5
        %v928 = vmul.f32 %v745, 0.5
        %v929 = vmul.f32 %v749, 0.5
        %v930 = vmul.f32 %v751, 0.5
        %v931 = vmul.f32 %v753, 0.5
        %v932 = vmul.f32 %v755, 0.5
        %v933 = vmul.f32 %v759, 0.5
        %v934 = vmul.f32 %v761, 0.5
        %v935 = vmul.f32 %v763, 0.5
        %v936 = vmul.f32 %v765, 0.5
        %v937 = vmul.f32 %v769, 0.5
        %v938 = vmul.f32 %v771, 0.5
        %v939 = vmul.f32 %v773, 0.5
        %v940 = vmul.f32 %v775, 0.5
        %v941 = vmul.f32 %v779, 0.5
        %v942 = vmul.f32 %v781, 0.5
        %v943 = vmul.f32 %v783, 0.5
        %v944 = vmul.f32 %v785, 0.5
        %v945 = vmul.f32 %v789, 0.5
        %v946 = vmul.f32 %v791, 0.5
        %v947 = vmul.f32 %v793, 0.5
        %v948 = vmul.f32 %v795, 0.5
        %v949 = vmul.f32 %v799, 0.5
        %v950 = vmul.f32 %v801, 0.5
        %v951 = vmul.f32 %v803, 0.5
        %v952 = vmul.f32 %v805, 0.5
        %v953 = vmul.f32 %v809, 0.5
        %v954 = vmul.f32 %v811, 0.5
        %v955 = vmul.f32 %v813, 0.5
        %v956 = vmul.f32 %v815, 0.5
        %v957 = vmul.f32 %v819, 0.5
        %v958 = vmul.f32 %v821, 0.5
        %v959 = vmul.f32 %v823, 0.5
        %v960 = vmul.f32 %v825, 0.5
        %v961 = vmul.f32 %v829, 0.5
        %v962 = vmul.f32 %v831, 0.5
        %v963 = vmul.f32 %v833, 0.5
        %v964 = vmul.f32 %v835, 0.5
        %v965 = vmul.f32 %v519, 0.70710677
        %v966 = vmul.f32 %v521, 0.70710677
        %v967 = vmul.f32 %v523, 0.70710677
        %v968 = vmul.f32 %v525, 0.70710677
        %v969 = vmul.f32 %v529, 0.70710677
        %v970 = vmul.f32 %v531, 0.70710677
        %v971 = vmul.f32 %v533, 0.70710677
        %v972 = vmul.f32 %v535, 0.70710677
        %v973 = vmul.f32 %v539, 0.70710677
        %v974 = vmul.f32 %v541, 0.70710677
        %v975 = vmul.f32 %v543, 0.70710677
        %v976 = vmul.f32 %v545, 0.70710677
        %v977 = vmul.f32 %v549, 0.70710677
        %v978 = vmul.f32 %v551, 0.70710677
        %v979 = vmul.f32 %v553, 0.70710677
        %v980 = vmul.f32 %v555, 0.70710677
        %v981 = vmul.f32 %v559, 0.70710677
        %v982 = vmul.f32 %v561, 0.70710677
        %v983 = vmul.f32 %v563, 0.70710677
        %v984 = vmul.f32 %v565, 0.70710677
        %v985 = vmul.f32 %v569, 0.70710677
        %v986 = vmul.f32 %v571, 0.70710677
        %v987 = vmul.f32 %v573, 0.70710677
        %v988 = vmul.f32 %v575, 0.70710677
        %v989 = vmul.f32 %v579, 0.70710677
        %v990 = vmul.f32 %v581, 0.70710677
        %v991 = vmul.f32 %v583, 0.70710677
        %v992 = vmul.f32 %v585, 0.70710677
        %v993 = vmul.f32 %v589, 0.70710677
        %v994 = vmul.f32 %v591, 0.70710677
        %v995 = vmul.f32 %v593, 0.70710677
        %v996 = vmul.f32 %v595, 0.70710677
        %v997 = vmul.f32 %v599, 0.70710677
        %v998 = vmul.f32 %v601, 0.70710677
        %v999 = vmul.f32 %v603, 0.70710677
        %v1000 = vmul.f32 %v605, 0.70710677
        %v1001 = vmul.f32 %v609, 0.70710677
        %v1002 = vmul.f32 %v611, 0.70710677
        %v1003 = vmul.f32 %v613, 0.70710677
        %v1004 = vmul.f32 %v615, 0.70710677
        %v1005 = vmul.f32 %v619, 0.70710677
        %v1006 = vmul.f32 %v621, 0.70710677
        %v1007 = vmul.f32 %v623, 0.70710677
        %v1008 = vmul.f32 %v625, 0.70710677
        %v1009 = vmul.f32 %v629, 0.70710677
        %v1010 = vmul.f32 %v631, 0.70710677
        %v1011 = vmul.f32 %v633, 0.70710677
        %v1012 = vmul.f32 %v635, 0.70710677
        %v1013 = vmul.f32 %v639, 0.70710677
        %v1014 = vmul.f32 %v641, 0.70710677
        %v1015 = vmul.f32 %v643, 0.70710677
        %v1016 = vmul.f32 %v645, 0.70710677
        %v1017 = vmul.f32 %v649, 0.70710677
        %v1018 = vmul.f32 %v651, 0.70710677
        %v1019 = vmul.f32 %v653, 0.70710677
        %v1020 = vmul.f32 %v655, 0.70710677
        %v1021 = vmul.f32 %v659, 0.70710677
        %v1022 = vmul.f32 %v661, 0.70710677
        %v1023 = vmul.f32 %v663, 0.70710677
        %v1024 = vmul.f32 %v665, 0.70710677
        %v1025 = vmul.f32 %v669, 0.70710677
        %v1026 = vmul.f32 %v671, 0.70710677
        %v1027 = vmul.f32 %v673, 0.70710677
        %v1028 = vmul.f32 %v675, 0.70710677
        %v1029 = vmul.f32 %v679, 0.70710677
        %v1030 = vmul.f32 %v681, 0.70710677
        %v1031 = vmul.f32 %v683, 0.70710677
        %v1032 = vmul.f32 %v685, 0.70710677
        %v1033 = vmul.f32 %v689, 0.70710677
        %v1034 = vmul.f32 %v691, 0.70710677
        %v1035 = vmul.f32 %v693, 0.70710677
        %v1036 = vmul.f32 %v695, 0.70710677
        %v1037 = vmul.f32 %v699, 0.70710677
        %v1038 = vmul.f32 %v701, 0.70710677
        %v1039 = vmul.f32 %v703, 0.70710677
        %v1040 = vmul.f32 %v705, 0.70710677
        %v1041 = vmul.f32 %v709, 0.70710677
        %v1042 = vmul.f32 %v711, 0.70710677
        %v1043 = vmul.f32 %v713, 0.70710677
        %v1044 = vmul.f32 %v715, 0.70710677
        %v1045 = vmul.f32 %v719, 0.70710677
        %v1046 = vmul.f32 %v721, 0.70710677
        %v1047 = vmul.f32 %v723, 0.70710677
        %v1048 = vmul.f32 %v725, 0.70710677
        %v1049 = vmul.f32 %v729, 0.70710677
        %v1050 = vmul.f32 %v731, 0.70710677
        %v1051 = vmul.f32 %v733, 0.70710677
        %v1052 = vmul.f32 %v735, 0.70710677
        %v1053 = vmul.f32 %v739, 0.70710677
        %v1054 = vmul.f32 %v741, 0.70710677
        %v1055 = vmul.f32 %v743, 0.70710677
        %v1056 = vmul.f32 %v745, 0.70710677
        %v1057 = vmul.f32 %v749, 0.70710677
        %v1058 = vmul.f32 %v751, 0.70710677
        %v1059 = vmul.f32 %v753, 0.70710677
        %v1060 = vmul.f32 %v755, 0.70710677
        %v1061 = vmul.f32 %v759, 0.70710677
        %v1062 = vmul.f32 %v761, 0.70710677
        %v1063 = vmul.f32 %v763, 0.70710677
        %v1064 = vmul.f32 %v765, 0.70710677
        %v1065 = vmul.f32 %v769, 0.70710677
        %v1066 = vmul.f32 %v771, 0.70710677
        %v1067 = vmul.f32 %v773, 0.70710677
        %v1068 = vmul.f32 %v775, 0.70710677
        %v1069 = vmul.f32 %v779, 0.70710677
        %v1070 = vmul.f32 %v781, 0.70710677
        %v1071 = vmul.f32 %v783, 0.70710677
        %v1072 = vmul.f32 %v785, 0.70710677
        %v1073 = vmul.f32 %v789, 0.70710677
        %v1074 = vmul.f32 %v791, 0.70710677
        %v1075 = vmul.f32 %v793, 0.70710677
        %v1076 = vmul.f32 %v795, 0.70710677
        %v1077 = vmul.f32 %v799, 0.70710677
        %v1078 = vmul.f32 %v801, 0.70710677
        %v1079 = vmul.f32 %v803, 0.70710677
        %v1080 = vmul.f32 %v805, 0.70710677
        %v1081 = vmul.f32 %v809, 0.70710677
        %v1082 = vmul.f32 %v811, 0.70710677
        %v1083 = vmul.f32 %v813, 0.70710677
        %v1084 = vmul.f32 %v815, 0.70710677
        %v1085 = vmul.f32 %v819, 0.70710677
        %v1086 = vmul.f32 %v821, 0.70710677
        %v1087 = vmul.f32 %v823, 0.70710677
        %v1088 = vmul.f32 %v825, 0.70710677
        %v1089 = vmul.f32 %v829, 0.70710677
        %v1090 = vmul.f32 %v831, 0.70710677
        %v1091 = vmul.f32 %v833, 0.70710677
        %v1092 = vmul.f32 %v835, 0.70710677
        %v1093 = vand.u32 2147483647, %v965
        %v1094 = vand.u32 2147483647, %v966
        %v1095 = vand.u32 2147483647, %v967
        %v1096 = vand.u32 2147483647, %v968
        %v1097 = vand.u32 2147483647, %v969
        %v1098 = vand.u32 2147483647, %v970
        %v1099 = vand.u32 2147483647, %v971
        %v1100 = vand.u32 2147483647, %v972
        %v1101 = vand.u32 2147483647, %v973
        %v1102 = vand.u32 2147483647, %v974
        %v1103 = vand.u32 2147483647, %v975
        %v1104 = vand.u32 2147483647, %v976
        %v1105 = vand.u32 2147483647, %v977
        %v1106 = vand.u32 2147483647, %v978
        %v1107 = vand.u32 2147483647, %v979
        %v1108 = vand.u32 2147483647, %v980
        %v1109 = vand.u32 2147483647, %v981
        %v1110 = vand.u32 2147483647, %v982
        %v1111 = vand.u32 2147483647, %v983
        %v1112 = vand.u32 2147483647, %v984
        %v1113 = vand.u32 2147483647, %v985
        %v1114 = vand.u32 2147483647, %v986
        %v1115 = vand.u32 2147483647, %v987
        %v1116 = vand.u32 2147483647, %v988
        %v1117 = vand.u32 2147483647, %v989
        %v1118 = vand.u32 2147483647, %v990
        %v1119 = vand.u32 2147483647, %v991
        %v1120 = vand.u32 2147483647, %v992
        %v1121 = vand.u32 2147483647, %v993
        %v1122 = vand.u32 2147483647, %v994
        %v1123 = vand.u32 2147483647, %v995
        %v1124 = vand.u32 2147483647, %v996
        %v1125 = vand.u32 2147483647, %v997
        %v1126 = vand.u32 2147483647, %v998
        %v1127 = vand.u32 2147483647, %v999
        %v1128 = vand.u32 2147483647, %v1000
        %v1129 = vand.u32 2147483647, %v1001
        %v1130 = vand.u32 2147483647, %v1002
        %v1131 = vand.u32 2147483647, %v1003
        %v1132 = vand.u32 2147483647, %v1004
        %v1133 = vand.u32 2147483647, %v1005
        %v1134 = vand.u32 2147483647, %v1006
        %v1135 = vand.u32 2147483647, %v1007
        %v1136 = vand.u32 2147483647, %v1008
        %v1137 = vand.u32 2147483647, %v1009
        %v1138 = vand.u32 2147483647, %v1010
        %v1139 = vand.u32 2147483647, %v1011
        %v1140 = vand.u32 2147483647, %v1012
        %v1141 = vand.u32 2147483647, %v1013
        %v1142 = vand.u32 2147483647, %v1014
        %v1143 = vand.u32 2147483647, %v1015
        %v1144 = vand.u32 2147483647, %v1016
        %v1145 = vand.u32 2147483647, %v1017
        %v1146 = vand.u32 2147483647, %v1018
        %v1147 = vand.u32 2147483647, %v1019
        %v1148 = vand.u32 2147483647, %v1020
        %v1149 = vand.u32 2147483647, %v1021
        %v1150 = vand.u32 2147483647, %v1022
        %v1151 = vand.u32 2147483647, %v1023
        %v1152 = vand.u32 2147483647, %v1024
        %v1153 = vand.u32 2147483647, %v1025
        %v1154 = vand.u32 2147483647, %v1026
        %v1155 = vand.u32 2147483647, %v1027
        %v1156 = vand.u32 2147483647, %v1028
        %v1157 = vand.u32 2147483647, %v1029
        %v1158 = vand.u32 2147483647, %v1030
        %v1159 = vand.u32 2147483647, %v1031
        %v1160 = vand.u32 2147483647, %v1032
        %v1161 = vand.u32 2147483647, %v1033
        %v1162 = vand.u32 2147483647, %v1034
        %v1163 = vand.u32 2147483647, %v1035
        %v1164 = vand.u32 2147483647, %v1036
        %v1165 = vand.u32 2147483647, %v1037
        %v1166 = vand.u32 2147483647, %v1038
        %v1167 = vand.u32 2147483647, %v1039
        %v1168 = vand.u32 2147483647, %v1040
        %v1169 = vand.u32 2147483647, %v1041
        %v1170 = vand.u32 2147483647, %v1042
        %v1171 = vand.u32 2147483647, %v1043
        %v1172 = vand.u32 2147483647, %v1044
        %v1173 = vand.u32 2147483647, %v1045
        %v1174 = vand.u32 2147483647, %v1046
        %v1175 = vand.u32 2147483647, %v1047
        %v1176 = vand.u32 2147483647, %v1048
        %v1177 = vand.u32 2147483647, %v1049
        %v1178 = vand.u32 2147483647, %v1050
        %v1179 = vand.u32 2147483647, %v1051
        %v1180 = vand.u32 2147483647, %v1052
        %v1181 = vand.u32 2147483647, %v1053
        %v1182 = vand.u32 2147483647, %v1054
        %v1183 = vand.u32 2147483647, %v1055
        %v1184 = vand.u32 2147483647, %v1056
        %v1185 = vand.u32 2147483647, %v1057
        %v1186 = vand.u32 2147483647, %v1058
        %v1187 = vand.u32 2147483647, %v1059
        %v1188 = vand.u32 2147483647, %v1060
        %v1189 = vand.u32 2147483647, %v1061
        %v1190 = vand.u32 2147483647, %v1062
        %v1191 = vand.u32 2147483647, %v1063
        %v1192 = vand.u32 2147483647, %v1064
        %v1193 = vand.u32 2147483647, %v1065
        %v1194 = vand.u32 2147483647, %v1066
        %v1195 = vand.u32 2147483647, %v1067
        %v1196 = vand.u32 2147483647, %v1068
        %v1197 = vand.u32 2147483647, %v1069
        %v1198 = vand.u32 2147483647, %v1070
        %v1199 = vand.u32 2147483647, %v1071
        %v1200 = vand.u32 2147483647, %v1072
        %v1201 = vand.u32 2147483647, %v1073
        %v1202 = vand.u32 2147483647, %v1074
        %v1203 = vand.u32 2147483647, %v1075
        %v1204 = vand.u32 2147483647, %v1076
        %v1205 = vand.u32 2147483647, %v1077
        %v1206 = vand.u32 2147483647, %v1078
        %v1207 = vand.u32 2147483647, %v1079
        %v1208 = vand.u32 2147483647, %v1080
        %v1209 = vand.u32 2147483647, %v1081
        %v1210 = vand.u32 2147483647, %v1082
        %v1211 = vand.u32 2147483647, %v1083
        %v1212 = vand.u32 2147483647, %v1084
        %v1213 = vand.u32 2147483647, %v1085
        %v1214 = vand.u32 2147483647, %v1086
        %v1215 = vand.u32 2147483647, %v1087
        %v1216 = vand.u32 2147483647, %v1088
        %v1217 = vand.u32 2147483647, %v1089
        %v1218 = vand.u32 2147483647, %v1090
        %v1219 = vand.u32 2147483647, %v1091
        %v1220 = vand.u32 2147483647, %v1092
        %v1221 = vmul.f32 %v1093, 0.3275911
        %v1222 = vmul.f32 %v1094, 0.3275911
        %v1223 = vmul.f32 %v1095, 0.3275911
        %v1224 = vmul.f32 %v1096, 0.3275911
        %v1225 = vmul.f32 %v1097, 0.3275911
        %v1226 = vmul.f32 %v1098, 0.3275911
        %v1227 = vmul.f32 %v1099, 0.3275911
        %v1228 = vmul.f32 %v1100, 0.3275911
        %v1229 = vmul.f32 %v1101, 0.3275911
        %v1230 = vmul.f32 %v1102, 0.3275911
        %v1231 = vmul.f32 %v1103, 0.3275911
        %v1232 = vmul.f32 %v1104, 0.3275911
        %v1233 = vmul.f32 %v1105, 0.3275911
        %v1234 = vmul.f32 %v1106, 0.3275911
        %v1235 = vmul.f32 %v1107, 0.3275911
        %v1236 = vmul.f32 %v1108, 0.3275911
        %v1237 = vmul.f32 %v1109, 0.3275911
        %v1238 = vmul.f32 %v1110, 0.3275911
        %v1239 = vmul.f32 %v1111, 0.3275911
        %v1240 = vmul.f32 %v1112, 0.3275911
        %v1241 = vmul.f32 %v1113, 0.3275911
        %v1242 = vmul.f32 %v1114, 0.3275911
        %v1243 = vmul.f32 %v1115, 0.3275911
        %v1244 = vmul.f32 %v1116, 0.3275911
        %v1245 = vmul.f32 %v1117, 0.3275911
        %v1246 = vmul.f32 %v1118, 0.3275911
        %v1247 = vmul.f32 %v1119, 0.3275911
        %v1248 = vmul.f32 %v1120, 0.3275911
        %v1249 = vmul.f32 %v1121, 0.3275911
        %v1250 = vmul.f32 %v1122, 0.3275911
        %v1251 = vmul.f32 %v1123, 0.3275911
        %v1252 = vmul.f32 %v1124, 0.3275911
        %v1253 = vmul.f32 %v1125, 0.3275911
        %v1254 = vmul.f32 %v1126, 0.3275911
        %v1255 = vmul.f32 %v1127, 0.3275911
        %v1256 = vmul.f32 %v1128, 0.3275911
        %v1257 = vmul.f32 %v1129, 0.3275911
        %v1258 = vmul.f32 %v1130, 0.3275911
        %v1259 = vmul.f32 %v1131, 0.3275911
        %v1260 = vmul.f32 %v1132, 0.3275911
        %v1261 = vmul.f32 %v1133, 0.3275911
        %v1262 = vmul.f32 %v1134, 0.3275911
        %v1263 = vmul.f32 %v1135, 0.3275911
        %v1264 = vmul.f32 %v1136, 0.3275911
        %v1265 = vmul.f32 %v1137, 0.3275911
        %v1266 = vmul.f32 %v1138, 0.3275911
        %v1267 = vmul.f32 %v1139, 0.3275911
        %v1268 = vmul.f32 %v1140, 0.3275911
        %v1269 = vmul.f32 %v1141, 0.3275911
        %v1270 = vmul.f32 %v1142, 0.3275911
        %v1271 = vmul.f32 %v1143, 0.3275911
        %v1272 = vmul.f32 %v1144, 0.3275911
        %v1273 = vmul.f32 %v1145, 0.3275911
        %v1274 = vmul.f32 %v1146, 0.3275911
        %v1275 = vmul.f32 %v1147, 0.3275911
        %v1276 = vmul.f32 %v1148, 0.3275911
        %v1277 = vmul.f32 %v1149, 0.3275911
        %v1278 = vmul.f32 %v1150, 0.3275911
        %v1279 = vmul.f32 %v1151, 0.3275911
        %v1280 = vmul.f32 %v1152, 0.3275911
        %v1281 = vmul.f32 %v1153, 0.3275911
        %v1282 = vmul.f32 %v1154, 0.3275911
        %v1283 = vmul.f32 %v1155, 0.3275911
        %v1284 = vmul.f32 %v1156, 0.3275911
        %v1285 = vmul.f32 %v1157, 0.3275911
        %v1286 = vmul.f32 %v1158, 0.3275911
        %v1287 = vmul.f32 %v1159, 0.3275911
        %v1288 = vmul.f32 %v1160, 0.3275911
        %v1289 = vmul.f32 %v1161, 0.3275911
        %v1290 = vmul.f32 %v1162, 0.3275911
        %v1291 = vmul.f32 %v1163, 0.3275911
        %v1292 = vmul.f32 %v1164, 0.3275911
        %v1293 = vmul.f32 %v1165, 0.3275911
        %v1294 = vmul.f32 %v1166, 0.3275911
        %v1295 = vmul.f32 %v1167, 0.3275911
        %v1296 = vmul.f32 %v1168, 0.3275911
        %v1297 = vmul.f32 %v1169, 0.3275911
        %v1298 = vmul.f32 %v1170, 0.3275911
        %v1299 = vmul.f32 %v1171, 0.3275911
        %v1300 = vmul.f32 %v1172, 0.3275911
        %v1301 = vmul.f32 %v1173, 0.3275911
        %v1302 = vmul.f32 %v1174, 0.3275911
        %v1303 = vmul.f32 %v1175, 0.3275911
        %v1304 = vmul.f32 %v1176, 0.3275911
        %v1305 = vmul.f32 %v1177, 0.3275911
        %v1306 = vmul.f32 %v1178, 0.3275911
        %v1307 = vmul.f32 %v1179, 0.3275911
        %v1308 = vmul.f32 %v1180, 0.3275911
        %v1309 = vmul.f32 %v1181, 0.3275911
        %v1310 = vmul.f32 %v1182, 0.3275911
        %v1311 = vmul.f32 %v1183, 0.3275911
        %v1312 = vmul.f32 %v1184, 0.3275911
        %v1313 = vmul.f32 %v1185, 0.3275911
        %v1314 = vmul.f32 %v1186, 0.3275911
        %v1315 = vmul.f32 %v1187, 0.3275911
        %v1316 = vmul.f32 %v1188, 0.3275911
        %v1317 = vmul.f32 %v1189, 0.3275911
        %v1318 = vmul.f32 %v1190, 0.3275911
        %v1319 = vmul.f32 %v1191, 0.3275911
        %v1320 = vmul.f32 %v1192, 0.3275911
        %v1321 = vmul.f32 %v1193, 0.3275911
        %v1322 = vmul.f32 %v1194, 0.3275911
        %v1323 = vmul.f32 %v1195, 0.3275911
        %v1324 = vmul.f32 %v1196, 0.3275911
        %v1325 = vmul.f32 %v1197, 0.3275911
        %v1326 = vmul.f32 %v1198, 0.3275911
        %v1327 = vmul.f32 %v1199, 0.3275911
        %v1328 = vmul.f32 %v1200, 0.3275911
        %v1329 = vmul.f32 %v1201, 0.3275911
        %v1330 = vmul.f32 %v1202, 0.3275911
        %v1331 = vmul.f32 %v1203, 0.3275911
        %v1332 = vmul.f32 %v1204, 0.3275911
        %v1333 = vmul.f32 %v1205, 0.3275911
        %v1334 = vmul.f32 %v1206, 0.3275911
        %v1335 = vmul.f32 %v1207, 0.3275911
        %v1336 = vmul.f32 %v1208, 0.3275911
        %v1337 = vmul.f32 %v1209, 0.3275911
        %v1338 = vmul.f32 %v1210, 0.3275911
        %v1339 = vmul.f32 %v1211, 0.3275911
        %v1340 = vmul.f32 %v1212, 0.3275911
        %v1341 = vmul.f32 %v1213, 0.3275911
        %v1342 = vmul.f32 %v1214, 0.3275911
        %v1343 = vmul.f32 %v1215, 0.3275911
        %v1344 = vmul.f32 %v1216, 0.3275911
        %v1345 = vmul.f32 %v1217, 0.3275911
        %v1346 = vmul.f32 %v1218, 0.3275911
        %v1347 = vmul.f32 %v1219, 0.3275911
        %v1348 = vmul.f32 %v1220, 0.3275911
        %v1349 = vadd.f32 %v1221, 1.0
        %v1350 = vadd.f32 %v1222, 1.0
        %v1351 = vadd.f32 %v1223, 1.0
        %v1352 = vadd.f32 %v1224, 1.0
        %v1353 = vadd.f32 %v1225, 1.0
        %v1354 = vadd.f32 %v1226, 1.0
        %v1355 = vadd.f32 %v1227, 1.0
        %v1356 = vadd.f32 %v1228, 1.0
        %v1357 = vadd.f32 %v1229, 1.0
        %v1358 = vadd.f32 %v1230, 1.0
        %v1359 = vadd.f32 %v1231, 1.0
        %v1360 = vadd.f32 %v1232, 1.0
        %v1361 = vadd.f32 %v1233, 1.0
        %v1362 = vadd.f32 %v1234, 1.0
        %v1363 = vadd.f32 %v1235, 1.0
        %v1364 = vadd.f32 %v1236, 1.0
        %v1365 = vadd.f32 %v1237, 1.0
        %v1366 = vadd.f32 %v1238, 1.0
        %v1367 = vadd.f32 %v1239, 1.0
        %v1368 = vadd.f32 %v1240, 1.0
        %v1369 = vadd.f32 %v1241, 1.0
        %v1370 = vadd.f32 %v1242, 1.0
        %v1371 = vadd.f32 %v1243, 1.0
        %v1372 = vadd.f32 %v1244, 1.0
        %v1373 = vadd.f32 %v1245, 1.0
        %v1374 = vadd.f32 %v1246, 1.0
        %v1375 = vadd.f32 %v1247, 1.0
        %v1376 = vadd.f32 %v1248, 1.0
        %v1377 = vadd.f32 %v1249, 1.0
        %v1378 = vadd.f32 %v1250, 1.0
        %v1379 = vadd.f32 %v1251, 1.0
        %v1380 = vadd.f32 %v1252, 1.0
        %v1381 = vadd.f32 %v1253, 1.0
        %v1382 = vadd.f32 %v1254, 1.0
        %v1383 = vadd.f32 %v1255, 1.0
        %v1384 = vadd.f32 %v1256, 1.0
        %v1385 = vadd.f32 %v1257, 1.0
        %v1386 = vadd.f32 %v1258, 1.0
        %v1387 = vadd.f32 %v1259, 1.0
        %v1388 = vadd.f32 %v1260, 1.0
        %v1389 = vadd.f32 %v1261, 1.0
        %v1390 = vadd.f32 %v1262, 1.0
        %v1391 = vadd.f32 %v1263, 1.0
        %v1392 = vadd.f32 %v1264, 1.0
        %v1393 = vadd.f32 %v1265, 1.0
        %v1394 = vadd.f32 %v1266, 1.0
        %v1395 = vadd.f32 %v1267, 1.0
        %v1396 = vadd.f32 %v1268, 1.0
        %v1397 = vadd.f32 %v1269, 1.0
        %v1398 = vadd.f32 %v1270, 1.0
        %v1399 = vadd.f32 %v1271, 1.0
        %v1400 = vadd.f32 %v1272, 1.0
        %v1401 = vadd.f32 %v1273, 1.0
        %v1402 = vadd.f32 %v1274, 1.0
        %v1403 = vadd.f32 %v1275, 1.0
        %v1404 = vadd.f32 %v1276, 1.0
        %v1405 = vadd.f32 %v1277, 1.0
        %v1406 = vadd.f32 %v1278, 1.0
        %v1407 = vadd.f32 %v1279, 1.0
        %v1408 = vadd.f32 %v1280, 1.0
        %v1409 = vadd.f32 %v1281, 1.0
        %v1410 = vadd.f32 %v1282, 1.0
        %v1411 = vadd.f32 %v1283, 1.0
        %v1412 = vadd.f32 %v1284, 1.0
        %v1413 = vadd.f32 %v1285, 1.0
        %v1414 = vadd.f32 %v1286, 1.0
        %v1415 = vadd.f32 %v1287, 1.0
        %v1416 = vadd.f32 %v1288, 1.0
        %v1417 = vadd.f32 %v1289, 1.0
        %v1418 = vadd.f32 %v1290, 1.0
        %v1419 = vadd.f32 %v1291, 1.0
        %v1420 = vadd.f32 %v1292, 1.0
        %v1421 = vadd.f32 %v1293, 1.0
        %v1422 = vadd.f32 %v1294, 1.0
        %v1423 = vadd.f32 %v1295, 1.0
        %v1424 = vadd.f32 %v1296, 1.0
        %v1425 = vadd.f32 %v1297, 1.0
        %v1426 = vadd.f32 %v1298, 1.0
        %v1427 = vadd.f32 %v1299, 1.0
        %v1428 = vadd.f32 %v1300, 1.0
        %v1429 = vadd.f32 %v1301, 1.0
        %v1430 = vadd.f32 %v1302, 1.0
        %v1431 = vadd.f32 %v1303, 1.0
        %v1432 = vadd.f32 %v1304, 1.0
        %v1433 = vadd.f32 %v1305, 1.0
        %v1434 = vadd.f32 %v1306, 1.0
        %v1435 = vadd.f32 %v1307, 1.0
        %v1436 = vadd.f32 %v1308, 1.0
        %v1437 = vadd.f32 %v1309, 1.0
        %v1438 = vadd.f32 %v1310, 1.0
        %v1439 = vadd.f32 %v1311, 1.0
        %v1440 = vadd.f32 %v1312, 1.0
        %v1441 = vadd.f32 %v1313, 1.0
        %v1442 = vadd.f32 %v1314, 1.0
        %v1443 = vadd.f32 %v1315, 1.0
        %v1444 = vadd.f32 %v1316, 1.0
        %v1445 = vadd.f32 %v1317, 1.0
        %v1446 = vadd.f32 %v1318, 1.0
        %v1447 = vadd.f32 %v1319, 1.0
        %v1448 = vadd.f32 %v1320, 1.0
        %v1449 = vadd.f32 %v1321, 1.0
        %v1450 = vadd.f32 %v1322, 1.0
        %v1451 = vadd.f32 %v1323, 1.0
        %v1452 = vadd.f32 %v1324, 1.0
        %v1453 = vadd.f32 %v1325, 1.0
        %v1454 = vadd.f32 %v1326, 1.0
        %v1455 = vadd.f32 %v1327, 1.0
        %v1456 = vadd.f32 %v1328, 1.0
        %v1457 = vadd.f32 %v1329, 1.0
        %v1458 = vadd.f32 %v1330, 1.0
        %v1459 = vadd.f32 %v1331, 1.0
        %v1460 = vadd.f32 %v1332, 1.0
        %v1461 = vadd.f32 %v1333, 1.0
        %v1462 = vadd.f32 %v1334, 1.0
        %v1463 = vadd.f32 %v1335, 1.0
        %v1464 = vadd.f32 %v1336, 1.0
        %v1465 = vadd.f32 %v1337, 1.0
        %v1466 = vadd.f32 %v1338, 1.0
        %v1467 = vadd.f32 %v1339, 1.0
        %v1468 = vadd.f32 %v1340, 1.0
        %v1469 = vadd.f32 %v1341, 1.0
        %v1470 = vadd.f32 %v1342, 1.0
        %v1471 = vadd.f32 %v1343, 1.0
        %v1472 = vadd.f32 %v1344, 1.0
        %v1473 = vadd.f32 %v1345, 1.0
        %v1474 = vadd.f32 %v1346, 1.0
        %v1475 = vadd.f32 %v1347, 1.0
        %v1476 = vadd.f32 %v1348, 1.0
        %v1477 = vrcp.pop %v1349
        %v1478 = vrcp.pop %v1350
        %v1479 = vrcp.pop %v1351
        %v1480 = vrcp.pop %v1352
        %v1481 = vrcp.pop %v1353
        %v1482 = vrcp.pop %v1354
        %v1483 = vrcp.pop %v1355
        %v1484 = vrcp.pop %v1356
        %v1485 = vrcp.pop %v1357
        %v1486 = vrcp.pop %v1358
        %v1487 = vrcp.pop %v1359
        %v1488 = vrcp.pop %v1360
        %v1489 = vrcp.pop %v1361
        %v1490 = vrcp.pop %v1362
        %v1491 = vrcp.pop %v1363
        %v1492 = vrcp.pop %v1364
        %v1493 = vrcp.pop %v1365
        %v1494 = vrcp.pop %v1366
        %v1495 = vrcp.pop %v1367
        %v1496 = vrcp.pop %v1368
        %v1497 = vrcp.pop %v1369
        %v1498 = vrcp.pop %v1370
        %v1499 = vrcp.pop %v1371
        %v1500 = vrcp.pop %v1372
        %v1501 = vrcp.pop %v1373
        %v1502 = vrcp.pop %v1374
        %v1503 = vrcp.pop %v1375
        %v1504 = vrcp.pop %v1376
        %v1505 = vrcp.pop %v1377
        %v1506 = vrcp.pop %v1378
        %v1507 = vrcp.pop %v1379
        %v1508 = vrcp.pop %v1380
        %v1509 = vrcp.pop %v1381
        %v1510 = vrcp.pop %v1382
        %v1511 = vrcp.pop %v1383
        %v1512 = vrcp.pop %v1384
        %v1513 = vrcp.pop %v1385
        %v1514 = vrcp.pop %v1386
        %v1515 = vrcp.pop %v1387
        %v1516 = vrcp.pop %v1388
        %v1517 = vrcp.pop %v1389
        %v1518 = vrcp.pop %v1390
        %v1519 = vrcp.pop %v1391
        %v1520 = vrcp.pop %v1392
        %v1521 = vrcp.pop %v1393
        %v1522 = vrcp.pop %v1394
        %v1523 = vrcp.pop %v1395
        %v1524 = vrcp.pop %v1396
        %v1525 = vrcp.pop %v1397
        %v1526 = vrcp.pop %v1398
        %v1527 = vrcp.pop %v1399
        %v1528 = vrcp.pop %v1400
        %v1529 = vrcp.pop %v1401
        %v1530 = vrcp.pop %v1402
        %v1531 = vrcp.pop %v1403
        %v1532 = vrcp.pop %v1404
        %v1533 = vrcp.pop %v1405
        %v1534 = vrcp.pop %v1406
        %v1535 = vrcp.pop %v1407
        %v1536 = vrcp.pop %v1408
        %v1537 = vrcp.pop %v1409
        %v1538 = vrcp.pop %v1410
        %v1539 = vrcp.pop %v1411
        %v1540 = vrcp.pop %v1412
        %v1541 = vrcp.pop %v1413
        %v1542 = vrcp.pop %v1414
        %v1543 = vrcp.pop %v1415
        %v1544 = vrcp.pop %v1416
        %v1545 = vrcp.pop %v1417
        %v1546 = vrcp.pop %v1418
        %v1547 = vrcp.pop %v1419
        %v1548 = vrcp.pop %v1420
        %v1549 = vrcp.pop %v1421
        %v1550 = vrcp.pop %v1422
        %v1551 = vrcp.pop %v1423
        %v1552 = vrcp.pop %v1424
        %v1553 = vrcp.pop %v1425
        %v1554 = vrcp.pop %v1426
        %v1555 = vrcp.pop %v1427
        %v1556 = vrcp.pop %v1428
        %v1557 = vrcp.pop %v1429
        %v1558 = vrcp.pop %v1430
        %v1559 = vrcp.pop %v1431
        %v1560 = vrcp.pop %v1432
        %v1561 = vrcp.pop %v1433
        %v1562 = vrcp.pop %v1434
        %v1563 = vrcp.pop %v1435
        %v1564 = vrcp.pop %v1436
        %v1565 = vrcp.pop %v1437
        %v1566 = vrcp.pop %v1438
        %v1567 = vrcp.pop %v1439
        %v1568 = vrcp.pop %v1440
        %v1569 = vrcp.pop %v1441
        %v1570 = vrcp.pop %v1442
        %v1571 = vrcp.pop %v1443
        %v1572 = vrcp.pop %v1444
        %v1573 = vrcp.pop %v1445
        %v1574 = vrcp.pop %v1446
        %v1575 = vrcp.pop %v1447
        %v1576 = vrcp.pop %v1448
        %v1577 = vrcp.pop %v1449
        %v1578 = vrcp.pop %v1450
        %v1579 = vrcp.pop %v1451
        %v1580 = vrcp.pop %v1452
        %v1581 = vrcp.pop %v1453
        %v1582 = vrcp.pop %v1454
        %v1583 = vrcp.pop %v1455
        %v1584 = vrcp.pop %v1456
        %v1585 = vrcp.pop %v1457
        %v1586 = vrcp.pop %v1458
        %v1587 = vrcp.pop %v1459
        %v1588 = vrcp.pop %v1460
        %v1589 = vrcp.pop %v1461
        %v1590 = vrcp.pop %v1462
        %v1591 = vrcp.pop %v1463
        %v1592 = vrcp.pop %v1464
        %v1593 = vrcp.pop %v1465
        %v1594 = vrcp.pop %v1466
        %v1595 = vrcp.pop %v1467
        %v1596 = vrcp.pop %v1468
        %v1597 = vrcp.pop %v1469
        %v1598 = vrcp.pop %v1470
        %v1599 = vrcp.pop %v1471
        %v1600 = vrcp.pop %v1472
        %v1601 = vrcp.pop %v1473
        %v1602 = vrcp.pop %v1474
        %v1603 = vrcp.pop %v1475
        %v1604 = vrcp.pop %v1476
        %v1605 = vpack.c.bf16 %v1479, %v1477
        %v1606 = vpack.c.bf16 %v1480, %v1478
        %v1607 = vpack.c.bf16 %v1483, %v1481
        %v1608 = vpack.c.bf16 %v1484, %v1482
        %v1609 = vpack.c.bf16 %v1487, %v1485
        %v1610 = vpack.c.bf16 %v1488, %v1486
        %v1611 = vpack.c.bf16 %v1491, %v1489
        %v1612 = vpack.c.bf16 %v1492, %v1490
        %v1613 = vpack.c.bf16 %v1495, %v1493
        %v1614 = vpack.c.bf16 %v1496, %v1494
        %v1615 = vpack.c.bf16 %v1499, %v1497
        %v1616 = vpack.c.bf16 %v1500, %v1498
        %v1617 = vpack.c.bf16 %v1503, %v1501
        %v1618 = vpack.c.bf16 %v1504, %v1502
        %v1619 = vpack.c.bf16 %v1507, %v1505
        %v1620 = vpack.c.bf16 %v1508, %v1506
        %v1621 = vpack.c.bf16 %v1511, %v1509
        %v1622 = vpack.c.bf16 %v1512, %v1510
        %v1623 = vpack.c.bf16 %v1515, %v1513
        %v1624 = vpack.c.bf16 %v1516, %v1514
        %v1625 = vpack.c.bf16 %v1519, %v1517
        %v1626 = vpack.c.bf16 %v1520, %v1518
        %v1627 = vpack.c.bf16 %v1523, %v1521
        %v1628 = vpack.c.bf16 %v1524, %v1522
        %v1629 = vpack.c.bf16 %v1527, %v1525
        %v1630 = vpack.c.bf16 %v1528, %v1526
        %v1631 = vpack.c.bf16 %v1531, %v1529
        %v1632 = vpack.c.bf16 %v1532, %v1530
        %v1633 = vpack.c.bf16 %v1535, %v1533
        %v1634 = vpack.c.bf16 %v1536, %v1534
        %v1635 = vpack.c.bf16 %v1539, %v1537
        %v1636 = vpack.c.bf16 %v1540, %v1538
        %v1637 = vpack.c.bf16 %v1543, %v1541
        %v1638 = vpack.c.bf16 %v1544, %v1542
        %v1639 = vpack.c.bf16 %v1547, %v1545
        %v1640 = vpack.c.bf16 %v1548, %v1546
        %v1641 = vpack.c.bf16 %v1551, %v1549
        %v1642 = vpack.c.bf16 %v1552, %v1550
        %v1643 = vpack.c.bf16 %v1555, %v1553
        %v1644 = vpack.c.bf16 %v1556, %v1554
        %v1645 = vpack.c.bf16 %v1559, %v1557
        %v1646 = vpack.c.bf16 %v1560, %v1558
        %v1647 = vpack.c.bf16 %v1563, %v1561
        %v1648 = vpack.c.bf16 %v1564, %v1562
        %v1649 = vpack.c.bf16 %v1567, %v1565
        %v1650 = vpack.c.bf16 %v1568, %v1566
        %v1651 = vpack.c.bf16 %v1571, %v1569
        %v1652 = vpack.c.bf16 %v1572, %v1570
        %v1653 = vpack.c.bf16 %v1575, %v1573
        %v1654 = vpack.c.bf16 %v1576, %v1574
        %v1655 = vpack.c.bf16 %v1579, %v1577
        %v1656 = vpack.c.bf16 %v1580, %v1578
        %v1657 = vpack.c.bf16 %v1583, %v1581
        %v1658 = vpack.c.bf16 %v1584, %v1582
        %v1659 = vpack.c.bf16 %v1587, %v1585
        %v1660 = vpack.c.bf16 %v1588, %v1586
        %v1661 = vpack.c.bf16 %v1591, %v1589
        %v1662 = vpack.c.bf16 %v1592, %v1590
        %v1663 = vpack.c.bf16 %v1595, %v1593
        %v1664 = vpack.c.bf16 %v1596, %v1594
        %v1665 = vpack.c.bf16 %v1599, %v1597
        %v1666 = vpack.c.bf16 %v1600, %v1598
        %v1667 = vpack.c.bf16 %v1603, %v1601
        %v1668 = vpack.c.bf16 %v1604, %v1602
        %v1669 = vmul.bf16 %v1605, 1065893768
        %v1670 = vmul.bf16 %v1606, 1065893768
        %v1671 = vmul.bf16 %v1607, 1065893768
        %v1672 = vmul.bf16 %v1608, 1065893768
        %v1673 = vmul.bf16 %v1609, 1065893768
        %v1674 = vmul.bf16 %v1610, 1065893768
        %v1675 = vmul.bf16 %v1611, 1065893768
        %v1676 = vmul.bf16 %v1612, 1065893768
        %v1677 = vmul.bf16 %v1613, 1065893768
        %v1678 = vmul.bf16 %v1614, 1065893768
        %v1679 = vmul.bf16 %v1615, 1065893768
        %v1680 = vmul.bf16 %v1616, 1065893768
        %v1681 = vmul.bf16 %v1617, 1065893768
        %v1682 = vmul.bf16 %v1618, 1065893768
        %v1683 = vmul.bf16 %v1619, 1065893768
        %v1684 = vmul.bf16 %v1620, 1065893768
        %v1685 = vmul.bf16 %v1621, 1065893768
        %v1686 = vmul.bf16 %v1622, 1065893768
        %v1687 = vmul.bf16 %v1623, 1065893768
        %v1688 = vmul.bf16 %v1624, 1065893768
        %v1689 = vmul.bf16 %v1625, 1065893768
        %v1690 = vmul.bf16 %v1626, 1065893768
        %v1691 = vmul.bf16 %v1627, 1065893768
        %v1692 = vmul.bf16 %v1628, 1065893768
        %v1693 = vmul.bf16 %v1629, 1065893768
        %v1694 = vmul.bf16 %v1630, 1065893768
        %v1695 = vmul.bf16 %v1631, 1065893768
        %v1696 = vmul.bf16 %v1632, 1065893768
        %v1697 = vmul.bf16 %v1633, 1065893768
        %v1698 = vmul.bf16 %v1634, 1065893768
        %v1699 = vmul.bf16 %v1635, 1065893768
        %v1700 = vmul.bf16 %v1636, 1065893768
        %v1701 = vmul.bf16 %v1637, 1065893768
        %v1702 = vmul.bf16 %v1638, 1065893768
        %v1703 = vmul.bf16 %v1639, 1065893768
        %v1704 = vmul.bf16 %v1640, 1065893768
        %v1705 = vmul.bf16 %v1641, 1065893768
        %v1706 = vmul.bf16 %v1642, 1065893768
        %v1707 = vmul.bf16 %v1643, 1065893768
        %v1708 = vmul.bf16 %v1644, 1065893768
        %v1709 = vmul.bf16 %v1645, 1065893768
        %v1710 = vmul.bf16 %v1646, 1065893768
        %v1711 = vmul.bf16 %v1647, 1065893768
        %v1712 = vmul.bf16 %v1648, 1065893768
        %v1713 = vmul.bf16 %v1649, 1065893768
        %v1714 = vmul.bf16 %v1650, 1065893768
        %v1715 = vmul.bf16 %v1651, 1065893768
        %v1716 = vmul.bf16 %v1652, 1065893768
        %v1717 = vmul.bf16 %v1653, 1065893768
        %v1718 = vmul.bf16 %v1654, 1065893768
        %v1719 = vmul.bf16 %v1655, 1065893768
        %v1720 = vmul.bf16 %v1656, 1065893768
        %v1721 = vmul.bf16 %v1657, 1065893768
        %v1722 = vmul.bf16 %v1658, 1065893768
        %v1723 = vmul.bf16 %v1659, 1065893768
        %v1724 = vmul.bf16 %v1660, 1065893768
        %v1725 = vmul.bf16 %v1661, 1065893768
        %v1726 = vmul.bf16 %v1662, 1065893768
        %v1727 = vmul.bf16 %v1663, 1065893768
        %v1728 = vmul.bf16 %v1664, 1065893768
        %v1729 = vmul.bf16 %v1665, 1065893768
        %v1730 = vmul.bf16 %v1666, 1065893768
        %v1731 = vmul.bf16 %v1667, 1065893768
        %v1732 = vmul.bf16 %v1668, 1065893768
        %v1733 = vadd.bf16 %v1669, 3216687034
        %v1734 = vadd.bf16 %v1670, 3216687034
        %v1735 = vadd.bf16 %v1671, 3216687034
        %v1736 = vadd.bf16 %v1672, 3216687034
        %v1737 = vadd.bf16 %v1673, 3216687034
        %v1738 = vadd.bf16 %v1674, 3216687034
        %v1739 = vadd.bf16 %v1675, 3216687034
        %v1740 = vadd.bf16 %v1676, 3216687034
        %v1741 = vadd.bf16 %v1677, 3216687034
        %v1742 = vadd.bf16 %v1678, 3216687034
        %v1743 = vadd.bf16 %v1679, 3216687034
        %v1744 = vadd.bf16 %v1680, 3216687034
        %v1745 = vadd.bf16 %v1681, 3216687034
        %v1746 = vadd.bf16 %v1682, 3216687034
        %v1747 = vadd.bf16 %v1683, 3216687034
        %v1748 = vadd.bf16 %v1684, 3216687034
        %v1749 = vadd.bf16 %v1685, 3216687034
        %v1750 = vadd.bf16 %v1686, 3216687034
        %v1751 = vadd.bf16 %v1687, 3216687034
        %v1752 = vadd.bf16 %v1688, 3216687034
        %v1753 = vadd.bf16 %v1689, 3216687034
        %v1754 = vadd.bf16 %v1690, 3216687034
        %v1755 = vadd.bf16 %v1691, 3216687034
        %v1756 = vadd.bf16 %v1692, 3216687034
        %v1757 = vadd.bf16 %v1693, 3216687034
        %v1758 = vadd.bf16 %v1694, 3216687034
        %v1759 = vadd.bf16 %v1695, 3216687034
        %v1760 = vadd.bf16 %v1696, 3216687034
        %v1761 = vadd.bf16 %v1697, 3216687034
        %v1762 = vadd.bf16 %v1698, 3216687034
        %v1763 = vadd.bf16 %v1699, 3216687034
        %v1764 = vadd.bf16 %v1700, 3216687034
        %v1765 = vadd.bf16 %v1701, 3216687034
        %v1766 = vadd.bf16 %v1702, 3216687034
        %v1767 = vadd.bf16 %v1703, 3216687034
        %v1768 = vadd.bf16 %v1704, 3216687034
        %v1769 = vadd.bf16 %v1705, 3216687034
        %v1770 = vadd.bf16 %v1706, 3216687034
        %v1771 = vadd.bf16 %v1707, 3216687034
        %v1772 = vadd.bf16 %v1708, 3216687034
        %v1773 = vadd.bf16 %v1709, 3216687034
        %v1774 = vadd.bf16 %v1710, 3216687034
        %v1775 = vadd.bf16 %v1711, 3216687034
        %v1776 = vadd.bf16 %v1712, 3216687034
        %v1777 = vadd.bf16 %v1713, 3216687034
        %v1778 = vadd.bf16 %v1714, 3216687034
        %v1779 = vadd.bf16 %v1715, 3216687034
        %v1780 = vadd.bf16 %v1716, 3216687034
        %v1781 = vadd.bf16 %v1717, 3216687034
        %v1782 = vadd.bf16 %v1718, 3216687034
        %v1783 = vadd.bf16 %v1719, 3216687034
        %v1784 = vadd.bf16 %v1720, 3216687034
        %v1785 = vadd.bf16 %v1721, 3216687034
        %v1786 = vadd.bf16 %v1722, 3216687034
        %v1787 = vadd.bf16 %v1723, 3216687034
        %v1788 = vadd.bf16 %v1724, 3216687034
        %v1789 = vadd.bf16 %v1725, 3216687034
        %v1790 = vadd.bf16 %v1726, 3216687034
        %v1791 = vadd.bf16 %v1727, 3216687034
        %v1792 = vadd.bf16 %v1728, 3216687034
        %v1793 = vadd.bf16 %v1729, 3216687034
        %v1794 = vadd.bf16 %v1730, 3216687034
        %v1795 = vadd.bf16 %v1731, 3216687034
        %v1796 = vadd.bf16 %v1732, 3216687034
        %v1797 = vmul.bf16 %v1733, %v1605
        %v1798 = vmul.bf16 %v1734, %v1606
        %v1799 = vmul.bf16 %v1735, %v1607
        %v1800 = vmul.bf16 %v1736, %v1608
        %v1801 = vmul.bf16 %v1737, %v1609
        %v1802 = vmul.bf16 %v1738, %v1610
        %v1803 = vmul.bf16 %v1739, %v1611
        %v1804 = vmul.bf16 %v1740, %v1612
        %v1805 = vmul.bf16 %v1741, %v1613
        %v1806 = vmul.bf16 %v1742, %v1614
        %v1807 = vmul.bf16 %v1743, %v1615
        %v1808 = vmul.bf16 %v1744, %v1616
        %v1809 = vmul.bf16 %v1745, %v1617
        %v1810 = vmul.bf16 %v1746, %v1618
        %v1811 = vmul.bf16 %v1747, %v1619
        %v1812 = vmul.bf16 %v1748, %v1620
        %v1813 = vmul.bf16 %v1749, %v1621
        %v1814 = vmul.bf16 %v1750, %v1622
        %v1815 = vmul.bf16 %v1751, %v1623
        %v1816 = vmul.bf16 %v1752, %v1624
        %v1817 = vmul.bf16 %v1753, %v1625
        %v1818 = vmul.bf16 %v1754, %v1626
        %v1819 = vmul.bf16 %v1755, %v1627
        %v1820 = vmul.bf16 %v1756, %v1628
        %v1821 = vmul.bf16 %v1757, %v1629
        %v1822 = vmul.bf16 %v1758, %v1630
        %v1823 = vmul.bf16 %v1759, %v1631
        %v1824 = vmul.bf16 %v1760, %v1632
        %v1825 = vmul.bf16 %v1761, %v1633
        %v1826 = vmul.bf16 %v1762, %v1634
        %v1827 = vmul.bf16 %v1763, %v1635
        %v1828 = vmul.bf16 %v1764, %v1636
        %v1829 = vmul.bf16 %v1765, %v1637
        %v1830 = vmul.bf16 %v1766, %v1638
        %v1831 = vmul.bf16 %v1767, %v1639
        %v1832 = vmul.bf16 %v1768, %v1640
        %v1833 = vmul.bf16 %v1769, %v1641
        %v1834 = vmul.bf16 %v1770, %v1642
        %v1835 = vmul.bf16 %v1771, %v1643
        %v1836 = vmul.bf16 %v1772, %v1644
        %v1837 = vmul.bf16 %v1773, %v1645
        %v1838 = vmul.bf16 %v1774, %v1646
        %v1839 = vmul.bf16 %v1775, %v1647
        %v1840 = vmul.bf16 %v1776, %v1648
        %v1841 = vmul.bf16 %v1777, %v1649
        %v1842 = vmul.bf16 %v1778, %v1650
        %v1843 = vmul.bf16 %v1779, %v1651
        %v1844 = vmul.bf16 %v1780, %v1652
        %v1845 = vmul.bf16 %v1781, %v1653
        %v1846 = vmul.bf16 %v1782, %v1654
        %v1847 = vmul.bf16 %v1783, %v1655
        %v1848 = vmul.bf16 %v1784, %v1656
        %v1849 = vmul.bf16 %v1785, %v1657
        %v1850 = vmul.bf16 %v1786, %v1658
        %v1851 = vmul.bf16 %v1787, %v1659
        %v1852 = vmul.bf16 %v1788, %v1660
        %v1853 = vmul.bf16 %v1789, %v1661
        %v1854 = vmul.bf16 %v1790, %v1662
        %v1855 = vmul.bf16 %v1791, %v1663
        %v1856 = vmul.bf16 %v1792, %v1664
        %v1857 = vmul.bf16 %v1793, %v1665
        %v1858 = vmul.bf16 %v1794, %v1666
        %v1859 = vmul.bf16 %v1795, %v1667
        %v1860 = vmul.bf16 %v1796, %v1668
        %v1861 = vadd.bf16 %v1797, 1068908470
        %v1862 = vadd.bf16 %v1798, 1068908470
        %v1863 = vadd.bf16 %v1799, 1068908470
        %v1864 = vadd.bf16 %v1800, 1068908470
        %v1865 = vadd.bf16 %v1801, 1068908470
        %v1866 = vadd.bf16 %v1802, 1068908470
        %v1867 = vadd.bf16 %v1803, 1068908470
        %v1868 = vadd.bf16 %v1804, 1068908470
        %v1869 = vadd.bf16 %v1805, 1068908470
        %v1870 = vadd.bf16 %v1806, 1068908470
        %v1871 = vadd.bf16 %v1807, 1068908470
        %v1872 = vadd.bf16 %v1808, 1068908470
        %v1873 = vadd.bf16 %v1809, 1068908470
        %v1874 = vadd.bf16 %v1810, 1068908470
        %v1875 = vadd.bf16 %v1811, 1068908470
        %v1876 = vadd.bf16 %v1812, 1068908470
        %v1877 = vadd.bf16 %v1813, 1068908470
        %v1878 = vadd.bf16 %v1814, 1068908470
        %v1879 = vadd.bf16 %v1815, 1068908470
        %v1880 = vadd.bf16 %v1816, 1068908470
        %v1881 = vadd.bf16 %v1817, 1068908470
        %v1882 = vadd.bf16 %v1818, 1068908470
        %v1883 = vadd.bf16 %v1819, 1068908470
        %v1884 = vadd.bf16 %v1820, 1068908470
        %v1885 = vadd.bf16 %v1821, 1068908470
        %v1886 = vadd.bf16 %v1822, 1068908470
        %v1887 = vadd.bf16 %v1823, 1068908470
        %v1888 = vadd.bf16 %v1824, 1068908470
        %v1889 = vadd.bf16 %v1825, 1068908470
        %v1890 = vadd.bf16 %v1826, 1068908470
        %v1891 = vadd.bf16 %v1827, 1068908470
        %v1892 = vadd.bf16 %v1828, 1068908470
        %v1893 = vadd.bf16 %v1829, 1068908470
        %v1894 = vadd.bf16 %v1830, 1068908470
        %v1895 = vadd.bf16 %v1831, 1068908470
        %v1896 = vadd.bf16 %v1832, 1068908470
        %v1897 = vadd.bf16 %v1833, 1068908470
        %v1898 = vadd.bf16 %v1834, 1068908470
        %v1899 = vadd.bf16 %v1835, 1068908470
        %v1900 = vadd.bf16 %v1836, 1068908470
        %v1901 = vadd.bf16 %v1837, 1068908470
        %v1902 = vadd.bf16 %v1838, 1068908470
        %v1903 = vadd.bf16 %v1839, 1068908470
        %v1904 = vadd.bf16 %v1840, 1068908470
        %v1905 = vadd.bf16 %v1841, 1068908470
        %v1906 = vadd.bf16 %v1842, 1068908470
        %v1907 = vadd.bf16 %v1843, 1068908470
        %v1908 = vadd.bf16 %v1844, 1068908470
        %v1909 = vadd.bf16 %v1845, 1068908470
        %v1910 = vadd.bf16 %v1846, 1068908470
        %v1911 = vadd.bf16 %v1847, 1068908470
        %v1912 = vadd.bf16 %v1848, 1068908470
        %v1913 = vadd.bf16 %v1849, 1068908470
        %v1914 = vadd.bf16 %v1850, 1068908470
        %v1915 = vadd.bf16 %v1851, 1068908470
        %v1916 = vadd.bf16 %v1852, 1068908470
        %v1917 = vadd.bf16 %v1853, 1068908470
        %v1918 = vadd.bf16 %v1854, 1068908470
        %v1919 = vadd.bf16 %v1855, 1068908470
        %v1920 = vadd.bf16 %v1856, 1068908470
        %v1921 = vadd.bf16 %v1857, 1068908470
        %v1922 = vadd.bf16 %v1858, 1068908470
        %v1923 = vadd.bf16 %v1859, 1068908470
        %v1924 = vadd.bf16 %v1860, 1068908470
        %v1925 = vmul.bf16 %v1861, %v1605
        %v1926 = vmul.bf16 %v1862, %v1606
        %v1927 = vmul.bf16 %v1863, %v1607
        %v1928 = vmul.bf16 %v1864, %v1608
        %v1929 = vmul.bf16 %v1865, %v1609
        %v1930 = vmul.bf16 %v1866, %v1610
        %v1931 = vmul.bf16 %v1867, %v1611
        %v1932 = vmul.bf16 %v1868, %v1612
        %v1933 = vmul.bf16 %v1869, %v1613
        %v1934 = vmul.bf16 %v1870, %v1614
        %v1935 = vmul.bf16 %v1871, %v1615
        %v1936 = vmul.bf16 %v1872, %v1616
        %v1937 = vmul.bf16 %v1873, %v1617
        %v1938 = vmul.bf16 %v1874, %v1618
        %v1939 = vmul.bf16 %v1875, %v1619
        %v1940 = vmul.bf16 %v1876, %v1620
        %v1941 = vmul.bf16 %v1877, %v1621
        %v1942 = vmul.bf16 %v1878, %v1622
        %v1943 = vmul.bf16 %v1879, %v1623
        %v1944 = vmul.bf16 %v1880, %v1624
        %v1945 = vmul.bf16 %v1881, %v1625
        %v1946 = vmul.bf16 %v1882, %v1626
        %v1947 = vmul.bf16 %v1883, %v1627
        %v1948 = vmul.bf16 %v1884, %v1628
        %v1949 = vmul.bf16 %v1885, %v1629
        %v1950 = vmul.bf16 %v1886, %v1630
        %v1951 = vmul.bf16 %v1887, %v1631
        %v1952 = vmul.bf16 %v1888, %v1632
        %v1953 = vmul.bf16 %v1889, %v1633
        %v1954 = vmul.bf16 %v1890, %v1634
        %v1955 = vmul.bf16 %v1891, %v1635
        %v1956 = vmul.bf16 %v1892, %v1636
        %v1957 = vmul.bf16 %v1893, %v1637
        %v1958 = vmul.bf16 %v1894, %v1638
        %v1959 = vmul.bf16 %v1895, %v1639
        %v1960 = vmul.bf16 %v1896, %v1640
        %v1961 = vmul.bf16 %v1897, %v1641
        %v1962 = vmul.bf16 %v1898, %v1642
        %v1963 = vmul.bf16 %v1899, %v1643
        %v1964 = vmul.bf16 %v1900, %v1644
        %v1965 = vmul.bf16 %v1901, %v1645
        %v1966 = vmul.bf16 %v1902, %v1646
        %v1967 = vmul.bf16 %v1903, %v1647
        %v1968 = vmul.bf16 %v1904, %v1648
        %v1969 = vmul.bf16 %v1905, %v1649
        %v1970 = vmul.bf16 %v1906, %v1650
        %v1971 = vmul.bf16 %v1907, %v1651
        %v1972 = vmul.bf16 %v1908, %v1652
        %v1973 = vmul.bf16 %v1909, %v1653
        %v1974 = vmul.bf16 %v1910, %v1654
        %v1975 = vmul.bf16 %v1911, %v1655
        %v1976 = vmul.bf16 %v1912, %v1656
        %v1977 = vmul.bf16 %v1913, %v1657
        %v1978 = vmul.bf16 %v1914, %v1658
        %v1979 = vmul.bf16 %v1915, %v1659
        %v1980 = vmul.bf16 %v1916, %v1660
        %v1981 = vmul.bf16 %v1917, %v1661
        %v1982 = vmul.bf16 %v1918, %v1662
        %v1983 = vmul.bf16 %v1919, %v1663
        %v1984 = vmul.bf16 %v1920, %v1664
        %v1985 = vmul.bf16 %v1921, %v1665
        %v1986 = vmul.bf16 %v1922, %v1666
        %v1987 = vmul.bf16 %v1923, %v1667
        %v1988 = vmul.bf16 %v1924, %v1668
        %v1989 = vadd.bf16 %v1925, 3197288082
        %v1990 = vadd.bf16 %v1926, 3197288082
        %v1991 = vadd.bf16 %v1927, 3197288082
        %v1992 = vadd.bf16 %v1928, 3197288082
        %v1993 = vadd.bf16 %v1929, 3197288082
        %v1994 = vadd.bf16 %v1930, 3197288082
        %v1995 = vadd.bf16 %v1931, 3197288082
        %v1996 = vadd.bf16 %v1932, 3197288082
        %v1997 = vadd.bf16 %v1933, 3197288082
        %v1998 = vadd.bf16 %v1934, 3197288082
        %v1999 = vadd.bf16 %v1935, 3197288082
        %v2000 = vadd.bf16 %v1936, 3197288082
        %v2001 = vadd.bf16 %v1937, 3197288082
        %v2002 = vadd.bf16 %v1938, 3197288082
        %v2003 = vadd.bf16 %v1939, 3197288082
        %v2004 = vadd.bf16 %v1940, 3197288082
        %v2005 = vadd.bf16 %v1941, 3197288082
        %v2006 = vadd.bf16 %v1942, 3197288082
        %v2007 = vadd.bf16 %v1943, 3197288082
        %v2008 = vadd.bf16 %v1944, 3197288082
        %v2009 = vadd.bf16 %v1945, 3197288082
        %v2010 = vadd.bf16 %v1946, 3197288082
        %v2011 = vadd.bf16 %v1947, 3197288082
        %v2012 = vadd.bf16 %v1948, 3197288082
        %v2013 = vadd.bf16 %v1949, 3197288082
        %v2014 = vadd.bf16 %v1950, 3197288082
        %v2015 = vadd.bf16 %v1951, 3197288082
        %v2016 = vadd.bf16 %v1952, 3197288082
        %v2017 = vadd.bf16 %v1953, 3197288082
        %v2018 = vadd.bf16 %v1954, 3197288082
        %v2019 = vadd.bf16 %v1955, 3197288082
        %v2020 = vadd.bf16 %v1956, 3197288082
        %v2021 = vadd.bf16 %v1957, 3197288082
        %v2022 = vadd.bf16 %v1958, 3197288082
        %v2023 = vadd.bf16 %v1959, 3197288082
        %v2024 = vadd.bf16 %v1960, 3197288082
        %v2025 = vadd.bf16 %v1961, 3197288082
        %v2026 = vadd.bf16 %v1962, 3197288082
        %v2027 = vadd.bf16 %v1963, 3197288082
        %v2028 = vadd.bf16 %v1964, 3197288082
        %v2029 = vadd.bf16 %v1965, 3197288082
        %v2030 = vadd.bf16 %v1966, 3197288082
        %v2031 = vadd.bf16 %v1967, 3197288082
        %v2032 = vadd.bf16 %v1968, 3197288082
        %v2033 = vadd.bf16 %v1969, 3197288082
        %v2034 = vadd.bf16 %v1970, 3197288082
        %v2035 = vadd.bf16 %v1971, 3197288082
        %v2036 = vadd.bf16 %v1972, 3197288082
        %v2037 = vadd.bf16 %v1973, 3197288082
        %v2038 = vadd.bf16 %v1974, 3197288082
        %v2039 = vadd.bf16 %v1975, 3197288082
        %v2040 = vadd.bf16 %v1976, 3197288082
        %v2041 = vadd.bf16 %v1977, 3197288082
        %v2042 = vadd.bf16 %v1978, 3197288082
        %v2043 = vadd.bf16 %v1979, 3197288082
        %v2044 = vadd.bf16 %v1980, 3197288082
        %v2045 = vadd.bf16 %v1981, 3197288082
        %v2046 = vadd.bf16 %v1982, 3197288082
        %v2047 = vadd.bf16 %v1983, 3197288082
        %v2048 = vadd.bf16 %v1984, 3197288082
        %v2049 = vadd.bf16 %v1985, 3197288082
        %v2050 = vadd.bf16 %v1986, 3197288082
        %v2051 = vadd.bf16 %v1987, 3197288082
        %v2052 = vadd.bf16 %v1988, 3197288082
        %v2053 = vmul.bf16 %v1989, %v1605
        %v2054 = vmul.bf16 %v1990, %v1606
        %v2055 = vmul.bf16 %v1991, %v1607
        %v2056 = vmul.bf16 %v1992, %v1608
        %v2057 = vmul.bf16 %v1993, %v1609
        %v2058 = vmul.bf16 %v1994, %v1610
        %v2059 = vmul.bf16 %v1995, %v1611
        %v2060 = vmul.bf16 %v1996, %v1612
        %v2061 = vmul.bf16 %v1997, %v1613
        %v2062 = vmul.bf16 %v1998, %v1614
        %v2063 = vmul.bf16 %v1999, %v1615
        %v2064 = vmul.bf16 %v2000, %v1616
        %v2065 = vmul.bf16 %v2001, %v1617
        %v2066 = vmul.bf16 %v2002, %v1618
        %v2067 = vmul.bf16 %v2003, %v1619
        %v2068 = vmul.bf16 %v2004, %v1620
        %v2069 = vmul.bf16 %v2005, %v1621
        %v2070 = vmul.bf16 %v2006, %v1622
        %v2071 = vmul.bf16 %v2007, %v1623
        %v2072 = vmul.bf16 %v2008, %v1624
        %v2073 = vmul.bf16 %v2009, %v1625
        %v2074 = vmul.bf16 %v2010, %v1626
        %v2075 = vmul.bf16 %v2011, %v1627
        %v2076 = vmul.bf16 %v2012, %v1628
        %v2077 = vmul.bf16 %v2013, %v1629
        %v2078 = vmul.bf16 %v2014, %v1630
        %v2079 = vmul.bf16 %v2015, %v1631
        %v2080 = vmul.bf16 %v2016, %v1632
        %v2081 = vmul.bf16 %v2017, %v1633
        %v2082 = vmul.bf16 %v2018, %v1634
        %v2083 = vmul.bf16 %v2019, %v1635
        %v2084 = vmul.bf16 %v2020, %v1636
        %v2085 = vmul.bf16 %v2021, %v1637
        %v2086 = vmul.bf16 %v2022, %v1638
        %v2087 = vmul.bf16 %v2023, %v1639
        %v2088 = vmul.bf16 %v2024, %v1640
        %v2089 = vmul.bf16 %v2025, %v1641
        %v2090 = vmul.bf16 %v2026, %v1642
        %v2091 = vmul.bf16 %v2027, %v1643
        %v2092 = vmul.bf16 %v2028, %v1644
        %v2093 = vmul.bf16 %v2029, %v1645
        %v2094 = vmul.bf16 %v2030, %v1646
        %v2095 = vmul.bf16 %v2031, %v1647
        %v2096 = vmul.bf16 %v2032, %v1648
        %v2097 = vmul.bf16 %v2033, %v1649
        %v2098 = vmul.bf16 %v2034, %v1650
        %v2099 = vmul.bf16 %v2035, %v1651
        %v2100 = vmul.bf16 %v2036, %v1652
        %v2101 = vmul.bf16 %v2037, %v1653
        %v2102 = vmul.bf16 %v2038, %v1654
        %v2103 = vmul.bf16 %v2039, %v1655
        %v2104 = vmul.bf16 %v2040, %v1656
        %v2105 = vmul.bf16 %v2041, %v1657
        %v2106 = vmul.bf16 %v2042, %v1658
        %v2107 = vmul.bf16 %v2043, %v1659
        %v2108 = vmul.bf16 %v2044, %v1660
        %v2109 = vmul.bf16 %v2045, %v1661
        %v2110 = vmul.bf16 %v2046, %v1662
        %v2111 = vmul.bf16 %v2047, %v1663
        %v2112 = vmul.bf16 %v2048, %v1664
        %v2113 = vmul.bf16 %v2049, %v1665
        %v2114 = vmul.bf16 %v2050, %v1666
        %v2115 = vmul.bf16 %v2051, %v1667
        %v2116 = vmul.bf16 %v2052, %v1668
        %v2117 = vadd.bf16 %v2053, 1048723074
        %v2118 = vadd.bf16 %v2054, 1048723074
        %v2119 = vadd.bf16 %v2055, 1048723074
        %v2120 = vadd.bf16 %v2056, 1048723074
        %v2121 = vadd.bf16 %v2057, 1048723074
        %v2122 = vadd.bf16 %v2058, 1048723074
        %v2123 = vadd.bf16 %v2059, 1048723074
        %v2124 = vadd.bf16 %v2060, 1048723074
        %v2125 = vadd.bf16 %v2061, 1048723074
        %v2126 = vadd.bf16 %v2062, 1048723074
        %v2127 = vadd.bf16 %v2063, 1048723074
        %v2128 = vadd.bf16 %v2064, 1048723074
        %v2129 = vadd.bf16 %v2065, 1048723074
        %v2130 = vadd.bf16 %v2066, 1048723074
        %v2131 = vadd.bf16 %v2067, 1048723074
        %v2132 = vadd.bf16 %v2068, 1048723074
        %v2133 = vadd.bf16 %v2069, 1048723074
        %v2134 = vadd.bf16 %v2070, 1048723074
        %v2135 = vadd.bf16 %v2071, 1048723074
        %v2136 = vadd.bf16 %v2072, 1048723074
        %v2137 = vadd.bf16 %v2073, 1048723074
        %v2138 = vadd.bf16 %v2074, 1048723074
        %v2139 = vadd.bf16 %v2075, 1048723074
        %v2140 = vadd.bf16 %v2076, 1048723074
        %v2141 = vadd.bf16 %v2077, 1048723074
        %v2142 = vadd.bf16 %v2078, 1048723074
        %v2143 = vadd.bf16 %v2079, 1048723074
        %v2144 = vadd.bf16 %v2080, 1048723074
        %v2145 = vadd.bf16 %v2081, 1048723074
        %v2146 = vadd.bf16 %v2082, 1048723074
        %v2147 = vadd.bf16 %v2083, 1048723074
        %v2148 = vadd.bf16 %v2084, 1048723074
        %v2149 = vadd.bf16 %v2085, 1048723074
        %v2150 = vadd.bf16 %v2086, 1048723074
        %v2151 = vadd.bf16 %v2087, 1048723074
        %v2152 = vadd.bf16 %v2088, 1048723074
        %v2153 = vadd.bf16 %v2089, 1048723074
        %v2154 = vadd.bf16 %v2090, 1048723074
        %v2155 = vadd.bf16 %v2091, 1048723074
        %v2156 = vadd.bf16 %v2092, 1048723074
        %v2157 = vadd.bf16 %v2093, 1048723074
        %v2158 = vadd.bf16 %v2094, 1048723074
        %v2159 = vadd.bf16 %v2095, 1048723074
        %v2160 = vadd.bf16 %v2096, 1048723074
        %v2161 = vadd.bf16 %v2097, 1048723074
        %v2162 = vadd.bf16 %v2098, 1048723074
        %v2163 = vadd.bf16 %v2099, 1048723074
        %v2164 = vadd.bf16 %v2100, 1048723074
        %v2165 = vadd.bf16 %v2101, 1048723074
        %v2166 = vadd.bf16 %v2102, 1048723074
        %v2167 = vadd.bf16 %v2103, 1048723074
        %v2168 = vadd.bf16 %v2104, 1048723074
        %v2169 = vadd.bf16 %v2105, 1048723074
        %v2170 = vadd.bf16 %v2106, 1048723074
        %v2171 = vadd.bf16 %v2107, 1048723074
        %v2172 = vadd.bf16 %v2108, 1048723074
        %v2173 = vadd.bf16 %v2109, 1048723074
        %v2174 = vadd.bf16 %v2110, 1048723074
        %v2175 = vadd.bf16 %v2111, 1048723074
        %v2176 = vadd.bf16 %v2112, 1048723074
        %v2177 = vadd.bf16 %v2113, 1048723074
        %v2178 = vadd.bf16 %v2114, 1048723074
        %v2179 = vadd.bf16 %v2115, 1048723074
        %v2180 = vadd.bf16 %v2116, 1048723074
        %v2181 = vmul.bf16 %v2117, %v1605
        %v2182 = vmul.bf16 %v2118, %v1606
        %v2183 = vmul.bf16 %v2119, %v1607
        %v2184 = vmul.bf16 %v2120, %v1608
        %v2185 = vmul.bf16 %v2121, %v1609
        %v2186 = vmul.bf16 %v2122, %v1610
        %v2187 = vmul.bf16 %v2123, %v1611
        %v2188 = vmul.bf16 %v2124, %v1612
        %v2189 = vmul.bf16 %v2125, %v1613
        %v2190 = vmul.bf16 %v2126, %v1614
        %v2191 = vmul.bf16 %v2127, %v1615
        %v2192 = vmul.bf16 %v2128, %v1616
        %v2193 = vmul.bf16 %v2129, %v1617
        %v2194 = vmul.bf16 %v2130, %v1618
        %v2195 = vmul.bf16 %v2131, %v1619
        %v2196 = vmul.bf16 %v2132, %v1620
        %v2197 = vmul.bf16 %v2133, %v1621
        %v2198 = vmul.bf16 %v2134, %v1622
        %v2199 = vmul.bf16 %v2135, %v1623
        %v2200 = vmul.bf16 %v2136, %v1624
        %v2201 = vmul.bf16 %v2137, %v1625
        %v2202 = vmul.bf16 %v2138, %v1626
        %v2203 = vmul.bf16 %v2139, %v1627
        %v2204 = vmul.bf16 %v2140, %v1628
        %v2205 = vmul.bf16 %v2141, %v1629
        %v2206 = vmul.bf16 %v2142, %v1630
        %v2207 = vmul.bf16 %v2143, %v1631
        %v2208 = vmul.bf16 %v2144, %v1632
        %v2209 = vmul.bf16 %v2145, %v1633
        %v2210 = vmul.bf16 %v2146, %v1634
        %v2211 = vmul.bf16 %v2147, %v1635
        %v2212 = vmul.bf16 %v2148, %v1636
        %v2213 = vmul.bf16 %v2149, %v1637
        %v2214 = vmul.bf16 %v2150, %v1638
        %v2215 = vmul.bf16 %v2151, %v1639
        %v2216 = vmul.bf16 %v2152, %v1640
        %v2217 = vmul.bf16 %v2153, %v1641
        %v2218 = vmul.bf16 %v2154, %v1642
        %v2219 = vmul.bf16 %v2155, %v1643
        %v2220 = vmul.bf16 %v2156, %v1644
        %v2221 = vmul.bf16 %v2157, %v1645
        %v2222 = vmul.bf16 %v2158, %v1646
        %v2223 = vmul.bf16 %v2159, %v1647
        %v2224 = vmul.bf16 %v2160, %v1648
        %v2225 = vmul.bf16 %v2161, %v1649
        %v2226 = vmul.bf16 %v2162, %v1650
        %v2227 = vmul.bf16 %v2163, %v1651
        %v2228 = vmul.bf16 %v2164, %v1652
        %v2229 = vmul.bf16 %v2165, %v1653
        %v2230 = vmul.bf16 %v2166, %v1654
        %v2231 = vmul.bf16 %v2167, %v1655
        %v2232 = vmul.bf16 %v2168, %v1656
        %v2233 = vmul.bf16 %v2169, %v1657
        %v2234 = vmul.bf16 %v2170, %v1658
        %v2235 = vmul.bf16 %v2171, %v1659
        %v2236 = vmul.bf16 %v2172, %v1660
        %v2237 = vmul.bf16 %v2173, %v1661
        %v2238 = vmul.bf16 %v2174, %v1662
        %v2239 = vmul.bf16 %v2175, %v1663
        %v2240 = vmul.bf16 %v2176, %v1664
        %v2241 = vmul.bf16 %v2177, %v1665
        %v2242 = vmul.bf16 %v2178, %v1666
        %v2243 = vmul.bf16 %v2179, %v1667
        %v2244 = vmul.bf16 %v2180, %v1668
        %v2245 = vunpack.c.l.bf16 %v2181
        %v2246 = vunpack.c.l.bf16 %v2182
        %v2247 = vunpack.c.h.bf16 %v2181
        %v2248 = vunpack.c.h.bf16 %v2182
        %v2249 = vunpack.c.l.bf16 %v2183
        %v2250 = vunpack.c.l.bf16 %v2184
        %v2251 = vunpack.c.h.bf16 %v2183
        %v2252 = vunpack.c.h.bf16 %v2184
        %v2253 = vunpack.c.l.bf16 %v2185
        %v2254 = vunpack.c.l.bf16 %v2186
        %v2255 = vunpack.c.h.bf16 %v2185
        %v2256 = vunpack.c.h.bf16 %v2186
        %v2257 = vunpack.c.l.bf16 %v2187
        %v2258 = vunpack.c.l.bf16 %v2188
        %v2259 = vunpack.c.h.bf16 %v2187
        %v2260 = vunpack.c.h.bf16 %v2188
        %v2261 = vunpack.c.l.bf16 %v2189
        %v2262 = vunpack.c.l.bf16 %v2190
        %v2263 = vunpack.c.h.bf16 %v2189
        %v2264 = vunpack.c.h.bf16 %v2190
        %v2265 = vunpack.c.l.bf16 %v2191
        %v2266 = vunpack.c.l.bf16 %v2192
        %v2267 = vunpack.c.h.bf16 %v2191
        %v2268 = vunpack.c.h.bf16 %v2192
        %v2269 = vunpack.c.l.bf16 %v2193
        %v2270 = vunpack.c.l.bf16 %v2194
        %v2271 = vunpack.c.h.bf16 %v2193
        %v2272 = vunpack.c.h.bf16 %v2194
        %v2273 = vunpack.c.l.bf16 %v2195
        %v2274 = vunpack.c.l.bf16 %v2196
        %v2275 = vunpack.c.h.bf16 %v2195
        %v2276 = vunpack.c.h.bf16 %v2196
        %v2277 = vunpack.c.l.bf16 %v2197
        %v2278 = vunpack.c.l.bf16 %v2198
        %v2279 = vunpack.c.h.bf16 %v2197
        %v2280 = vunpack.c.h.bf16 %v2198
        %v2281 = vunpack.c.l.bf16 %v2199
        %v2282 = vunpack.c.l.bf16 %v2200
        %v2283 = vunpack.c.h.bf16 %v2199
        %v2284 = vunpack.c.h.bf16 %v2200
        %v2285 = vunpack.c.l.bf16 %v2201
        %v2286 = vunpack.c.l.bf16 %v2202
        %v2287 = vunpack.c.h.bf16 %v2201
        %v2288 = vunpack.c.h.bf16 %v2202
        %v2289 = vunpack.c.l.bf16 %v2203
        %v2290 = vunpack.c.l.bf16 %v2204
        %v2291 = vunpack.c.h.bf16 %v2203
        %v2292 = vunpack.c.h.bf16 %v2204
        %v2293 = vunpack.c.l.bf16 %v2205
        %v2294 = vunpack.c.l.bf16 %v2206
        %v2295 = vunpack.c.h.bf16 %v2205
        %v2296 = vunpack.c.h.bf16 %v2206
        %v2297 = vunpack.c.l.bf16 %v2207
        %v2298 = vunpack.c.l.bf16 %v2208
        %v2299 = vunpack.c.h.bf16 %v2207
        %v2300 = vunpack.c.h.bf16 %v2208
        %v2301 = vunpack.c.l.bf16 %v2209
        %v2302 = vunpack.c.l.bf16 %v2210
        %v2303 = vunpack.c.h.bf16 %v2209
        %v2304 = vunpack.c.h.bf16 %v2210
        %v2305 = vunpack.c.l.bf16 %v2211
        %v2306 = vunpack.c.l.bf16 %v2212
        %v2307 = vunpack.c.h.bf16 %v2211
        %v2308 = vunpack.c.h.bf16 %v2212
        %v2309 = vunpack.c.l.bf16 %v2213
        %v2310 = vunpack.c.l.bf16 %v2214
        %v2311 = vunpack.c.h.bf16 %v2213
        %v2312 = vunpack.c.h.bf16 %v2214
        %v2313 = vunpack.c.l.bf16 %v2215
        %v2314 = vunpack.c.l.bf16 %v2216
        %v2315 = vunpack.c.h.bf16 %v2215
        %v2316 = vunpack.c.h.bf16 %v2216
        %v2317 = vunpack.c.l.bf16 %v2217
        %v2318 = vunpack.c.l.bf16 %v2218
        %v2319 = vunpack.c.h.bf16 %v2217
        %v2320 = vunpack.c.h.bf16 %v2218
        %v2321 = vunpack.c.l.bf16 %v2219
        %v2322 = vunpack.c.l.bf16 %v2220
        %v2323 = vunpack.c.h.bf16 %v2219
        %v2324 = vunpack.c.h.bf16 %v2220
        %v2325 = vunpack.c.l.bf16 %v2221
        %v2326 = vunpack.c.l.bf16 %v2222
        %v2327 = vunpack.c.h.bf16 %v2221
        %v2328 = vunpack.c.h.bf16 %v2222
        %v2329 = vunpack.c.l.bf16 %v2223
        %v2330 = vunpack.c.l.bf16 %v2224
        %v2331 = vunpack.c.h.bf16 %v2223
        %v2332 = vunpack.c.h.bf16 %v2224
        %v2333 = vunpack.c.l.bf16 %v2225
        %v2334 = vunpack.c.l.bf16 %v2226
        %v2335 = vunpack.c.h.bf16 %v2225
        %v2336 = vunpack.c.h.bf16 %v2226
        %v2337 = vunpack.c.l.bf16 %v2227
        %v2338 = vunpack.c.l.bf16 %v2228
        %v2339 = vunpack.c.h.bf16 %v2227
        %v2340 = vunpack.c.h.bf16 %v2228
        %v2341 = vunpack.c.l.bf16 %v2229
        %v2342 = vunpack.c.l.bf16 %v2230
        %v2343 = vunpack.c.h.bf16 %v2229
        %v2344 = vunpack.c.h.bf16 %v2230
        %v2345 = vunpack.c.l.bf16 %v2231
        %v2346 = vunpack.c.l.bf16 %v2232
        %v2347 = vunpack.c.h.bf16 %v2231
        %v2348 = vunpack.c.h.bf16 %v2232
        %v2349 = vunpack.c.l.bf16 %v2233
        %v2350 = vunpack.c.l.bf16 %v2234
        %v2351 = vunpack.c.h.bf16 %v2233
        %v2352 = vunpack.c.h.bf16 %v2234
        %v2353 = vunpack.c.l.bf16 %v2235
        %v2354 = vunpack.c.l.bf16 %v2236
        %v2355 = vunpack.c.h.bf16 %v2235
        %v2356 = vunpack.c.h.bf16 %v2236
        %v2357 = vunpack.c.l.bf16 %v2237
        %v2358 = vunpack.c.l.bf16 %v2238
        %v2359 = vunpack.c.h.bf16 %v2237
        %v2360 = vunpack.c.h.bf16 %v2238
        %v2361 = vunpack.c.l.bf16 %v2239
        %v2362 = vunpack.c.l.bf16 %v2240
        %v2363 = vunpack.c.h.bf16 %v2239
        %v2364 = vunpack.c.h.bf16 %v2240
        %v2365 = vunpack.c.l.bf16 %v2241
        %v2366 = vunpack.c.l.bf16 %v2242
        %v2367 = vunpack.c.h.bf16 %v2241
        %v2368 = vunpack.c.h.bf16 %v2242
        %v2369 = vunpack.c.l.bf16 %v2243
        %v2370 = vunpack.c.l.bf16 %v2244
        %v2371 = vunpack.c.h.bf16 %v2243
        %v2372 = vunpack.c.h.bf16 %v2244
        %v2373 = vsub.f32 0.0, %v1093
        %v2374 = vsub.f32 0.0, %v1094
        %v2375 = vsub.f32 0.0, %v1095
        %v2376 = vsub.f32 0.0, %v1096
        %v2377 = vsub.f32 0.0, %v1097
        %v2378 = vsub.f32 0.0, %v1098
        %v2379 = vsub.f32 0.0, %v1099
        %v2380 = vsub.f32 0.0, %v1100
        %v2381 = vsub.f32 0.0, %v1101
        %v2382 = vsub.f32 0.0, %v1102
        %v2383 = vsub.f32 0.0, %v1103
        %v2384 = vsub.f32 0.0, %v1104
        %v2385 = vsub.f32 0.0, %v1105
        %v2386 = vsub.f32 0.0, %v1106
        %v2387 = vsub.f32 0.0, %v1107
        %v2388 = vsub.f32 0.0, %v1108
        %v2389 = vsub.f32 0.0, %v1109
        %v2390 = vsub.f32 0.0, %v1110
        %v2391 = vsub.f32 0.0, %v1111
        %v2392 = vsub.f32 0.0, %v1112
        %v2393 = vsub.f32 0.0, %v1113
        %v2394 = vsub.f32 0.0, %v1114
        %v2395 = vsub.f32 0.0, %v1115
        %v2396 = vsub.f32 0.0, %v1116
        %v2397 = vsub.f32 0.0, %v1117
        %v2398 = vsub.f32 0.0, %v1118
        %v2399 = vsub.f32 0.0, %v1119
        %v2400 = vsub.f32 0.0, %v1120
        %v2401 = vsub.f32 0.0, %v1121
        %v2402 = vsub.f32 0.0, %v1122
        %v2403 = vsub.f32 0.0, %v1123
        %v2404 = vsub.f32 0.0, %v1124
        %v2405 = vsub.f32 0.0, %v1125
        %v2406 = vsub.f32 0.0, %v1126
        %v2407 = vsub.f32 0.0, %v1127
        %v2408 = vsub.f32 0.0, %v1128
        %v2409 = vsub.f32 0.0, %v1129
        %v2410 = vsub.f32 0.0, %v1130
        %v2411 = vsub.f32 0.0, %v1131
        %v2412 = vsub.f32 0.0, %v1132
        %v2413 = vsub.f32 0.0, %v1133
        %v2414 = vsub.f32 0.0, %v1134
        %v2415 = vsub.f32 0.0, %v1135
        %v2416 = vsub.f32 0.0, %v1136
        %v2417 = vsub.f32 0.0, %v1137
        %v2418 = vsub.f32 0.0, %v1138
        %v2419 = vsub.f32 0.0, %v1139
        %v2420 = vsub.f32 0.0, %v1140
        %v2421 = vsub.f32 0.0, %v1141
        %v2422 = vsub.f32 0.0, %v1142
        %v2423 = vsub.f32 0.0, %v1143
        %v2424 = vsub.f32 0.0, %v1144
        %v2425 = vsub.f32 0.0, %v1145
        %v2426 = vsub.f32 0.0, %v1146
        %v2427 = vsub.f32 0.0, %v1147
        %v2428 = vsub.f32 0.0, %v1148
        %v2429 = vsub.f32 0.0, %v1149
        %v2430 = vsub.f32 0.0, %v1150
        %v2431 = vsub.f32 0.0, %v1151
        %v2432 = vsub.f32 0.0, %v1152
        %v2433 = vsub.f32 0.0, %v1153
        %v2434 = vsub.f32 0.0, %v1154
        %v2435 = vsub.f32 0.0, %v1155
        %v2436 = vsub.f32 0.0, %v1156
        %v2437 = vsub.f32 0.0, %v1157
        %v2438 = vsub.f32 0.0, %v1158
        %v2439 = vsub.f32 0.0, %v1159
        %v2440 = vsub.f32 0.0, %v1160
        %v2441 = vsub.f32 0.0, %v1161
        %v2442 = vsub.f32 0.0, %v1162
        %v2443 = vsub.f32 0.0, %v1163
        %v2444 = vsub.f32 0.0, %v1164
        %v2445 = vsub.f32 0.0, %v1165
        %v2446 = vsub.f32 0.0, %v1166
        %v2447 = vsub.f32 0.0, %v1167
        %v2448 = vsub.f32 0.0, %v1168
        %v2449 = vsub.f32 0.0, %v1169
        %v2450 = vsub.f32 0.0, %v1170
        %v2451 = vsub.f32 0.0, %v1171
        %v2452 = vsub.f32 0.0, %v1172
        %v2453 = vsub.f32 0.0, %v1173
        %v2454 = vsub.f32 0.0, %v1174
        %v2455 = vsub.f32 0.0, %v1175
        %v2456 = vsub.f32 0.0, %v1176
        %v2457 = vsub.f32 0.0, %v1177
        %v2458 = vsub.f32 0.0, %v1178
        %v2459 = vsub.f32 0.0, %v1179
        %v2460 = vsub.f32 0.0, %v1180
        %v2461 = vsub.f32 0.0, %v1181
        %v2462 = vsub.f32 0.0, %v1182
        %v2463 = vsub.f32 0.0, %v1183
        %v2464 = vsub.f32 0.0, %v1184
        %v2465 = vsub.f32 0.0, %v1185
        %v2466 = vsub.f32 0.0, %v1186
        %v2467 = vsub.f32 0.0, %v1187
        %v2468 = vsub.f32 0.0, %v1188
        %v2469 = vsub.f32 0.0, %v1189
        %v2470 = vsub.f32 0.0, %v1190
        %v2471 = vsub.f32 0.0, %v1191
        %v2472 = vsub.f32 0.0, %v1192
        %v2473 = vsub.f32 0.0, %v1193
        %v2474 = vsub.f32 0.0, %v1194
        %v2475 = vsub.f32 0.0, %v1195
        %v2476 = vsub.f32 0.0, %v1196
        %v2477 = vsub.f32 0.0, %v1197
        %v2478 = vsub.f32 0.0, %v1198
        %v2479 = vsub.f32 0.0, %v1199
        %v2480 = vsub.f32 0.0, %v1200
        %v2481 = vsub.f32 0.0, %v1201
        %v2482 = vsub.f32 0.0, %v1202
        %v2483 = vsub.f32 0.0, %v1203
        %v2484 = vsub.f32 0.0, %v1204
        %v2485 = vsub.f32 0.0, %v1205
        %v2486 = vsub.f32 0.0, %v1206
        %v2487 = vsub.f32 0.0, %v1207
        %v2488 = vsub.f32 0.0, %v1208
        %v2489 = vsub.f32 0.0, %v1209
        %v2490 = vsub.f32 0.0, %v1210
        %v2491 = vsub.f32 0.0, %v1211
        %v2492 = vsub.f32 0.0, %v1212
        %v2493 = vsub.f32 0.0, %v1213
        %v2494 = vsub.f32 0.0, %v1214
        %v2495 = vsub.f32 0.0, %v1215
        %v2496 = vsub.f32 0.0, %v1216
        %v2497 = vsub.f32 0.0, %v1217
        %v2498 = vsub.f32 0.0, %v1218
        %v2499 = vsub.f32 0.0, %v1219
        %v2500 = vsub.f32 0.0, %v1220
        %v2501 = vmul.f32 %v2373, %v1093
        %v2502 = vmul.f32 %v2374, %v1094
        %v2503 = vmul.f32 %v2375, %v1095
        %v2504 = vmul.f32 %v2376, %v1096
        %v2505 = vmul.f32 %v2377, %v1097
        %v2506 = vmul.f32 %v2378, %v1098
        %v2507 = vmul.f32 %v2379, %v1099
        %v2508 = vmul.f32 %v2380, %v1100
        %v2509 = vmul.f32 %v2381, %v1101
        %v2510 = vmul.f32 %v2382, %v1102
        %v2511 = vmul.f32 %v2383, %v1103
        %v2512 = vmul.f32 %v2384, %v1104
        %v2513 = vmul.f32 %v2385, %v1105
        %v2514 = vmul.f32 %v2386, %v1106
        %v2515 = vmul.f32 %v2387, %v1107
        %v2516 = vmul.f32 %v2388, %v1108
        %v2517 = vmul.f32 %v2389, %v1109
        %v2518 = vmul.f32 %v2390, %v1110
        %v2519 = vmul.f32 %v2391, %v1111
        %v2520 = vmul.f32 %v2392, %v1112
        %v2521 = vmul.f32 %v2393, %v1113
        %v2522 = vmul.f32 %v2394, %v1114
        %v2523 = vmul.f32 %v2395, %v1115
        %v2524 = vmul.f32 %v2396, %v1116
        %v2525 = vmul.f32 %v2397, %v1117
        %v2526 = vmul.f32 %v2398, %v1118
        %v2527 = vmul.f32 %v2399, %v1119
        %v2528 = vmul.f32 %v2400, %v1120
        %v2529 = vmul.f32 %v2401, %v1121
        %v2530 = vmul.f32 %v2402, %v1122
        %v2531 = vmul.f32 %v2403, %v1123
        %v2532 = vmul.f32 %v2404, %v1124
        %v2533 = vmul.f32 %v2405, %v1125
        %v2534 = vmul.f32 %v2406, %v1126
        %v2535 = vmul.f32 %v2407, %v1127
        %v2536 = vmul.f32 %v2408, %v1128
        %v2537 = vmul.f32 %v2409, %v1129
        %v2538 = vmul.f32 %v2410, %v1130
        %v2539 = vmul.f32 %v2411, %v1131
        %v2540 = vmul.f32 %v2412, %v1132
        %v2541 = vmul.f32 %v2413, %v1133
        %v2542 = vmul.f32 %v2414, %v1134
        %v2543 = vmul.f32 %v2415, %v1135
        %v2544 = vmul.f32 %v2416, %v1136
        %v2545 = vmul.f32 %v2417, %v1137
        %v2546 = vmul.f32 %v2418, %v1138
        %v2547 = vmul.f32 %v2419, %v1139
        %v2548 = vmul.f32 %v2420, %v1140
        %v2549 = vmul.f32 %v2421, %v1141
        %v2550 = vmul.f32 %v2422, %v1142
        %v2551 = vmul.f32 %v2423, %v1143
        %v2552 = vmul.f32 %v2424, %v1144
        %v2553 = vmul.f32 %v2425, %v1145
        %v2554 = vmul.f32 %v2426, %v1146
        %v2555 = vmul.f32 %v2427, %v1147
        %v2556 = vmul.f32 %v2428, %v1148
        %v2557 = vmul.f32 %v2429, %v1149
        %v2558 = vmul.f32 %v2430, %v1150
        %v2559 = vmul.f32 %v2431, %v1151
        %v2560 = vmul.f32 %v2432, %v1152
        %v2561 = vmul.f32 %v2433, %v1153
        %v2562 = vmul.f32 %v2434, %v1154
        %v2563 = vmul.f32 %v2435, %v1155
        %v2564 = vmul.f32 %v2436, %v1156
        %v2565 = vmul.f32 %v2437, %v1157
        %v2566 = vmul.f32 %v2438, %v1158
        %v2567 = vmul.f32 %v2439, %v1159
        %v2568 = vmul.f32 %v2440, %v1160
        %v2569 = vmul.f32 %v2441, %v1161
        %v2570 = vmul.f32 %v2442, %v1162
        %v2571 = vmul.f32 %v2443, %v1163
        %v2572 = vmul.f32 %v2444, %v1164
        %v2573 = vmul.f32 %v2445, %v1165
        %v2574 = vmul.f32 %v2446, %v1166
        %v2575 = vmul.f32 %v2447, %v1167
        %v2576 = vmul.f32 %v2448, %v1168
        %v2577 = vmul.f32 %v2449, %v1169
        %v2578 = vmul.f32 %v2450, %v1170
        %v2579 = vmul.f32 %v2451, %v1171
        %v2580 = vmul.f32 %v2452, %v1172
        %v2581 = vmul.f32 %v2453, %v1173
        %v2582 = vmul.f32 %v2454, %v1174
        %v2583 = vmul.f32 %v2455, %v1175
        %v2584 = vmul.f32 %v2456, %v1176
        %v2585 = vmul.f32 %v2457, %v1177
        %v2586 = vmul.f32 %v2458, %v1178
        %v2587 = vmul.f32 %v2459, %v1179
        %v2588 = vmul.f32 %v2460, %v1180
        %v2589 = vmul.f32 %v2461, %v1181
        %v2590 = vmul.f32 %v2462, %v1182
        %v2591 = vmul.f32 %v2463, %v1183
        %v2592 = vmul.f32 %v2464, %v1184
        %v2593 = vmul.f32 %v2465, %v1185
        %v2594 = vmul.f32 %v2466, %v1186
        %v2595 = vmul.f32 %v2467, %v1187
        %v2596 = vmul.f32 %v2468, %v1188
        %v2597 = vmul.f32 %v2469, %v1189
        %v2598 = vmul.f32 %v2470, %v1190
        %v2599 = vmul.f32 %v2471, %v1191
        %v2600 = vmul.f32 %v2472, %v1192
        %v2601 = vmul.f32 %v2473, %v1193
        %v2602 = vmul.f32 %v2474, %v1194
        %v2603 = vmul.f32 %v2475, %v1195
        %v2604 = vmul.f32 %v2476, %v1196
        %v2605 = vmul.f32 %v2477, %v1197
        %v2606 = vmul.f32 %v2478, %v1198
        %v2607 = vmul.f32 %v2479, %v1199
        %v2608 = vmul.f32 %v2480, %v1200
        %v2609 = vmul.f32 %v2481, %v1201
        %v2610 = vmul.f32 %v2482, %v1202
        %v2611 = vmul.f32 %v2483, %v1203
        %v2612 = vmul.f32 %v2484, %v1204
        %v2613 = vmul.f32 %v2485, %v1205
        %v2614 = vmul.f32 %v2486, %v1206
        %v2615 = vmul.f32 %v2487, %v1207
        %v2616 = vmul.f32 %v2488, %v1208
        %v2617 = vmul.f32 %v2489, %v1209
        %v2618 = vmul.f32 %v2490, %v1210
        %v2619 = vmul.f32 %v2491, %v1211
        %v2620 = vmul.f32 %v2492, %v1212
        %v2621 = vmul.f32 %v2493, %v1213
        %v2622 = vmul.f32 %v2494, %v1214
        %v2623 = vmul.f32 %v2495, %v1215
        %v2624 = vmul.f32 %v2496, %v1216
        %v2625 = vmul.f32 %v2497, %v1217
        %v2626 = vmul.f32 %v2498, %v1218
        %v2627 = vmul.f32 %v2499, %v1219
        %v2628 = vmul.f32 %v2500, %v1220
        %v2629 = vmul.f32 %v2501, 1.442695
        %v2630 = vpow.pop %v2629
        %v2631 = vmul.f32 %v2502, 1.442695
        %v2632 = vpow.pop %v2631
        %v2633 = vmul.f32 %v2503, 1.442695
        %v2634 = vpow.pop %v2633
        %v2635 = vmul.f32 %v2504, 1.442695
        %v2636 = vpow.pop %v2635
        %v2637 = vmul.f32 %v2505, 1.442695
        %v2638 = vpow.pop %v2637
        %v2639 = vmul.f32 %v2506, 1.442695
        %v2640 = vpow.pop %v2639
        %v2641 = vmul.f32 %v2507, 1.442695
        %v2642 = vpow.pop %v2641
        %v2643 = vmul.f32 %v2508, 1.442695
        %v2644 = vpow.pop %v2643
        %v2645 = vmul.f32 %v2509, 1.442695
        %v2646 = vpow.pop %v2645
        %v2647 = vmul.f32 %v2510, 1.442695
        %v2648 = vpow.pop %v2647
        %v2649 = vmul.f32 %v2511, 1.442695
        %v2650 = vpow.pop %v2649
        %v2651 = vmul.f32 %v2512, 1.442695
        %v2652 = vpow.pop %v2651
        %v2653 = vmul.f32 %v2513, 1.442695
        %v2654 = vpow.pop %v2653
        %v2655 = vmul.f32 %v2514, 1.442695
        %v2656 = vpow.pop %v2655
        %v2657 = vmul.f32 %v2515, 1.442695
        %v2658 = vpow.pop %v2657
        %v2659 = vmul.f32 %v2516, 1.442695
        %v2660 = vpow.pop %v2659
        %v2661 = vmul.f32 %v2517, 1.442695
        %v2662 = vpow.pop %v2661
        %v2663 = vmul.f32 %v2518, 1.442695
        %v2664 = vpow.pop %v2663
        %v2665 = vmul.f32 %v2519, 1.442695
        %v2666 = vpow.pop %v2665
        %v2667 = vmul.f32 %v2520, 1.442695
        %v2668 = vpow.pop %v2667
        %v2669 = vmul.f32 %v2521, 1.442695
        %v2670 = vpow.pop %v2669
        %v2671 = vmul.f32 %v2522, 1.442695
        %v2672 = vpow.pop %v2671
        %v2673 = vmul.f32 %v2523, 1.442695
        %v2674 = vpow.pop %v2673
        %v2675 = vmul.f32 %v2524, 1.442695
        %v2676 = vpow.pop %v2675
        %v2677 = vmul.f32 %v2525, 1.442695
        %v2678 = vpow.pop %v2677
        %v2679 = vmul.f32 %v2526, 1.442695
        %v2680 = vpow.pop %v2679
        %v2681 = vmul.f32 %v2527, 1.442695
        %v2682 = vpow.pop %v2681
        %v2683 = vmul.f32 %v2528, 1.442695
        %v2684 = vpow.pop %v2683
        %v2685 = vmul.f32 %v2529, 1.442695
        %v2686 = vpow.pop %v2685
        %v2687 = vmul.f32 %v2530, 1.442695
        %v2688 = vpow.pop %v2687
        %v2689 = vmul.f32 %v2531, 1.442695
        %v2690 = vpow.pop %v2689
        %v2691 = vmul.f32 %v2532, 1.442695
        %v2692 = vpow.pop %v2691
        %v2693 = vmul.f32 %v2533, 1.442695
        %v2694 = vpow.pop %v2693
        %v2695 = vmul.f32 %v2534, 1.442695
        %v2696 = vpow.pop %v2695
        %v2697 = vmul.f32 %v2535, 1.442695
        %v2698 = vpow.pop %v2697
        %v2699 = vmul.f32 %v2536, 1.442695
        %v2700 = vpow.pop %v2699
        %v2701 = vmul.f32 %v2537, 1.442695
        %v2702 = vpow.pop %v2701
        %v2703 = vmul.f32 %v2538, 1.442695
        %v2704 = vpow.pop %v2703
        %v2705 = vmul.f32 %v2539, 1.442695
        %v2706 = vpow.pop %v2705
        %v2707 = vmul.f32 %v2540, 1.442695
        %v2708 = vpow.pop %v2707
        %v2709 = vmul.f32 %v2541, 1.442695
        %v2710 = vpow.pop %v2709
        %v2711 = vmul.f32 %v2542, 1.442695
        %v2712 = vpow.pop %v2711
        %v2713 = vmul.f32 %v2543, 1.442695
        %v2714 = vpow.pop %v2713
        %v2715 = vmul.f32 %v2544, 1.442695
        %v2716 = vpow.pop %v2715
        %v2717 = vmul.f32 %v2545, 1.442695
        %v2718 = vpow.pop %v2717
        %v2719 = vmul.f32 %v2546, 1.442695
        %v2720 = vpow.pop %v2719
        %v2721 = vmul.f32 %v2547, 1.442695
        %v2722 = vpow.pop %v2721
        %v2723 = vmul.f32 %v2548, 1.442695
        %v2724 = vpow.pop %v2723
        %v2725 = vmul.f32 %v2549, 1.442695
        %v2726 = vpow.pop %v2725
        %v2727 = vmul.f32 %v2550, 1.442695
        %v2728 = vpow.pop %v2727
        %v2729 = vmul.f32 %v2551, 1.442695
        %v2730 = vpow.pop %v2729
        %v2731 = vmul.f32 %v2552, 1.442695
        %v2732 = vpow.pop %v2731
        %v2733 = vmul.f32 %v2553, 1.442695
        %v2734 = vpow.pop %v2733
        %v2735 = vmul.f32 %v2554, 1.442695
        %v2736 = vpow.pop %v2735
        %v2737 = vmul.f32 %v2555, 1.442695
        %v2738 = vpow.pop %v2737
        %v2739 = vmul.f32 %v2556, 1.442695
        %v2740 = vpow.pop %v2739
        %v2741 = vmul.f32 %v2557, 1.442695
        %v2742 = vpow.pop %v2741
        %v2743 = vmul.f32 %v2558, 1.442695
        %v2744 = vpow.pop %v2743
        %v2745 = vmul.f32 %v2559, 1.442695
        %v2746 = vpow.pop %v2745
        %v2747 = vmul.f32 %v2560, 1.442695
        %v2748 = vpow.pop %v2747
        %v2749 = vmul.f32 %v2561, 1.442695
        %v2750 = vpow.pop %v2749
        %v2751 = vmul.f32 %v2562, 1.442695
        %v2752 = vpow.pop %v2751
        %v2753 = vmul.f32 %v2563, 1.442695
        %v2754 = vpow.pop %v2753
        %v2755 = vmul.f32 %v2564, 1.442695
        %v2756 = vpow.pop %v2755
        %v2757 = vmul.f32 %v2565, 1.442695
        %v2758 = vpow.pop %v2757
        %v2759 = vmul.f32 %v2566, 1.442695
        %v2760 = vpow.pop %v2759
        %v2761 = vmul.f32 %v2567, 1.442695
        %v2762 = vpow.pop %v2761
        %v2763 = vmul.f32 %v2568, 1.442695
        %v2764 = vpow.pop %v2763
        %v2765 = vmul.f32 %v2569, 1.442695
        %v2766 = vpow.pop %v2765
        %v2767 = vmul.f32 %v2570, 1.442695
        %v2768 = vpow.pop %v2767
        %v2769 = vmul.f32 %v2571, 1.442695
        %v2770 = vpow.pop %v2769
        %v2771 = vmul.f32 %v2572, 1.442695
        %v2772 = vpow.pop %v2771
        %v2773 = vmul.f32 %v2573, 1.442695
        %v2774 = vpow.pop %v2773
        %v2775 = vmul.f32 %v2574, 1.442695
        %v2776 = vpow.pop %v2775
        %v2777 = vmul.f32 %v2575, 1.442695
        %v2778 = vpow.pop %v2777
        %v2779 = vmul.f32 %v2576, 1.442695
        %v2780 = vpow.pop %v2779
        %v2781 = vmul.f32 %v2577, 1.442695
        %v2782 = vpow.pop %v2781
        %v2783 = vmul.f32 %v2578, 1.442695
        %v2784 = vpow.pop %v2783
        %v2785 = vmul.f32 %v2579, 1.442695
        %v2786 = vpow.pop %v2785
        %v2787 = vmul.f32 %v2580, 1.442695
        %v2788 = vpow.pop %v2787
        %v2789 = vmul.f32 %v2581, 1.442695
        %v2790 = vpow.pop %v2789
        %v2791 = vmul.f32 %v2582, 1.442695
        %v2792 = vpow.pop %v2791
        %v2793 = vmul.f32 %v2583, 1.442695
        %v2794 = vpow.pop %v2793
        %v2795 = vmul.f32 %v2584, 1.442695
        %v2796 = vpow.pop %v2795
        %v2797 = vmul.f32 %v2585, 1.442695
        %v2798 = vpow.pop %v2797
        %v2799 = vmul.f32 %v2586, 1.442695
        %v2800 = vpow.pop %v2799
        %v2801 = vmul.f32 %v2587, 1.442695
        %v2802 = vpow.pop %v2801
        %v2803 = vmul.f32 %v2588, 1.442695
        %v2804 = vpow.pop %v2803
        %v2805 = vmul.f32 %v2589, 1.442695
        %v2806 = vpow.pop %v2805
        %v2807 = vmul.f32 %v2590, 1.442695
        %v2808 = vpow.pop %v2807
        %v2809 = vmul.f32 %v2591, 1.442695
        %v2810 = vpow.pop %v2809
        %v2811 = vmul.f32 %v2592, 1.442695
        %v2812 = vpow.pop %v2811
        %v2813 = vmul.f32 %v2593, 1.442695
        %v2814 = vpow.pop %v2813
        %v2815 = vmul.f32 %v2594, 1.442695
        %v2816 = vpow.pop %v2815
        %v2817 = vmul.f32 %v2595, 1.442695
        %v2818 = vpow.pop %v2817
        %v2819 = vmul.f32 %v2596, 1.442695
        %v2820 = vpow.pop %v2819
        %v2821 = vmul.f32 %v2597, 1.442695
        %v2822 = vpow.pop %v2821
        %v2823 = vmul.f32 %v2598, 1.442695
        %v2824 = vpow.pop %v2823
        %v2825 = vmul.f32 %v2599, 1.442695
        %v2826 = vpow.pop %v2825
        %v2827 = vmul.f32 %v2600, 1.442695
        %v2828 = vpow.pop %v2827
        %v2829 = vmul.f32 %v2601, 1.442695
        %v2830 = vpow.pop %v2829
        %v2831 = vmul.f32 %v2602, 1.442695
        %v2832 = vpow.pop %v2831
        %v2833 = vmul.f32 %v2603, 1.442695
        %v2834 = vpow.pop %v2833
        %v2835 = vmul.f32 %v2604, 1.442695
        %v2836 = vpow.pop %v2835
        %v2837 = vmul.f32 %v2605, 1.442695
        %v2838 = vpow.pop %v2837
        %v2839 = vmul.f32 %v2606, 1.442695
        %v2840 = vpow.pop %v2839
        %v2841 = vmul.f32 %v2607, 1.442695
        %v2842 = vpow.pop %v2841
        %v2843 = vmul.f32 %v2608, 1.442695
        %v2844 = vpow.pop %v2843
        %v2845 = vmul.f32 %v2609, 1.442695
        %v2846 = vpow.pop %v2845
        %v2847 = vmul.f32 %v2610, 1.442695
        %v2848 = vpow.pop %v2847
        %v2849 = vmul.f32 %v2611, 1.442695
        %v2850 = vpow.pop %v2849
        %v2851 = vmul.f32 %v2612, 1.442695
        %v2852 = vpow.pop %v2851
        %v2853 = vmul.f32 %v2613, 1.442695
        %v2854 = vpow.pop %v2853
        %v2855 = vmul.f32 %v2614, 1.442695
        %v2856 = vpow.pop %v2855
        %v2857 = vmul.f32 %v2615, 1.442695
        %v2858 = vpow.pop %v2857
        %v2859 = vmul.f32 %v2616, 1.442695
        %v2860 = vpow.pop %v2859
        %v2861 = vmul.f32 %v2617, 1.442695
        %v2862 = vpow.pop %v2861
        %v2863 = vmul.f32 %v2618, 1.442695
        %v2864 = vpow.pop %v2863
        %v2865 = vmul.f32 %v2619, 1.442695
        %v2866 = vpow.pop %v2865
        %v2867 = vmul.f32 %v2620, 1.442695
        %v2868 = vpow.pop %v2867
        %v2869 = vmul.f32 %v2621, 1.442695
        %v2870 = vpow.pop %v2869
        %v2871 = vmul.f32 %v2622, 1.442695
        %v2872 = vpow.pop %v2871
        %v2873 = vmul.f32 %v2623, 1.442695
        %v2874 = vpow.pop %v2873
        %v2875 = vmul.f32 %v2624, 1.442695
        %v2876 = vpow.pop %v2875
        %v2877 = vmul.f32 %v2625, 1.442695
        %v2878 = vpow.pop %v2877
        %v2879 = vmul.f32 %v2626, 1.442695
        %v2880 = vpow.pop %v2879
        %v2881 = vmul.f32 %v2627, 1.442695
        %v2882 = vpow.pop %v2881
        %v2883 = vmul.f32 %v2628, 1.442695
        %v2884 = vpow.pop %v2883
        %v2885 = vmul.f32 %v2245, %v2630
        %v2886 = vmul.f32 %v2246, %v2632
        %v2887 = vmul.f32 %v2247, %v2634
        %v2888 = vmul.f32 %v2248, %v2636
        %v2889 = vmul.f32 %v2249, %v2638
        %v2890 = vmul.f32 %v2250, %v2640
        %v2891 = vmul.f32 %v2251, %v2642
        %v2892 = vmul.f32 %v2252, %v2644
        %v2893 = vmul.f32 %v2253, %v2646
        %v2894 = vmul.f32 %v2254, %v2648
        %v2895 = vmul.f32 %v2255, %v2650
        %v2896 = vmul.f32 %v2256, %v2652
        %v2897 = vmul.f32 %v2257, %v2654
        %v2898 = vmul.f32 %v2258, %v2656
        %v2899 = vmul.f32 %v2259, %v2658
        %v2900 = vmul.f32 %v2260, %v2660
        %v2901 = vmul.f32 %v2261, %v2662
        %v2902 = vmul.f32 %v2262, %v2664
        %v2903 = vmul.f32 %v2263, %v2666
        %v2904 = vmul.f32 %v2264, %v2668
        %v2905 = vmul.f32 %v2265, %v2670
        %v2906 = vmul.f32 %v2266, %v2672
        %v2907 = vmul.f32 %v2267, %v2674
        %v2908 = vmul.f32 %v2268, %v2676
        %v2909 = vmul.f32 %v2269, %v2678
        %v2910 = vmul.f32 %v2270, %v2680
        %v2911 = vmul.f32 %v2271, %v2682
        %v2912 = vmul.f32 %v2272, %v2684
        %v2913 = vmul.f32 %v2273, %v2686
        %v2914 = vmul.f32 %v2274, %v2688
        %v2915 = vmul.f32 %v2275, %v2690
        %v2916 = vmul.f32 %v2276, %v2692
        %v2917 = vmul.f32 %v2277, %v2694
        %v2918 = vmul.f32 %v2278, %v2696
        %v2919 = vmul.f32 %v2279, %v2698
        %v2920 = vmul.f32 %v2280, %v2700
        %v2921 = vmul.f32 %v2281, %v2702
        %v2922 = vmul.f32 %v2282, %v2704
        %v2923 = vmul.f32 %v2283, %v2706
        %v2924 = vmul.f32 %v2284, %v2708
        %v2925 = vmul.f32 %v2285, %v2710
        %v2926 = vmul.f32 %v2286, %v2712
        %v2927 = vmul.f32 %v2287, %v2714
        %v2928 = vmul.f32 %v2288, %v2716
        %v2929 = vmul.f32 %v2289, %v2718
        %v2930 = vmul.f32 %v2290, %v2720
        %v2931 = vmul.f32 %v2291, %v2722
        %v2932 = vmul.f32 %v2292, %v2724
        %v2933 = vmul.f32 %v2293, %v2726
        %v2934 = vmul.f32 %v2294, %v2728
        %v2935 = vmul.f32 %v2295, %v2730
        %v2936 = vmul.f32 %v2296, %v2732
        %v2937 = vmul.f32 %v2297, %v2734
        %v2938 = vmul.f32 %v2298, %v2736
        %v2939 = vmul.f32 %v2299, %v2738
        %v2940 = vmul.f32 %v2300, %v2740
        %v2941 = vmul.f32 %v2301, %v2742
        %v2942 = vmul.f32 %v2302, %v2744
        %v2943 = vmul.f32 %v2303, %v2746
        %v2944 = vmul.f32 %v2304, %v2748
        %v2945 = vmul.f32 %v2305, %v2750
        %v2946 = vmul.f32 %v2306, %v2752
        %v2947 = vmul.f32 %v2307, %v2754
        %v2948 = vmul.f32 %v2308, %v2756
        %v2949 = vmul.f32 %v2309, %v2758
        %v2950 = vmul.f32 %v2310, %v2760
        %v2951 = vmul.f32 %v2311, %v2762
        %v2952 = vmul.f32 %v2312, %v2764
        %v2953 = vmul.f32 %v2313, %v2766
        %v2954 = vmul.f32 %v2314, %v2768
        %v2955 = vmul.f32 %v2315, %v2770
        %v2956 = vmul.f32 %v2316, %v2772
        %v2957 = vmul.f32 %v2317, %v2774
        %v2958 = vmul.f32 %v2318, %v2776
        %v2959 = vmul.f32 %v2319, %v2778
        %v2960 = vmul.f32 %v2320, %v2780
        %v2961 = vmul.f32 %v2321, %v2782
        %v2962 = vmul.f32 %v2322, %v2784
        %v2963 = vmul.f32 %v2323, %v2786
        %v2964 = vmul.f32 %v2324, %v2788
        %v2965 = vmul.f32 %v2325, %v2790
        %v2966 = vmul.f32 %v2326, %v2792
        %v2967 = vmul.f32 %v2327, %v2794
        %v2968 = vmul.f32 %v2328, %v2796
        %v2969 = vmul.f32 %v2329, %v2798
        %v2970 = vmul.f32 %v2330, %v2800
        %v2971 = vmul.f32 %v2331, %v2802
        %v2972 = vmul.f32 %v2332, %v2804
        %v2973 = vmul.f32 %v2333, %v2806
        %v2974 = vmul.f32 %v2334, %v2808
        %v2975 = vmul.f32 %v2335, %v2810
        %v2976 = vmul.f32 %v2336, %v2812
        %v2977 = vmul.f32 %v2337, %v2814
        %v2978 = vmul.f32 %v2338, %v2816
        %v2979 = vmul.f32 %v2339, %v2818
        %v2980 = vmul.f32 %v2340, %v2820
        %v2981 = vmul.f32 %v2341, %v2822
        %v2982 = vmul.f32 %v2342, %v2824
        %v2983 = vmul.f32 %v2343, %v2826
        %v2984 = vmul.f32 %v2344, %v2828
        %v2985 = vmul.f32 %v2345, %v2830
        %v2986 = vmul.f32 %v2346, %v2832
        %v2987 = vmul.f32 %v2347, %v2834
        %v2988 = vmul.f32 %v2348, %v2836
        %v2989 = vmul.f32 %v2349, %v2838
        %v2990 = vmul.f32 %v2350, %v2840
        %v2991 = vmul.f32 %v2351, %v2842
        %v2992 = vmul.f32 %v2352, %v2844
        %v2993 = vmul.f32 %v2353, %v2846
        %v2994 = vmul.f32 %v2354, %v2848
        %v2995 = vmul.f32 %v2355, %v2850
        %v2996 = vmul.f32 %v2356, %v2852
        %v2997 = vmul.f32 %v2357, %v2854
        %v2998 = vmul.f32 %v2358, %v2856
        %v2999 = vmul.f32 %v2359, %v2858
        %v3000 = vmul.f32 %v2360, %v2860
        %v3001 = vmul.f32 %v2361, %v2862
        %v3002 = vmul.f32 %v2362, %v2864
        %v3003 = vmul.f32 %v2363, %v2866
        %v3004 = vmul.f32 %v2364, %v2868
        %v3005 = vmul.f32 %v2365, %v2870
        %v3006 = vmul.f32 %v2366, %v2872
        %v3007 = vmul.f32 %v2367, %v2874
        %v3008 = vmul.f32 %v2368, %v2876
        %v3009 = vmul.f32 %v2369, %v2878
        %v3010 = vmul.f32 %v2370, %v2880
        %v3011 = vmul.f32 %v2371, %v2882
        %v3012 = vmul.f32 %v2372, %v2884
        %v3013 = vsub.f32 1.0, %v2885
        %v3014 = vsub.f32 1.0, %v2886
        %v3015 = vsub.f32 1.0, %v2887
        %v3016 = vsub.f32 1.0, %v2888
        %v3017 = vsub.f32 1.0, %v2889
        %v3018 = vsub.f32 1.0, %v2890
        %v3019 = vsub.f32 1.0, %v2891
        %v3020 = vsub.f32 1.0, %v2892
        %v3021 = vsub.f32 1.0, %v2893
        %v3022 = vsub.f32 1.0, %v2894
        %v3023 = vsub.f32 1.0, %v2895
        %v3024 = vsub.f32 1.0, %v2896
        %v3025 = vsub.f32 1.0, %v2897
        %v3026 = vsub.f32 1.0, %v2898
        %v3027 = vsub.f32 1.0, %v2899
        %v3028 = vsub.f32 1.0, %v2900
        %v3029 = vsub.f32 1.0, %v2901
        %v3030 = vsub.f32 1.0, %v2902
        %v3031 = vsub.f32 1.0, %v2903
        %v3032 = vsub.f32 1.0, %v2904
        %v3033 = vsub.f32 1.0, %v2905
        %v3034 = vsub.f32 1.0, %v2906
        %v3035 = vsub.f32 1.0, %v2907
        %v3036 = vsub.f32 1.0, %v2908
        %v3037 = vsub.f32 1.0, %v2909
        %v3038 = vsub.f32 1.0, %v2910
        %v3039 = vsub.f32 1.0, %v2911
        %v3040 = vsub.f32 1.0, %v2912
        %v3041 = vsub.f32 1.0, %v2913
        %v3042 = vsub.f32 1.0, %v2914
        %v3043 = vsub.f32 1.0, %v2915
        %v3044 = vsub.f32 1.0, %v2916
        %v3045 = vsub.f32 1.0, %v2917
        %v3046 = vsub.f32 1.0, %v2918
        %v3047 = vsub.f32 1.0, %v2919
        %v3048 = vsub.f32 1.0, %v2920
        %v3049 = vsub.f32 1.0, %v2921
        %v3050 = vsub.f32 1.0, %v2922
        %v3051 = vsub.f32 1.0, %v2923
        %v3052 = vsub.f32 1.0, %v2924
        %v3053 = vsub.f32 1.0, %v2925
        %v3054 = vsub.f32 1.0, %v2926
        %v3055 = vsub.f32 1.0, %v2927
        %v3056 = vsub.f32 1.0, %v2928
        %v3057 = vsub.f32 1.0, %v2929
        %v3058 = vsub.f32 1.0, %v2930
        %v3059 = vsub.f32 1.0, %v2931
        %v3060 = vsub.f32 1.0, %v2932
        %v3061 = vsub.f32 1.0, %v2933
        %v3062 = vsub.f32 1.0, %v2934
        %v3063 = vsub.f32 1.0, %v2935
        %v3064 = vsub.f32 1.0, %v2936
        %v3065 = vsub.f32 1.0, %v2937
        %v3066 = vsub.f32 1.0, %v2938
        %v3067 = vsub.f32 1.0, %v2939
        %v3068 = vsub.f32 1.0, %v2940
        %v3069 = vsub.f32 1.0, %v2941
        %v3070 = vsub.f32 1.0, %v2942
        %v3071 = vsub.f32 1.0, %v2943
        %v3072 = vsub.f32 1.0, %v2944
        %v3073 = vsub.f32 1.0, %v2945
        %v3074 = vsub.f32 1.0, %v2946
        %v3075 = vsub.f32 1.0, %v2947
        %v3076 = vsub.f32 1.0, %v2948
        %v3077 = vsub.f32 1.0, %v2949
        %v3078 = vsub.f32 1.0, %v2950
        %v3079 = vsub.f32 1.0, %v2951
        %v3080 = vsub.f32 1.0, %v2952
        %v3081 = vsub.f32 1.0, %v2953
        %v3082 = vsub.f32 1.0, %v2954
        %v3083 = vsub.f32 1.0, %v2955
        %v3084 = vsub.f32 1.0, %v2956
        %v3085 = vsub.f32 1.0, %v2957
        %v3086 = vsub.f32 1.0, %v2958
        %v3087 = vsub.f32 1.0, %v2959
        %v3088 = vsub.f32 1.0, %v2960
        %v3089 = vsub.f32 1.0, %v2961
        %v3090 = vsub.f32 1.0, %v2962
        %v3091 = vsub.f32 1.0, %v2963
        %v3092 = vsub.f32 1.0, %v2964
        %v3093 = vsub.f32 1.0, %v2965
        %v3094 = vsub.f32 1.0, %v2966
        %v3095 = vsub.f32 1.0, %v2967
        %v3096 = vsub.f32 1.0, %v2968
        %v3097 = vsub.f32 1.0, %v2969
        %v3098 = vsub.f32 1.0, %v2970
        %v3099 = vsub.f32 1.0, %v2971
        %v3100 = vsub.f32 1.0, %v2972
        %v3101 = vsub.f32 1.0, %v2973
        %v3102 = vsub.f32 1.0, %v2974
        %v3103 = vsub.f32 1.0, %v2975
        %v3104 = vsub.f32 1.0, %v2976
        %v3105 = vsub.f32 1.0, %v2977
        %v3106 = vsub.f32 1.0, %v2978
        %v3107 = vsub.f32 1.0, %v2979
        %v3108 = vsub.f32 1.0, %v2980
        %v3109 = vsub.f32 1.0, %v2981
        %v3110 = vsub.f32 1.0, %v2982
        %v3111 = vsub.f32 1.0, %v2983
        %v3112 = vsub.f32 1.0, %v2984
        %v3113 = vsub.f32 1.0, %v2985
        %v3114 = vsub.f32 1.0, %v2986
        %v3115 = vsub.f32 1.0, %v2987
        %v3116 = vsub.f32 1.0, %v2988
        %v3117 = vsub.f32 1.0, %v2989
        %v3118 = vsub.f32 1.0, %v2990
        %v3119 = vsub.f32 1.0, %v2991
        %v3120 = vsub.f32 1.0, %v2992
        %v3121 = vsub.f32 1.0, %v2993
        %v3122 = vsub.f32 1.0, %v2994
        %v3123 = vsub.f32 1.0, %v2995
        %v3124 = vsub.f32 1.0, %v2996
        %v3125 = vsub.f32 1.0, %v2997
        %v3126 = vsub.f32 1.0, %v2998
        %v3127 = vsub.f32 1.0, %v2999
        %v3128 = vsub.f32 1.0, %v3000
        %v3129 = vsub.f32 1.0, %v3001
        %v3130 = vsub.f32 1.0, %v3002
        %v3131 = vsub.f32 1.0, %v3003
        %v3132 = vsub.f32 1.0, %v3004
        %v3133 = vsub.f32 1.0, %v3005
        %v3134 = vsub.f32 1.0, %v3006
        %v3135 = vsub.f32 1.0, %v3007
        %v3136 = vsub.f32 1.0, %v3008
        %v3137 = vsub.f32 1.0, %v3009
        %v3138 = vsub.f32 1.0, %v3010
        %v3139 = vsub.f32 1.0, %v3011
        %v3140 = vsub.f32 1.0, %v3012
        %vm3141 = vcmp.ge.f32.partialorder %v965, 0.0
        %vm3142 = vcmp.ge.f32.partialorder %v966, 0.0
        %vm3143 = vcmp.ge.f32.partialorder %v967, 0.0
        %vm3144 = vcmp.ge.f32.partialorder %v968, 0.0
        %vm3145 = vcmp.ge.f32.partialorder %v969, 0.0
        %vm3146 = vcmp.ge.f32.partialorder %v970, 0.0
        %vm3147 = vcmp.ge.f32.partialorder %v971, 0.0
        %vm3148 = vcmp.ge.f32.partialorder %v972, 0.0
        %vm3149 = vcmp.ge.f32.partialorder %v973, 0.0
        %vm3150 = vcmp.ge.f32.partialorder %v974, 0.0
        %vm3151 = vcmp.ge.f32.partialorder %v975, 0.0
        %vm3152 = vcmp.ge.f32.partialorder %v976, 0.0
        %vm3153 = vcmp.ge.f32.partialorder %v977, 0.0
        %vm3154 = vcmp.ge.f32.partialorder %v978, 0.0
        %vm3155 = vcmp.ge.f32.partialorder %v979, 0.0
        %vm3156 = vcmp.ge.f32.partialorder %v980, 0.0
        %vm3157 = vcmp.ge.f32.partialorder %v981, 0.0
        %vm3158 = vcmp.ge.f32.partialorder %v982, 0.0
        %vm3159 = vcmp.ge.f32.partialorder %v983, 0.0
        %vm3160 = vcmp.ge.f32.partialorder %v984, 0.0
        %vm3161 = vcmp.ge.f32.partialorder %v985, 0.0
        %vm3162 = vcmp.ge.f32.partialorder %v986, 0.0
        %vm3163 = vcmp.ge.f32.partialorder %v987, 0.0
        %vm3164 = vcmp.ge.f32.partialorder %v988, 0.0
        %vm3165 = vcmp.ge.f32.partialorder %v989, 0.0
        %vm3166 = vcmp.ge.f32.partialorder %v990, 0.0
        %vm3167 = vcmp.ge.f32.partialorder %v991, 0.0
        %vm3168 = vcmp.ge.f32.partialorder %v992, 0.0
        %vm3169 = vcmp.ge.f32.partialorder %v993, 0.0
        %vm3170 = vcmp.ge.f32.partialorder %v994, 0.0
        %vm3171 = vcmp.ge.f32.partialorder %v995, 0.0
        %vm3172 = vcmp.ge.f32.partialorder %v996, 0.0
        %vm3173 = vcmp.ge.f32.partialorder %v997, 0.0
        %vm3174 = vcmp.ge.f32.partialorder %v998, 0.0
        %vm3175 = vcmp.ge.f32.partialorder %v999, 0.0
        %vm3176 = vcmp.ge.f32.partialorder %v1000, 0.0
        %vm3177 = vcmp.ge.f32.partialorder %v1001, 0.0
        %vm3178 = vcmp.ge.f32.partialorder %v1002, 0.0
        %vm3179 = vcmp.ge.f32.partialorder %v1003, 0.0
        %vm3180 = vcmp.ge.f32.partialorder %v1004, 0.0
        %vm3181 = vcmp.ge.f32.partialorder %v1005, 0.0
        %vm3182 = vcmp.ge.f32.partialorder %v1006, 0.0
        %vm3183 = vcmp.ge.f32.partialorder %v1007, 0.0
        %vm3184 = vcmp.ge.f32.partialorder %v1008, 0.0
        %vm3185 = vcmp.ge.f32.partialorder %v1009, 0.0
        %vm3186 = vcmp.ge.f32.partialorder %v1010, 0.0
        %vm3187 = vcmp.ge.f32.partialorder %v1011, 0.0
        %vm3188 = vcmp.ge.f32.partialorder %v1012, 0.0
        %vm3189 = vcmp.ge.f32.partialorder %v1013, 0.0
        %vm3190 = vcmp.ge.f32.partialorder %v1014, 0.0
        %vm3191 = vcmp.ge.f32.partialorder %v1015, 0.0
        %vm3192 = vcmp.ge.f32.partialorder %v1016, 0.0
        %vm3193 = vcmp.ge.f32.partialorder %v1017, 0.0
        %vm3194 = vcmp.ge.f32.partialorder %v1018, 0.0
        %vm3195 = vcmp.ge.f32.partialorder %v1019, 0.0
        %vm3196 = vcmp.ge.f32.partialorder %v1020, 0.0
        %vm3197 = vcmp.ge.f32.partialorder %v1021, 0.0
        %vm3198 = vcmp.ge.f32.partialorder %v1022, 0.0
        %vm3199 = vcmp.ge.f32.partialorder %v1023, 0.0
        %vm3200 = vcmp.ge.f32.partialorder %v1024, 0.0
        %vm3201 = vcmp.ge.f32.partialorder %v1025, 0.0
        %vm3202 = vcmp.ge.f32.partialorder %v1026, 0.0
        %vm3203 = vcmp.ge.f32.partialorder %v1027, 0.0
        %vm3204 = vcmp.ge.f32.partialorder %v1028, 0.0
        %vm3205 = vcmp.ge.f32.partialorder %v1029, 0.0
        %vm3206 = vcmp.ge.f32.partialorder %v1030, 0.0
        %vm3207 = vcmp.ge.f32.partialorder %v1031, 0.0
        %vm3208 = vcmp.ge.f32.partialorder %v1032, 0.0
        %vm3209 = vcmp.ge.f32.partialorder %v1033, 0.0
        %vm3210 = vcmp.ge.f32.partialorder %v1034, 0.0
        %vm3211 = vcmp.ge.f32.partialorder %v1035, 0.0
        %vm3212 = vcmp.ge.f32.partialorder %v1036, 0.0
        %vm3213 = vcmp.ge.f32.partialorder %v1037, 0.0
        %vm3214 = vcmp.ge.f32.partialorder %v1038, 0.0
        %vm3215 = vcmp.ge.f32.partialorder %v1039, 0.0
        %vm3216 = vcmp.ge.f32.partialorder %v1040, 0.0
        %vm3217 = vcmp.ge.f32.partialorder %v1041, 0.0
        %vm3218 = vcmp.ge.f32.partialorder %v1042, 0.0
        %vm3219 = vcmp.ge.f32.partialorder %v1043, 0.0
        %vm3220 = vcmp.ge.f32.partialorder %v1044, 0.0
        %vm3221 = vcmp.ge.f32.partialorder %v1045, 0.0
        %vm3222 = vcmp.ge.f32.partialorder %v1046, 0.0
        %vm3223 = vcmp.ge.f32.partialorder %v1047, 0.0
        %vm3224 = vcmp.ge.f32.partialorder %v1048, 0.0
        %vm3225 = vcmp.ge.f32.partialorder %v1049, 0.0
        %vm3226 = vcmp.ge.f32.partialorder %v1050, 0.0
        %vm3227 = vcmp.ge.f32.partialorder %v1051, 0.0
        %vm3228 = vcmp.ge.f32.partialorder %v1052, 0.0
        %vm3229 = vcmp.ge.f32.partialorder %v1053, 0.0
        %vm3230 = vcmp.ge.f32.partialorder %v1054, 0.0
        %vm3231 = vcmp.ge.f32.partialorder %v1055, 0.0
        %vm3232 = vcmp.ge.f32.partialorder %v1056, 0.0
        %vm3233 = vcmp.ge.f32.partialorder %v1057, 0.0
        %vm3234 = vcmp.ge.f32.partialorder %v1058, 0.0
        %vm3235 = vcmp.ge.f32.partialorder %v1059, 0.0
        %vm3236 = vcmp.ge.f32.partialorder %v1060, 0.0
        %vm3237 = vcmp.ge.f32.partialorder %v1061, 0.0
        %vm3238 = vcmp.ge.f32.partialorder %v1062, 0.0
        %vm3239 = vcmp.ge.f32.partialorder %v1063, 0.0
        %vm3240 = vcmp.ge.f32.partialorder %v1064, 0.0
        %vm3241 = vcmp.ge.f32.partialorder %v1065, 0.0
        %vm3242 = vcmp.ge.f32.partialorder %v1066, 0.0
        %vm3243 = vcmp.ge.f32.partialorder %v1067, 0.0
        %vm3244 = vcmp.ge.f32.partialorder %v1068, 0.0
        %vm3245 = vcmp.ge.f32.partialorder %v1069, 0.0
        %vm3246 = vcmp.ge.f32.partialorder %v1070, 0.0
        %vm3247 = vcmp.ge.f32.partialorder %v1071, 0.0
        %vm3248 = vcmp.ge.f32.partialorder %v1072, 0.0
        %vm3249 = vcmp.ge.f32.partialorder %v1073, 0.0
        %vm3250 = vcmp.ge.f32.partialorder %v1074, 0.0
        %vm3251 = vcmp.ge.f32.partialorder %v1075, 0.0
        %vm3252 = vcmp.ge.f32.partialorder %v1076, 0.0
        %vm3253 = vcmp.ge.f32.partialorder %v1077, 0.0
        %vm3254 = vcmp.ge.f32.partialorder %v1078, 0.0
        %vm3255 = vcmp.ge.f32.partialorder %v1079, 0.0
        %vm3256 = vcmp.ge.f32.partialorder %v1080, 0.0
        %vm3257 = vcmp.ge.f32.partialorder %v1081, 0.0
        %vm3258 = vcmp.ge.f32.partialorder %v1082, 0.0
        %vm3259 = vcmp.ge.f32.partialorder %v1083, 0.0
        %vm3260 = vcmp.ge.f32.partialorder %v1084, 0.0
        %vm3261 = vcmp.ge.f32.partialorder %v1085, 0.0
        %vm3262 = vcmp.ge.f32.partialorder %v1086, 0.0
        %vm3263 = vcmp.ge.f32.partialorder %v1087, 0.0
        %vm3264 = vcmp.ge.f32.partialorder %v1088, 0.0
        %vm3265 = vcmp.ge.f32.partialorder %v1089, 0.0
        %vm3266 = vcmp.ge.f32.partialorder %v1090, 0.0
        %vm3267 = vcmp.ge.f32.partialorder %v1091, 0.0
        %vm3268 = vcmp.ge.f32.partialorder %v1092, 0.0
        %v3269 = vsub.f32 0.0, %v3013
        %v3270 = vsub.f32 0.0, %v3014
        %v3271 = vsub.f32 0.0, %v3015
        %v3272 = vsub.f32 0.0, %v3016
        %v3273 = vsub.f32 0.0, %v3017
        %v3274 = vsub.f32 0.0, %v3018
        %v3275 = vsub.f32 0.0, %v3019
        %v3276 = vsub.f32 0.0, %v3020
        %v3277 = vsub.f32 0.0, %v3021
        %v3278 = vsub.f32 0.0, %v3022
        %v3279 = vsub.f32 0.0, %v3023
        %v3280 = vsub.f32 0.0, %v3024
        %v3281 = vsub.f32 0.0, %v3025
        %v3282 = vsub.f32 0.0, %v3026
        %v3283 = vsub.f32 0.0, %v3027
        %v3284 = vsub.f32 0.0, %v3028
        %v3285 = vsub.f32 0.0, %v3029
        %v3286 = vsub.f32 0.0, %v3030
        %v3287 = vsub.f32 0.0, %v3031
        %v3288 = vsub.f32 0.0, %v3032
        %v3289 = vsub.f32 0.0, %v3033
        %v3290 = vsub.f32 0.0, %v3034
        %v3291 = vsub.f32 0.0, %v3035
        %v3292 = vsub.f32 0.0, %v3036
        %v3293 = vsub.f32 0.0, %v3037
        %v3294 = vsub.f32 0.0, %v3038
        %v3295 = vsub.f32 0.0, %v3039
        %v3296 = vsub.f32 0.0, %v3040
        %v3297 = vsub.f32 0.0, %v3041
        %v3298 = vsub.f32 0.0, %v3042
        %v3299 = vsub.f32 0.0, %v3043
        %v3300 = vsub.f32 0.0, %v3044
        %v3301 = vsub.f32 0.0, %v3045
        %v3302 = vsub.f32 0.0, %v3046
        %v3303 = vsub.f32 0.0, %v3047
        %v3304 = vsub.f32 0.0, %v3048
        %v3305 = vsub.f32 0.0, %v3049
        %v3306 = vsub.f32 0.0, %v3050
        %v3307 = vsub.f32 0.0, %v3051
        %v3308 = vsub.f32 0.0, %v3052
        %v3309 = vsub.f32 0.0, %v3053
        %v3310 = vsub.f32 0.0, %v3054
        %v3311 = vsub.f32 0.0, %v3055
        %v3312 = vsub.f32 0.0, %v3056
        %v3313 = vsub.f32 0.0, %v3057
        %v3314 = vsub.f32 0.0, %v3058
        %v3315 = vsub.f32 0.0, %v3059
        %v3316 = vsub.f32 0.0, %v3060
        %v3317 = vsub.f32 0.0, %v3061
        %v3318 = vsub.f32 0.0, %v3062
        %v3319 = vsub.f32 0.0, %v3063
        %v3320 = vsub.f32 0.0, %v3064
        %v3321 = vsub.f32 0.0, %v3065
        %v3322 = vsub.f32 0.0, %v3066
        %v3323 = vsub.f32 0.0, %v3067
        %v3324 = vsub.f32 0.0, %v3068
        %v3325 = vsub.f32 0.0, %v3069
        %v3326 = vsub.f32 0.0, %v3070
        %v3327 = vsub.f32 0.0, %v3071
        %v3328 = vsub.f32 0.0, %v3072
        %v3329 = vsub.f32 0.0, %v3073
        %v3330 = vsub.f32 0.0, %v3074
        %v3331 = vsub.f32 0.0, %v3075
        %v3332 = vsub.f32 0.0, %v3076
        %v3333 = vsub.f32 0.0, %v3077
        %v3334 = vsub.f32 0.0, %v3078
        %v3335 = vsub.f32 0.0, %v3079
        %v3336 = vsub.f32 0.0, %v3080
        %v3337 = vsub.f32 0.0, %v3081
        %v3338 = vsub.f32 0.0, %v3082
        %v3339 = vsub.f32 0.0, %v3083
        %v3340 = vsub.f32 0.0, %v3084
        %v3341 = vsub.f32 0.0, %v3085
        %v3342 = vsub.f32 0.0, %v3086
        %v3343 = vsub.f32 0.0, %v3087
        %v3344 = vsub.f32 0.0, %v3088
        %v3345 = vsub.f32 0.0, %v3089
        %v3346 = vsub.f32 0.0, %v3090
        %v3347 = vsub.f32 0.0, %v3091
        %v3348 = vsub.f32 0.0, %v3092
        %v3349 = vsub.f32 0.0, %v3093
        %v3350 = vsub.f32 0.0, %v3094
        %v3351 = vsub.f32 0.0, %v3095
        %v3352 = vsub.f32 0.0, %v3096
        %v3353 = vsub.f32 0.0, %v3097
        %v3354 = vsub.f32 0.0, %v3098
        %v3355 = vsub.f32 0.0, %v3099
        %v3356 = vsub.f32 0.0, %v3100
        %v3357 = vsub.f32 0.0, %v3101
        %v3358 = vsub.f32 0.0, %v3102
        %v3359 = vsub.f32 0.0, %v3103
        %v3360 = vsub.f32 0.0, %v3104
        %v3361 = vsub.f32 0.0, %v3105
        %v3362 = vsub.f32 0.0, %v3106
        %v3363 = vsub.f32 0.0, %v3107
        %v3364 = vsub.f32 0.0, %v3108
        %v3365 = vsub.f32 0.0, %v3109
        %v3366 = vsub.f32 0.0, %v3110
        %v3367 = vsub.f32 0.0, %v3111
        %v3368 = vsub.f32 0.0, %v3112
        %v3369 = vsub.f32 0.0, %v3113
        %v3370 = vsub.f32 0.0, %v3114
        %v3371 = vsub.f32 0.0, %v3115
        %v3372 = vsub.f32 0.0, %v3116
        %v3373 = vsub.f32 0.0, %v3117
        %v3374 = vsub.f32 0.0, %v3118
        %v3375 = vsub.f32 0.0, %v3119
        %v3376 = vsub.f32 0.0, %v3120
        %v3377 = vsub.f32 0.0, %v3121
        %v3378 = vsub.f32 0.0, %v3122
        %v3379 = vsub.f32 0.0, %v3123
        %v3380 = vsub.f32 0.0, %v3124
        %v3381 = vsub.f32 0.0, %v3125
        %v3382 = vsub.f32 0.0, %v3126
        %v3383 = vsub.f32 0.0, %v3127
        %v3384 = vsub.f32 0.0, %v3128
        %v3385 = vsub.f32 0.0, %v3129
        %v3386 = vsub.f32 0.0, %v3130
        %v3387 = vsub.f32 0.0, %v3131
        %v3388 = vsub.f32 0.0, %v3132
        %v3389 = vsub.f32 0.0, %v3133
        %v3390 = vsub.f32 0.0, %v3134
        %v3391 = vsub.f32 0.0, %v3135
        %v3392 = vsub.f32 0.0, %v3136
        %v3393 = vsub.f32 0.0, %v3137
        %v3394 = vsub.f32 0.0, %v3138
        %v3395 = vsub.f32 0.0, %v3139
        %v3396 = vsub.f32 0.0, %v3140
        %v3397 = vsel %vm3141, %v3013, %v3269
        %v3398 = vsel %vm3142, %v3014, %v3270
        %v3399 = vsel %vm3143, %v3015, %v3271
        %v3400 = vsel %vm3144, %v3016, %v3272
        %v3401 = vsel %vm3145, %v3017, %v3273
        %v3402 = vsel %vm3146, %v3018, %v3274
        %v3403 = vsel %vm3147, %v3019, %v3275
        %v3404 = vsel %vm3148, %v3020, %v3276
        %v3405 = vsel %vm3149, %v3021, %v3277
        %v3406 = vsel %vm3150, %v3022, %v3278
        %v3407 = vsel %vm3151, %v3023, %v3279
        %v3408 = vsel %vm3152, %v3024, %v3280
        %v3409 = vsel %vm3153, %v3025, %v3281
        %v3410 = vsel %vm3154, %v3026, %v3282
        %v3411 = vsel %vm3155, %v3027, %v3283
        %v3412 = vsel %vm3156, %v3028, %v3284
        %v3413 = vsel %vm3157, %v3029, %v3285
        %v3414 = vsel %vm3158, %v3030, %v3286
        %v3415 = vsel %vm3159, %v3031, %v3287
        %v3416 = vsel %vm3160, %v3032, %v3288
        %v3417 = vsel %vm3161, %v3033, %v3289
        %v3418 = vsel %vm3162, %v3034, %v3290
        %v3419 = vsel %vm3163, %v3035, %v3291
        %v3420 = vsel %vm3164, %v3036, %v3292
        %v3421 = vsel %vm3165, %v3037, %v3293
        %v3422 = vsel %vm3166, %v3038, %v3294
        %v3423 = vsel %vm3167, %v3039, %v3295
        %v3424 = vsel %vm3168, %v3040, %v3296
        %v3425 = vsel %vm3169, %v3041, %v3297
        %v3426 = vsel %vm3170, %v3042, %v3298
        %v3427 = vsel %vm3171, %v3043, %v3299
        %v3428 = vsel %vm3172, %v3044, %v3300
        %v3429 = vsel %vm3173, %v3045, %v3301
        %v3430 = vsel %vm3174, %v3046, %v3302
        %v3431 = vsel %vm3175, %v3047, %v3303
        %v3432 = vsel %vm3176, %v3048, %v3304
        %v3433 = vsel %vm3177, %v3049, %v3305
        %v3434 = vsel %vm3178, %v3050, %v3306
        %v3435 = vsel %vm3179, %v3051, %v3307
        %v3436 = vsel %vm3180, %v3052, %v3308
        %v3437 = vsel %vm3181, %v3053, %v3309
        %v3438 = vsel %vm3182, %v3054, %v3310
        %v3439 = vsel %vm3183, %v3055, %v3311
        %v3440 = vsel %vm3184, %v3056, %v3312
        %v3441 = vsel %vm3185, %v3057, %v3313
        %v3442 = vsel %vm3186, %v3058, %v3314
        %v3443 = vsel %vm3187, %v3059, %v3315
        %v3444 = vsel %vm3188, %v3060, %v3316
        %v3445 = vsel %vm3189, %v3061, %v3317
        %v3446 = vsel %vm3190, %v3062, %v3318
        %v3447 = vsel %vm3191, %v3063, %v3319
        %v3448 = vsel %vm3192, %v3064, %v3320
        %v3449 = vsel %vm3193, %v3065, %v3321
        %v3450 = vsel %vm3194, %v3066, %v3322
        %v3451 = vsel %vm3195, %v3067, %v3323
        %v3452 = vsel %vm3196, %v3068, %v3324
        %v3453 = vsel %vm3197, %v3069, %v3325
        %v3454 = vsel %vm3198, %v3070, %v3326
        %v3455 = vsel %vm3199, %v3071, %v3327
        %v3456 = vsel %vm3200, %v3072, %v3328
        %v3457 = vsel %vm3201, %v3073, %v3329
        %v3458 = vsel %vm3202, %v3074, %v3330
        %v3459 = vsel %vm3203, %v3075, %v3331
        %v3460 = vsel %vm3204, %v3076, %v3332
        %v3461 = vsel %vm3205, %v3077, %v3333
        %v3462 = vsel %vm3206, %v3078, %v3334
        %v3463 = vsel %vm3207, %v3079, %v3335
        %v3464 = vsel %vm3208, %v3080, %v3336
        %v3465 = vsel %vm3209, %v3081, %v3337
        %v3466 = vsel %vm3210, %v3082, %v3338
        %v3467 = vsel %vm3211, %v3083, %v3339
        %v3468 = vsel %vm3212, %v3084, %v3340
        %v3469 = vsel %vm3213, %v3085, %v3341
        %v3470 = vsel %vm3214, %v3086, %v3342
        %v3471 = vsel %vm3215, %v3087, %v3343
        %v3472 = vsel %vm3216, %v3088, %v3344
        %v3473 = vsel %vm3217, %v3089, %v3345
        %v3474 = vsel %vm3218, %v3090, %v3346
        %v3475 = vsel %vm3219, %v3091, %v3347
        %v3476 = vsel %vm3220, %v3092, %v3348
        %v3477 = vsel %vm3221, %v3093, %v3349
        %v3478 = vsel %vm3222, %v3094, %v3350
        %v3479 = vsel %vm3223, %v3095, %v3351
        %v3480 = vsel %vm3224, %v3096, %v3352
        %v3481 = vsel %vm3225, %v3097, %v3353
        %v3482 = vsel %vm3226, %v3098, %v3354
        %v3483 = vsel %vm3227, %v3099, %v3355
        %v3484 = vsel %vm3228, %v3100, %v3356
        %v3485 = vsel %vm3229, %v3101, %v3357
        %v3486 = vsel %vm3230, %v3102, %v3358
        %v3487 = vsel %vm3231, %v3103, %v3359
        %v3488 = vsel %vm3232, %v3104, %v3360
        %v3489 = vsel %vm3233, %v3105, %v3361
        %v3490 = vsel %vm3234, %v3106, %v3362
        %v3491 = vsel %vm3235, %v3107, %v3363
        %v3492 = vsel %vm3236, %v3108, %v3364
        %v3493 = vsel %vm3237, %v3109, %v3365
        %v3494 = vsel %vm3238, %v3110, %v3366
        %v3495 = vsel %vm3239, %v3111, %v3367
        %v3496 = vsel %vm3240, %v3112, %v3368
        %v3497 = vsel %vm3241, %v3113, %v3369
        %v3498 = vsel %vm3242, %v3114, %v3370
        %v3499 = vsel %vm3243, %v3115, %v3371
        %v3500 = vsel %vm3244, %v3116, %v3372
        %v3501 = vsel %vm3245, %v3117, %v3373
        %v3502 = vsel %vm3246, %v3118, %v3374
        %v3503 = vsel %vm3247, %v3119, %v3375
        %v3504 = vsel %vm3248, %v3120, %v3376
        %v3505 = vsel %vm3249, %v3121, %v3377
        %v3506 = vsel %vm3250, %v3122, %v3378
        %v3507 = vsel %vm3251, %v3123, %v3379
        %v3508 = vsel %vm3252, %v3124, %v3380
        %v3509 = vsel %vm3253, %v3125, %v3381
        %v3510 = vsel %vm3254, %v3126, %v3382
        %v3511 = vsel %vm3255, %v3127, %v3383
        %v3512 = vsel %vm3256, %v3128, %v3384
        %v3513 = vsel %vm3257, %v3129, %v3385
        %v3514 = vsel %vm3258, %v3130, %v3386
        %v3515 = vsel %vm3259, %v3131, %v3387
        %v3516 = vsel %vm3260, %v3132, %v3388
        %v3517 = vsel %vm3261, %v3133, %v3389
        %v3518 = vsel %vm3262, %v3134, %v3390
        %v3519 = vsel %vm3263, %v3135, %v3391
        %v3520 = vsel %vm3264, %v3136, %v3392
        %v3521 = vsel %vm3265, %v3137, %v3393
        %v3522 = vsel %vm3266, %v3138, %v3394
        %v3523 = vsel %vm3267, %v3139, %v3395
        %v3524 = vsel %vm3268, %v3140, %v3396
        %v3525 = vadd.f32 %v3397, 1.0
        %v3526 = vadd.f32 %v3398, 1.0
        %v3527 = vadd.f32 %v3399, 1.0
        %v3528 = vadd.f32 %v3400, 1.0
        %v3529 = vadd.f32 %v3401, 1.0
        %v3530 = vadd.f32 %v3402, 1.0
        %v3531 = vadd.f32 %v3403, 1.0
        %v3532 = vadd.f32 %v3404, 1.0
        %v3533 = vadd.f32 %v3405, 1.0
        %v3534 = vadd.f32 %v3406, 1.0
        %v3535 = vadd.f32 %v3407, 1.0
        %v3536 = vadd.f32 %v3408, 1.0
        %v3537 = vadd.f32 %v3409, 1.0
        %v3538 = vadd.f32 %v3410, 1.0
        %v3539 = vadd.f32 %v3411, 1.0
        %v3540 = vadd.f32 %v3412, 1.0
        %v3541 = vadd.f32 %v3413, 1.0
        %v3542 = vadd.f32 %v3414, 1.0
        %v3543 = vadd.f32 %v3415, 1.0
        %v3544 = vadd.f32 %v3416, 1.0
        %v3545 = vadd.f32 %v3417, 1.0
        %v3546 = vadd.f32 %v3418, 1.0
        %v3547 = vadd.f32 %v3419, 1.0
        %v3548 = vadd.f32 %v3420, 1.0
        %v3549 = vadd.f32 %v3421, 1.0
        %v3550 = vadd.f32 %v3422, 1.0
        %v3551 = vadd.f32 %v3423, 1.0
        %v3552 = vadd.f32 %v3424, 1.0
        %v3553 = vadd.f32 %v3425, 1.0
        %v3554 = vadd.f32 %v3426, 1.0
        %v3555 = vadd.f32 %v3427, 1.0
        %v3556 = vadd.f32 %v3428, 1.0
        %v3557 = vadd.f32 %v3429, 1.0
        %v3558 = vadd.f32 %v3430, 1.0
        %v3559 = vadd.f32 %v3431, 1.0
        %v3560 = vadd.f32 %v3432, 1.0
        %v3561 = vadd.f32 %v3433, 1.0
        %v3562 = vadd.f32 %v3434, 1.0
        %v3563 = vadd.f32 %v3435, 1.0
        %v3564 = vadd.f32 %v3436, 1.0
        %v3565 = vadd.f32 %v3437, 1.0
        %v3566 = vadd.f32 %v3438, 1.0
        %v3567 = vadd.f32 %v3439, 1.0
        %v3568 = vadd.f32 %v3440, 1.0
        %v3569 = vadd.f32 %v3441, 1.0
        %v3570 = vadd.f32 %v3442, 1.0
        %v3571 = vadd.f32 %v3443, 1.0
        %v3572 = vadd.f32 %v3444, 1.0
        %v3573 = vadd.f32 %v3445, 1.0
        %v3574 = vadd.f32 %v3446, 1.0
        %v3575 = vadd.f32 %v3447, 1.0
        %v3576 = vadd.f32 %v3448, 1.0
        %v3577 = vadd.f32 %v3449, 1.0
        %v3578 = vadd.f32 %v3450, 1.0
        %v3579 = vadd.f32 %v3451, 1.0
        %v3580 = vadd.f32 %v3452, 1.0
        %v3581 = vadd.f32 %v3453, 1.0
        %v3582 = vadd.f32 %v3454, 1.0
        %v3583 = vadd.f32 %v3455, 1.0
        %v3584 = vadd.f32 %v3456, 1.0
        %v3585 = vadd.f32 %v3457, 1.0
        %v3586 = vadd.f32 %v3458, 1.0
        %v3587 = vadd.f32 %v3459, 1.0
        %v3588 = vadd.f32 %v3460, 1.0
        %v3589 = vadd.f32 %v3461, 1.0
        %v3590 = vadd.f32 %v3462, 1.0
        %v3591 = vadd.f32 %v3463, 1.0
        %v3592 = vadd.f32 %v3464, 1.0
        %v3593 = vadd.f32 %v3465, 1.0
        %v3594 = vadd.f32 %v3466, 1.0
        %v3595 = vadd.f32 %v3467, 1.0
        %v3596 = vadd.f32 %v3468, 1.0
        %v3597 = vadd.f32 %v3469, 1.0
        %v3598 = vadd.f32 %v3470, 1.0
        %v3599 = vadd.f32 %v3471, 1.0
        %v3600 = vadd.f32 %v3472, 1.0
        %v3601 = vadd.f32 %v3473, 1.0
        %v3602 = vadd.f32 %v3474, 1.0
        %v3603 = vadd.f32 %v3475, 1.0
        %v3604 = vadd.f32 %v3476, 1.0
        %v3605 = vadd.f32 %v3477, 1.0
        %v3606 = vadd.f32 %v3478, 1.0
        %v3607 = vadd.f32 %v3479, 1.0
        %v3608 = vadd.f32 %v3480, 1.0
        %v3609 = vadd.f32 %v3481, 1.0
        %v3610 = vadd.f32 %v3482, 1.0
        %v3611 = vadd.f32 %v3483, 1.0
        %v3612 = vadd.f32 %v3484, 1.0
        %v3613 = vadd.f32 %v3485, 1.0
        %v3614 = vadd.f32 %v3486, 1.0
        %v3615 = vadd.f32 %v3487, 1.0
        %v3616 = vadd.f32 %v3488, 1.0
        %v3617 = vadd.f32 %v3489, 1.0
        %v3618 = vadd.f32 %v3490, 1.0
        %v3619 = vadd.f32 %v3491, 1.0
        %v3620 = vadd.f32 %v3492, 1.0
        %v3621 = vadd.f32 %v3493, 1.0
        %v3622 = vadd.f32 %v3494, 1.0
        %v3623 = vadd.f32 %v3495, 1.0
        %v3624 = vadd.f32 %v3496, 1.0
        %v3625 = vadd.f32 %v3497, 1.0
        %v3626 = vadd.f32 %v3498, 1.0
        %v3627 = vadd.f32 %v3499, 1.0
        %v3628 = vadd.f32 %v3500, 1.0
        %v3629 = vadd.f32 %v3501, 1.0
        %v3630 = vadd.f32 %v3502, 1.0
        %v3631 = vadd.f32 %v3503, 1.0
        %v3632 = vadd.f32 %v3504, 1.0
        %v3633 = vadd.f32 %v3505, 1.0
        %v3634 = vadd.f32 %v3506, 1.0
        %v3635 = vadd.f32 %v3507, 1.0
        %v3636 = vadd.f32 %v3508, 1.0
        %v3637 = vadd.f32 %v3509, 1.0
        %v3638 = vadd.f32 %v3510, 1.0
        %v3639 = vadd.f32 %v3511, 1.0
        %v3640 = vadd.f32 %v3512, 1.0
        %v3641 = vadd.f32 %v3513, 1.0
        %v3642 = vadd.f32 %v3514, 1.0
        %v3643 = vadd.f32 %v3515, 1.0
        %v3644 = vadd.f32 %v3516, 1.0
        %v3645 = vadd.f32 %v3517, 1.0
        %v3646 = vadd.f32 %v3518, 1.0
        %v3647 = vadd.f32 %v3519, 1.0
        %v3648 = vadd.f32 %v3520, 1.0
        %v3649 = vadd.f32 %v3521, 1.0
        %v3650 = vadd.f32 %v3522, 1.0
        %v3651 = vadd.f32 %v3523, 1.0
        %v3652 = vadd.f32 %v3524, 1.0
        %v3653 = vmul.f32 %v837, %v3525
        %v3654 = vmul.f32 %v838, %v3526
        %v3655 = vmul.f32 %v839, %v3527
        %v3656 = vmul.f32 %v840, %v3528
        %v3657 = vmul.f32 %v841, %v3529
        %v3658 = vmul.f32 %v842, %v3530
        %v3659 = vmul.f32 %v843, %v3531
        %v3660 = vmul.f32 %v844, %v3532
        %v3661 = vmul.f32 %v845, %v3533
        %v3662 = vmul.f32 %v846, %v3534
        %v3663 = vmul.f32 %v847, %v3535
        %v3664 = vmul.f32 %v848, %v3536
        %v3665 = vmul.f32 %v849, %v3537
        %v3666 = vmul.f32 %v850, %v3538
        %v3667 = vmul.f32 %v851, %v3539
        %v3668 = vmul.f32 %v852, %v3540
        %v3669 = vmul.f32 %v853, %v3541
        %v3670 = vmul.f32 %v854, %v3542
        %v3671 = vmul.f32 %v855, %v3543
        %v3672 = vmul.f32 %v856, %v3544
        %v3673 = vmul.f32 %v857, %v3545
        %v3674 = vmul.f32 %v858, %v3546
        %v3675 = vmul.f32 %v859, %v3547
        %v3676 = vmul.f32 %v860, %v3548
        %v3677 = vmul.f32 %v861, %v3549
        %v3678 = vmul.f32 %v862, %v3550
        %v3679 = vmul.f32 %v863, %v3551
        %v3680 = vmul.f32 %v864, %v3552
        %v3681 = vmul.f32 %v865, %v3553
        %v3682 = vmul.f32 %v866, %v3554
        %v3683 = vmul.f32 %v867, %v3555
        %v3684 = vmul.f32 %v868, %v3556
        %v3685 = vmul.f32 %v869, %v3557
        %v3686 = vmul.f32 %v870, %v3558
        %v3687 = vmul.f32 %v871, %v3559
        %v3688 = vmul.f32 %v872, %v3560
        %v3689 = vmul.f32 %v873, %v3561
        %v3690 = vmul.f32 %v874, %v3562
        %v3691 = vmul.f32 %v875, %v3563
        %v3692 = vmul.f32 %v876, %v3564
        %v3693 = vmul.f32 %v877, %v3565
        %v3694 = vmul.f32 %v878, %v3566
        %v3695 = vmul.f32 %v879, %v3567
        %v3696 = vmul.f32 %v880, %v3568
        %v3697 = vmul.f32 %v881, %v3569
        %v3698 = vmul.f32 %v882, %v3570
        %v3699 = vmul.f32 %v883, %v3571
        %v3700 = vmul.f32 %v884, %v3572
        %v3701 = vmul.f32 %v885, %v3573
        %v3702 = vmul.f32 %v886, %v3574
        %v3703 = vmul.f32 %v887, %v3575
        %v3704 = vmul.f32 %v888, %v3576
        %v3705 = vmul.f32 %v889, %v3577
        %v3706 = vmul.f32 %v890, %v3578
        %v3707 = vmul.f32 %v891, %v3579
        %v3708 = vmul.f32 %v892, %v3580
        %v3709 = vmul.f32 %v893, %v3581
        %v3710 = vmul.f32 %v894, %v3582
        %v3711 = vmul.f32 %v895, %v3583
        %v3712 = vmul.f32 %v896, %v3584
        %v3713 = vmul.f32 %v897, %v3585
        %v3714 = vmul.f32 %v898, %v3586
        %v3715 = vmul.f32 %v899, %v3587
        %v3716 = vmul.f32 %v900, %v3588
        %v3717 = vmul.f32 %v901, %v3589
        %v3718 = vmul.f32 %v902, %v3590
        %v3719 = vmul.f32 %v903, %v3591
        %v3720 = vmul.f32 %v904, %v3592
        %v3721 = vmul.f32 %v905, %v3593
        %v3722 = vmul.f32 %v906, %v3594
        %v3723 = vmul.f32 %v907, %v3595
        %v3724 = vmul.f32 %v908, %v3596
        %v3725 = vmul.f32 %v909, %v3597
        %v3726 = vmul.f32 %v910, %v3598
        %v3727 = vmul.f32 %v911, %v3599
        %v3728 = vmul.f32 %v912, %v3600
        %v3729 = vmul.f32 %v913, %v3601
        %v3730 = vmul.f32 %v914, %v3602
        %v3731 = vmul.f32 %v915, %v3603
        %v3732 = vmul.f32 %v916, %v3604
        %v3733 = vmul.f32 %v917, %v3605
        %v3734 = vmul.f32 %v918, %v3606
        %v3735 = vmul.f32 %v919, %v3607
        %v3736 = vmul.f32 %v920, %v3608
        %v3737 = vmul.f32 %v921, %v3609
        %v3738 = vmul.f32 %v922, %v3610
        %v3739 = vmul.f32 %v923, %v3611
        %v3740 = vmul.f32 %v924, %v3612
        %v3741 = vmul.f32 %v925, %v3613
        %v3742 = vmul.f32 %v926, %v3614
        %v3743 = vmul.f32 %v927, %v3615
        %v3744 = vmul.f32 %v928, %v3616
        %v3745 = vmul.f32 %v929, %v3617
        %v3746 = vmul.f32 %v930, %v3618
        %v3747 = vmul.f32 %v931, %v3619
        %v3748 = vmul.f32 %v932, %v3620
        %v3749 = vmul.f32 %v933, %v3621
        %v3750 = vmul.f32 %v934, %v3622
        %v3751 = vmul.f32 %v935, %v3623
        %v3752 = vmul.f32 %v936, %v3624
        %v3753 = vmul.f32 %v937, %v3625
        %v3754 = vmul.f32 %v938, %v3626
        %v3755 = vmul.f32 %v939, %v3627
        %v3756 = vmul.f32 %v940, %v3628
        %v3757 = vmul.f32 %v941, %v3629
        %v3758 = vmul.f32 %v942, %v3630
        %v3759 = vmul.f32 %v943, %v3631
        %v3760 = vmul.f32 %v944, %v3632
        %v3761 = vmul.f32 %v945, %v3633
        %v3762 = vmul.f32 %v946, %v3634
        %v3763 = vmul.f32 %v947, %v3635
        %v3764 = vmul.f32 %v948, %v3636
        %v3765 = vmul.f32 %v949, %v3637
        %v3766 = vmul.f32 %v950, %v3638
        %v3767 = vmul.f32 %v951, %v3639
        %v3768 = vmul.f32 %v952, %v3640
        %v3769 = vmul.f32 %v953, %v3641
        %v3770 = vmul.f32 %v954, %v3642
        %v3771 = vmul.f32 %v955, %v3643
        %v3772 = vmul.f32 %v956, %v3644
        %v3773 = vmul.f32 %v957, %v3645
        %v3774 = vmul.f32 %v958, %v3646
        %v3775 = vmul.f32 %v959, %v3647
        %v3776 = vmul.f32 %v960, %v3648
        %v3777 = vmul.f32 %v961, %v3649
        %v3778 = vmul.f32 %v962, %v3650
        %v3779 = vmul.f32 %v963, %v3651
        %v3780 = vmul.f32 %v964, %v3652
        %v3781 = vpack.c.bf16 %v3655, %v3653
        %v3782 = vpack.c.bf16 %v3656, %v3654
        %v3783 = vpack.c.bf16 %v3659, %v3657
        %v3784 = vpack.c.bf16 %v3660, %v3658
        %v3785 = vpack.c.bf16 %v3663, %v3661
        %v3786 = vpack.c.bf16 %v3664, %v3662
        %v3787 = vpack.c.bf16 %v3667, %v3665
        %v3788 = vpack.c.bf16 %v3668, %v3666
        %v3789 = vpack.c.bf16 %v3671, %v3669
        %v3790 = vpack.c.bf16 %v3672, %v3670
        %v3791 = vpack.c.bf16 %v3675, %v3673
        %v3792 = vpack.c.bf16 %v3676, %v3674
        %v3793 = vpack.c.bf16 %v3679, %v3677
        %v3794 = vpack.c.bf16 %v3680, %v3678
        %v3795 = vpack.c.bf16 %v3683, %v3681
        %v3796 = vpack.c.bf16 %v3684, %v3682
        %v3797 = vpack.c.bf16 %v3687, %v3685
        %v3798 = vpack.c.bf16 %v3688, %v3686
        %v3799 = vpack.c.bf16 %v3691, %v3689
        %v3800 = vpack.c.bf16 %v3692, %v3690
        %v3801 = vpack.c.bf16 %v3695, %v3693
        %v3802 = vpack.c.bf16 %v3696, %v3694
        %v3803 = vpack.c.bf16 %v3699, %v3697
        %v3804 = vpack.c.bf16 %v3700, %v3698
        %v3805 = vpack.c.bf16 %v3703, %v3701
        %v3806 = vpack.c.bf16 %v3704, %v3702
        %v3807 = vpack.c.bf16 %v3707, %v3705
        %v3808 = vpack.c.bf16 %v3708, %v3706
        %v3809 = vpack.c.bf16 %v3711, %v3709
        %v3810 = vpack.c.bf16 %v3712, %v3710
        %v3811 = vpack.c.bf16 %v3715, %v3713
        %v3812 = vpack.c.bf16 %v3716, %v3714
        %v3813 = vpack.c.bf16 %v3719, %v3717
        %v3814 = vpack.c.bf16 %v3720, %v3718
        %v3815 = vpack.c.bf16 %v3723, %v3721
        %v3816 = vpack.c.bf16 %v3724, %v3722
        %v3817 = vpack.c.bf16 %v3727, %v3725
        %v3818 = vpack.c.bf16 %v3728, %v3726
        %v3819 = vpack.c.bf16 %v3731, %v3729
        %v3820 = vpack.c.bf16 %v3732, %v3730
        %v3821 = vpack.c.bf16 %v3735, %v3733
        %v3822 = vpack.c.bf16 %v3736, %v3734
        %v3823 = vpack.c.bf16 %v3739, %v3737
        %v3824 = vpack.c.bf16 %v3740, %v3738
        %v3825 = vpack.c.bf16 %v3743, %v3741
        %v3826 = vpack.c.bf16 %v3744, %v3742
        %v3827 = vpack.c.bf16 %v3747, %v3745
        %v3828 = vpack.c.bf16 %v3748, %v3746
        %v3829 = vpack.c.bf16 %v3751, %v3749
        %v3830 = vpack.c.bf16 %v3752, %v3750
        %v3831 = vpack.c.bf16 %v3755, %v3753
        %v3832 = vpack.c.bf16 %v3756, %v3754
        %v3833 = vpack.c.bf16 %v3759, %v3757
        %v3834 = vpack.c.bf16 %v3760, %v3758
        %v3835 = vpack.c.bf16 %v3763, %v3761
        %v3836 = vpack.c.bf16 %v3764, %v3762
        %v3837 = vpack.c.bf16 %v3767, %v3765
        %v3838 = vpack.c.bf16 %v3768, %v3766
        %v3839 = vpack.c.bf16 %v3771, %v3769
        %v3840 = vpack.c.bf16 %v3772, %v3770
        %v3841 = vpack.c.bf16 %v3775, %v3773
        %v3842 = vpack.c.bf16 %v3776, %v3774
        %v3843 = vpack.c.bf16 %v3779, %v3777
        %v3844 = vpack.c.bf16 %v3780, %v3778
        %v3845 = vld [vmem:[#allocation7] sm:$0xf]
        %v3846 = vld [vmem:[#allocation7 + $0x4] sm:$0xf]
        %v3847 = vld [vmem:[#allocation7 + $0x8] sm:$0xf]
        %v3848 = vld [vmem:[#allocation7 + $0xc] sm:$0xf]
        %v3849 = vld [vmem:[#allocation7 + $0x10] sm:$0xf]
        %v3850 = vld [vmem:[#allocation7 + $0x14] sm:$0xf]
        %v3851 = vld [vmem:[#allocation7 + $0x18] sm:$0xf]
        %v3852 = vld [vmem:[#allocation7 + $0x1c] sm:$0xf]
        %v3853 = vld [vmem:[#allocation7 + $0x20] sm:$0xf]
        %v3854 = vld [vmem:[#allocation7 + $0x24] sm:$0xf]
        %v3855 = vld [vmem:[#allocation7 + $0x28] sm:$0xf]
        %v3856 = vld [vmem:[#allocation7 + $0x2c] sm:$0xf]
        %v3857 = vld [vmem:[#allocation7 + $0x30] sm:$0xf]
        %v3858 = vld [vmem:[#allocation7 + $0x34] sm:$0xf]
        %v3859 = vld [vmem:[#allocation7 + $0x38] sm:$0xf]
        %v3860 = vld [vmem:[#allocation7 + $0x3c] sm:$0xf]
        %v3861 = vld [vmem:[#allocation7 + $0x40] sm:$0xf]
        %v3862 = vld [vmem:[#allocation7 + $0x44] sm:$0xf]
        %v3863 = vld [vmem:[#allocation7 + $0x48] sm:$0xf]
        %v3864 = vld [vmem:[#allocation7 + $0x4c] sm:$0xf]
        %v3865 = vld [vmem:[#allocation7 + $0x50] sm:$0xf]
        %v3866 = vld [vmem:[#allocation7 + $0x54] sm:$0xf]
        %v3867 = vld [vmem:[#allocation7 + $0x58] sm:$0xf]
        %v3868 = vld [vmem:[#allocation7 + $0x5c] sm:$0xf]
        %v3869 = vld [vmem:[#allocation7 + $0x60] sm:$0xf]
        %v3870 = vld [vmem:[#allocation7 + $0x64] sm:$0xf]
        %v3871 = vld [vmem:[#allocation7 + $0x68] sm:$0xf]
        %v3872 = vld [vmem:[#allocation7 + $0x6c] sm:$0xf]
        %v3873 = vld [vmem:[#allocation7 + $0x70] sm:$0xf]
        %v3874 = vld [vmem:[#allocation7 + $0x74] sm:$0xf]
        %v3875 = vld [vmem:[#allocation7 + $0x78] sm:$0xf]
        %v3876 = vld [vmem:[#allocation7 + $0x7c] sm:$0xf]
        %v3877 = vld [vmem:[%s4] sm:$0x1]
        %v3879 = vlaneseq
        %v3880 = vshrl.u32 %v3879, 7
        %v3881 = vsub.s32 0, %v3880
        %v3882 = vrot.slane %v3877, %v3881
        %v3916 = vunpack.c.l.b16 %v3845
        %v3917 = vunpack.c.l.b16 %v3846
        %v3918 = vunpack.c.l.b16 %v3847
        %v3919 = vunpack.c.l.b16 %v3848
        %v3920 = vunpack.c.l.b16 %v3849
        %v3921 = vunpack.c.l.b16 %v3850
        %v3922 = vunpack.c.l.b16 %v3851
        %v3923 = vunpack.c.l.b16 %v3852
        %v3924 = vunpack.c.l.b16 %v3853
        %v3925 = vunpack.c.l.b16 %v3854
        %v3926 = vunpack.c.l.b16 %v3855
        %v3927 = vunpack.c.l.b16 %v3856
        %v3928 = vunpack.c.l.b16 %v3857
        %v3929 = vunpack.c.l.b16 %v3858
        %v3930 = vunpack.c.l.b16 %v3859
        %v3931 = vunpack.c.l.b16 %v3860
        %v3932 = vunpack.c.l.b16 %v3861
        %v3933 = vunpack.c.l.b16 %v3862
        %v3934 = vunpack.c.l.b16 %v3863
        %v3935 = vunpack.c.l.b16 %v3864
        %v3936 = vunpack.c.l.b16 %v3865
        %v3937 = vunpack.c.l.b16 %v3866
        %v3938 = vunpack.c.l.b16 %v3867
        %v3939 = vunpack.c.l.b16 %v3868
        %v3940 = vunpack.c.l.b16 %v3869
        %v3941 = vunpack.c.l.b16 %v3870
        %v3942 = vunpack.c.l.b16 %v3871
        %v3943 = vunpack.c.l.b16 %v3872
        %v3944 = vunpack.c.l.b16 %v3873
        %v3945 = vunpack.c.l.b16 %v3874
        %v3946 = vunpack.c.l.b16 %v3875
        %v3947 = vunpack.c.l.b16 %v3876
        %v3948 = vpack.c.b16 %v3917, %v3916
        %v3949 = vpack.c.b16 %v3919, %v3918
        %v3950 = vpack.c.b16 %v3921, %v3920
        %v3951 = vpack.c.b16 %v3923, %v3922
        %v3952 = vpack.c.b16 %v3925, %v3924
        %v3953 = vpack.c.b16 %v3927, %v3926
        %v3954 = vpack.c.b16 %v3929, %v3928
        %v3955 = vpack.c.b16 %v3931, %v3930
        %v3956 = vpack.c.b16 %v3933, %v3932
        %v3957 = vpack.c.b16 %v3935, %v3934
        %v3958 = vpack.c.b16 %v3937, %v3936
        %v3959 = vpack.c.b16 %v3939, %v3938
        %v3960 = vpack.c.b16 %v3941, %v3940
        %v3961 = vpack.c.b16 %v3943, %v3942
        %v3962 = vpack.c.b16 %v3945, %v3944
        %v3963 = vpack.c.b16 %v3947, %v3946
        %3980 = vmatprep.subr.bf16.mxu0 0
        %3981 = vmatpush1.bf16.msra.mxu0 %v3955
        %3982 = vmatprep.subr.bf16.mxu0 0
        %3983 = vmatpush1.bf16.msra.mxu0 %v3954
        %3984 = vmatprep.subr.bf16.mxu0 0
        %3985 = vmatpush1.bf16.msra.mxu0 %v3953
        %3986 = vmatprep.subr.bf16.mxu0 0
        %3987 = vmatpush1.bf16.msra.mxu0 %v3952
        %3988 = vmatprep.subr.bf16.mxu0 0
        %3989 = vmatpush1.bf16.msra.mxu0 %v3951
        %3990 = vmatprep.subr.bf16.mxu0 0
        %3991 = vmatpush1.bf16.msra.mxu0 %v3950
        %3992 = vmatprep.subr.bf16.mxu0 0
        %3993 = vmatpush1.bf16.msra.mxu0 %v3949
        %3994 = vmatprep.subr.bf16.mxu0 0
        %3995 = vmatpush1.bf16.msra.mxu0 %v3948
        %3996 = vmatprep.subr.bf16.mxu0 0
        %3997 = vmatpush2.bf16.msra.mxu0 %v3963
        %3998 = vmatprep.subr.bf16.mxu0 0
        %3999 = vmatpush2.bf16.msra.mxu0 %v3962
        %4000 = vmatprep.subr.bf16.mxu0 0
        %4001 = vmatpush2.bf16.msra.mxu0 %v3961
        %4002 = vmatprep.subr.bf16.mxu0 0
        %4003 = vmatpush2.bf16.msra.mxu0 %v3960
        %4004 = vmatprep.subr.bf16.mxu0 0
        %4005 = vmatpush2.bf16.msra.mxu0 %v3959
        %4006 = vmatprep.subr.bf16.mxu0 0
        %4007 = vmatpush2.bf16.msra.mxu0 %v3958
        %4008 = vmatprep.subr.bf16.mxu0 0
        %4009 = vmatpush2.bf16.msra.mxu0 %v3957
        %4010 = vmatprep.subr.bf16.mxu0 0
        %4011 = vmatpush2.bf16.msra.mxu0 %v3956
        %4012 = vmatprep.mubr.bf16.mxu0 %v3782
        %4013 = vmatmul.mubr.bf16.gmra.mxu0 %v3781
        %v4014 = vpop.f32.mrf.mxu0
        %v4015 = vadd.f32 %v3882, %v4014
        %v4016 = vpop.f32.mrf.mxu0
        %v4017 = vpop.f32.mrf.mxu0
        %v4018 = vadd.f32 %v3882, %v4017
        %v4019 = vpop.f32.mrf.mxu0
        %4020 = vmatprep.mubr.bf16.mxu0 %v3784
        %4021 = vmatmul.mubr.bf16.gmra.mxu0 %v3783
        %v4022 = vpop.f32.mrf.mxu0
        %v4023 = vadd.f32 %v3882, %v4022
        %v4024 = vpop.f32.mrf.mxu0
        %v4025 = vpop.f32.mrf.mxu0
        %v4026 = vadd.f32 %v3882, %v4025
        %v4027 = vpop.f32.mrf.mxu0
        %4028 = vmatprep.mubr.bf16.mxu0 %v3786
        %4029 = vmatmul.mubr.bf16.gmra.mxu0 %v3785
        %v4030 = vpop.f32.mrf.mxu0
        %v4031 = vadd.f32 %v3882, %v4030
        %v4032 = vpop.f32.mrf.mxu0
        %v4033 = vpop.f32.mrf.mxu0
        %v4034 = vadd.f32 %v3882, %v4033
        %v4035 = vpop.f32.mrf.mxu0
        %4036 = vmatprep.mubr.bf16.mxu0 %v3788
        %4037 = vmatmul.mubr.bf16.gmra.mxu0 %v3787
        %v4038 = vpop.f32.mrf.mxu0
        %v4039 = vadd.f32 %v3882, %v4038
        %v4040 = vpop.f32.mrf.mxu0
        %v4041 = vpop.f32.mrf.mxu0
        %v4042 = vadd.f32 %v3882, %v4041
        %v4043 = vpop.f32.mrf.mxu0
        %4044 = vmatprep.mubr.bf16.mxu0 %v3790
        %4045 = vmatmul.mubr.bf16.gmra.mxu0 %v3789
        %v4046 = vpop.f32.mrf.mxu0
        %v4047 = vadd.f32 %v3882, %v4046
        %v4048 = vpop.f32.mrf.mxu0
        %v4049 = vpop.f32.mrf.mxu0
        %v4050 = vadd.f32 %v3882, %v4049
        %v4051 = vpop.f32.mrf.mxu0
        %4052 = vmatprep.mubr.bf16.mxu0 %v3792
        %4053 = vmatmul.mubr.bf16.gmra.mxu0 %v3791
        %v4054 = vpop.f32.mrf.mxu0
        %v4055 = vadd.f32 %v3882, %v4054
        %v4056 = vpop.f32.mrf.mxu0
        %v4057 = vpop.f32.mrf.mxu0
        %v4058 = vadd.f32 %v3882, %v4057
        %v4059 = vpop.f32.mrf.mxu0
        %4060 = vmatprep.mubr.bf16.mxu0 %v3794
        %4061 = vmatmul.mubr.bf16.gmra.mxu0 %v3793
        %v4062 = vpop.f32.mrf.mxu0
        %v4063 = vadd.f32 %v3882, %v4062
        %v4064 = vpop.f32.mrf.mxu0
        %v4065 = vpop.f32.mrf.mxu0
        %v4066 = vadd.f32 %v3882, %v4065
        %v4067 = vpop.f32.mrf.mxu0
        %4068 = vmatprep.mubr.bf16.mxu0 %v3796
        %4069 = vmatmul.mubr.bf16.gmra.mxu0 %v3795
        %v4070 = vpop.f32.mrf.mxu0
        %v4071 = vadd.f32 %v3882, %v4070
        %v4072 = vpop.f32.mrf.mxu0
        %v4073 = vpop.f32.mrf.mxu0
        %v4074 = vadd.f32 %v3882, %v4073
        %v4075 = vpop.f32.mrf.mxu0
        %4076 = vmatprep.mubr.bf16.mxu0 %v3798
        %4077 = vmatmul.mubr.bf16.gmra.mxu0 %v3797
        %v4078 = vpop.f32.mrf.mxu0
        %v4079 = vadd.f32 %v3882, %v4078
        %v4080 = vpop.f32.mrf.mxu0
        %v4081 = vpop.f32.mrf.mxu0
        %v4082 = vadd.f32 %v3882, %v4081
        %v4083 = vpop.f32.mrf.mxu0
        %4084 = vmatprep.mubr.bf16.mxu0 %v3800
        %4085 = vmatmul.mubr.bf16.gmra.mxu0 %v3799
        %v4086 = vpop.f32.mrf.mxu0
        %v4087 = vadd.f32 %v3882, %v4086
        %v4088 = vpop.f32.mrf.mxu0
        %v4089 = vpop.f32.mrf.mxu0
        %v4090 = vadd.f32 %v3882, %v4089
        %v4091 = vpop.f32.mrf.mxu0
        %4092 = vmatprep.mubr.bf16.mxu0 %v3802
        %4093 = vmatmul.mubr.bf16.gmra.mxu0 %v3801
        %v4094 = vpop.f32.mrf.mxu0
        %v4095 = vadd.f32 %v3882, %v4094
        %v4096 = vpop.f32.mrf.mxu0
        %v4097 = vpop.f32.mrf.mxu0
        %v4098 = vadd.f32 %v3882, %v4097
        %v4099 = vpop.f32.mrf.mxu0
        %4100 = vmatprep.mubr.bf16.mxu0 %v3804
        %4101 = vmatmul.mubr.bf16.gmra.mxu0 %v3803
        %v4102 = vpop.f32.mrf.mxu0
        %v4103 = vadd.f32 %v3882, %v4102
        %v4104 = vpop.f32.mrf.mxu0
        %v4105 = vpop.f32.mrf.mxu0
        %v4106 = vadd.f32 %v3882, %v4105
        %v4107 = vpop.f32.mrf.mxu0
        %4108 = vmatprep.mubr.bf16.mxu0 %v3806
        %4109 = vmatmul.mubr.bf16.gmra.mxu0 %v3805
        %v4110 = vpop.f32.mrf.mxu0
        %v4111 = vadd.f32 %v3882, %v4110
        %v4112 = vpop.f32.mrf.mxu0
        %v4113 = vpop.f32.mrf.mxu0
        %v4114 = vadd.f32 %v3882, %v4113
        %v4115 = vpop.f32.mrf.mxu0
        %4116 = vmatprep.mubr.bf16.mxu0 %v3808
        %4117 = vmatmul.mubr.bf16.gmra.mxu0 %v3807
        %v4118 = vpop.f32.mrf.mxu0
        %v4119 = vadd.f32 %v3882, %v4118
        %v4120 = vpop.f32.mrf.mxu0
        %v4121 = vpop.f32.mrf.mxu0
        %v4122 = vadd.f32 %v3882, %v4121
        %v4123 = vpop.f32.mrf.mxu0
        %4124 = vmatprep.mubr.bf16.mxu0 %v3810
        %4125 = vmatmul.mubr.bf16.gmra.mxu0 %v3809
        %v4126 = vpop.f32.mrf.mxu0
        %v4127 = vadd.f32 %v3882, %v4126
        %v4128 = vpop.f32.mrf.mxu0
        %v4129 = vpop.f32.mrf.mxu0
        %v4130 = vadd.f32 %v3882, %v4129
        %v4131 = vpop.f32.mrf.mxu0
        %4132 = vmatprep.mubr.bf16.mxu0 %v3812
        %4133 = vmatmul.mubr.bf16.gmra.mxu0 %v3811
        %v4134 = vpop.f32.mrf.mxu0
        %v4135 = vadd.f32 %v3882, %v4134
        %v4136 = vpop.f32.mrf.mxu0
        %v4137 = vpop.f32.mrf.mxu0
        %v4138 = vadd.f32 %v3882, %v4137
        %v4139 = vpop.f32.mrf.mxu0
        %4140 = vmatprep.mubr.bf16.mxu0 %v3814
        %4141 = vmatmul.mubr.bf16.gmra.mxu0 %v3813
        %v4142 = vpop.f32.mrf.mxu0
        %v4143 = vadd.f32 %v3882, %v4142
        %v4144 = vpop.f32.mrf.mxu0
        %v4145 = vpop.f32.mrf.mxu0
        %v4146 = vadd.f32 %v3882, %v4145
        %v4147 = vpop.f32.mrf.mxu0
        %4148 = vmatprep.mubr.bf16.mxu0 %v3816
        %4149 = vmatmul.mubr.bf16.gmra.mxu0 %v3815
        %v4150 = vpop.f32.mrf.mxu0
        %v4151 = vadd.f32 %v3882, %v4150
        %v4152 = vpop.f32.mrf.mxu0
        %v4153 = vpop.f32.mrf.mxu0
        %v4154 = vadd.f32 %v3882, %v4153
        %v4155 = vpop.f32.mrf.mxu0
        %4156 = vmatprep.mubr.bf16.mxu0 %v3818
        %4157 = vmatmul.mubr.bf16.gmra.mxu0 %v3817
        %v4158 = vpop.f32.mrf.mxu0
        %v4159 = vadd.f32 %v3882, %v4158
        %v4160 = vpop.f32.mrf.mxu0
        %v4161 = vpop.f32.mrf.mxu0
        %v4162 = vadd.f32 %v3882, %v4161
        %v4163 = vpop.f32.mrf.mxu0
        %4164 = vmatprep.mubr.bf16.mxu0 %v3820
        %4165 = vmatmul.mubr.bf16.gmra.mxu0 %v3819
        %v4166 = vpop.f32.mrf.mxu0
        %v4167 = vadd.f32 %v3882, %v4166
        %v4168 = vpop.f32.mrf.mxu0
        %v4169 = vpop.f32.mrf.mxu0
        %v4170 = vadd.f32 %v3882, %v4169
        %v4171 = vpop.f32.mrf.mxu0
        %4172 = vmatprep.mubr.bf16.mxu0 %v3822
        %4173 = vmatmul.mubr.bf16.gmra.mxu0 %v3821
        %v4174 = vpop.f32.mrf.mxu0
        %v4175 = vadd.f32 %v3882, %v4174
        %v4176 = vpop.f32.mrf.mxu0
        %v4177 = vpop.f32.mrf.mxu0
        %v4178 = vadd.f32 %v3882, %v4177
        %v4179 = vpop.f32.mrf.mxu0
        %4180 = vmatprep.mubr.bf16.mxu0 %v3824
        %4181 = vmatmul.mubr.bf16.gmra.mxu0 %v3823
        %v4182 = vpop.f32.mrf.mxu0
        %v4183 = vadd.f32 %v3882, %v4182
        %v4184 = vpop.f32.mrf.mxu0
        %v4185 = vpop.f32.mrf.mxu0
        %v4186 = vadd.f32 %v3882, %v4185
        %v4187 = vpop.f32.mrf.mxu0
        %4188 = vmatprep.mubr.bf16.mxu0 %v3826
        %4189 = vmatmul.mubr.bf16.gmra.mxu0 %v3825
        %v4190 = vpop.f32.mrf.mxu0
        %v4191 = vadd.f32 %v3882, %v4190
        %v4192 = vpop.f32.mrf.mxu0
        %v4193 = vpop.f32.mrf.mxu0
        %v4194 = vadd.f32 %v3882, %v4193
        %v4195 = vpop.f32.mrf.mxu0
        %4196 = vmatprep.mubr.bf16.mxu0 %v3828
        %4197 = vmatmul.mubr.bf16.gmra.mxu0 %v3827
        %v4198 = vpop.f32.mrf.mxu0
        %v4199 = vadd.f32 %v3882, %v4198
        %v4200 = vpop.f32.mrf.mxu0
        %v4201 = vpop.f32.mrf.mxu0
        %v4202 = vadd.f32 %v3882, %v4201
        %v4203 = vpop.f32.mrf.mxu0
        %4204 = vmatprep.mubr.bf16.mxu0 %v3830
        %4205 = vmatmul.mubr.bf16.gmra.mxu0 %v3829
        %v4206 = vpop.f32.mrf.mxu0
        %v4207 = vadd.f32 %v3882, %v4206
        %v4208 = vpop.f32.mrf.mxu0
        %v4209 = vpop.f32.mrf.mxu0
        %v4210 = vadd.f32 %v3882, %v4209
        %v4211 = vpop.f32.mrf.mxu0
        %4212 = vmatprep.mubr.bf16.mxu0 %v3832
        %4213 = vmatmul.mubr.bf16.gmra.mxu0 %v3831
        %v4214 = vpop.f32.mrf.mxu0
        %v4215 = vadd.f32 %v3882, %v4214
        %v4216 = vpop.f32.mrf.mxu0
        %v4217 = vpop.f32.mrf.mxu0
        %v4218 = vadd.f32 %v3882, %v4217
        %v4219 = vpop.f32.mrf.mxu0
        %4220 = vmatprep.mubr.bf16.mxu0 %v3834
        %4221 = vmatmul.mubr.bf16.gmra.mxu0 %v3833
        %v4222 = vpop.f32.mrf.mxu0
        %v4223 = vadd.f32 %v3882, %v4222
        %v4224 = vpop.f32.mrf.mxu0
        %v4225 = vpop.f32.mrf.mxu0
        %v4226 = vadd.f32 %v3882, %v4225
        %v4227 = vpop.f32.mrf.mxu0
        %4228 = vmatprep.mubr.bf16.mxu0 %v3836
        %4229 = vmatmul.mubr.bf16.gmra.mxu0 %v3835
        %v4230 = vpop.f32.mrf.mxu0
        %v4231 = vadd.f32 %v3882, %v4230
        %v4232 = vpop.f32.mrf.mxu0
        %v4233 = vpop.f32.mrf.mxu0
        %v4234 = vadd.f32 %v3882, %v4233
        %v4235 = vpop.f32.mrf.mxu0
        %4236 = vmatprep.mubr.bf16.mxu0 %v3838
        %4237 = vmatmul.mubr.bf16.gmra.mxu0 %v3837
        %v4238 = vpop.f32.mrf.mxu0
        %v4239 = vadd.f32 %v3882, %v4238
        %v4240 = vpop.f32.mrf.mxu0
        %v4241 = vpop.f32.mrf.mxu0
        %v4242 = vadd.f32 %v3882, %v4241
        %v4243 = vpop.f32.mrf.mxu0
        %4244 = vmatprep.mubr.bf16.mxu0 %v3840
        %4245 = vmatmul.mubr.bf16.gmra.mxu0 %v3839
        %v4246 = vpop.f32.mrf.mxu0
        %v4247 = vadd.f32 %v3882, %v4246
        %v4248 = vpop.f32.mrf.mxu0
        %v4249 = vpop.f32.mrf.mxu0
        %v4250 = vadd.f32 %v3882, %v4249
        %v4251 = vpop.f32.mrf.mxu0
        %4252 = vmatprep.mubr.bf16.mxu0 %v3842
        %4253 = vmatmul.mubr.bf16.gmra.mxu0 %v3841
        %v4254 = vpop.f32.mrf.mxu0
        %v4255 = vadd.f32 %v3882, %v4254
        %v4256 = vpop.f32.mrf.mxu0
        %v4257 = vpop.f32.mrf.mxu0
        %v4258 = vadd.f32 %v3882, %v4257
        %v4259 = vpop.f32.mrf.mxu0
        %4260 = vmatprep.mubr.bf16.mxu0 %v3844
        %4261 = vmatmul.mubr.bf16.gmra.mxu0 %v3843
        %v4262 = vpop.f32.mrf.mxu0
        %v4263 = vadd.f32 %v3882, %v4262
        %v4264 = vpop.f32.mrf.mxu0
        %v4265 = vpop.f32.mrf.mxu0
        %v4266 = vadd.f32 %v3882, %v4265
        %v4267 = vpop.f32.mrf.mxu0
        %4268 = vdwg.mxu0
        %v4269 = vpack.c.bf16 %v4018, %v4015
        %v4270 = vpack.c.bf16 %v4026, %v4023
        %v4271 = vpack.c.bf16 %v4034, %v4031
        %v4272 = vpack.c.bf16 %v4042, %v4039
        %v4273 = vpack.c.bf16 %v4050, %v4047
        %v4274 = vpack.c.bf16 %v4058, %v4055
        %v4275 = vpack.c.bf16 %v4066, %v4063
        %v4276 = vpack.c.bf16 %v4074, %v4071
        %v4277 = vpack.c.bf16 %v4082, %v4079
        %v4278 = vpack.c.bf16 %v4090, %v4087
        %v4279 = vpack.c.bf16 %v4098, %v4095
        %v4280 = vpack.c.bf16 %v4106, %v4103
        %v4281 = vpack.c.bf16 %v4114, %v4111
        %v4282 = vpack.c.bf16 %v4122, %v4119
        %v4283 = vpack.c.bf16 %v4130, %v4127
        %v4284 = vpack.c.bf16 %v4138, %v4135
        %v4285 = vpack.c.bf16 %v4146, %v4143
        %v4286 = vpack.c.bf16 %v4154, %v4151
        %v4287 = vpack.c.bf16 %v4162, %v4159
        %v4288 = vpack.c.bf16 %v4170, %v4167
        %v4289 = vpack.c.bf16 %v4178, %v4175
        %v4290 = vpack.c.bf16 %v4186, %v4183
        %v4291 = vpack.c.bf16 %v4194, %v4191
        %v4292 = vpack.c.bf16 %v4202, %v4199
        %v4293 = vpack.c.bf16 %v4210, %v4207
        %v4294 = vpack.c.bf16 %v4218, %v4215
        %v4295 = vpack.c.bf16 %v4226, %v4223
        %v4296 = vpack.c.bf16 %v4234, %v4231
        %v4297 = vpack.c.bf16 %v4242, %v4239
        %v4298 = vpack.c.bf16 %v4250, %v4247
        %v4299 = vpack.c.bf16 %v4258, %v4255
        %v4300 = vpack.c.bf16 %v4266, %v4263
        %v4333 = vunpack.c.l.b16 %v4269
        %v4334 = vunpack.c.h.b16 %v4269
        %v4335 = vunpack.c.l.b16 %v4270
        %v4336 = vunpack.c.h.b16 %v4270
        %v4337 = vunpack.c.l.b16 %v4271
        %v4338 = vunpack.c.h.b16 %v4271
        %v4339 = vunpack.c.l.b16 %v4272
        %v4340 = vunpack.c.h.b16 %v4272
        %v4341 = vunpack.c.l.b16 %v4273
        %v4342 = vunpack.c.h.b16 %v4273
        %v4343 = vunpack.c.l.b16 %v4274
        %v4344 = vunpack.c.h.b16 %v4274
        %v4345 = vunpack.c.l.b16 %v4275
        %v4346 = vunpack.c.h.b16 %v4275
        %v4347 = vunpack.c.l.b16 %v4276
        %v4348 = vunpack.c.h.b16 %v4276
        %v4349 = vunpack.c.l.b16 %v4277
        %v4350 = vunpack.c.h.b16 %v4277
        %v4351 = vunpack.c.l.b16 %v4278
        %v4352 = vunpack.c.h.b16 %v4278
        %v4353 = vunpack.c.l.b16 %v4279
        %v4354 = vunpack.c.h.b16 %v4279
        %v4355 = vunpack.c.l.b16 %v4280
        %v4356 = vunpack.c.h.b16 %v4280
        %v4357 = vunpack.c.l.b16 %v4281
        %v4358 = vunpack.c.h.b16 %v4281
        %v4359 = vunpack.c.l.b16 %v4282
        %v4360 = vunpack.c.h.b16 %v4282
        %v4361 = vunpack.c.l.b16 %v4283
        %v4362 = vunpack.c.h.b16 %v4283
        %v4363 = vunpack.c.l.b16 %v4284
        %v4364 = vunpack.c.h.b16 %v4284
        %v4365 = vunpack.c.l.b16 %v4285
        %v4366 = vunpack.c.h.b16 %v4285
        %v4367 = vunpack.c.l.b16 %v4286
        %v4368 = vunpack.c.h.b16 %v4286
        %v4369 = vunpack.c.l.b16 %v4287
        %v4370 = vunpack.c.h.b16 %v4287
        %v4371 = vunpack.c.l.b16 %v4288
        %v4372 = vunpack.c.h.b16 %v4288
        %v4373 = vunpack.c.l.b16 %v4289
        %v4374 = vunpack.c.h.b16 %v4289
        %v4375 = vunpack.c.l.b16 %v4290
        %v4376 = vunpack.c.h.b16 %v4290
        %v4377 = vunpack.c.l.b16 %v4291
        %v4378 = vunpack.c.h.b16 %v4291
        %v4379 = vunpack.c.l.b16 %v4292
        %v4380 = vunpack.c.h.b16 %v4292
        %v4381 = vunpack.c.l.b16 %v4293
        %v4382 = vunpack.c.h.b16 %v4293
        %v4383 = vunpack.c.l.b16 %v4294
        %v4384 = vunpack.c.h.b16 %v4294
        %v4385 = vunpack.c.l.b16 %v4295
        %v4386 = vunpack.c.h.b16 %v4295
        %v4387 = vunpack.c.l.b16 %v4296
        %v4388 = vunpack.c.h.b16 %v4296
        %v4389 = vunpack.c.l.b16 %v4297
        %v4390 = vunpack.c.h.b16 %v4297
        %v4391 = vunpack.c.l.b16 %v4298
        %v4392 = vunpack.c.h.b16 %v4298
        %v4393 = vunpack.c.l.b16 %v4299
        %v4394 = vunpack.c.h.b16 %v4299
        %v4395 = vunpack.c.l.b16 %v4300
        %v4396 = vunpack.c.h.b16 %v4300
        %v4397 = vpack.c.b16 %v4333, %v4333
        %v4398 = vpack.c.b16 %v4334, %v4334
        %v4399 = vpack.c.b16 %v4335, %v4335
        %v4400 = vpack.c.b16 %v4336, %v4336
        %v4401 = vpack.c.b16 %v4337, %v4337
        %v4402 = vpack.c.b16 %v4338, %v4338
        %v4403 = vpack.c.b16 %v4339, %v4339
        %v4404 = vpack.c.b16 %v4340, %v4340
        %v4405 = vpack.c.b16 %v4341, %v4341
        %v4406 = vpack.c.b16 %v4342, %v4342
        %v4407 = vpack.c.b16 %v4343, %v4343
        %v4408 = vpack.c.b16 %v4344, %v4344
        %v4409 = vpack.c.b16 %v4345, %v4345
        %v4410 = vpack.c.b16 %v4346, %v4346
        %v4411 = vpack.c.b16 %v4347, %v4347
        %v4412 = vpack.c.b16 %v4348, %v4348
        %v4413 = vpack.c.b16 %v4349, %v4349
        %v4414 = vpack.c.b16 %v4350, %v4350
        %v4415 = vpack.c.b16 %v4351, %v4351
        %v4416 = vpack.c.b16 %v4352, %v4352
        %v4417 = vpack.c.b16 %v4353, %v4353
        %v4418 = vpack.c.b16 %v4354, %v4354
        %v4419 = vpack.c.b16 %v4355, %v4355
        %v4420 = vpack.c.b16 %v4356, %v4356
        %v4421 = vpack.c.b16 %v4357, %v4357
        %v4422 = vpack.c.b16 %v4358, %v4358
        %v4423 = vpack.c.b16 %v4359, %v4359
        %v4424 = vpack.c.b16 %v4360, %v4360
        %v4425 = vpack.c.b16 %v4361, %v4361
        %v4426 = vpack.c.b16 %v4362, %v4362
        %v4427 = vpack.c.b16 %v4363, %v4363
        %v4428 = vpack.c.b16 %v4364, %v4364
        %v4429 = vpack.c.b16 %v4365, %v4365
        %v4430 = vpack.c.b16 %v4366, %v4366
        %v4431 = vpack.c.b16 %v4367, %v4367
        %v4432 = vpack.c.b16 %v4368, %v4368
        %v4433 = vpack.c.b16 %v4369, %v4369
        %v4434 = vpack.c.b16 %v4370, %v4370
        %v4435 = vpack.c.b16 %v4371, %v4371
        %v4436 = vpack.c.b16 %v4372, %v4372
        %v4437 = vpack.c.b16 %v4373, %v4373
        %v4438 = vpack.c.b16 %v4374, %v4374
        %v4439 = vpack.c.b16 %v4375, %v4375
        %v4440 = vpack.c.b16 %v4376, %v4376
        %v4441 = vpack.c.b16 %v4377, %v4377
        %v4442 = vpack.c.b16 %v4378, %v4378
        %v4443 = vpack.c.b16 %v4379, %v4379
        %v4444 = vpack.c.b16 %v4380, %v4380
        %v4445 = vpack.c.b16 %v4381, %v4381
        %v4446 = vpack.c.b16 %v4382, %v4382
        %v4447 = vpack.c.b16 %v4383, %v4383
        %v4448 = vpack.c.b16 %v4384, %v4384
        %v4449 = vpack.c.b16 %v4385, %v4385
        %v4450 = vpack.c.b16 %v4386, %v4386
        %v4451 = vpack.c.b16 %v4387, %v4387
        %v4452 = vpack.c.b16 %v4388, %v4388
        %v4453 = vpack.c.b16 %v4389, %v4389
        %v4454 = vpack.c.b16 %v4390, %v4390
        %v4455 = vpack.c.b16 %v4391, %v4391
        %v4456 = vpack.c.b16 %v4392, %v4392
        %v4457 = vpack.c.b16 %v4393, %v4393
        %v4458 = vpack.c.b16 %v4394, %v4394
        %v4459 = vpack.c.b16 %v4395, %v4395
        %v4460 = vpack.c.b16 %v4396, %v4396
        %4525 = vst [vmem:[%s271] sm:$0xf] %v4397
        %4526 = vst [vmem:[%s271 + $0x4] sm:$0xf] %v4398
        %4527 = vst [vmem:[%s271 + $0x8] sm:$0xf] %v4399
        %4528 = vst [vmem:[%s271 + $0xc] sm:$0xf] %v4400
        %4529 = vst [vmem:[%s271 + $0x10] sm:$0xf] %v4401
        %4530 = vst [vmem:[%s271 + $0x14] sm:$0xf] %v4402
        %4531 = vst [vmem:[%s271 + $0x18] sm:$0xf] %v4403
        %4532 = vst [vmem:[%s271 + $0x1c] sm:$0xf] %v4404
        %4533 = vst [vmem:[%s271 + $0x20] sm:$0xf] %v4405
        %4534 = vst [vmem:[%s271 + $0x24] sm:$0xf] %v4406
        %4535 = vst [vmem:[%s271 + $0x28] sm:$0xf] %v4407
        %4536 = vst [vmem:[%s271 + $0x2c] sm:$0xf] %v4408
        %4537 = vst [vmem:[%s271 + $0x30] sm:$0xf] %v4409
        %4538 = vst [vmem:[%s271 + $0x34] sm:$0xf] %v4410
        %4539 = vst [vmem:[%s271 + $0x38] sm:$0xf] %v4411
        %4540 = vst [vmem:[%s271 + $0x3c] sm:$0xf] %v4412
        %4541 = vst [vmem:[%s271 + $0x40] sm:$0xf] %v4413
        %4542 = vst [vmem:[%s271 + $0x44] sm:$0xf] %v4414
        %4543 = vst [vmem:[%s271 + $0x48] sm:$0xf] %v4415
        %4544 = vst [vmem:[%s271 + $0x4c] sm:$0xf] %v4416
        %4545 = vst [vmem:[%s271 + $0x50] sm:$0xf] %v4417
        %4546 = vst [vmem:[%s271 + $0x54] sm:$0xf] %v4418
        %4547 = vst [vmem:[%s271 + $0x58] sm:$0xf] %v4419
        %4548 = vst [vmem:[%s271 + $0x5c] sm:$0xf] %v4420
        %4549 = vst [vmem:[%s271 + $0x60] sm:$0xf] %v4421
        %4550 = vst [vmem:[%s271 + $0x64] sm:$0xf] %v4422
        %4551 = vst [vmem:[%s271 + $0x68] sm:$0xf] %v4423
        %4552 = vst [vmem:[%s271 + $0x6c] sm:$0xf] %v4424
        %4553 = vst [vmem:[%s271 + $0x70] sm:$0xf] %v4425
        %4554 = vst [vmem:[%s271 + $0x74] sm:$0xf] %v4426
        %4555 = vst [vmem:[%s271 + $0x78] sm:$0xf] %v4427
        %4556 = vst [vmem:[%s271 + $0x7c] sm:$0xf] %v4428
        %4557 = vst [vmem:[%s271 + $0x80] sm:$0xf] %v4429
        %4558 = vst [vmem:[%s271 + $0x84] sm:$0xf] %v4430
        %4559 = vst [vmem:[%s271 + $0x88] sm:$0xf] %v4431
        %4560 = vst [vmem:[%s271 + $0x8c] sm:$0xf] %v4432
        %4561 = vst [vmem:[%s271 + $0x90] sm:$0xf] %v4433
        %4562 = vst [vmem:[%s271 + $0x94] sm:$0xf] %v4434
        %4563 = vst [vmem:[%s271 + $0x98] sm:$0xf] %v4435
        %4564 = vst [vmem:[%s271 + $0x9c] sm:$0xf] %v4436
        %4565 = vst [vmem:[%s271 + $0xa0] sm:$0xf] %v4437
        %4566 = vst [vmem:[%s271 + $0xa4] sm:$0xf] %v4438
        %4567 = vst [vmem:[%s271 + $0xa8] sm:$0xf] %v4439
        %4568 = vst [vmem:[%s271 + $0xac] sm:$0xf] %v4440
        %4569 = vst [vmem:[%s271 + $0xb0] sm:$0xf] %v4441
        %4570 = vst [vmem:[%s271 + $0xb4] sm:$0xf] %v4442
        %4571 = vst [vmem:[%s271 + $0xb8] sm:$0xf] %v4443
        %4572 = vst [vmem:[%s271 + $0xbc] sm:$0xf] %v4444
        %4573 = vst [vmem:[%s271 + $0xc0] sm:$0xf] %v4445
        %4574 = vst [vmem:[%s271 + $0xc4] sm:$0xf] %v4446
        %4575 = vst [vmem:[%s271 + $0xc8] sm:$0xf] %v4447
        %4576 = vst [vmem:[%s271 + $0xcc] sm:$0xf] %v4448
        %4577 = vst [vmem:[%s271 + $0xd0] sm:$0xf] %v4449
        %4578 = vst [vmem:[%s271 + $0xd4] sm:$0xf] %v4450
        %4579 = vst [vmem:[%s271 + $0xd8] sm:$0xf] %v4451
        %4580 = vst [vmem:[%s271 + $0xdc] sm:$0xf] %v4452
        %4581 = vst [vmem:[%s271 + $0xe0] sm:$0xf] %v4453
        %4582 = vst [vmem:[%s271 + $0xe4] sm:$0xf] %v4454
        %4583 = vst [vmem:[%s271 + $0xe8] sm:$0xf] %v4455
        %4584 = vst [vmem:[%s271 + $0xec] sm:$0xf] %v4456
        %4585 = vst [vmem:[%s271 + $0xf0] sm:$0xf] %v4457
        %4586 = vst [vmem:[%s271 + $0xf4] sm:$0xf] %v4458
        %4587 = vst [vmem:[%s271 + $0xf8] sm:$0xf] %v4459
        %4588 = vst [vmem:[%s271 + $0xfc] sm:$0xf] %v4460
        %s4589 = sand.u32 %s141, 1
        %s4590 = scalar_lea.sflag [#allocation4], %s4589
        %s4591 = sand.u32 %s141, 1
        %s4592 = smul.addr %s4591, 256
        %s4593 = scalar_lea.vmem [#allocation8], %s4592
        // Predicated region
        $region53: #{tpu_custom_call.1} parent=39 // pred_check
          %p4594 = pneg %p151
        $region54: #{tpu_custom_call.1} parent=39 // pred_check_branch
          %4596 = sbr.rel (%p4594) target = $region56
        $region55: #{tpu_custom_call.1} parent=39 // pred_region
          %s4597 = smul.u32 64, %s23
          %s4599 = ssub.s32 4096, 4096
          %4600 = vsyncadd %s4590, %s4599
          %s4601 = smul.addr %s4597, 64
          %s4602 = scalar_lea.hbm %s5, %s4601
          %s4603 = sshll.u32 %s4593, 4
          %s4604 = int_to_ptr.vmem [resolvable:$true] %s4603
          %4609 = dma.vmem_to_hbm [thread:$0]  %s4604, 4096, %s4602, %s4590, 64, 64, 4
        $region56: #{tpu_custom_call.1} parent=39 // pred_fallthru
          _
      $region40: #{tpu_custom_call.1} parent=5 // pred_fallthru
        _
      %p4610 = scmp.le.s32.totalorder 2, %s18
      // Predicated region
      $region57: #{tpu_custom_call.1} parent=5 // pred_check
        %p4611 = pneg %p4610
      $region58: #{tpu_custom_call.1} parent=5 // pred_check_branch
        %4613 = sbr.rel (%p4611) target = $region60
      $region59: #{tpu_custom_call.1} parent=5 // pred_region
        %s4614 = ssub.s32 %s18, 2
        // Predicated region
        $region61: #{tpu_custom_call.1} parent=59 // pred_check
          %p4615 = pneg %p157
        $region62: #{tpu_custom_call.1} parent=59 // pred_check_branch
          %4617 = sbr.rel (%p4615) target = $region64
        $region63: #{tpu_custom_call.1} parent=59 // pred_region
          %s4618 = sand.u32 %s142, 1
          %s4619 = scalar_lea.sflag [#allocation4], %s4618
          %s4620 = sand.u32 %s142, 1
          %s4621 = smul.addr %s4620, 256
          %s4622 = scalar_lea.vmem [#allocation8], %s4621
          %4623 = dma.done %s4619, 4096
        $region64: #{tpu_custom_call.1} parent=59 // pred_fallthru
          _
      $region60: #{tpu_custom_call.1} parent=5 // pred_fallthru
        _
    $region6: #{tpu_custom_call.1} parent=1 // loop_footer
      %s22 = sadd.s32 1, %s18
    $region7: #{tpu_custom_call.1} parent=1 // loop_footer_branch
      %17 = sbr.rel target = $region3
    $region8: #{tpu_custom_call.1} parent=1 // loop_exit
      _
    %4624 = vsyncpa [#allocation3], 1
    %s4625 = scalar_lea.sflag [#allocation3], 1
    %4626 = vsyncpa %s4625, 1
    %4627 = vsyncpa [#allocation6], 1
    %4628 = vsyncpa [#allocation4], 1
    %s4629 = scalar_lea.sflag [#allocation4], 1
    %4630 = vsyncpa %s4629, 1

</llo_original>
